<compile_context>
chip_gen: v7x
topology: tpu7x:2x2x1
jax: 0.10.0
libtpu: 0.0.40
codegen_flags: <defaults>
</compile_context>

<pallas_src>
import functools

import jax
import jax.numpy as jnp
import numpy as np
from jax.experimental import pallas as pl
from jax.experimental.pallas import tpu as pltpu


# ----------------------------------------------------------------------------
# Fused kernel: conv1->conv2->conv3 (+ReLU), running max over point chunks,
# and (on the last chunk) fc1->fc2->fc3 on the pooled features.
# ----------------------------------------------------------------------------
def _stn3d_fused_kernel(x_ref, w1_ref, b1_ref, w2_ref, b2_ref, w3_ref, b3_ref,
                        fw1_ref, fb1_ref, fw2_ref, fb2_ref, fw3_ref, fb3_ref,
                        out_ref, feat_ref, *, n_points, mask_tail):
    tb, _, tn = x_ref.shape            # input block: (TB, 3, TN), NCW layout
    n_idx = pl.program_id(1)           # point-chunk index (reduction axis)
    n_last = pl.num_programs(1) - 1

    # --- conv stack on this chunk -------------------------------------------
    # One transpose of the whole block (no Python loop), flatten to M rows.
    xt = jnp.swapaxes(x_ref[...], 1, 2).reshape(tb * tn, 3)        # (M, 3)

    # conv1 as a K=3 MXU matmul (MXU is otherwise idle here), f32 operands.
    h1 = jnp.dot(xt, w1_ref[...], preferred_element_type=jnp.float32) + b1_ref[...]
    h1 = jnp.maximum(h1, 0.0)                                       # (M, 64)

    # conv2 / conv3: bf16 operands, f32 accumulation.
    h2 = jnp.dot(h1.astype(jnp.bfloat16), w2_ref[...],
                 preferred_element_type=jnp.float32) + b2_ref[...]
    h2 = jnp.maximum(h2, 0.0)                                       # (M, 128)
    h3 = jnp.dot(h2.astype(jnp.bfloat16), w3_ref[...],
                 preferred_element_type=jnp.float32) + b3_ref[...]
    h3 = jnp.maximum(h3, 0.0)                                       # (M, 1024)

    # --- per-chunk max over points (single sublane reduction) ---------------
    h3 = h3.reshape(tb, tn, h3.shape[-1])                           # (TB, TN, 1024)
    if mask_tail:
        # Points past N in the (partial) last chunk are garbage; zero them.
        # All real h3 values are >= 0 (post-ReLU), so a 0 mask never changes
        # the global max.
        pt = n_idx * tn + jax.lax.broadcasted_iota(jnp.int32, (tn, 1), 0)
        valid = (pt < n_points)[None, :, :]                         # (1, TN, 1)
        h3 = jnp.where(valid, h3, 0.0)
    chunk_max = jnp.max(h3, axis=1)                                 # (TB, 1024)

    # Fold into the resident pooled-feature accumulator (scratch VMEM).
    @pl.when(n_idx == 0)
    def _():
        feat_ref[...] = chunk_max

    @pl.when(n_idx != 0)
    def _():
        feat_ref[...] = jnp.maximum(feat_ref[...], chunk_max)

    # --- fused FC head on the last point chunk ------------------------------
    @pl.when(n_idx == n_last)
    def _():
        f = feat_ref[...].astype(jnp.bfloat16)                      # (TB, 1024)
        f1 = jnp.dot(f, fw1_ref[...],
                     preferred_element_type=jnp.float32) + fb1_ref[...]
        f1 = jnp.maximum(f1, 0.0)
        f2 = jnp.dot(f1.astype(jnp.bfloat16), fw2_ref[...],
                     preferred_element_type=jnp.float32) + fb2_ref[...]
        f2 = jnp.maximum(f2, 0.0)
        f3 = jnp.dot(f2.astype(jnp.bfloat16), fw3_ref[...],
                     preferred_element_type=jnp.float32) + fb3_ref[...]
        out_ref[...] = f3[:, None, :]                               # (TB, 1, 9)


# ----------------------------------------------------------------------------
# Tiling heuristics.
# ----------------------------------------------------------------------------
def _choose_tiles(B, N, m_cap=2048):
    """Pick (TB, TN): TN a multiple of 128 (prefer one dividing N), TB a
    divisor of B with TB*TN <= m_cap and >= 2 batch blocks when B >= 2 (so
    v7x's two TensorCores both get parallel work)."""
    if N < 128:
        tn = N
    else:
        tn = 0
        cap = min(N, m_cap)
        for cand in (2048, 1024, 512, 256, 128):
            if cand <= cap and N % cand == 0:
                tn = cand
                break
        if tn == 0:
            tn = (cap // 128) * 128          # tail handled by in-kernel mask
    tb_cap = max(1, m_cap // tn)
    if B >= 2:
        tb_cap = min(tb_cap, B // 2)         # keep >= 2 parallel batch blocks
    tb = 1
    for d in range(min(B, max(1, tb_cap)), 0, -1):
        if B % d == 0:
            tb = d
            break
    return tb, tn


# ----------------------------------------------------------------------------
# Forward pass wrapper.
# ----------------------------------------------------------------------------
def stn3d_forward(x_ncw, params):
    """x_ncw: (B, 3, N) float32 (PyTorch Conv1d NCW layout)."""
    B, C, N = x_ncw.shape
    assert C == 3
    (w1, b1, w2, b2, w3, b3, fw1, fb1, fw2, fb2, fw3, fb3) = params

    # bf16 MXU operands (accumulation stays f32 inside the kernel).
    w2b = w2.astype(jnp.bfloat16)
    w3b = w3.astype(jnp.bfloat16)
    fw1b = fw1.astype(jnp.bfloat16)
    fw2b = fw2.astype(jnp.bfloat16)
    fw3b = fw3.astype(jnp.bfloat16)

    TB, TN = _choose_tiles(B, N)
    n_chunks = pl.cdiv(N, TN)
    grid = (B // TB, n_chunks)               # reduction (points) axis last

    def const_spec(a):
        nd = a.ndim
        return pl.BlockSpec(a.shape, lambda b, n, _nd=nd: (0,) * _nd)

    kernel = functools.partial(_stn3d_fused_kernel,
                               n_points=N, mask_tail=(N % TN != 0))

    out = pl.pallas_call(
        kernel,
        out_shape=jax.ShapeDtypeStruct((B, 1, 9), jnp.float32),
        grid_spec=pltpu.PrefetchScalarGridSpec(
            num_scalar_prefetch=0,
            grid=grid,
            in_specs=[
                pl.BlockSpec((TB, 3, TN), lambda b, n: (b, 0, n)),
                const_spec(w1), const_spec(b1),
                const_spec(w2b), const_spec(b2),
                const_spec(w3b), const_spec(b3),
                const_spec(fw1b), const_spec(fb1),
                const_spec(fw2b), const_spec(fb2),
                const_spec(fw3b), const_spec(fb3),
            ],
            out_specs=pl.BlockSpec((TB, 1, 9), lambda b, n: (b, 0, 0)),
            scratch_shapes=[pltpu.VMEM((TB, 1024), jnp.float32)],   # pooled feat
        ),
        compiler_params=pltpu.CompilerParams(
            dimension_semantics=("parallel", "arbitrary"),
            vmem_limit_bytes=32 << 20),
    )(x_ncw, w1, b1, w2b, b2, w3b, b3, fw1b, fb1, fw2b, fb2, fw3b, fb3)

    iden = jnp.array([1, 0, 0, 0, 1, 0, 0, 0, 1], jnp.float32)[None, :]
    return (out.reshape(B, 9) + iden).reshape(B, 3, 3)


# ----------------------------------------------------------------------------
# Parameters (deterministic synthetic), pure-JAX reference, test harness.
# ----------------------------------------------------------------------------
def init_params(key):
    """Weights stored pre-transposed (in_features, out_features) for the kernel."""
    ks = jax.random.split(key, 12)

    def w(k, shape, scale):
        return (jax.random.normal(k, shape, jnp.float32) * scale).astype(jnp.float32)

    w1 = w(ks[0], (3, 64), 0.3)
    b1 = w(ks[1], (1, 64), 0.1)
    w2 = w(ks[2], (64, 128), 0.1)
    b2 = w(ks[3], (1, 128), 0.1)
    w3 = w(ks[4], (128, 1024), 0.05)
    b3 = w(ks[5], (1, 1024), 0.1)
    fw1 = w(ks[6], (1024, 512), 0.02)
    fb1 = w(ks[7], (1, 512), 0.1)
    fw2 = w(ks[8], (512, 256), 0.03)
    fb2 = w(ks[9], (1, 256), 0.1)
    fw3 = w(ks[10], (256, 9), 0.05)
    fb3 = w(ks[11], (1, 9), 0.1)
    return (w1, b1, w2, b2, w3, b3, fw1, fb1, fw2, fb2, fw3, fb3)


def stn3d_reference(x_ncw, params):
    """Pure-JAX reference mirroring the PyTorch forward (f32, highest precision)."""
    (w1, b1, w2, b2, w3, b3, fw1, fb1, fw2, fb2, fw3, fb3) = params
    B = x_ncw.shape[0]
    hp = jax.lax.Precision.HIGHEST
    x = jnp.transpose(x_ncw, (0, 2, 1))                               # (B, N, 3)
    h = jnp.maximum(jnp.matmul(x, w1, precision=hp) + b1, 0.0)        # (B, N, 64)
    h = jnp.maximum(jnp.matmul(h, w2, precision=hp) + b2, 0.0)        # (B, N, 128)
    h = jnp.maximum(jnp.matmul(h, w3, precision=hp) + b3, 0.0)        # (B, N, 1024)
    feat = jnp.max(h, axis=1)                                         # (B, 1024)
    f = jnp.maximum(jnp.matmul(feat, fw1, precision=hp) + fb1, 0.0)
    f = jnp.maximum(jnp.matmul(f, fw2, precision=hp) + fb2, 0.0)
    f = jnp.matmul(f, fw3, precision=hp) + fb3                        # (B, 9)
    iden = jnp.array([1, 0, 0, 0, 1, 0, 0, 0, 1], jnp.float32)[None, :]
    return (f + iden).reshape(B, 3, 3)


if __name__ == "__main__":
    key = jax.random.PRNGKey(0)
    kp, kx1, kx2 = jax.random.split(key, 3)
    params = init_params(kp)

    fwd = jax.jit(stn3d_forward)

    # Case 1: module default num_points=1024.  TB=1 -> 2 parallel batch blocks
    # (v7x megacore), TN=1024 -> single point chunk, M=1024 MXU rows per step.
    B, N = 2, 1024
    x = jax.random.normal(kx1, (B, 3, N), jnp.float32)     # PyTorch NCW layout
    out = jax.block_until_ready(fwd(x, params))
    ref = stn3d_reference(x, params)
    assert out.shape == (B, 3, 3)
    # bf16 MXU operands vs f32 HIGHEST reference -> relaxed tolerance.
    np.testing.assert_allclose(np.asarray(out), np.asarray(ref), rtol=2e-2, atol=2e-2)

    # Case 2: non-divisible point count — exercises the multi-chunk running-max
    # accumulator and the in-kernel tail masking (no wrapper-side pad copy).
    B2, N2 = 2, 1000
    x2 = jax.random.normal(kx2, (B2, 3, N2), jnp.float32)
    out2 = jax.block_until_ready(fwd(x2, params))
    ref2 = stn3d_reference(x2, params)
    np.testing.assert_allclose(np.asarray(out2), np.asarray(ref2), rtol=2e-2, atol=2e-2)

    print("KERNEL_OK")
</pallas_src>

<mosaic_0001>
module attributes {stable_mosaic.version = 11 : i64} {
  func.func @_stn3d_fused_kernel(%arg0: i32, %arg1: i32, %arg2: memref<1x3x1024xf32, #tpu.memory_space<vmem>>, %arg3: memref<3x64xf32, #tpu.memory_space<vmem>>, %arg4: memref<1x64xf32, #tpu.memory_space<vmem>>, %arg5: memref<64x128xbf16, #tpu.memory_space<vmem>>, %arg6: memref<1x128xf32, #tpu.memory_space<vmem>>, %arg7: memref<128x1024xbf16, #tpu.memory_space<vmem>>, %arg8: memref<1x1024xf32, #tpu.memory_space<vmem>>, %arg9: memref<1024x512xbf16, #tpu.memory_space<vmem>>, %arg10: memref<1x512xf32, #tpu.memory_space<vmem>>, %arg11: memref<512x256xbf16, #tpu.memory_space<vmem>>, %arg12: memref<1x256xf32, #tpu.memory_space<vmem>>, %arg13: memref<256x9xbf16, #tpu.memory_space<vmem>>, %arg14: memref<1x9xf32, #tpu.memory_space<vmem>>, %arg15: memref<1x1x9xf32, #tpu.memory_space<vmem>>, %arg16: memref<1x1024xf32, #tpu.memory_space<vmem>>) attributes {dimension_semantics = [#tpu.dimension_semantics<parallel>, #tpu.dimension_semantics<arbitrary>], iteration_bounds = array<i64: 2, 1>, scalar_prefetch = 0 : i64, scratch_operands = 1 : i64, tpu.core_type = #tpu.core_type<tc>, window_params = [{transform_indices = @transform_0, window_bounds = array<i64: 1, 3, 1024>}, {pipeline_mode = #tpu.pipeline_mode<synchronous>, transform_indices = @transform_1, window_bounds = array<i64: 3, 64>}, {pipeline_mode = #tpu.pipeline_mode<synchronous>, transform_indices = @transform_2, window_bounds = array<i64: 1, 64>}, {pipeline_mode = #tpu.pipeline_mode<synchronous>, transform_indices = @transform_3, window_bounds = array<i64: 64, 128>}, {pipeline_mode = #tpu.pipeline_mode<synchronous>, transform_indices = @transform_4, window_bounds = array<i64: 1, 128>}, {pipeline_mode = #tpu.pipeline_mode<synchronous>, transform_indices = @transform_5, window_bounds = array<i64: 128, 1024>}, {pipeline_mode = #tpu.pipeline_mode<synchronous>, transform_indices = @transform_6, window_bounds = array<i64: 1, 1024>}, {pipeline_mode = #tpu.pipeline_mode<synchronous>, transform_indices = @transform_7, window_bounds = array<i64: 1024, 512>}, {pipeline_mode = #tpu.pipeline_mode<synchronous>, transform_indices = @transform_8, window_bounds = array<i64: 1, 512>}, {pipeline_mode = #tpu.pipeline_mode<synchronous>, transform_indices = @transform_9, window_bounds = array<i64: 512, 256>}, {pipeline_mode = #tpu.pipeline_mode<synchronous>, transform_indices = @transform_10, window_bounds = array<i64: 1, 256>}, {pipeline_mode = #tpu.pipeline_mode<synchronous>, transform_indices = @transform_11, window_bounds = array<i64: 256, 9>}, {pipeline_mode = #tpu.pipeline_mode<synchronous>, transform_indices = @transform_12, window_bounds = array<i64: 1, 9>}, {transform_indices = @transform_13, window_bounds = array<i64: 1, 1, 9>}]} {
    %c0 = arith.constant 0 : index
    %c0_0 = arith.constant 0 : index
    %c0_1 = arith.constant 0 : index
    %0 = vector.load %arg2[%c0, %c0_0, %c0_1] : memref<1x3x1024xf32, #tpu.memory_space<vmem>>, vector<1x3x1024xf32>
    %1 = tpu.transpose %0, [0, 2, 1] : vector<1x3x1024xf32> -> vector<1x1024x3xf32>
    %2 = vector.shape_cast %1 : vector<1x1024x3xf32> to vector<1024x3xf32>
    %c0_2 = arith.constant 0 : index
    %c0_3 = arith.constant 0 : index
    %3 = vector.load %arg3[%c0_2, %c0_3] : memref<3x64xf32, #tpu.memory_space<vmem>>, vector<3x64xf32>
    %cst = arith.constant dense<0.000000e+00> : vector<1024x64xf32>
    %4 = tpu.matmul %2, %3, %cst {dimension_numbers = #tpu.dot_dimension_numbers<[1], [0], [0], [1], [0, 0, 1, 1], [], []>} : vector<1024x3xf32>, vector<3x64xf32>, vector<1024x64xf32> -> vector<1024x64xf32>
    %c0_4 = arith.constant 0 : index
    %c0_5 = arith.constant 0 : index
    %5 = vector.load %arg4[%c0_4, %c0_5] : memref<1x64xf32, #tpu.memory_space<vmem>>, vector<1x64xf32>
    %6 = vector.broadcast %5 : vector<1x64xf32> to vector<1024x64xf32>
    %7 = arith.addf %4, %6 : vector<1024x64xf32>
    %cst_6 = arith.constant 0.000000e+00 : f32
    %8 = vector.broadcast %cst_6 : f32 to vector<1024x64xf32>
    %9 = arith.maximumf %7, %8 : vector<1024x64xf32>
    %10 = arith.truncf %9 : vector<1024x64xf32> to vector<1024x64xbf16>
    %c0_7 = arith.constant 0 : index
    %c0_8 = arith.constant 0 : index
    %11 = vector.load %arg5[%c0_7, %c0_8] : memref<64x128xbf16, #tpu.memory_space<vmem>>, vector<64x128xbf16>
    %cst_9 = arith.constant dense<0.000000e+00> : vector<1024x128xf32>
    %12 = tpu.matmul %10, %11, %cst_9 {dimension_numbers = #tpu.dot_dimension_numbers<[1], [0], [0], [1], [0, 0, 1, 1], [], []>} : vector<1024x64xbf16>, vector<64x128xbf16>, vector<1024x128xf32> -> vector<1024x128xf32>
    %c0_10 = arith.constant 0 : index
    %c0_11 = arith.constant 0 : index
    %13 = vector.load %arg6[%c0_10, %c0_11] : memref<1x128xf32, #tpu.memory_space<vmem>>, vector<1x128xf32>
    %14 = vector.broadcast %13 : vector<1x128xf32> to vector<1024x128xf32>
    %15 = arith.addf %12, %14 : vector<1024x128xf32>
    %cst_12 = arith.constant 0.000000e+00 : f32
    %16 = vector.broadcast %cst_12 : f32 to vector<1024x128xf32>
    %17 = arith.maximumf %15, %16 : vector<1024x128xf32>
    %18 = arith.truncf %17 : vector<1024x128xf32> to vector<1024x128xbf16>
    %c0_13 = arith.constant 0 : index
    %c0_14 = arith.constant 0 : index
    %19 = vector.load %arg7[%c0_13, %c0_14] : memref<128x1024xbf16, #tpu.memory_space<vmem>>, vector<128x1024xbf16>
    %cst_15 = arith.constant dense<0.000000e+00> : vector<1024x1024xf32>
    %20 = tpu.matmul %18, %19, %cst_15 {dimension_numbers = #tpu.dot_dimension_numbers<[1], [0], [0], [1], [0, 0, 1, 1], [], []>} : vector<1024x128xbf16>, vector<128x1024xbf16>, vector<1024x1024xf32> -> vector<1024x1024xf32>
    %c0_16 = arith.constant 0 : index
    %c0_17 = arith.constant 0 : index
    %21 = vector.load %arg8[%c0_16, %c0_17] : memref<1x1024xf32, #tpu.memory_space<vmem>>, vector<1x1024xf32>
    %22 = vector.broadcast %21 : vector<1x1024xf32> to vector<1024x1024xf32>
    %23 = arith.addf %20, %22 : vector<1024x1024xf32>
    %cst_18 = arith.constant 0.000000e+00 : f32
    %24 = vector.broadcast %cst_18 : f32 to vector<1024x1024xf32>
    %25 = arith.maximumf %23, %24 : vector<1024x1024xf32>
    %26 = vector.shape_cast %25 : vector<1024x1024xf32> to vector<1x1024x1024xf32>
    %cst_19 = arith.constant dense<0xFF800000> : vector<1x1024xf32>
    %27 = vector.multi_reduction <maximumf>, %26, %cst_19 [1] : vector<1x1024x1024xf32> to vector<1x1024xf32>
    %c0_i32 = arith.constant 0 : i32
    %28 = arith.cmpi eq, %arg1, %c0_i32 : i32
    %29 = arith.extui %28 : i1 to i32
    %c0_i32_20 = arith.constant 0 : i32
    %30 = arith.cmpi ne, %29, %c0_i32_20 : i32
    scf.if %30 {
      %c0_25 = arith.constant 0 : index
      %c0_26 = arith.constant 0 : index
      %37 = vector.load %arg16[%c0_25, %c0_26] : memref<1x1024xf32, #tpu.memory_space<vmem>>, vector<1x1024xf32>
      tpu.vector_store %arg16[%c0_25, %c0_26], %27 {strides = array<i32>} : memref<1x1024xf32, #tpu.memory_space<vmem>>, vector<1x1024xf32>,
    } else {
    }
    %c0_i32_21 = arith.constant 0 : i32
    %31 = arith.cmpi ne, %arg1, %c0_i32_21 : i32
    %32 = arith.extui %31 : i1 to i32
    %c0_i32_22 = arith.constant 0 : i32
    %33 = arith.cmpi ne, %32, %c0_i32_22 : i32
    scf.if %33 {
      %c0_25 = arith.constant 0 : index
      %c0_26 = arith.constant 0 : index
      %37 = vector.load %arg16[%c0_25, %c0_26] : memref<1x1024xf32, #tpu.memory_space<vmem>>, vector<1x1024xf32>
      %38 = arith.maximumf %37, %27 : vector<1x1024xf32>
      %c0_27 = arith.constant 0 : index
      %c0_28 = arith.constant 0 : index
      %39 = vector.load %arg16[%c0_27, %c0_28] : memref<1x1024xf32, #tpu.memory_space<vmem>>, vector<1x1024xf32>
      tpu.vector_store %arg16[%c0_27, %c0_28], %38 {strides = array<i32>} : memref<1x1024xf32, #tpu.memory_space<vmem>>, vector<1x1024xf32>,
    } else {
    }
    %c0_i32_23 = arith.constant 0 : i32
    %34 = arith.cmpi eq, %arg1, %c0_i32_23 : i32
    %35 = arith.extui %34 : i1 to i32
    %c0_i32_24 = arith.constant 0 : i32
    %36 = arith.cmpi ne, %35, %c0_i32_24 : i32
    scf.if %36 {
      %c0_25 = arith.constant 0 : index
      %c0_26 = arith.constant 0 : index
      %37 = vector.load %arg16[%c0_25, %c0_26] : memref<1x1024xf32, #tpu.memory_space<vmem>>, vector<1x1024xf32>
      %38 = arith.truncf %37 : vector<1x1024xf32> to vector<1x1024xbf16>
      %c0_27 = arith.constant 0 : index
      %c0_28 = arith.constant 0 : index
      %39 = vector.load %arg9[%c0_27, %c0_28] : memref<1024x512xbf16, #tpu.memory_space<vmem>>, vector<1024x512xbf16>
      %cst_29 = arith.constant dense<0.000000e+00> : vector<1x512xf32>
      %40 = tpu.matmul %38, %39, %cst_29 {dimension_numbers = #tpu.dot_dimension_numbers<[1], [0], [0], [1], [0, 0, 1, 1], [], []>} : vector<1x1024xbf16>, vector<1024x512xbf16>, vector<1x512xf32> -> vector<1x512xf32>
      %c0_30 = arith.constant 0 : index
      %c0_31 = arith.constant 0 : index
      %41 = vector.load %arg10[%c0_30, %c0_31] : memref<1x512xf32, #tpu.memory_space<vmem>>, vector<1x512xf32>
      %42 = arith.addf %40, %41 : vector<1x512xf32>
      %cst_32 = arith.constant 0.000000e+00 : f32
      %43 = vector.broadcast %cst_32 : f32 to vector<1x512xf32>
      %44 = arith.maximumf %42, %43 : vector<1x512xf32>
      %45 = arith.truncf %44 : vector<1x512xf32> to vector<1x512xbf16>
      %c0_33 = arith.constant 0 : index
      %c0_34 = arith.constant 0 : index
      %46 = vector.load %arg11[%c0_33, %c0_34] : memref<512x256xbf16, #tpu.memory_space<vmem>>, vector<512x256xbf16>
      %cst_35 = arith.constant dense<0.000000e+00> : vector<1x256xf32>
      %47 = tpu.matmul %45, %46, %cst_35 {dimension_numbers = #tpu.dot_dimension_numbers<[1], [0], [0], [1], [0, 0, 1, 1], [], []>} : vector<1x512xbf16>, vector<512x256xbf16>, vector<1x256xf32> -> vector<1x256xf32>
      %c0_36 = arith.constant 0 : index
      %c0_37 = arith.constant 0 : index
      %48 = vector.load %arg12[%c0_36, %c0_37] : memref<1x256xf32, #tpu.memory_space<vmem>>, vector<1x256xf32>
      %49 = arith.addf %47, %48 : vector<1x256xf32>
      %cst_38 = arith.constant 0.000000e+00 : f32
      %50 = vector.broadcast %cst_38 : f32 to vector<1x256xf32>
      %51 = arith.maximumf %49, %50 : vector<1x256xf32>
      %52 = arith.truncf %51 : vector<1x256xf32> to vector<1x256xbf16>
      %c0_39 = arith.constant 0 : index
      %c0_40 = arith.constant 0 : index
      %53 = vector.load %arg13[%c0_39, %c0_40] : memref<256x9xbf16, #tpu.memory_space<vmem>>, vector<256x9xbf16>
      %cst_41 = arith.constant dense<0.000000e+00> : vector<1x9xf32>
      %54 = tpu.matmul %52, %53, %cst_41 {dimension_numbers = #tpu.dot_dimension_numbers<[1], [0], [0], [1], [0, 0, 1, 1], [], []>} : vector<1x256xbf16>, vector<256x9xbf16>, vector<1x9xf32> -> vector<1x9xf32>
      %c0_42 = arith.constant 0 : index
      %c0_43 = arith.constant 0 : index
      %55 = vector.load %arg14[%c0_42, %c0_43] : memref<1x9xf32, #tpu.memory_space<vmem>>, vector<1x9xf32>
      %56 = arith.addf %54, %55 : vector<1x9xf32>
      %57 = vector.shape_cast %56 : vector<1x9xf32> to vector<1x1x9xf32>
      %c0_44 = arith.constant 0 : index
      %c0_45 = arith.constant 0 : index
      %c0_46 = arith.constant 0 : index
      %58 = vector.load %arg15[%c0_44, %c0_45, %c0_46] : memref<1x1x9xf32, #tpu.memory_space<vmem>>, vector<1x1x9xf32>
      tpu.vector_store %arg15[%c0_44, %c0_45, %c0_46], %57 {strides = array<i32>} : memref<1x1x9xf32, #tpu.memory_space<vmem>>, vector<1x1x9xf32>,
    } else {
    }
    return
  }
  func.func @transform_0(%arg0: i32, %arg1: i32) -> (i32, i32, i32) {
    %c0_i32 = arith.constant 0 : i32
    %c0_i32_0 = arith.constant 0 : i32
    return %arg0, %c0_i32, %arg1 : i32, i32, i32
  }
  func.func @transform_1(%arg0: i32, %arg1: i32) -> (i32, i32) {
    %c0_i32 = arith.constant 0 : i32
    %c0_i32_0 = arith.constant 0 : i32
    %c0_i32_1 = arith.constant 0 : i32
    return %c0_i32, %c0_i32_0 : i32, i32
  }
  func.func @transform_2(%arg0: i32, %arg1: i32) -> (i32, i32) {
    %c0_i32 = arith.constant 0 : i32
    %c0_i32_0 = arith.constant 0 : i32
    %c0_i32_1 = arith.constant 0 : i32
    return %c0_i32, %c0_i32_0 : i32, i32
  }
  func.func @transform_3(%arg0: i32, %arg1: i32) -> (i32, i32) {
    %c0_i32 = arith.constant 0 : i32
    %c0_i32_0 = arith.constant 0 : i32
    %c0_i32_1 = arith.constant 0 : i32
    return %c0_i32, %c0_i32_0 : i32, i32
  }
  func.func @transform_4(%arg0: i32, %arg1: i32) -> (i32, i32) {
    %c0_i32 = arith.constant 0 : i32
    %c0_i32_0 = arith.constant 0 : i32
    %c0_i32_1 = arith.constant 0 : i32
    return %c0_i32, %c0_i32_0 : i32, i32
  }
  func.func @transform_5(%arg0: i32, %arg1: i32) -> (i32, i32) {
    %c0_i32 = arith.constant 0 : i32
    %c0_i32_0 = arith.constant 0 : i32
    %c0_i32_1 = arith.constant 0 : i32
    return %c0_i32, %c0_i32_0 : i32, i32
  }
  func.func @transform_6(%arg0: i32, %arg1: i32) -> (i32, i32) {
    %c0_i32 = arith.constant 0 : i32
    %c0_i32_0 = arith.constant 0 : i32
    %c0_i32_1 = arith.constant 0 : i32
    return %c0_i32, %c0_i32_0 : i32, i32
  }
  func.func @transform_7(%arg0: i32, %arg1: i32) -> (i32, i32) {
    %c0_i32 = arith.constant 0 : i32
    %c0_i32_0 = arith.constant 0 : i32
    %c0_i32_1 = arith.constant 0 : i32
    return %c0_i32, %c0_i32_0 : i32, i32
  }
  func.func @transform_8(%arg0: i32, %arg1: i32) -> (i32, i32) {
    %c0_i32 = arith.constant 0 : i32
    %c0_i32_0 = arith.constant 0 : i32
    %c0_i32_1 = arith.constant 0 : i32
    return %c0_i32, %c0_i32_0 : i32, i32
  }
  func.func @transform_9(%arg0: i32, %arg1: i32) -> (i32, i32) {
    %c0_i32 = arith.constant 0 : i32
    %c0_i32_0 = arith.constant 0 : i32
    %c0_i32_1 = arith.constant 0 : i32
    return %c0_i32, %c0_i32_0 : i32, i32
  }
  func.func @transform_10(%arg0: i32, %arg1: i32) -> (i32, i32) {
    %c0_i32 = arith.constant 0 : i32
    %c0_i32_0 = arith.constant 0 : i32
    %c0_i32_1 = arith.constant 0 : i32
    return %c0_i32, %c0_i32_0 : i32, i32
  }
  func.func @transform_11(%arg0: i32, %arg1: i32) -> (i32, i32) {
    %c0_i32 = arith.constant 0 : i32
    %c0_i32_0 = arith.constant 0 : i32
    %c0_i32_1 = arith.constant 0 : i32
    return %c0_i32, %c0_i32_0 : i32, i32
  }
  func.func @transform_12(%arg0: i32, %arg1: i32) -> (i32, i32) {
    %c0_i32 = arith.constant 0 : i32
    %c0_i32_0 = arith.constant 0 : i32
    %c0_i32_1 = arith.constant 0 : i32
    return %c0_i32, %c0_i32_0 : i32, i32
  }
  func.func @transform_13(%arg0: i32, %arg1: i32) -> (i32, i32, i32) {
    %c0_i32 = arith.constant 0 : i32
    %c0_i32_0 = arith.constant 0 : i32
    %c0_i32_1 = arith.constant 0 : i32
    return %arg0, %c0_i32, %c0_i32_0 : i32, i32, i32
  }
}

</mosaic_0001>

<llo_original>
// kernel: stn3d_forward.1
$region0: #{stn3d_forward.1}
  #allocation0 [shape = 'u32[]', space=smem, size = 0x4, offset = 0x4, fixed_abs, tag = 'smem constant byte address 0x4 - core index']
  #allocation1 [shape = 'u32[144,128]{1,0:T(1,128)}', space=vmem, size = 0x12000, scoped, tag = 'internal scratch']
  #allocation2 [shape = 'f32[1,1024]{1,0:T(1,128)}', space=vmem, size = 0x1000, scoped, tag = 'scratch operand']
  %s0 = inlined_call_operand.vmem [shape: f32[2,3,1024], index: 0, kind: input, shape index: {}]
  %s1 = inlined_call_operand.vmem [shape: f32[3,64], index: 1, kind: input, shape index: {}]
  %s2 = inlined_call_operand.vmem [shape: f32[1,64], index: 2, kind: input, shape index: {}]
  %s3 = inlined_call_operand.vmem [shape: bf16[64,128], index: 3, kind: input, shape index: {}]
  %s4 = inlined_call_operand.vmem [shape: f32[1,128], index: 4, kind: input, shape index: {}]
  %s5 = inlined_call_operand.vmem [shape: bf16[128,1024], index: 5, kind: input, shape index: {}]
  %s6 = inlined_call_operand.vmem [shape: f32[1,1024], index: 6, kind: input, shape index: {}]
  %s7 = inlined_call_operand.vmem [shape: bf16[1024,512], index: 7, kind: input, shape index: {}]
  %s8 = inlined_call_operand.vmem [shape: f32[1,512], index: 8, kind: input, shape index: {}]
  %s9 = inlined_call_operand.vmem [shape: bf16[512,256], index: 9, kind: input, shape index: {}]
  %s10 = inlined_call_operand.vmem [shape: f32[1,256], index: 10, kind: input, shape index: {}]
  %s11 = inlined_call_operand.vmem [shape: bf16[256,9], index: 11, kind: input, shape index: {}]
  %s12 = inlined_call_operand.vmem [shape: f32[1,9], index: 12, kind: input, shape index: {}]
  %s13 = inlined_call_operand.vmem [shape: f32[2,1,9], index: 13, kind: output, shape index: {}]
  %s14 = sld [smem:[#allocation0]]
  $region97: #{stn3d_forward.1} parent=0
    _
  %s16 = ssub.s32 1, %s14
  %s17 = scalar_select 0, %s16, %s14
  loop: start=0, step=1, limit=4
  $region2: #{stn3d_forward.1} parent=0 // loop_pre_header
    _
  $region3: #{stn3d_forward.1} parent=0 // loop_header
    %s19 = sphi 0, %s23
    %p20 = scmp.ge.s32.totalorder %s19, 4
    %s26 = sphi 0, %s38
    %s27 = sphi 0, %s34
    %s28 = sphi 0, %s26
    %s29 = sphi 0, %s27
    %s30 = sphi 0, %s28
    %s31 = sphi 0, %s29
    %s43 = sphi 0, %s45
    %s46 = sphi 0, %s43
    %s47 = sphi 0, %s46
    %s63 = sphi 0, %s47
    %s67 = sphi 0, %s67
    %s69 = sphi 0, %s67
    %s70 = sphi 0, %s69
    %s84 = sphi 0, %s70
    %s88 = sphi 0, %s88
    %s90 = sphi 0, %s88
    %s91 = sphi 0, %s90
    %s105 = sphi 0, %s91
    %s109 = sphi 0, %s109
    %s111 = sphi 0, %s109
    %s112 = sphi 0, %s111
    %s126 = sphi 0, %s112
    %s130 = sphi 0, %s130
    %s132 = sphi 0, %s130
    %s133 = sphi 0, %s132
    %s147 = sphi 0, %s133
    %s151 = sphi 0, %s151
    %s153 = sphi 0, %s151
    %s154 = sphi 0, %s153
    %s168 = sphi 0, %s154
    %s172 = sphi 0, %s172
    %s174 = sphi 0, %s172
    %s175 = sphi 0, %s174
    %s189 = sphi 0, %s175
    %s193 = sphi 0, %s193
    %s195 = sphi 0, %s193
    %s196 = sphi 0, %s195
    %s210 = sphi 0, %s196
    %s214 = sphi 0, %s214
    %s216 = sphi 0, %s214
    %s217 = sphi 0, %s216
    %s231 = sphi 0, %s217
    %s235 = sphi 0, %s235
    %s237 = sphi 0, %s235
    %s238 = sphi 0, %s237
    %s252 = sphi 0, %s238
    %s256 = sphi 0, %s256
    %s258 = sphi 0, %s256
    %s259 = sphi 0, %s258
    %s273 = sphi 0, %s259
    %s277 = sphi 0, %s277
    %s279 = sphi 0, %s277
    %s280 = sphi 0, %s279
    %s294 = sphi 0, %s280
    %s298 = sphi 0, %s298
    %s300 = sphi 0, %s298
    %s301 = sphi 0, %s300
    %s315 = sphi 0, %s301
    %s321 = sphi 0, %s323
    %s324 = sphi 0, %s321
    %s325 = sphi 0, %s324
    %s341 = sphi 0, %s325
  $region4: #{stn3d_forward.1} parent=0 // loop_header_branch
    %22 = sbr.rel (%p20) target = $region8
  $region5: #{stn3d_forward.1} parent=0 // loop_body
    %s24 = ssub.s32 %s19, 1
    %s25 = ssub.s32 %s19, 2
    %s32 = sadd.s32 1, %s27
    %p33 = scmp.ge.s32.totalorder %s32, 1
    %s34 = scalar_select %p33, 0, %s32
    %s35 = sadd.s32 1, %s26
    %s36 = scalar_select %p33, %s35, %s26
    %p37 = scmp.ge.s32.totalorder %s36, 2
    %s38 = scalar_select %p37, 0, %s36
    %s39 = ssub.s32 %s26, %s38
    %s40 = ssub.s32 %s27, %s34
    %s41 = sor.u32 %s39, %s40
    %p42 = scmp.eq.s32.totalorder %s41, 0
    %s44 = sadd.s32 %s43, 1
    %s45 = scalar_select %p42, %s43, %s44
    %p48 = pneg %p42
    %p49 = scmp.eq.s32.totalorder %s19, 1
    %p50 = por %p48, %p49
    %p51 = scmp.ne.s32.totalorder %s43, %s46
    %p52 = scmp.eq.s32.totalorder %s19, 0
    %p53 = por %p51, %p52
    %p54 = scmp.ne.s32.totalorder %s43, %s46
    %p55 = scmp.eq.s32.totalorder %s24, 1
    %p56 = por %p54, %p55
    %p57 = scmp.ne.s32.totalorder %s46, %s47
    %p58 = scmp.eq.s32.totalorder %s24, 0
    %p59 = por %p57, %p58
    %p60 = scmp.ne.s32.totalorder %s46, %s47
    %p61 = scmp.eq.s32.totalorder %s25, 1
    %p62 = por %p60, %p61
    %p64 = scmp.ne.s32.totalorder %s47, %s63
    %p65 = scmp.eq.s32.totalorder %s25, 0
    %p66 = por %p64, %p65
    %s68 = sadd.s32 %s67, 1
    %p71 = scmp.eq.s32.totalorder %s19, 1
    %p72 = scmp.ne.s32.totalorder %s67, %s69
    %p73 = scmp.eq.s32.totalorder %s19, 0
    %p74 = por %p72, %p73
    %p75 = scmp.ne.s32.totalorder %s67, %s69
    %p76 = scmp.eq.s32.totalorder %s24, 1
    %p77 = por %p75, %p76
    %p78 = scmp.ne.s32.totalorder %s69, %s70
    %p79 = scmp.eq.s32.totalorder %s24, 0
    %p80 = por %p78, %p79
    %p81 = scmp.ne.s32.totalorder %s69, %s70
    %p82 = scmp.eq.s32.totalorder %s25, 1
    %p83 = por %p81, %p82
    %p85 = scmp.ne.s32.totalorder %s70, %s84
    %p86 = scmp.eq.s32.totalorder %s25, 0
    %p87 = por %p85, %p86
    %s89 = sadd.s32 %s88, 1
    %p92 = scmp.eq.s32.totalorder %s19, 1
    %p93 = scmp.ne.s32.totalorder %s88, %s90
    %p94 = scmp.eq.s32.totalorder %s19, 0
    %p95 = por %p93, %p94
    %p96 = scmp.ne.s32.totalorder %s88, %s90
    %p97 = scmp.eq.s32.totalorder %s24, 1
    %p98 = por %p96, %p97
    %p99 = scmp.ne.s32.totalorder %s90, %s91
    %p100 = scmp.eq.s32.totalorder %s24, 0
    %p101 = por %p99, %p100
    %p102 = scmp.ne.s32.totalorder %s90, %s91
    %p103 = scmp.eq.s32.totalorder %s25, 1
    %p104 = por %p102, %p103
    %p106 = scmp.ne.s32.totalorder %s91, %s105
    %p107 = scmp.eq.s32.totalorder %s25, 0
    %p108 = por %p106, %p107
    %s110 = sadd.s32 %s109, 1
    %p113 = scmp.eq.s32.totalorder %s19, 1
    %p114 = scmp.ne.s32.totalorder %s109, %s111
    %p115 = scmp.eq.s32.totalorder %s19, 0
    %p116 = por %p114, %p115
    %p117 = scmp.ne.s32.totalorder %s109, %s111
    %p118 = scmp.eq.s32.totalorder %s24, 1
    %p119 = por %p117, %p118
    %p120 = scmp.ne.s32.totalorder %s111, %s112
    %p121 = scmp.eq.s32.totalorder %s24, 0
    %p122 = por %p120, %p121
    %p123 = scmp.ne.s32.totalorder %s111, %s112
    %p124 = scmp.eq.s32.totalorder %s25, 1
    %p125 = por %p123, %p124
    %p127 = scmp.ne.s32.totalorder %s112, %s126
    %p128 = scmp.eq.s32.totalorder %s25, 0
    %p129 = por %p127, %p128
    %s131 = sadd.s32 %s130, 1
    %p134 = scmp.eq.s32.totalorder %s19, 1
    %p135 = scmp.ne.s32.totalorder %s130, %s132
    %p136 = scmp.eq.s32.totalorder %s19, 0
    %p137 = por %p135, %p136
    %p138 = scmp.ne.s32.totalorder %s130, %s132
    %p139 = scmp.eq.s32.totalorder %s24, 1
    %p140 = por %p138, %p139
    %p141 = scmp.ne.s32.totalorder %s132, %s133
    %p142 = scmp.eq.s32.totalorder %s24, 0
    %p143 = por %p141, %p142
    %p144 = scmp.ne.s32.totalorder %s132, %s133
    %p145 = scmp.eq.s32.totalorder %s25, 1
    %p146 = por %p144, %p145
    %p148 = scmp.ne.s32.totalorder %s133, %s147
    %p149 = scmp.eq.s32.totalorder %s25, 0
    %p150 = por %p148, %p149
    %s152 = sadd.s32 %s151, 1
    %p155 = scmp.eq.s32.totalorder %s19, 1
    %p156 = scmp.ne.s32.totalorder %s151, %s153
    %p157 = scmp.eq.s32.totalorder %s19, 0
    %p158 = por %p156, %p157
    %p159 = scmp.ne.s32.totalorder %s151, %s153
    %p160 = scmp.eq.s32.totalorder %s24, 1
    %p161 = por %p159, %p160
    %p162 = scmp.ne.s32.totalorder %s153, %s154
    %p163 = scmp.eq.s32.totalorder %s24, 0
    %p164 = por %p162, %p163
    %p165 = scmp.ne.s32.totalorder %s153, %s154
    %p166 = scmp.eq.s32.totalorder %s25, 1
    %p167 = por %p165, %p166
    %p169 = scmp.ne.s32.totalorder %s154, %s168
    %p170 = scmp.eq.s32.totalorder %s25, 0
    %p171 = por %p169, %p170
    %s173 = sadd.s32 %s172, 1
    %p176 = scmp.eq.s32.totalorder %s19, 1
    %p177 = scmp.ne.s32.totalorder %s172, %s174
    %p178 = scmp.eq.s32.totalorder %s19, 0
    %p179 = por %p177, %p178
    %p180 = scmp.ne.s32.totalorder %s172, %s174
    %p181 = scmp.eq.s32.totalorder %s24, 1
    %p182 = por %p180, %p181
    %p183 = scmp.ne.s32.totalorder %s174, %s175
    %p184 = scmp.eq.s32.totalorder %s24, 0
    %p185 = por %p183, %p184
    %p186 = scmp.ne.s32.totalorder %s174, %s175
    %p187 = scmp.eq.s32.totalorder %s25, 1
    %p188 = por %p186, %p187
    %p190 = scmp.ne.s32.totalorder %s175, %s189
    %p191 = scmp.eq.s32.totalorder %s25, 0
    %p192 = por %p190, %p191
    %s194 = sadd.s32 %s193, 1
    %p197 = scmp.eq.s32.totalorder %s19, 1
    %p198 = scmp.ne.s32.totalorder %s193, %s195
    %p199 = scmp.eq.s32.totalorder %s19, 0
    %p200 = por %p198, %p199
    %p201 = scmp.ne.s32.totalorder %s193, %s195
    %p202 = scmp.eq.s32.totalorder %s24, 1
    %p203 = por %p201, %p202
    %p204 = scmp.ne.s32.totalorder %s195, %s196
    %p205 = scmp.eq.s32.totalorder %s24, 0
    %p206 = por %p204, %p205
    %p207 = scmp.ne.s32.totalorder %s195, %s196
    %p208 = scmp.eq.s32.totalorder %s25, 1
    %p209 = por %p207, %p208
    %p211 = scmp.ne.s32.totalorder %s196, %s210
    %p212 = scmp.eq.s32.totalorder %s25, 0
    %p213 = por %p211, %p212
    %s215 = sadd.s32 %s214, 1
    %p218 = scmp.eq.s32.totalorder %s19, 1
    %p219 = scmp.ne.s32.totalorder %s214, %s216
    %p220 = scmp.eq.s32.totalorder %s19, 0
    %p221 = por %p219, %p220
    %p222 = scmp.ne.s32.totalorder %s214, %s216
    %p223 = scmp.eq.s32.totalorder %s24, 1
    %p224 = por %p222, %p223
    %p225 = scmp.ne.s32.totalorder %s216, %s217
    %p226 = scmp.eq.s32.totalorder %s24, 0
    %p227 = por %p225, %p226
    %p228 = scmp.ne.s32.totalorder %s216, %s217
    %p229 = scmp.eq.s32.totalorder %s25, 1
    %p230 = por %p228, %p229
    %p232 = scmp.ne.s32.totalorder %s217, %s231
    %p233 = scmp.eq.s32.totalorder %s25, 0
    %p234 = por %p232, %p233
    %s236 = sadd.s32 %s235, 1
    %p239 = scmp.eq.s32.totalorder %s19, 1
    %p240 = scmp.ne.s32.totalorder %s235, %s237
    %p241 = scmp.eq.s32.totalorder %s19, 0
    %p242 = por %p240, %p241
    %p243 = scmp.ne.s32.totalorder %s235, %s237
    %p244 = scmp.eq.s32.totalorder %s24, 1
    %p245 = por %p243, %p244
    %p246 = scmp.ne.s32.totalorder %s237, %s238
    %p247 = scmp.eq.s32.totalorder %s24, 0
    %p248 = por %p246, %p247
    %p249 = scmp.ne.s32.totalorder %s237, %s238
    %p250 = scmp.eq.s32.totalorder %s25, 1
    %p251 = por %p249, %p250
    %p253 = scmp.ne.s32.totalorder %s238, %s252
    %p254 = scmp.eq.s32.totalorder %s25, 0
    %p255 = por %p253, %p254
    %s257 = sadd.s32 %s256, 1
    %p260 = scmp.eq.s32.totalorder %s19, 1
    %p261 = scmp.ne.s32.totalorder %s256, %s258
    %p262 = scmp.eq.s32.totalorder %s19, 0
    %p263 = por %p261, %p262
    %p264 = scmp.ne.s32.totalorder %s256, %s258
    %p265 = scmp.eq.s32.totalorder %s24, 1
    %p266 = por %p264, %p265
    %p267 = scmp.ne.s32.totalorder %s258, %s259
    %p268 = scmp.eq.s32.totalorder %s24, 0
    %p269 = por %p267, %p268
    %p270 = scmp.ne.s32.totalorder %s258, %s259
    %p271 = scmp.eq.s32.totalorder %s25, 1
    %p272 = por %p270, %p271
    %p274 = scmp.ne.s32.totalorder %s259, %s273
    %p275 = scmp.eq.s32.totalorder %s25, 0
    %p276 = por %p274, %p275
    %s278 = sadd.s32 %s277, 1
    %p281 = scmp.eq.s32.totalorder %s19, 1
    %p282 = scmp.ne.s32.totalorder %s277, %s279
    %p283 = scmp.eq.s32.totalorder %s19, 0
    %p284 = por %p282, %p283
    %p285 = scmp.ne.s32.totalorder %s277, %s279
    %p286 = scmp.eq.s32.totalorder %s24, 1
    %p287 = por %p285, %p286
    %p288 = scmp.ne.s32.totalorder %s279, %s280
    %p289 = scmp.eq.s32.totalorder %s24, 0
    %p290 = por %p288, %p289
    %p291 = scmp.ne.s32.totalorder %s279, %s280
    %p292 = scmp.eq.s32.totalorder %s25, 1
    %p293 = por %p291, %p292
    %p295 = scmp.ne.s32.totalorder %s280, %s294
    %p296 = scmp.eq.s32.totalorder %s25, 0
    %p297 = por %p295, %p296
    %s299 = sadd.s32 %s298, 1
    %p302 = scmp.eq.s32.totalorder %s19, 1
    %p303 = scmp.ne.s32.totalorder %s298, %s300
    %p304 = scmp.eq.s32.totalorder %s19, 0
    %p305 = por %p303, %p304
    %p306 = scmp.ne.s32.totalorder %s298, %s300
    %p307 = scmp.eq.s32.totalorder %s24, 1
    %p308 = por %p306, %p307
    %p309 = scmp.ne.s32.totalorder %s300, %s301
    %p310 = scmp.eq.s32.totalorder %s24, 0
    %p311 = por %p309, %p310
    %p312 = scmp.ne.s32.totalorder %s300, %s301
    %p313 = scmp.eq.s32.totalorder %s25, 1
    %p314 = por %p312, %p313
    %p316 = scmp.ne.s32.totalorder %s301, %s315
    %p317 = scmp.eq.s32.totalorder %s25, 0
    %p318 = por %p316, %p317
    %s319 = ssub.s32 %s26, %s38
    %p320 = scmp.eq.s32.totalorder %s319, 0
    %s322 = sadd.s32 %s321, 1
    %s323 = scalar_select %p320, %s321, %s322
    %p326 = pneg %p320
    %p327 = scmp.eq.s32.totalorder %s19, 1
    %p328 = por %p326, %p327
    %p329 = scmp.ne.s32.totalorder %s321, %s324
    %p330 = scmp.eq.s32.totalorder %s19, 0
    %p331 = por %p329, %p330
    %p332 = scmp.ne.s32.totalorder %s321, %s324
    %p333 = scmp.eq.s32.totalorder %s24, 1
    %p334 = por %p332, %p333
    %p335 = scmp.ne.s32.totalorder %s324, %s325
    %p336 = scmp.eq.s32.totalorder %s24, 0
    %p337 = por %p335, %p336
    %p338 = scmp.ne.s32.totalorder %s324, %s325
    %p339 = scmp.eq.s32.totalorder %s25, 1
    %p340 = por %p338, %p339
    %p342 = scmp.ne.s32.totalorder %s325, %s341
    %p343 = scmp.eq.s32.totalorder %s25, 0
    %p344 = por %p342, %p343
    %p345 = scmp.le.s32.totalorder 1, %s19
    %p346 = scmp.lt.s32.totalorder %s19, 3
    %p347 = pnand %p345, %p346
    %p348 = pneg %p347
    // Predicated region
    $region9: #{stn3d_forward.1} parent=5 // pred_check
      _
    $region10: #{stn3d_forward.1} parent=5 // pred_check_branch
      %350 = sbr.rel (%p347) target = $region12
    $region11: #{stn3d_forward.1} parent=5 // pred_region
      %s351 = ssub.s32 %s19, 1
      // Predicated region
      $region13: #{stn3d_forward.1} parent=11 // pred_check
        %p352 = pneg %p80
      $region14: #{stn3d_forward.1} parent=11 // pred_check_branch
        %354 = sbr.rel (%p352) target = $region16
      $region15: #{stn3d_forward.1} parent=11 // pred_region
        _
      $region16: #{stn3d_forward.1} parent=11 // pred_fallthru
        _
      // Predicated region
      $region17: #{stn3d_forward.1} parent=11 // pred_check
        %p355 = pneg %p101
      $region18: #{stn3d_forward.1} parent=11 // pred_check_branch
        %357 = sbr.rel (%p355) target = $region20
      $region19: #{stn3d_forward.1} parent=11 // pred_region
        _
      $region20: #{stn3d_forward.1} parent=11 // pred_fallthru
        _
      // Predicated region
      $region21: #{stn3d_forward.1} parent=11 // pred_check
        %p358 = pneg %p122
      $region22: #{stn3d_forward.1} parent=11 // pred_check_branch
        %360 = sbr.rel (%p358) target = $region24
      $region23: #{stn3d_forward.1} parent=11 // pred_region
        _
      $region24: #{stn3d_forward.1} parent=11 // pred_fallthru
        _
      // Predicated region
      $region25: #{stn3d_forward.1} parent=11 // pred_check
        %p361 = pneg %p143
      $region26: #{stn3d_forward.1} parent=11 // pred_check_branch
        %363 = sbr.rel (%p361) target = $region28
      $region27: #{stn3d_forward.1} parent=11 // pred_region
        _
      $region28: #{stn3d_forward.1} parent=11 // pred_fallthru
        _
      // Predicated region
      $region29: #{stn3d_forward.1} parent=11 // pred_check
        %p364 = pneg %p164
      $region30: #{stn3d_forward.1} parent=11 // pred_check_branch
        %366 = sbr.rel (%p364) target = $region32
      $region31: #{stn3d_forward.1} parent=11 // pred_region
        _
      $region32: #{stn3d_forward.1} parent=11 // pred_fallthru
        _
      // Predicated region
      $region33: #{stn3d_forward.1} parent=11 // pred_check
        %p367 = pneg %p185
      $region34: #{stn3d_forward.1} parent=11 // pred_check_branch
        %369 = sbr.rel (%p367) target = $region36
      $region35: #{stn3d_forward.1} parent=11 // pred_region
        _
      $region36: #{stn3d_forward.1} parent=11 // pred_fallthru
        _
      // Predicated region
      $region37: #{stn3d_forward.1} parent=11 // pred_check
        %p370 = pneg %p206
      $region38: #{stn3d_forward.1} parent=11 // pred_check_branch
        %372 = sbr.rel (%p370) target = $region40
      $region39: #{stn3d_forward.1} parent=11 // pred_region
        _
      $region40: #{stn3d_forward.1} parent=11 // pred_fallthru
        _
      // Predicated region
      $region41: #{stn3d_forward.1} parent=11 // pred_check
        %p373 = pneg %p227
      $region42: #{stn3d_forward.1} parent=11 // pred_check_branch
        %375 = sbr.rel (%p373) target = $region44
      $region43: #{stn3d_forward.1} parent=11 // pred_region
        _
      $region44: #{stn3d_forward.1} parent=11 // pred_fallthru
        _
      // Predicated region
      $region45: #{stn3d_forward.1} parent=11 // pred_check
        %p376 = pneg %p248
      $region46: #{stn3d_forward.1} parent=11 // pred_check_branch
        %378 = sbr.rel (%p376) target = $region48
      $region47: #{stn3d_forward.1} parent=11 // pred_region
        _
      $region48: #{stn3d_forward.1} parent=11 // pred_fallthru
        _
      // Predicated region
      $region49: #{stn3d_forward.1} parent=11 // pred_check
        %p379 = pneg %p269
      $region50: #{stn3d_forward.1} parent=11 // pred_check_branch
        %381 = sbr.rel (%p379) target = $region52
      $region51: #{stn3d_forward.1} parent=11 // pred_region
        _
      $region52: #{stn3d_forward.1} parent=11 // pred_fallthru
        _
      // Predicated region
      $region53: #{stn3d_forward.1} parent=11 // pred_check
        %p382 = pneg %p290
      $region54: #{stn3d_forward.1} parent=11 // pred_check_branch
        %384 = sbr.rel (%p382) target = $region56
      $region55: #{stn3d_forward.1} parent=11 // pred_region
        _
      $region56: #{stn3d_forward.1} parent=11 // pred_fallthru
        _
      // Predicated region
      $region57: #{stn3d_forward.1} parent=11 // pred_check
        %p385 = pneg %p311
      $region58: #{stn3d_forward.1} parent=11 // pred_check_branch
        %387 = sbr.rel (%p385) target = $region60
      $region59: #{stn3d_forward.1} parent=11 // pred_region
        _
      $region60: #{stn3d_forward.1} parent=11 // pred_fallthru
        _
    $region12: #{stn3d_forward.1} parent=5 // pred_fallthru
      _
    %p388 = scmp.lt.s32.totalorder %s19, 2
    // Predicated region
    $region61: #{stn3d_forward.1} parent=5 // pred_check
      %p389 = pneg %p388
    $region62: #{stn3d_forward.1} parent=5 // pred_check_branch
      %391 = sbr.rel (%p389) target = $region64
    $region63: #{stn3d_forward.1} parent=5 // pred_region
      // Predicated region
      $region65: #{stn3d_forward.1} parent=63 // pred_check
        %p392 = pneg %p53
      $region66: #{stn3d_forward.1} parent=63 // pred_check_branch
        %394 = sbr.rel (%p392) target = $region68
      $region67: #{stn3d_forward.1} parent=63 // pred_region
        %s395 = smul.u32 8, %s27
        %p396 = scmp.lt.s32.totalorder %s26, 1
        %s397 = scalar_select %p396, %s26, 1
        %p398 = scmp.lt.s32.totalorder %s395, 7
        %s399 = scalar_select %p398, %s395, 7
        %s400 = smul.addr %s397, 8
        %s401 = sadd.s32 %s399, %s400
        %s402 = smul.addr %s401, 4
        %s403 = scalar_lea.vmem %s0, %s402
        %s404 = smul.u32 8, %s27
      $region68: #{stn3d_forward.1} parent=63 // pred_fallthru
        _
    $region64: #{stn3d_forward.1} parent=5 // pred_fallthru
      _
    %p405 = scmp.le.s32.totalorder 1, %s19
    %p406 = scmp.lt.s32.totalorder %s19, 3
    %p407 = pnand %p405, %p406
    %p408 = pneg %p407
    // Predicated region
    $region69: #{stn3d_forward.1} parent=5 // pred_check
      _
    $region70: #{stn3d_forward.1} parent=5 // pred_check_branch
      %410 = sbr.rel (%p407) target = $region72
    $region71: #{stn3d_forward.1} parent=5 // pred_region
      %s411 = ssub.s32 %s19, 1
      %s412 = smul.u32 8, %s29
      %p413 = scmp.lt.s32.totalorder %s28, 1
      %s414 = scalar_select %p413, %s28, 1
      %p415 = scmp.lt.s32.totalorder %s412, 7
      %s416 = scalar_select %p415, %s412, 7
      %s417 = smul.addr %s414, 8
      %s418 = sadd.s32 %s416, %s417
      %s419 = smul.addr %s418, 4
      %s420 = scalar_lea.vmem %s0, %s419
      %p421 = pneg %p59
      %p422 = pneg %p56
      %p423 = pneg %p80
      %p424 = pneg %p77
      %p425 = pneg %p101
      %p426 = pneg %p98
      %p427 = pneg %p122
      %p428 = pneg %p119
      %p429 = pneg %p143
      %p430 = pneg %p140
      %p431 = pneg %p164
      %p432 = pneg %p161
      %p433 = pneg %p185
      %p434 = pneg %p182
      %p435 = pneg %p206
      %p436 = pneg %p203
      %p437 = pneg %p227
      %p438 = pneg %p224
      %p439 = pneg %p248
      %p440 = pneg %p245
      %p441 = pneg %p269
      %p442 = pneg %p266
      %p443 = pneg %p290
      %p444 = pneg %p287
      %p445 = pneg %p311
      %p446 = pneg %p308
      %p447 = pneg %p337
      %p448 = pneg %p334
      %p449 = scmp.lt.s32.totalorder %s28, 1
      %s450 = scalar_select %p449, %s28, 1
      %s451 = scalar_lea.vmem %s13, %s450
      %s452 = smul.u32 8, %s29
      %p453 = scmp.lt.s32.totalorder %s28, 1
      %s454 = scalar_select %p453, %s28, 1
      %p455 = scmp.lt.s32.totalorder %s452, 7
      %s456 = scalar_select %p455, %s452, 7
      %s457 = smul.addr %s454, 8
      %s458 = sadd.s32 %s456, %s457
      %s459 = smul.addr %s458, 4
      %s460 = scalar_lea.vmem %s0, %s459
      %s461 = smul.u32 8, %s29
      %p462 = scmp.lt.s32.totalorder %s28, 1
      %s463 = scalar_select %p462, %s28, 1
      %s464 = scalar_lea.vmem %s13, %s463
      %v466 = vld [vmem:[%s460] sm:$0x77]
      %v467 = vld [vmem:[%s460 + $0x8] sm:$0x77]
      %v468 = vld [vmem:[%s460 + $0x10] sm:$0x77]
      %v469 = vld [vmem:[%s460 + $0x18] sm:$0x77]
      %v474 = vcombine.high %v466, %v466
      %v475 = vcombine.high %v467, %v467
      %v476 = vcombine.high %v468, %v468
      %v477 = vcombine.high %v469, %v469
      %482 = vxpose.xlu0.b32.start [1/16] %v466, 128
      %483 = vxpose.xlu0.b32.cont [2/16] 0.0, 128
      %484 = vxpose.xlu0.b32.cont [3/16] 0.0, 128
      %485 = vxpose.xlu0.b32.cont [4/16] 0.0, 128
      %486 = vxpose.xlu0.b32.cont [5/16] 0.0, 128
      %487 = vxpose.xlu0.b32.cont [6/16] 0.0, 128
      %488 = vxpose.xlu0.b32.cont [7/16] 0.0, 128
      %489 = vxpose.xlu0.b32.cont [8/16] 0.0, 128
      %490 = vxpose.xlu0.b32.cont [9/16] 0.0, 128
      %491 = vxpose.xlu0.b32.cont [10/16] 0.0, 128
      %492 = vxpose.xlu0.b32.cont [11/16] 0.0, 128
      %493 = vxpose.xlu0.b32.cont [12/16] 0.0, 128
      %494 = vxpose.xlu0.b32.cont [13/16] 0.0, 128
      %495 = vxpose.xlu0.b32.cont [14/16] 0.0, 128
      %496 = vxpose.xlu0.b32.cont [15/16] 0.0, 128
      %497 = vxpose.xlu0.b32.end [16/16] 0.0, 128
      %v498 = vpop.trf.xlu0
      %v499 = vpop.trf.xlu0
      %v500 = vpop.trf.xlu0
      %v501 = vpop.trf.xlu0
      %v502 = vpop.trf.xlu0
      %v503 = vpop.trf.xlu0
      %v504 = vpop.trf.xlu0
      %v505 = vpop.trf.xlu0
      %v506 = vpop.trf.xlu0
      %v507 = vpop.trf.xlu0
      %v508 = vpop.trf.xlu0
      %v509 = vpop.trf.xlu0
      %v510 = vpop.trf.xlu0
      %v511 = vpop.trf.xlu0
      %v512 = vpop.trf.xlu0
      %v513 = vpop.trf.xlu0
      %514 = vxpose.xlu0.b32.start [1/16] %v474, 128
      %515 = vxpose.xlu0.b32.cont [2/16] 0.0, 128
      %516 = vxpose.xlu0.b32.cont [3/16] 0.0, 128
      %517 = vxpose.xlu0.b32.cont [4/16] 0.0, 128
      %518 = vxpose.xlu0.b32.cont [5/16] 0.0, 128
      %519 = vxpose.xlu0.b32.cont [6/16] 0.0, 128
      %520 = vxpose.xlu0.b32.cont [7/16] 0.0, 128
      %521 = vxpose.xlu0.b32.cont [8/16] 0.0, 128
      %522 = vxpose.xlu0.b32.cont [9/16] 0.0, 128
      %523 = vxpose.xlu0.b32.cont [10/16] 0.0, 128
      %524 = vxpose.xlu0.b32.cont [11/16] 0.0, 128
      %525 = vxpose.xlu0.b32.cont [12/16] 0.0, 128
      %526 = vxpose.xlu0.b32.cont [13/16] 0.0, 128
      %527 = vxpose.xlu0.b32.cont [14/16] 0.0, 128
      %528 = vxpose.xlu0.b32.cont [15/16] 0.0, 128
      %529 = vxpose.xlu0.b32.end [16/16] 0.0, 128
      %v530 = vpop.trf.xlu0
      %v531 = vpop.trf.xlu0
      %v532 = vpop.trf.xlu0
      %v533 = vpop.trf.xlu0
      %v534 = vpop.trf.xlu0
      %v535 = vpop.trf.xlu0
      %v536 = vpop.trf.xlu0
      %v537 = vpop.trf.xlu0
      %v538 = vpop.trf.xlu0
      %v539 = vpop.trf.xlu0
      %v540 = vpop.trf.xlu0
      %v541 = vpop.trf.xlu0
      %v542 = vpop.trf.xlu0
      %v543 = vpop.trf.xlu0
      %v544 = vpop.trf.xlu0
      %v545 = vpop.trf.xlu0
      %546 = vxpose.xlu0.b32.start [1/16] %v467, 128
      %547 = vxpose.xlu0.b32.cont [2/16] 0.0, 128
      %548 = vxpose.xlu0.b32.cont [3/16] 0.0, 128
      %549 = vxpose.xlu0.b32.cont [4/16] 0.0, 128
      %550 = vxpose.xlu0.b32.cont [5/16] 0.0, 128
      %551 = vxpose.xlu0.b32.cont [6/16] 0.0, 128
      %552 = vxpose.xlu0.b32.cont [7/16] 0.0, 128
      %553 = vxpose.xlu0.b32.cont [8/16] 0.0, 128
      %554 = vxpose.xlu0.b32.cont [9/16] 0.0, 128
      %555 = vxpose.xlu0.b32.cont [10/16] 0.0, 128
      %556 = vxpose.xlu0.b32.cont [11/16] 0.0, 128
      %557 = vxpose.xlu0.b32.cont [12/16] 0.0, 128
      %558 = vxpose.xlu0.b32.cont [13/16] 0.0, 128
      %559 = vxpose.xlu0.b32.cont [14/16] 0.0, 128
      %560 = vxpose.xlu0.b32.cont [15/16] 0.0, 128
      %561 = vxpose.xlu0.b32.end [16/16] 0.0, 128
      %v562 = vpop.trf.xlu0
      %v563 = vpop.trf.xlu0
      %v564 = vpop.trf.xlu0
      %v565 = vpop.trf.xlu0
      %v566 = vpop.trf.xlu0
      %v567 = vpop.trf.xlu0
      %v568 = vpop.trf.xlu0
      %v569 = vpop.trf.xlu0
      %v570 = vpop.trf.xlu0
      %v571 = vpop.trf.xlu0
      %v572 = vpop.trf.xlu0
      %v573 = vpop.trf.xlu0
      %v574 = vpop.trf.xlu0
      %v575 = vpop.trf.xlu0
      %v576 = vpop.trf.xlu0
      %v577 = vpop.trf.xlu0
      %578 = vxpose.xlu0.b32.start [1/16] %v475, 128
      %579 = vxpose.xlu0.b32.cont [2/16] 0.0, 128
      %580 = vxpose.xlu0.b32.cont [3/16] 0.0, 128
      %581 = vxpose.xlu0.b32.cont [4/16] 0.0, 128
      %582 = vxpose.xlu0.b32.cont [5/16] 0.0, 128
      %583 = vxpose.xlu0.b32.cont [6/16] 0.0, 128
      %584 = vxpose.xlu0.b32.cont [7/16] 0.0, 128
      %585 = vxpose.xlu0.b32.cont [8/16] 0.0, 128
      %586 = vxpose.xlu0.b32.cont [9/16] 0.0, 128
      %587 = vxpose.xlu0.b32.cont [10/16] 0.0, 128
      %588 = vxpose.xlu0.b32.cont [11/16] 0.0, 128
      %589 = vxpose.xlu0.b32.cont [12/16] 0.0, 128
      %590 = vxpose.xlu0.b32.cont [13/16] 0.0, 128
      %591 = vxpose.xlu0.b32.cont [14/16] 0.0, 128
      %592 = vxpose.xlu0.b32.cont [15/16] 0.0, 128
      %593 = vxpose.xlu0.b32.end [16/16] 0.0, 128
      %v594 = vpop.trf.xlu0
      %v595 = vpop.trf.xlu0
      %v596 = vpop.trf.xlu0
      %v597 = vpop.trf.xlu0
      %v598 = vpop.trf.xlu0
      %v599 = vpop.trf.xlu0
      %v600 = vpop.trf.xlu0
      %v601 = vpop.trf.xlu0
      %v602 = vpop.trf.xlu0
      %v603 = vpop.trf.xlu0
      %v604 = vpop.trf.xlu0
      %v605 = vpop.trf.xlu0
      %v606 = vpop.trf.xlu0
      %v607 = vpop.trf.xlu0
      %v608 = vpop.trf.xlu0
      %v609 = vpop.trf.xlu0
      %610 = vxpose.xlu0.b32.start [1/16] %v468, 128
      %611 = vxpose.xlu0.b32.cont [2/16] 0.0, 128
      %612 = vxpose.xlu0.b32.cont [3/16] 0.0, 128
      %613 = vxpose.xlu0.b32.cont [4/16] 0.0, 128
      %614 = vxpose.xlu0.b32.cont [5/16] 0.0, 128
      %615 = vxpose.xlu0.b32.cont [6/16] 0.0, 128
      %616 = vxpose.xlu0.b32.cont [7/16] 0.0, 128
      %617 = vxpose.xlu0.b32.cont [8/16] 0.0, 128
      %618 = vxpose.xlu0.b32.cont [9/16] 0.0, 128
      %619 = vxpose.xlu0.b32.cont [10/16] 0.0, 128
      %620 = vxpose.xlu0.b32.cont [11/16] 0.0, 128
      %621 = vxpose.xlu0.b32.cont [12/16] 0.0, 128
      %622 = vxpose.xlu0.b32.cont [13/16] 0.0, 128
      %623 = vxpose.xlu0.b32.cont [14/16] 0.0, 128
      %624 = vxpose.xlu0.b32.cont [15/16] 0.0, 128
      %625 = vxpose.xlu0.b32.end [16/16] 0.0, 128
      %v626 = vpop.trf.xlu0
      %v627 = vpop.trf.xlu0
      %v628 = vpop.trf.xlu0
      %v629 = vpop.trf.xlu0
      %v630 = vpop.trf.xlu0
      %v631 = vpop.trf.xlu0
      %v632 = vpop.trf.xlu0
      %v633 = vpop.trf.xlu0
      %v634 = vpop.trf.xlu0
      %v635 = vpop.trf.xlu0
      %v636 = vpop.trf.xlu0
      %v637 = vpop.trf.xlu0
      %v638 = vpop.trf.xlu0
      %v639 = vpop.trf.xlu0
      %v640 = vpop.trf.xlu0
      %v641 = vpop.trf.xlu0
      %642 = vxpose.xlu0.b32.start [1/16] %v476, 128
      %643 = vxpose.xlu0.b32.cont [2/16] 0.0, 128
      %644 = vxpose.xlu0.b32.cont [3/16] 0.0, 128
      %645 = vxpose.xlu0.b32.cont [4/16] 0.0, 128
      %646 = vxpose.xlu0.b32.cont [5/16] 0.0, 128
      %647 = vxpose.xlu0.b32.cont [6/16] 0.0, 128
      %648 = vxpose.xlu0.b32.cont [7/16] 0.0, 128
      %649 = vxpose.xlu0.b32.cont [8/16] 0.0, 128
      %650 = vxpose.xlu0.b32.cont [9/16] 0.0, 128
      %651 = vxpose.xlu0.b32.cont [10/16] 0.0, 128
      %652 = vxpose.xlu0.b32.cont [11/16] 0.0, 128
      %653 = vxpose.xlu0.b32.cont [12/16] 0.0, 128
      %654 = vxpose.xlu0.b32.cont [13/16] 0.0, 128
      %655 = vxpose.xlu0.b32.cont [14/16] 0.0, 128
      %656 = vxpose.xlu0.b32.cont [15/16] 0.0, 128
      %657 = vxpose.xlu0.b32.end [16/16] 0.0, 128
      %v658 = vpop.trf.xlu0
      %v659 = vpop.trf.xlu0
      %v660 = vpop.trf.xlu0
      %v661 = vpop.trf.xlu0
      %v662 = vpop.trf.xlu0
      %v663 = vpop.trf.xlu0
      %v664 = vpop.trf.xlu0
      %v665 = vpop.trf.xlu0
      %v666 = vpop.trf.xlu0
      %v667 = vpop.trf.xlu0
      %v668 = vpop.trf.xlu0
      %v669 = vpop.trf.xlu0
      %v670 = vpop.trf.xlu0
      %v671 = vpop.trf.xlu0
      %v672 = vpop.trf.xlu0
      %v673 = vpop.trf.xlu0
      %674 = vxpose.xlu0.b32.start [1/16] %v469, 128
      %675 = vxpose.xlu0.b32.cont [2/16] 0.0, 128
      %676 = vxpose.xlu0.b32.cont [3/16] 0.0, 128
      %677 = vxpose.xlu0.b32.cont [4/16] 0.0, 128
      %678 = vxpose.xlu0.b32.cont [5/16] 0.0, 128
      %679 = vxpose.xlu0.b32.cont [6/16] 0.0, 128
      %680 = vxpose.xlu0.b32.cont [7/16] 0.0, 128
      %681 = vxpose.xlu0.b32.cont [8/16] 0.0, 128
      %682 = vxpose.xlu0.b32.cont [9/16] 0.0, 128
      %683 = vxpose.xlu0.b32.cont [10/16] 0.0, 128
      %684 = vxpose.xlu0.b32.cont [11/16] 0.0, 128
      %685 = vxpose.xlu0.b32.cont [12/16] 0.0, 128
      %686 = vxpose.xlu0.b32.cont [13/16] 0.0, 128
      %687 = vxpose.xlu0.b32.cont [14/16] 0.0, 128
      %688 = vxpose.xlu0.b32.cont [15/16] 0.0, 128
      %689 = vxpose.xlu0.b32.end [16/16] 0.0, 128
      %v690 = vpop.trf.xlu0
      %v691 = vpop.trf.xlu0
      %v692 = vpop.trf.xlu0
      %v693 = vpop.trf.xlu0
      %v694 = vpop.trf.xlu0
      %v695 = vpop.trf.xlu0
      %v696 = vpop.trf.xlu0
      %v697 = vpop.trf.xlu0
      %v698 = vpop.trf.xlu0
      %v699 = vpop.trf.xlu0
      %v700 = vpop.trf.xlu0
      %v701 = vpop.trf.xlu0
      %v702 = vpop.trf.xlu0
      %v703 = vpop.trf.xlu0
      %v704 = vpop.trf.xlu0
      %v705 = vpop.trf.xlu0
      %706 = vxpose.xlu0.b32.start [1/16] %v477, 128
      %707 = vxpose.xlu0.b32.cont [2/16] 0.0, 128
      %708 = vxpose.xlu0.b32.cont [3/16] 0.0, 128
      %709 = vxpose.xlu0.b32.cont [4/16] 0.0, 128
      %710 = vxpose.xlu0.b32.cont [5/16] 0.0, 128
      %711 = vxpose.xlu0.b32.cont [6/16] 0.0, 128
      %712 = vxpose.xlu0.b32.cont [7/16] 0.0, 128
      %713 = vxpose.xlu0.b32.cont [8/16] 0.0, 128
      %714 = vxpose.xlu0.b32.cont [9/16] 0.0, 128
      %715 = vxpose.xlu0.b32.cont [10/16] 0.0, 128
      %716 = vxpose.xlu0.b32.cont [11/16] 0.0, 128
      %717 = vxpose.xlu0.b32.cont [12/16] 0.0, 128
      %718 = vxpose.xlu0.b32.cont [13/16] 0.0, 128
      %719 = vxpose.xlu0.b32.cont [14/16] 0.0, 128
      %720 = vxpose.xlu0.b32.cont [15/16] 0.0, 128
      %721 = vxpose.xlu0.b32.end [16/16] 0.0, 128
      %v722 = vpop.trf.xlu0
      %v723 = vpop.trf.xlu0
      %v724 = vpop.trf.xlu0
      %v725 = vpop.trf.xlu0
      %v726 = vpop.trf.xlu0
      %v727 = vpop.trf.xlu0
      %v728 = vpop.trf.xlu0
      %v729 = vpop.trf.xlu0
      %v730 = vpop.trf.xlu0
      %v731 = vpop.trf.xlu0
      %v732 = vpop.trf.xlu0
      %v733 = vpop.trf.xlu0
      %v734 = vpop.trf.xlu0
      %v735 = vpop.trf.xlu0
      %v736 = vpop.trf.xlu0
      %v737 = vpop.trf.xlu0
      %v738 = vld [vmem:[%s1] sm:$0x7]
      %v739 = vld [vmem:[%s2] sm:$0x1]
      %v741 = vlaneseq
      %v742 = vshrl.u32 %v741, 7
      %v743 = vsub.s32 0, %v742
      %v744 = vrot.slane %v739, %v743
      %vm746 = vcmask 23552
      %v748 = vsel %vm746, %v498, 0
      %v751 = vsel %vm746, %v499, 0
      %v754 = vsel %vm746, %v500, 0
      %v757 = vsel %vm746, %v501, 0
      %v760 = vsel %vm746, %v502, 0
      %v763 = vsel %vm746, %v503, 0
      %v766 = vsel %vm746, %v504, 0
      %v769 = vsel %vm746, %v505, 0
      %v772 = vsel %vm746, %v506, 0
      %v775 = vsel %vm746, %v507, 0
      %v778 = vsel %vm746, %v508, 0
      %v781 = vsel %vm746, %v509, 0
      %v784 = vsel %vm746, %v510, 0
      %v787 = vsel %vm746, %v511, 0
      %v790 = vsel %vm746, %v512, 0
      %v793 = vsel %vm746, %v513, 0
      %v796 = vsel %vm746, %v530, 0
      %v799 = vsel %vm746, %v531, 0
      %v802 = vsel %vm746, %v532, 0
      %v805 = vsel %vm746, %v533, 0
      %v808 = vsel %vm746, %v534, 0
      %v811 = vsel %vm746, %v535, 0
      %v814 = vsel %vm746, %v536, 0
      %v817 = vsel %vm746, %v537, 0
      %v820 = vsel %vm746, %v538, 0
      %v823 = vsel %vm746, %v539, 0
      %v826 = vsel %vm746, %v540, 0
      %v829 = vsel %vm746, %v541, 0
      %v832 = vsel %vm746, %v542, 0
      %v835 = vsel %vm746, %v543, 0
      %v838 = vsel %vm746, %v544, 0
      %v841 = vsel %vm746, %v545, 0
      %v844 = vsel %vm746, %v562, 0
      %v847 = vsel %vm746, %v563, 0
      %v850 = vsel %vm746, %v564, 0
      %v853 = vsel %vm746, %v565, 0
      %v856 = vsel %vm746, %v566, 0
      %v859 = vsel %vm746, %v567, 0
      %v862 = vsel %vm746, %v568, 0
      %v865 = vsel %vm746, %v569, 0
      %v868 = vsel %vm746, %v570, 0
      %v871 = vsel %vm746, %v571, 0
      %v874 = vsel %vm746, %v572, 0
      %v877 = vsel %vm746, %v573, 0
      %v880 = vsel %vm746, %v574, 0
      %v883 = vsel %vm746, %v575, 0
      %v886 = vsel %vm746, %v576, 0
      %v889 = vsel %vm746, %v577, 0
      %v892 = vsel %vm746, %v594, 0
      %v895 = vsel %vm746, %v595, 0
      %v898 = vsel %vm746, %v596, 0
      %v901 = vsel %vm746, %v597, 0
      %v904 = vsel %vm746, %v598, 0
      %v907 = vsel %vm746, %v599, 0
      %v910 = vsel %vm746, %v600, 0
      %v913 = vsel %vm746, %v601, 0
      %v916 = vsel %vm746, %v602, 0
      %v919 = vsel %vm746, %v603, 0
      %v922 = vsel %vm746, %v604, 0
      %v925 = vsel %vm746, %v605, 0
      %v928 = vsel %vm746, %v606, 0
      %v931 = vsel %vm746, %v607, 0
      %v934 = vsel %vm746, %v608, 0
      %v937 = vsel %vm746, %v609, 0
      %v940 = vsel %vm746, %v626, 0
      %v943 = vsel %vm746, %v627, 0
      %v946 = vsel %vm746, %v628, 0
      %v949 = vsel %vm746, %v629, 0
      %v952 = vsel %vm746, %v630, 0
      %v955 = vsel %vm746, %v631, 0
      %v958 = vsel %vm746, %v632, 0
      %v961 = vsel %vm746, %v633, 0
      %v964 = vsel %vm746, %v634, 0
      %v967 = vsel %vm746, %v635, 0
      %v970 = vsel %vm746, %v636, 0
      %v973 = vsel %vm746, %v637, 0
      %v976 = vsel %vm746, %v638, 0
      %v979 = vsel %vm746, %v639, 0
      %v982 = vsel %vm746, %v640, 0
      %v985 = vsel %vm746, %v641, 0
      %v988 = vsel %vm746, %v658, 0
      %v991 = vsel %vm746, %v659, 0
      %v994 = vsel %vm746, %v660, 0
      %v997 = vsel %vm746, %v661, 0
      %v1000 = vsel %vm746, %v662, 0
      %v1003 = vsel %vm746, %v663, 0
      %v1006 = vsel %vm746, %v664, 0
      %v1009 = vsel %vm746, %v665, 0
      %v1012 = vsel %vm746, %v666, 0
      %v1015 = vsel %vm746, %v667, 0
      %v1018 = vsel %vm746, %v668, 0
      %v1021 = vsel %vm746, %v669, 0
      %v1024 = vsel %vm746, %v670, 0
      %v1027 = vsel %vm746, %v671, 0
      %v1030 = vsel %vm746, %v672, 0
      %v1033 = vsel %vm746, %v673, 0
      %v1036 = vsel %vm746, %v690, 0
      %v1039 = vsel %vm746, %v691, 0
      %v1042 = vsel %vm746, %v692, 0
      %v1045 = vsel %vm746, %v693, 0
      %v1048 = vsel %vm746, %v694, 0
      %v1051 = vsel %vm746, %v695, 0
      %v1054 = vsel %vm746, %v696, 0
      %v1057 = vsel %vm746, %v697, 0
      %v1060 = vsel %vm746, %v698, 0
      %v1063 = vsel %vm746, %v699, 0
      %v1066 = vsel %vm746, %v700, 0
      %v1069 = vsel %vm746, %v701, 0
      %v1072 = vsel %vm746, %v702, 0
      %v1075 = vsel %vm746, %v703, 0
      %v1078 = vsel %vm746, %v704, 0
      %v1081 = vsel %vm746, %v705, 0
      %v1084 = vsel %vm746, %v722, 0
      %v1087 = vsel %vm746, %v723, 0
      %v1090 = vsel %vm746, %v724, 0
      %v1093 = vsel %vm746, %v725, 0
      %v1096 = vsel %vm746, %v726, 0
      %v1099 = vsel %vm746, %v727, 0
      %v1102 = vsel %vm746, %v728, 0
      %v1105 = vsel %vm746, %v729, 0
      %v1108 = vsel %vm746, %v730, 0
      %v1111 = vsel %vm746, %v731, 0
      %v1114 = vsel %vm746, %v732, 0
      %v1117 = vsel %vm746, %v733, 0
      %v1120 = vsel %vm746, %v734, 0
      %v1123 = vsel %vm746, %v735, 0
      %v1126 = vsel %vm746, %v736, 0
      %v1129 = vsel %vm746, %v737, 0
      %vm1131 = vcmask 1042432
      %v1133 = vsel %vm1131, %v738, 0
      %1135 = vmatprep.subr.mxu0 0.0
      %1136 = vmatpush1.msra.mxu0 %v1133
      %1137 = vmatprep.subr.mxu0 0.0
      %1138 = vmatpush1.msra.mxu0 0.0
      %1139 = vmatprep.subr.mxu0 0.0
      %1140 = vmatpush1.msra.mxu0 0.0
      %1141 = vmatprep.subr.mxu0 0.0
      %1142 = vmatpush1.msra.mxu0 0.0
      %1143 = vmatprep.subr.mxu0 0.0
      %1144 = vmatpush1.msra.mxu0 0.0
      %1145 = vmatprep.subr.mxu0 0.0
      %1146 = vmatpush1.msra.mxu0 0.0
      %1147 = vmatprep.subr.mxu0 0.0
      %1148 = vmatpush1.msra.mxu0 0.0
      %1149 = vmatprep.subr.mxu0 0.0
      %1150 = vmatpush1.msra.mxu0 0.0
      %1151 = vmatprep.subr.mxu0 0.0
      %1152 = vmatpush1.msra.mxu0 0.0
      %1153 = vmatprep.subr.mxu0 0.0
      %1154 = vmatpush1.msra.mxu0 0.0
      %1155 = vmatprep.subr.mxu0 0.0
      %1156 = vmatpush1.msra.mxu0 0.0
      %1157 = vmatprep.subr.mxu0 0.0
      %1158 = vmatpush1.msra.mxu0 0.0
      %1159 = vmatprep.subr.mxu0 0.0
      %1160 = vmatpush1.msra.mxu0 0.0
      %1161 = vmatprep.subr.mxu0 0.0
      %1162 = vmatpush1.msra.mxu0 0.0
      %1163 = vmatprep.subr.mxu0 0.0
      %1164 = vmatpush1.msra.mxu0 0.0
      %1165 = vmatprep.subr.mxu0 0.0
      %1166 = vmatpush1.msra.mxu0 0.0
      %1167 = vmatprep.subr.mxu0 0.0
      %1168 = vmatpush1.msra.mxu0 0.0
      %1169 = vmatprep.subr.mxu0 0.0
      %1170 = vmatpush1.msra.mxu0 0.0
      %1171 = vmatprep.subr.mxu0 0.0
      %1172 = vmatpush1.msra.mxu0 0.0
      %1173 = vmatprep.subr.mxu0 0.0
      %1174 = vmatpush1.msra.mxu0 0.0
      %1175 = vmatprep.subr.mxu0 0.0
      %1176 = vmatpush1.msra.mxu0 0.0
      %1177 = vmatprep.subr.mxu0 0.0
      %1178 = vmatpush1.msra.mxu0 0.0
      %1179 = vmatprep.subr.mxu0 0.0
      %1180 = vmatpush1.msra.mxu0 0.0
      %1181 = vmatprep.subr.mxu0 0.0
      %1182 = vmatpush1.msra.mxu0 0.0
      %1183 = vmatprep.subr.mxu0 0.0
      %1184 = vmatpush1.msra.mxu0 0.0
      %1185 = vmatprep.subr.mxu0 0.0
      %1186 = vmatpush1.msra.mxu0 0.0
      %1187 = vmatprep.subr.mxu0 0.0
      %1188 = vmatpush1.msra.mxu0 0.0
      %1189 = vmatprep.subr.mxu0 0.0
      %1190 = vmatpush1.msra.mxu0 0.0
      %1191 = vmatprep.subr.mxu0 0.0
      %1192 = vmatpush1.msra.mxu0 0.0
      %1193 = vmatprep.subr.mxu0 0.0
      %1194 = vmatpush1.msra.mxu0 0.0
      %1195 = vmatprep.subr.mxu0 0.0
      %1196 = vmatpush1.msra.mxu0 0.0
      %1197 = vmatprep.subr.mxu0 0.0
      %1198 = vmatpush1.msra.mxu0 0.0
      %1199 = vmatprep.mubr.f32.mxu0 0.0
      %1200 = vmatmul.mubr.f32.gmra.mrb[0].mxu0 %v748
      %v1201 = vpop.f32.mrb[0].mxu0
      %v1202 = vadd.f32 %v744, %v1201
      %v1203 = vpop.f32.mrb[0].mxu0
      %1204 = vmatprep.mubr.f32.mxu0 0.0
      %1205 = vmatmul.mubr.f32.gmra.mrb[0].mxu0 %v751
      %v1206 = vpop.f32.mrb[0].mxu0
      %v1207 = vadd.f32 %v744, %v1206
      %v1208 = vpop.f32.mrb[0].mxu0
      %1209 = vmatprep.mubr.f32.mxu0 0.0
      %1210 = vmatmul.mubr.f32.gmra.mrb[0].mxu0 %v754
      %v1211 = vpop.f32.mrb[0].mxu0
      %v1212 = vadd.f32 %v744, %v1211
      %v1213 = vpop.f32.mrb[0].mxu0
      %1214 = vmatprep.mubr.f32.mxu0 0.0
      %1215 = vmatmul.mubr.f32.gmra.mrb[0].mxu0 %v757
      %v1216 = vpop.f32.mrb[0].mxu0
      %v1217 = vadd.f32 %v744, %v1216
      %v1218 = vpop.f32.mrb[0].mxu0
      %1219 = vmatprep.mubr.f32.mxu0 0.0
      %1220 = vmatmul.mubr.f32.gmra.mrb[0].mxu0 %v760
      %v1221 = vpop.f32.mrb[0].mxu0
      %v1222 = vadd.f32 %v744, %v1221
      %v1223 = vpop.f32.mrb[0].mxu0
      %1224 = vmatprep.mubr.f32.mxu0 0.0
      %1225 = vmatmul.mubr.f32.gmra.mrb[0].mxu0 %v763
      %v1226 = vpop.f32.mrb[0].mxu0
      %v1227 = vadd.f32 %v744, %v1226
      %v1228 = vpop.f32.mrb[0].mxu0
      %1229 = vmatprep.mubr.f32.mxu0 0.0
      %1230 = vmatmul.mubr.f32.gmra.mrb[0].mxu0 %v766
      %v1231 = vpop.f32.mrb[0].mxu0
      %v1232 = vadd.f32 %v744, %v1231
      %v1233 = vpop.f32.mrb[0].mxu0
      %1234 = vmatprep.mubr.f32.mxu0 0.0
      %1235 = vmatmul.mubr.f32.gmra.mrb[0].mxu0 %v769
      %v1236 = vpop.f32.mrb[0].mxu0
      %v1237 = vadd.f32 %v744, %v1236
      %v1238 = vpop.f32.mrb[0].mxu0
      %1239 = vmatprep.mubr.f32.mxu0 0.0
      %1240 = vmatmul.mubr.f32.gmra.mrb[0].mxu0 %v772
      %v1241 = vpop.f32.mrb[0].mxu0
      %v1242 = vadd.f32 %v744, %v1241
      %v1243 = vpop.f32.mrb[0].mxu0
      %1244 = vmatprep.mubr.f32.mxu0 0.0
      %1245 = vmatmul.mubr.f32.gmra.mrb[0].mxu0 %v775
      %v1246 = vpop.f32.mrb[0].mxu0
      %v1247 = vadd.f32 %v744, %v1246
      %v1248 = vpop.f32.mrb[0].mxu0
      %1249 = vmatprep.mubr.f32.mxu0 0.0
      %1250 = vmatmul.mubr.f32.gmra.mrb[0].mxu0 %v778
      %v1251 = vpop.f32.mrb[0].mxu0
      %v1252 = vadd.f32 %v744, %v1251
      %v1253 = vpop.f32.mrb[0].mxu0
      %1254 = vmatprep.mubr.f32.mxu0 0.0
      %1255 = vmatmul.mubr.f32.gmra.mrb[0].mxu0 %v781
      %v1256 = vpop.f32.mrb[0].mxu0
      %v1257 = vadd.f32 %v744, %v1256
      %v1258 = vpop.f32.mrb[0].mxu0
      %1259 = vmatprep.mubr.f32.mxu0 0.0
      %1260 = vmatmul.mubr.f32.gmra.mrb[0].mxu0 %v784
      %v1261 = vpop.f32.mrb[0].mxu0
      %v1262 = vadd.f32 %v744, %v1261
      %v1263 = vpop.f32.mrb[0].mxu0
      %1264 = vmatprep.mubr.f32.mxu0 0.0
      %1265 = vmatmul.mubr.f32.gmra.mrb[0].mxu0 %v787
      %v1266 = vpop.f32.mrb[0].mxu0
      %v1267 = vadd.f32 %v744, %v1266
      %v1268 = vpop.f32.mrb[0].mxu0
      %1269 = vmatprep.mubr.f32.mxu0 0.0
      %1270 = vmatmul.mubr.f32.gmra.mrb[0].mxu0 %v790
      %v1271 = vpop.f32.mrb[0].mxu0
      %v1272 = vadd.f32 %v744, %v1271
      %v1273 = vpop.f32.mrb[0].mxu0
      %1274 = vmatprep.mubr.f32.mxu0 0.0
      %1275 = vmatmul.mubr.f32.gmra.mrb[0].mxu0 %v793
      %v1276 = vpop.f32.mrb[0].mxu0
      %v1277 = vadd.f32 %v744, %v1276
      %v1278 = vpop.f32.mrb[0].mxu0
      %1279 = vmatprep.mubr.f32.mxu0 0.0
      %1280 = vmatmul.mubr.f32.gmra.mrb[0].mxu0 %v796
      %v1281 = vpop.f32.mrb[0].mxu0
      %v1282 = vadd.f32 %v744, %v1281
      %v1283 = vpop.f32.mrb[0].mxu0
      %1284 = vmatprep.mubr.f32.mxu0 0.0
      %1285 = vmatmul.mubr.f32.gmra.mrb[0].mxu0 %v799
      %v1286 = vpop.f32.mrb[0].mxu0
      %v1287 = vadd.f32 %v744, %v1286
      %v1288 = vpop.f32.mrb[0].mxu0
      %1289 = vmatprep.mubr.f32.mxu0 0.0
      %1290 = vmatmul.mubr.f32.gmra.mrb[0].mxu0 %v802
      %v1291 = vpop.f32.mrb[0].mxu0
      %v1292 = vadd.f32 %v744, %v1291
      %v1293 = vpop.f32.mrb[0].mxu0
      %1294 = vmatprep.mubr.f32.mxu0 0.0
      %1295 = vmatmul.mubr.f32.gmra.mrb[0].mxu0 %v805
      %v1296 = vpop.f32.mrb[0].mxu0
      %v1297 = vadd.f32 %v744, %v1296
      %v1298 = vpop.f32.mrb[0].mxu0
      %1299 = vmatprep.mubr.f32.mxu0 0.0
      %1300 = vmatmul.mubr.f32.gmra.mrb[0].mxu0 %v808
      %v1301 = vpop.f32.mrb[0].mxu0
      %v1302 = vadd.f32 %v744, %v1301
      %v1303 = vpop.f32.mrb[0].mxu0
      %1304 = vmatprep.mubr.f32.mxu0 0.0
      %1305 = vmatmul.mubr.f32.gmra.mrb[0].mxu0 %v811
      %v1306 = vpop.f32.mrb[0].mxu0
      %v1307 = vadd.f32 %v744, %v1306
      %v1308 = vpop.f32.mrb[0].mxu0
      %1309 = vmatprep.mubr.f32.mxu0 0.0
      %1310 = vmatmul.mubr.f32.gmra.mrb[0].mxu0 %v814
      %v1311 = vpop.f32.mrb[0].mxu0
      %v1312 = vadd.f32 %v744, %v1311
      %v1313 = vpop.f32.mrb[0].mxu0
      %1314 = vmatprep.mubr.f32.mxu0 0.0
      %1315 = vmatmul.mubr.f32.gmra.mrb[0].mxu0 %v817
      %v1316 = vpop.f32.mrb[0].mxu0
      %v1317 = vadd.f32 %v744, %v1316
      %v1318 = vpop.f32.mrb[0].mxu0
      %1319 = vmatprep.mubr.f32.mxu0 0.0
      %1320 = vmatmul.mubr.f32.gmra.mrb[0].mxu0 %v820
      %v1321 = vpop.f32.mrb[0].mxu0
      %v1322 = vadd.f32 %v744, %v1321
      %v1323 = vpop.f32.mrb[0].mxu0
      %1324 = vmatprep.mubr.f32.mxu0 0.0
      %1325 = vmatmul.mubr.f32.gmra.mrb[0].mxu0 %v823
      %v1326 = vpop.f32.mrb[0].mxu0
      %v1327 = vadd.f32 %v744, %v1326
      %v1328 = vpop.f32.mrb[0].mxu0
      %1329 = vmatprep.mubr.f32.mxu0 0.0
      %1330 = vmatmul.mubr.f32.gmra.mrb[0].mxu0 %v826
      %v1331 = vpop.f32.mrb[0].mxu0
      %v1332 = vadd.f32 %v744, %v1331
      %v1333 = vpop.f32.mrb[0].mxu0
      %1334 = vmatprep.mubr.f32.mxu0 0.0
      %1335 = vmatmul.mubr.f32.gmra.mrb[0].mxu0 %v829
      %v1336 = vpop.f32.mrb[0].mxu0
      %v1337 = vadd.f32 %v744, %v1336
      %v1338 = vpop.f32.mrb[0].mxu0
      %1339 = vmatprep.mubr.f32.mxu0 0.0
      %1340 = vmatmul.mubr.f32.gmra.mrb[0].mxu0 %v832
      %v1341 = vpop.f32.mrb[0].mxu0
      %v1342 = vadd.f32 %v744, %v1341
      %v1343 = vpop.f32.mrb[0].mxu0
      %1344 = vmatprep.mubr.f32.mxu0 0.0
      %1345 = vmatmul.mubr.f32.gmra.mrb[0].mxu0 %v835
      %v1346 = vpop.f32.mrb[0].mxu0
      %v1347 = vadd.f32 %v744, %v1346
      %v1348 = vpop.f32.mrb[0].mxu0
      %1349 = vmatprep.mubr.f32.mxu0 0.0
      %1350 = vmatmul.mubr.f32.gmra.mrb[0].mxu0 %v838
      %v1351 = vpop.f32.mrb[0].mxu0
      %v1352 = vadd.f32 %v744, %v1351
      %v1353 = vpop.f32.mrb[0].mxu0
      %1354 = vmatprep.mubr.f32.mxu0 0.0
      %1355 = vmatmul.mubr.f32.gmra.mrb[0].mxu0 %v841
      %v1356 = vpop.f32.mrb[0].mxu0
      %v1357 = vadd.f32 %v744, %v1356
      %v1358 = vpop.f32.mrb[0].mxu0
      %1359 = vmatprep.mubr.f32.mxu0 0.0
      %1360 = vmatmul.mubr.f32.gmra.mrb[0].mxu0 %v844
      %v1361 = vpop.f32.mrb[0].mxu0
      %v1362 = vadd.f32 %v744, %v1361
      %v1363 = vpop.f32.mrb[0].mxu0
      %1364 = vmatprep.mubr.f32.mxu0 0.0
      %1365 = vmatmul.mubr.f32.gmra.mrb[0].mxu0 %v847
      %v1366 = vpop.f32.mrb[0].mxu0
      %v1367 = vadd.f32 %v744, %v1366
      %v1368 = vpop.f32.mrb[0].mxu0
      %1369 = vmatprep.mubr.f32.mxu0 0.0
      %1370 = vmatmul.mubr.f32.gmra.mrb[0].mxu0 %v850
      %v1371 = vpop.f32.mrb[0].mxu0
      %v1372 = vadd.f32 %v744, %v1371
      %v1373 = vpop.f32.mrb[0].mxu0
      %1374 = vmatprep.mubr.f32.mxu0 0.0
      %1375 = vmatmul.mubr.f32.gmra.mrb[0].mxu0 %v853
      %v1376 = vpop.f32.mrb[0].mxu0
      %v1377 = vadd.f32 %v744, %v1376
      %v1378 = vpop.f32.mrb[0].mxu0
      %1379 = vmatprep.mubr.f32.mxu0 0.0
      %1380 = vmatmul.mubr.f32.gmra.mrb[0].mxu0 %v856
      %v1381 = vpop.f32.mrb[0].mxu0
      %v1382 = vadd.f32 %v744, %v1381
      %v1383 = vpop.f32.mrb[0].mxu0
      %1384 = vmatprep.mubr.f32.mxu0 0.0
      %1385 = vmatmul.mubr.f32.gmra.mrb[0].mxu0 %v859
      %v1386 = vpop.f32.mrb[0].mxu0
      %v1387 = vadd.f32 %v744, %v1386
      %v1388 = vpop.f32.mrb[0].mxu0
      %1389 = vmatprep.mubr.f32.mxu0 0.0
      %1390 = vmatmul.mubr.f32.gmra.mrb[0].mxu0 %v862
      %v1391 = vpop.f32.mrb[0].mxu0
      %v1392 = vadd.f32 %v744, %v1391
      %v1393 = vpop.f32.mrb[0].mxu0
      %1394 = vmatprep.mubr.f32.mxu0 0.0
      %1395 = vmatmul.mubr.f32.gmra.mrb[0].mxu0 %v865
      %v1396 = vpop.f32.mrb[0].mxu0
      %v1397 = vadd.f32 %v744, %v1396
      %v1398 = vpop.f32.mrb[0].mxu0
      %1399 = vmatprep.mubr.f32.mxu0 0.0
      %1400 = vmatmul.mubr.f32.gmra.mrb[0].mxu0 %v868
      %v1401 = vpop.f32.mrb[0].mxu0
      %v1402 = vadd.f32 %v744, %v1401
      %v1403 = vpop.f32.mrb[0].mxu0
      %1404 = vmatprep.mubr.f32.mxu0 0.0
      %1405 = vmatmul.mubr.f32.gmra.mrb[0].mxu0 %v871
      %v1406 = vpop.f32.mrb[0].mxu0
      %v1407 = vadd.f32 %v744, %v1406
      %v1408 = vpop.f32.mrb[0].mxu0
      %1409 = vmatprep.mubr.f32.mxu0 0.0
      %1410 = vmatmul.mubr.f32.gmra.mrb[0].mxu0 %v874
      %v1411 = vpop.f32.mrb[0].mxu0
      %v1412 = vadd.f32 %v744, %v1411
      %v1413 = vpop.f32.mrb[0].mxu0
      %1414 = vmatprep.mubr.f32.mxu0 0.0
      %1415 = vmatmul.mubr.f32.gmra.mrb[0].mxu0 %v877
      %v1416 = vpop.f32.mrb[0].mxu0
      %v1417 = vadd.f32 %v744, %v1416
      %v1418 = vpop.f32.mrb[0].mxu0
      %1419 = vmatprep.mubr.f32.mxu0 0.0
      %1420 = vmatmul.mubr.f32.gmra.mrb[0].mxu0 %v880
      %v1421 = vpop.f32.mrb[0].mxu0
      %v1422 = vadd.f32 %v744, %v1421
      %v1423 = vpop.f32.mrb[0].mxu0
      %1424 = vmatprep.mubr.f32.mxu0 0.0
      %1425 = vmatmul.mubr.f32.gmra.mrb[0].mxu0 %v883
      %v1426 = vpop.f32.mrb[0].mxu0
      %v1427 = vadd.f32 %v744, %v1426
      %v1428 = vpop.f32.mrb[0].mxu0
      %1429 = vmatprep.mubr.f32.mxu0 0.0
      %1430 = vmatmul.mubr.f32.gmra.mrb[0].mxu0 %v886
      %v1431 = vpop.f32.mrb[0].mxu0
      %v1432 = vadd.f32 %v744, %v1431
      %v1433 = vpop.f32.mrb[0].mxu0
      %1434 = vmatprep.mubr.f32.mxu0 0.0
      %1435 = vmatmul.mubr.f32.gmra.mrb[0].mxu0 %v889
      %v1436 = vpop.f32.mrb[0].mxu0
      %v1437 = vadd.f32 %v744, %v1436
      %v1438 = vpop.f32.mrb[0].mxu0
      %1439 = vmatprep.mubr.f32.mxu0 0.0
      %1440 = vmatmul.mubr.f32.gmra.mrb[0].mxu0 %v892
      %v1441 = vpop.f32.mrb[0].mxu0
      %v1442 = vadd.f32 %v744, %v1441
      %v1443 = vpop.f32.mrb[0].mxu0
      %1444 = vmatprep.mubr.f32.mxu0 0.0
      %1445 = vmatmul.mubr.f32.gmra.mrb[0].mxu0 %v895
      %v1446 = vpop.f32.mrb[0].mxu0
      %v1447 = vadd.f32 %v744, %v1446
      %v1448 = vpop.f32.mrb[0].mxu0
      %1449 = vmatprep.mubr.f32.mxu0 0.0
      %1450 = vmatmul.mubr.f32.gmra.mrb[0].mxu0 %v898
      %v1451 = vpop.f32.mrb[0].mxu0
      %v1452 = vadd.f32 %v744, %v1451
      %v1453 = vpop.f32.mrb[0].mxu0
      %1454 = vmatprep.mubr.f32.mxu0 0.0
      %1455 = vmatmul.mubr.f32.gmra.mrb[0].mxu0 %v901
      %v1456 = vpop.f32.mrb[0].mxu0
      %v1457 = vadd.f32 %v744, %v1456
      %v1458 = vpop.f32.mrb[0].mxu0
      %1459 = vmatprep.mubr.f32.mxu0 0.0
      %1460 = vmatmul.mubr.f32.gmra.mrb[0].mxu0 %v904
      %v1461 = vpop.f32.mrb[0].mxu0
      %v1462 = vadd.f32 %v744, %v1461
      %v1463 = vpop.f32.mrb[0].mxu0
      %1464 = vmatprep.mubr.f32.mxu0 0.0
      %1465 = vmatmul.mubr.f32.gmra.mrb[0].mxu0 %v907
      %v1466 = vpop.f32.mrb[0].mxu0
      %v1467 = vadd.f32 %v744, %v1466
      %v1468 = vpop.f32.mrb[0].mxu0
      %1469 = vmatprep.mubr.f32.mxu0 0.0
      %1470 = vmatmul.mubr.f32.gmra.mrb[0].mxu0 %v910
      %v1471 = vpop.f32.mrb[0].mxu0
      %v1472 = vadd.f32 %v744, %v1471
      %v1473 = vpop.f32.mrb[0].mxu0
      %1474 = vmatprep.mubr.f32.mxu0 0.0
      %1475 = vmatmul.mubr.f32.gmra.mrb[0].mxu0 %v913
      %v1476 = vpop.f32.mrb[0].mxu0
      %v1477 = vadd.f32 %v744, %v1476
      %v1478 = vpop.f32.mrb[0].mxu0
      %1479 = vmatprep.mubr.f32.mxu0 0.0
      %1480 = vmatmul.mubr.f32.gmra.mrb[0].mxu0 %v916
      %v1481 = vpop.f32.mrb[0].mxu0
      %v1482 = vadd.f32 %v744, %v1481
      %v1483 = vpop.f32.mrb[0].mxu0
      %1484 = vmatprep.mubr.f32.mxu0 0.0
      %1485 = vmatmul.mubr.f32.gmra.mrb[0].mxu0 %v919
      %v1486 = vpop.f32.mrb[0].mxu0
      %v1487 = vadd.f32 %v744, %v1486
      %v1488 = vpop.f32.mrb[0].mxu0
      %1489 = vmatprep.mubr.f32.mxu0 0.0
      %1490 = vmatmul.mubr.f32.gmra.mrb[0].mxu0 %v922
      %v1491 = vpop.f32.mrb[0].mxu0
      %v1492 = vadd.f32 %v744, %v1491
      %v1493 = vpop.f32.mrb[0].mxu0
      %1494 = vmatprep.mubr.f32.mxu0 0.0
      %1495 = vmatmul.mubr.f32.gmra.mrb[0].mxu0 %v925
      %v1496 = vpop.f32.mrb[0].mxu0
      %v1497 = vadd.f32 %v744, %v1496
      %v1498 = vpop.f32.mrb[0].mxu0
      %1499 = vmatprep.mubr.f32.mxu0 0.0
      %1500 = vmatmul.mubr.f32.gmra.mrb[0].mxu0 %v928
      %v1501 = vpop.f32.mrb[0].mxu0
      %v1502 = vadd.f32 %v744, %v1501
      %v1503 = vpop.f32.mrb[0].mxu0
      %1504 = vmatprep.mubr.f32.mxu0 0.0
      %1505 = vmatmul.mubr.f32.gmra.mrb[0].mxu0 %v931
      %v1506 = vpop.f32.mrb[0].mxu0
      %v1507 = vadd.f32 %v744, %v1506
      %v1508 = vpop.f32.mrb[0].mxu0
      %1509 = vmatprep.mubr.f32.mxu0 0.0
      %1510 = vmatmul.mubr.f32.gmra.mrb[0].mxu0 %v934
      %v1511 = vpop.f32.mrb[0].mxu0
      %v1512 = vadd.f32 %v744, %v1511
      %v1513 = vpop.f32.mrb[0].mxu0
      %1514 = vmatprep.mubr.f32.mxu0 0.0
      %1515 = vmatmul.mubr.f32.gmra.mrb[0].mxu0 %v937
      %v1516 = vpop.f32.mrb[0].mxu0
      %v1517 = vadd.f32 %v744, %v1516
      %v1518 = vpop.f32.mrb[0].mxu0
      %1519 = vmatprep.mubr.f32.mxu0 0.0
      %1520 = vmatmul.mubr.f32.gmra.mrb[0].mxu0 %v940
      %v1521 = vpop.f32.mrb[0].mxu0
      %v1522 = vadd.f32 %v744, %v1521
      %v1523 = vpop.f32.mrb[0].mxu0
      %1524 = vmatprep.mubr.f32.mxu0 0.0
      %1525 = vmatmul.mubr.f32.gmra.mrb[0].mxu0 %v943
      %v1526 = vpop.f32.mrb[0].mxu0
      %v1527 = vadd.f32 %v744, %v1526
      %v1528 = vpop.f32.mrb[0].mxu0
      %1529 = vmatprep.mubr.f32.mxu0 0.0
      %1530 = vmatmul.mubr.f32.gmra.mrb[0].mxu0 %v946
      %v1531 = vpop.f32.mrb[0].mxu0
      %v1532 = vadd.f32 %v744, %v1531
      %v1533 = vpop.f32.mrb[0].mxu0
      %1534 = vmatprep.mubr.f32.mxu0 0.0
      %1535 = vmatmul.mubr.f32.gmra.mrb[0].mxu0 %v949
      %v1536 = vpop.f32.mrb[0].mxu0
      %v1537 = vadd.f32 %v744, %v1536
      %v1538 = vpop.f32.mrb[0].mxu0
      %1539 = vmatprep.mubr.f32.mxu0 0.0
      %1540 = vmatmul.mubr.f32.gmra.mrb[0].mxu0 %v952
      %v1541 = vpop.f32.mrb[0].mxu0
      %v1542 = vadd.f32 %v744, %v1541
      %v1543 = vpop.f32.mrb[0].mxu0
      %1544 = vmatprep.mubr.f32.mxu0 0.0
      %1545 = vmatmul.mubr.f32.gmra.mrb[0].mxu0 %v955
      %v1546 = vpop.f32.mrb[0].mxu0
      %v1547 = vadd.f32 %v744, %v1546
      %v1548 = vpop.f32.mrb[0].mxu0
      %1549 = vmatprep.mubr.f32.mxu0 0.0
      %1550 = vmatmul.mubr.f32.gmra.mrb[0].mxu0 %v958
      %v1551 = vpop.f32.mrb[0].mxu0
      %v1552 = vadd.f32 %v744, %v1551
      %v1553 = vpop.f32.mrb[0].mxu0
      %1554 = vmatprep.mubr.f32.mxu0 0.0
      %1555 = vmatmul.mubr.f32.gmra.mrb[0].mxu0 %v961
      %v1556 = vpop.f32.mrb[0].mxu0
      %v1557 = vadd.f32 %v744, %v1556
      %v1558 = vpop.f32.mrb[0].mxu0
      %1559 = vmatprep.mubr.f32.mxu0 0.0
      %1560 = vmatmul.mubr.f32.gmra.mrb[0].mxu0 %v964
      %v1561 = vpop.f32.mrb[0].mxu0
      %v1562 = vadd.f32 %v744, %v1561
      %v1563 = vpop.f32.mrb[0].mxu0
      %1564 = vmatprep.mubr.f32.mxu0 0.0
      %1565 = vmatmul.mubr.f32.gmra.mrb[0].mxu0 %v967
      %v1566 = vpop.f32.mrb[0].mxu0
      %v1567 = vadd.f32 %v744, %v1566
      %v1568 = vpop.f32.mrb[0].mxu0
      %1569 = vmatprep.mubr.f32.mxu0 0.0
      %1570 = vmatmul.mubr.f32.gmra.mrb[0].mxu0 %v970
      %v1571 = vpop.f32.mrb[0].mxu0
      %v1572 = vadd.f32 %v744, %v1571
      %v1573 = vpop.f32.mrb[0].mxu0
      %1574 = vmatprep.mubr.f32.mxu0 0.0
      %1575 = vmatmul.mubr.f32.gmra.mrb[0].mxu0 %v973
      %v1576 = vpop.f32.mrb[0].mxu0
      %v1577 = vadd.f32 %v744, %v1576
      %v1578 = vpop.f32.mrb[0].mxu0
      %1579 = vmatprep.mubr.f32.mxu0 0.0
      %1580 = vmatmul.mubr.f32.gmra.mrb[0].mxu0 %v976
      %v1581 = vpop.f32.mrb[0].mxu0
      %v1582 = vadd.f32 %v744, %v1581
      %v1583 = vpop.f32.mrb[0].mxu0
      %1584 = vmatprep.mubr.f32.mxu0 0.0
      %1585 = vmatmul.mubr.f32.gmra.mrb[0].mxu0 %v979
      %v1586 = vpop.f32.mrb[0].mxu0
      %v1587 = vadd.f32 %v744, %v1586
      %v1588 = vpop.f32.mrb[0].mxu0
      %1589 = vmatprep.mubr.f32.mxu0 0.0
      %1590 = vmatmul.mubr.f32.gmra.mrb[0].mxu0 %v982
      %v1591 = vpop.f32.mrb[0].mxu0
      %v1592 = vadd.f32 %v744, %v1591
      %v1593 = vpop.f32.mrb[0].mxu0
      %1594 = vmatprep.mubr.f32.mxu0 0.0
      %1595 = vmatmul.mubr.f32.gmra.mrb[0].mxu0 %v985
      %v1596 = vpop.f32.mrb[0].mxu0
      %v1597 = vadd.f32 %v744, %v1596
      %v1598 = vpop.f32.mrb[0].mxu0
      %1599 = vmatprep.mubr.f32.mxu0 0.0
      %1600 = vmatmul.mubr.f32.gmra.mrb[0].mxu0 %v988
      %v1601 = vpop.f32.mrb[0].mxu0
      %v1602 = vadd.f32 %v744, %v1601
      %v1603 = vpop.f32.mrb[0].mxu0
      %1604 = vmatprep.mubr.f32.mxu0 0.0
      %1605 = vmatmul.mubr.f32.gmra.mrb[0].mxu0 %v991
      %v1606 = vpop.f32.mrb[0].mxu0
      %v1607 = vadd.f32 %v744, %v1606
      %v1608 = vpop.f32.mrb[0].mxu0
      %1609 = vmatprep.mubr.f32.mxu0 0.0
      %1610 = vmatmul.mubr.f32.gmra.mrb[0].mxu0 %v994
      %v1611 = vpop.f32.mrb[0].mxu0
      %v1612 = vadd.f32 %v744, %v1611
      %v1613 = vpop.f32.mrb[0].mxu0
      %1614 = vmatprep.mubr.f32.mxu0 0.0
      %1615 = vmatmul.mubr.f32.gmra.mrb[0].mxu0 %v997
      %v1616 = vpop.f32.mrb[0].mxu0
      %v1617 = vadd.f32 %v744, %v1616
      %v1618 = vpop.f32.mrb[0].mxu0
      %1619 = vmatprep.mubr.f32.mxu0 0.0
      %1620 = vmatmul.mubr.f32.gmra.mrb[0].mxu0 %v1000
      %v1621 = vpop.f32.mrb[0].mxu0
      %v1622 = vadd.f32 %v744, %v1621
      %v1623 = vpop.f32.mrb[0].mxu0
      %1624 = vmatprep.mubr.f32.mxu0 0.0
      %1625 = vmatmul.mubr.f32.gmra.mrb[0].mxu0 %v1003
      %v1626 = vpop.f32.mrb[0].mxu0
      %v1627 = vadd.f32 %v744, %v1626
      %v1628 = vpop.f32.mrb[0].mxu0
      %1629 = vmatprep.mubr.f32.mxu0 0.0
      %1630 = vmatmul.mubr.f32.gmra.mrb[0].mxu0 %v1006
      %v1631 = vpop.f32.mrb[0].mxu0
      %v1632 = vadd.f32 %v744, %v1631
      %v1633 = vpop.f32.mrb[0].mxu0
      %1634 = vmatprep.mubr.f32.mxu0 0.0
      %1635 = vmatmul.mubr.f32.gmra.mrb[0].mxu0 %v1009
      %v1636 = vpop.f32.mrb[0].mxu0
      %v1637 = vadd.f32 %v744, %v1636
      %v1638 = vpop.f32.mrb[0].mxu0
      %1639 = vmatprep.mubr.f32.mxu0 0.0
      %1640 = vmatmul.mubr.f32.gmra.mrb[0].mxu0 %v1012
      %v1641 = vpop.f32.mrb[0].mxu0
      %v1642 = vadd.f32 %v744, %v1641
      %v1643 = vpop.f32.mrb[0].mxu0
      %1644 = vmatprep.mubr.f32.mxu0 0.0
      %1645 = vmatmul.mubr.f32.gmra.mrb[0].mxu0 %v1015
      %v1646 = vpop.f32.mrb[0].mxu0
      %v1647 = vadd.f32 %v744, %v1646
      %v1648 = vpop.f32.mrb[0].mxu0
      %1649 = vmatprep.mubr.f32.mxu0 0.0
      %1650 = vmatmul.mubr.f32.gmra.mrb[0].mxu0 %v1018
      %v1651 = vpop.f32.mrb[0].mxu0
      %v1652 = vadd.f32 %v744, %v1651
      %v1653 = vpop.f32.mrb[0].mxu0
      %1654 = vmatprep.mubr.f32.mxu0 0.0
      %1655 = vmatmul.mubr.f32.gmra.mrb[0].mxu0 %v1021
      %v1656 = vpop.f32.mrb[0].mxu0
      %v1657 = vadd.f32 %v744, %v1656
      %v1658 = vpop.f32.mrb[0].mxu0
      %1659 = vmatprep.mubr.f32.mxu0 0.0
      %1660 = vmatmul.mubr.f32.gmra.mrb[0].mxu0 %v1024
      %v1661 = vpop.f32.mrb[0].mxu0
      %v1662 = vadd.f32 %v744, %v1661
      %v1663 = vpop.f32.mrb[0].mxu0
      %1664 = vmatprep.mubr.f32.mxu0 0.0
      %1665 = vmatmul.mubr.f32.gmra.mrb[0].mxu0 %v1027
      %v1666 = vpop.f32.mrb[0].mxu0
      %v1667 = vadd.f32 %v744, %v1666
      %v1668 = vpop.f32.mrb[0].mxu0
      %1669 = vmatprep.mubr.f32.mxu0 0.0
      %1670 = vmatmul.mubr.f32.gmra.mrb[0].mxu0 %v1030
      %v1671 = vpop.f32.mrb[0].mxu0
      %v1672 = vadd.f32 %v744, %v1671
      %v1673 = vpop.f32.mrb[0].mxu0
      %1674 = vmatprep.mubr.f32.mxu0 0.0
      %1675 = vmatmul.mubr.f32.gmra.mrb[0].mxu0 %v1033
      %v1676 = vpop.f32.mrb[0].mxu0
      %v1677 = vadd.f32 %v744, %v1676
      %v1678 = vpop.f32.mrb[0].mxu0
      %1679 = vmatprep.mubr.f32.mxu0 0.0
      %1680 = vmatmul.mubr.f32.gmra.mrb[0].mxu0 %v1036
      %v1681 = vpop.f32.mrb[0].mxu0
      %v1682 = vadd.f32 %v744, %v1681
      %v1683 = vpop.f32.mrb[0].mxu0
      %1684 = vmatprep.mubr.f32.mxu0 0.0
      %1685 = vmatmul.mubr.f32.gmra.mrb[0].mxu0 %v1039
      %v1686 = vpop.f32.mrb[0].mxu0
      %v1687 = vadd.f32 %v744, %v1686
      %v1688 = vpop.f32.mrb[0].mxu0
      %1689 = vmatprep.mubr.f32.mxu0 0.0
      %1690 = vmatmul.mubr.f32.gmra.mrb[0].mxu0 %v1042
      %v1691 = vpop.f32.mrb[0].mxu0
      %v1692 = vadd.f32 %v744, %v1691
      %v1693 = vpop.f32.mrb[0].mxu0
      %1694 = vmatprep.mubr.f32.mxu0 0.0
      %1695 = vmatmul.mubr.f32.gmra.mrb[0].mxu0 %v1045
      %v1696 = vpop.f32.mrb[0].mxu0
      %v1697 = vadd.f32 %v744, %v1696
      %v1698 = vpop.f32.mrb[0].mxu0
      %1699 = vmatprep.mubr.f32.mxu0 0.0
      %1700 = vmatmul.mubr.f32.gmra.mrb[0].mxu0 %v1048
      %v1701 = vpop.f32.mrb[0].mxu0
      %v1702 = vadd.f32 %v744, %v1701
      %v1703 = vpop.f32.mrb[0].mxu0
      %1704 = vmatprep.mubr.f32.mxu0 0.0
      %1705 = vmatmul.mubr.f32.gmra.mrb[0].mxu0 %v1051
      %v1706 = vpop.f32.mrb[0].mxu0
      %v1707 = vadd.f32 %v744, %v1706
      %v1708 = vpop.f32.mrb[0].mxu0
      %1709 = vmatprep.mubr.f32.mxu0 0.0
      %1710 = vmatmul.mubr.f32.gmra.mrb[0].mxu0 %v1054
      %v1711 = vpop.f32.mrb[0].mxu0
      %v1712 = vadd.f32 %v744, %v1711
      %v1713 = vpop.f32.mrb[0].mxu0
      %1714 = vmatprep.mubr.f32.mxu0 0.0
      %1715 = vmatmul.mubr.f32.gmra.mrb[0].mxu0 %v1057
      %v1716 = vpop.f32.mrb[0].mxu0
      %v1717 = vadd.f32 %v744, %v1716
      %v1718 = vpop.f32.mrb[0].mxu0
      %1719 = vmatprep.mubr.f32.mxu0 0.0
      %1720 = vmatmul.mubr.f32.gmra.mrb[0].mxu0 %v1060
      %v1721 = vpop.f32.mrb[0].mxu0
      %v1722 = vadd.f32 %v744, %v1721
      %v1723 = vpop.f32.mrb[0].mxu0
      %1724 = vmatprep.mubr.f32.mxu0 0.0
      %1725 = vmatmul.mubr.f32.gmra.mrb[0].mxu0 %v1063
      %v1726 = vpop.f32.mrb[0].mxu0
      %v1727 = vadd.f32 %v744, %v1726
      %v1728 = vpop.f32.mrb[0].mxu0
      %1729 = vmatprep.mubr.f32.mxu0 0.0
      %1730 = vmatmul.mubr.f32.gmra.mrb[0].mxu0 %v1066
      %v1731 = vpop.f32.mrb[0].mxu0
      %v1732 = vadd.f32 %v744, %v1731
      %v1733 = vpop.f32.mrb[0].mxu0
      %1734 = vmatprep.mubr.f32.mxu0 0.0
      %1735 = vmatmul.mubr.f32.gmra.mrb[0].mxu0 %v1069
      %v1736 = vpop.f32.mrb[0].mxu0
      %v1737 = vadd.f32 %v744, %v1736
      %v1738 = vpop.f32.mrb[0].mxu0
      %1739 = vmatprep.mubr.f32.mxu0 0.0
      %1740 = vmatmul.mubr.f32.gmra.mrb[0].mxu0 %v1072
      %v1741 = vpop.f32.mrb[0].mxu0
      %v1742 = vadd.f32 %v744, %v1741
      %v1743 = vpop.f32.mrb[0].mxu0
      %1744 = vmatprep.mubr.f32.mxu0 0.0
      %1745 = vmatmul.mubr.f32.gmra.mrb[0].mxu0 %v1075
      %v1746 = vpop.f32.mrb[0].mxu0
      %v1747 = vadd.f32 %v744, %v1746
      %v1748 = vpop.f32.mrb[0].mxu0
      %1749 = vmatprep.mubr.f32.mxu0 0.0
      %1750 = vmatmul.mubr.f32.gmra.mrb[0].mxu0 %v1078
      %v1751 = vpop.f32.mrb[0].mxu0
      %v1752 = vadd.f32 %v744, %v1751
      %v1753 = vpop.f32.mrb[0].mxu0
      %1754 = vmatprep.mubr.f32.mxu0 0.0
      %1755 = vmatmul.mubr.f32.gmra.mrb[0].mxu0 %v1081
      %v1756 = vpop.f32.mrb[0].mxu0
      %v1757 = vadd.f32 %v744, %v1756
      %v1758 = vpop.f32.mrb[0].mxu0
      %1759 = vmatprep.mubr.f32.mxu0 0.0
      %1760 = vmatmul.mubr.f32.gmra.mrb[0].mxu0 %v1084
      %v1761 = vpop.f32.mrb[0].mxu0
      %v1762 = vadd.f32 %v744, %v1761
      %v1763 = vpop.f32.mrb[0].mxu0
      %1764 = vmatprep.mubr.f32.mxu0 0.0
      %1765 = vmatmul.mubr.f32.gmra.mrb[0].mxu0 %v1087
      %v1766 = vpop.f32.mrb[0].mxu0
      %v1767 = vadd.f32 %v744, %v1766
      %v1768 = vpop.f32.mrb[0].mxu0
      %1769 = vmatprep.mubr.f32.mxu0 0.0
      %1770 = vmatmul.mubr.f32.gmra.mrb[0].mxu0 %v1090
      %v1771 = vpop.f32.mrb[0].mxu0
      %v1772 = vadd.f32 %v744, %v1771
      %v1773 = vpop.f32.mrb[0].mxu0
      %1774 = vmatprep.mubr.f32.mxu0 0.0
      %1775 = vmatmul.mubr.f32.gmra.mrb[0].mxu0 %v1093
      %v1776 = vpop.f32.mrb[0].mxu0
      %v1777 = vadd.f32 %v744, %v1776
      %v1778 = vpop.f32.mrb[0].mxu0
      %1779 = vmatprep.mubr.f32.mxu0 0.0
      %1780 = vmatmul.mubr.f32.gmra.mrb[0].mxu0 %v1096
      %v1781 = vpop.f32.mrb[0].mxu0
      %v1782 = vadd.f32 %v744, %v1781
      %v1783 = vpop.f32.mrb[0].mxu0
      %1784 = vmatprep.mubr.f32.mxu0 0.0
      %1785 = vmatmul.mubr.f32.gmra.mrb[0].mxu0 %v1099
      %v1786 = vpop.f32.mrb[0].mxu0
      %v1787 = vadd.f32 %v744, %v1786
      %v1788 = vpop.f32.mrb[0].mxu0
      %1789 = vmatprep.mubr.f32.mxu0 0.0
      %1790 = vmatmul.mubr.f32.gmra.mrb[0].mxu0 %v1102
      %v1791 = vpop.f32.mrb[0].mxu0
      %v1792 = vadd.f32 %v744, %v1791
      %v1793 = vpop.f32.mrb[0].mxu0
      %1794 = vmatprep.mubr.f32.mxu0 0.0
      %1795 = vmatmul.mubr.f32.gmra.mrb[0].mxu0 %v1105
      %v1796 = vpop.f32.mrb[0].mxu0
      %v1797 = vadd.f32 %v744, %v1796
      %v1798 = vpop.f32.mrb[0].mxu0
      %1799 = vmatprep.mubr.f32.mxu0 0.0
      %1800 = vmatmul.mubr.f32.gmra.mrb[0].mxu0 %v1108
      %v1801 = vpop.f32.mrb[0].mxu0
      %v1802 = vadd.f32 %v744, %v1801
      %v1803 = vpop.f32.mrb[0].mxu0
      %1804 = vmatprep.mubr.f32.mxu0 0.0
      %1805 = vmatmul.mubr.f32.gmra.mrb[0].mxu0 %v1111
      %v1806 = vpop.f32.mrb[0].mxu0
      %v1807 = vadd.f32 %v744, %v1806
      %v1808 = vpop.f32.mrb[0].mxu0
      %1809 = vmatprep.mubr.f32.mxu0 0.0
      %1810 = vmatmul.mubr.f32.gmra.mrb[0].mxu0 %v1114
      %v1811 = vpop.f32.mrb[0].mxu0
      %v1812 = vadd.f32 %v744, %v1811
      %v1813 = vpop.f32.mrb[0].mxu0
      %1814 = vmatprep.mubr.f32.mxu0 0.0
      %1815 = vmatmul.mubr.f32.gmra.mrb[0].mxu0 %v1117
      %v1816 = vpop.f32.mrb[0].mxu0
      %v1817 = vadd.f32 %v744, %v1816
      %v1818 = vpop.f32.mrb[0].mxu0
      %1819 = vmatprep.mubr.f32.mxu0 0.0
      %1820 = vmatmul.mubr.f32.gmra.mrb[0].mxu0 %v1120
      %v1821 = vpop.f32.mrb[0].mxu0
      %v1822 = vadd.f32 %v744, %v1821
      %v1823 = vpop.f32.mrb[0].mxu0
      %1824 = vmatprep.mubr.f32.mxu0 0.0
      %1825 = vmatmul.mubr.f32.gmra.mrb[0].mxu0 %v1123
      %v1826 = vpop.f32.mrb[0].mxu0
      %v1827 = vadd.f32 %v744, %v1826
      %v1828 = vpop.f32.mrb[0].mxu0
      %1829 = vmatprep.mubr.f32.mxu0 0.0
      %1830 = vmatmul.mubr.f32.gmra.mrb[0].mxu0 %v1126
      %v1831 = vpop.f32.mrb[0].mxu0
      %v1832 = vadd.f32 %v744, %v1831
      %v1833 = vpop.f32.mrb[0].mxu0
      %1834 = vmatprep.mubr.f32.mxu0 0.0
      %1835 = vmatmul.mubr.f32.gmra.mrb[0].mxu0 %v1129
      %v1836 = vpop.f32.mrb[0].mxu0
      %v1837 = vadd.f32 %v744, %v1836
      %v1838 = vpop.f32.mrb[0].mxu0
      %1839 = vdwg.mxu0
      %v1840 = vmax.f32 %v1202, 0.0
      %v1841 = vmax.f32 %v1207, 0.0
      %v1842 = vmax.f32 %v1212, 0.0
      %v1843 = vmax.f32 %v1217, 0.0
      %v1844 = vmax.f32 %v1222, 0.0
      %v1845 = vmax.f32 %v1227, 0.0
      %v1846 = vmax.f32 %v1232, 0.0
      %v1847 = vmax.f32 %v1237, 0.0
      %v1848 = vmax.f32 %v1242, 0.0
      %v1849 = vmax.f32 %v1247, 0.0
      %v1850 = vmax.f32 %v1252, 0.0
      %v1851 = vmax.f32 %v1257, 0.0
      %v1852 = vmax.f32 %v1262, 0.0
      %v1853 = vmax.f32 %v1267, 0.0
      %v1854 = vmax.f32 %v1272, 0.0
      %v1855 = vmax.f32 %v1277, 0.0
      %v1856 = vmax.f32 %v1282, 0.0
      %v1857 = vmax.f32 %v1287, 0.0
      %v1858 = vmax.f32 %v1292, 0.0
      %v1859 = vmax.f32 %v1297, 0.0
      %v1860 = vmax.f32 %v1302, 0.0
      %v1861 = vmax.f32 %v1307, 0.0
      %v1862 = vmax.f32 %v1312, 0.0
      %v1863 = vmax.f32 %v1317, 0.0
      %v1864 = vmax.f32 %v1322, 0.0
      %v1865 = vmax.f32 %v1327, 0.0
      %v1866 = vmax.f32 %v1332, 0.0
      %v1867 = vmax.f32 %v1337, 0.0
      %v1868 = vmax.f32 %v1342, 0.0
      %v1869 = vmax.f32 %v1347, 0.0
      %v1870 = vmax.f32 %v1352, 0.0
      %v1871 = vmax.f32 %v1357, 0.0
      %v1872 = vmax.f32 %v1362, 0.0
      %v1873 = vmax.f32 %v1367, 0.0
      %v1874 = vmax.f32 %v1372, 0.0
      %v1875 = vmax.f32 %v1377, 0.0
      %v1876 = vmax.f32 %v1382, 0.0
      %v1877 = vmax.f32 %v1387, 0.0
      %v1878 = vmax.f32 %v1392, 0.0
      %v1879 = vmax.f32 %v1397, 0.0
      %v1880 = vmax.f32 %v1402, 0.0
      %v1881 = vmax.f32 %v1407, 0.0
      %v1882 = vmax.f32 %v1412, 0.0
      %v1883 = vmax.f32 %v1417, 0.0
      %v1884 = vmax.f32 %v1422, 0.0
      %v1885 = vmax.f32 %v1427, 0.0
      %v1886 = vmax.f32 %v1432, 0.0
      %v1887 = vmax.f32 %v1437, 0.0
      %v1888 = vmax.f32 %v1442, 0.0
      %v1889 = vmax.f32 %v1447, 0.0
      %v1890 = vmax.f32 %v1452, 0.0
      %v1891 = vmax.f32 %v1457, 0.0
      %v1892 = vmax.f32 %v1462, 0.0
      %v1893 = vmax.f32 %v1467, 0.0
      %v1894 = vmax.f32 %v1472, 0.0
      %v1895 = vmax.f32 %v1477, 0.0
      %v1896 = vmax.f32 %v1482, 0.0
      %v1897 = vmax.f32 %v1487, 0.0
      %v1898 = vmax.f32 %v1492, 0.0
      %v1899 = vmax.f32 %v1497, 0.0
      %v1900 = vmax.f32 %v1502, 0.0
      %v1901 = vmax.f32 %v1507, 0.0
      %v1902 = vmax.f32 %v1512, 0.0
      %v1903 = vmax.f32 %v1517, 0.0
      %v1904 = vmax.f32 %v1522, 0.0
      %v1905 = vmax.f32 %v1527, 0.0
      %v1906 = vmax.f32 %v1532, 0.0
      %v1907 = vmax.f32 %v1537, 0.0
      %v1908 = vmax.f32 %v1542, 0.0
      %v1909 = vmax.f32 %v1547, 0.0
      %v1910 = vmax.f32 %v1552, 0.0
      %v1911 = vmax.f32 %v1557, 0.0
      %v1912 = vmax.f32 %v1562, 0.0
      %v1913 = vmax.f32 %v1567, 0.0
      %v1914 = vmax.f32 %v1572, 0.0
      %v1915 = vmax.f32 %v1577, 0.0
      %v1916 = vmax.f32 %v1582, 0.0
      %v1917 = vmax.f32 %v1587, 0.0
      %v1918 = vmax.f32 %v1592, 0.0
      %v1919 = vmax.f32 %v1597, 0.0
      %v1920 = vmax.f32 %v1602, 0.0
      %v1921 = vmax.f32 %v1607, 0.0
      %v1922 = vmax.f32 %v1612, 0.0
      %v1923 = vmax.f32 %v1617, 0.0
      %v1924 = vmax.f32 %v1622, 0.0
      %v1925 = vmax.f32 %v1627, 0.0
      %v1926 = vmax.f32 %v1632, 0.0
      %v1927 = vmax.f32 %v1637, 0.0
      %v1928 = vmax.f32 %v1642, 0.0
      %v1929 = vmax.f32 %v1647, 0.0
      %v1930 = vmax.f32 %v1652, 0.0
      %v1931 = vmax.f32 %v1657, 0.0
      %v1932 = vmax.f32 %v1662, 0.0
      %v1933 = vmax.f32 %v1667, 0.0
      %v1934 = vmax.f32 %v1672, 0.0
      %v1935 = vmax.f32 %v1677, 0.0
      %v1936 = vmax.f32 %v1682, 0.0
      %v1937 = vmax.f32 %v1687, 0.0
      %v1938 = vmax.f32 %v1692, 0.0
      %v1939 = vmax.f32 %v1697, 0.0
      %v1940 = vmax.f32 %v1702, 0.0
      %v1941 = vmax.f32 %v1707, 0.0
      %v1942 = vmax.f32 %v1712, 0.0
      %v1943 = vmax.f32 %v1717, 0.0
      %v1944 = vmax.f32 %v1722, 0.0
      %v1945 = vmax.f32 %v1727, 0.0
      %v1946 = vmax.f32 %v1732, 0.0
      %v1947 = vmax.f32 %v1737, 0.0
      %v1948 = vmax.f32 %v1742, 0.0
      %v1949 = vmax.f32 %v1747, 0.0
      %v1950 = vmax.f32 %v1752, 0.0
      %v1951 = vmax.f32 %v1757, 0.0
      %v1952 = vmax.f32 %v1762, 0.0
      %v1953 = vmax.f32 %v1767, 0.0
      %v1954 = vmax.f32 %v1772, 0.0
      %v1955 = vmax.f32 %v1777, 0.0
      %v1956 = vmax.f32 %v1782, 0.0
      %v1957 = vmax.f32 %v1787, 0.0
      %v1958 = vmax.f32 %v1792, 0.0
      %v1959 = vmax.f32 %v1797, 0.0
      %v1960 = vmax.f32 %v1802, 0.0
      %v1961 = vmax.f32 %v1807, 0.0
      %v1962 = vmax.f32 %v1812, 0.0
      %v1963 = vmax.f32 %v1817, 0.0
      %v1964 = vmax.f32 %v1822, 0.0
      %v1965 = vmax.f32 %v1827, 0.0
      %v1966 = vmax.f32 %v1832, 0.0
      %v1967 = vmax.f32 %v1837, 0.0
      %v1968 = vpack.c.bf16 %v1841, %v1840
      %v1969 = vpack.c.bf16 %v1843, %v1842
      %v1970 = vpack.c.bf16 %v1845, %v1844
      %v1971 = vpack.c.bf16 %v1847, %v1846
      %v1972 = vpack.c.bf16 %v1849, %v1848
      %v1973 = vpack.c.bf16 %v1851, %v1850
      %v1974 = vpack.c.bf16 %v1853, %v1852
      %v1975 = vpack.c.bf16 %v1855, %v1854
      %v1976 = vpack.c.bf16 %v1857, %v1856
      %v1977 = vpack.c.bf16 %v1859, %v1858
      %v1978 = vpack.c.bf16 %v1861, %v1860
      %v1979 = vpack.c.bf16 %v1863, %v1862
      %v1980 = vpack.c.bf16 %v1865, %v1864
      %v1981 = vpack.c.bf16 %v1867, %v1866
      %v1982 = vpack.c.bf16 %v1869, %v1868
      %v1983 = vpack.c.bf16 %v1871, %v1870
      %v1984 = vpack.c.bf16 %v1873, %v1872
      %v1985 = vpack.c.bf16 %v1875, %v1874
      %v1986 = vpack.c.bf16 %v1877, %v1876
      %v1987 = vpack.c.bf16 %v1879, %v1878
      %v1988 = vpack.c.bf16 %v1881, %v1880
      %v1989 = vpack.c.bf16 %v1883, %v1882
      %v1990 = vpack.c.bf16 %v1885, %v1884
      %v1991 = vpack.c.bf16 %v1887, %v1886
      %v1992 = vpack.c.bf16 %v1889, %v1888
      %v1993 = vpack.c.bf16 %v1891, %v1890
      %v1994 = vpack.c.bf16 %v1893, %v1892
      %v1995 = vpack.c.bf16 %v1895, %v1894
      %v1996 = vpack.c.bf16 %v1897, %v1896
      %v1997 = vpack.c.bf16 %v1899, %v1898
      %v1998 = vpack.c.bf16 %v1901, %v1900
      %v1999 = vpack.c.bf16 %v1903, %v1902
      %v2000 = vpack.c.bf16 %v1905, %v1904
      %v2001 = vpack.c.bf16 %v1907, %v1906
      %v2002 = vpack.c.bf16 %v1909, %v1908
      %v2003 = vpack.c.bf16 %v1911, %v1910
      %v2004 = vpack.c.bf16 %v1913, %v1912
      %v2005 = vpack.c.bf16 %v1915, %v1914
      %v2006 = vpack.c.bf16 %v1917, %v1916
      %v2007 = vpack.c.bf16 %v1919, %v1918
      %v2008 = vpack.c.bf16 %v1921, %v1920
      %v2009 = vpack.c.bf16 %v1923, %v1922
      %v2010 = vpack.c.bf16 %v1925, %v1924
      %v2011 = vpack.c.bf16 %v1927, %v1926
      %v2012 = vpack.c.bf16 %v1929, %v1928
      %v2013 = vpack.c.bf16 %v1931, %v1930
      %v2014 = vpack.c.bf16 %v1933, %v1932
      %v2015 = vpack.c.bf16 %v1935, %v1934
      %v2016 = vpack.c.bf16 %v1937, %v1936
      %v2017 = vpack.c.bf16 %v1939, %v1938
      %v2018 = vpack.c.bf16 %v1941, %v1940
      %v2019 = vpack.c.bf16 %v1943, %v1942
      %v2020 = vpack.c.bf16 %v1945, %v1944
      %v2021 = vpack.c.bf16 %v1947, %v1946
      %v2022 = vpack.c.bf16 %v1949, %v1948
      %v2023 = vpack.c.bf16 %v1951, %v1950
      %v2024 = vpack.c.bf16 %v1953, %v1952
      %v2025 = vpack.c.bf16 %v1955, %v1954
      %v2026 = vpack.c.bf16 %v1957, %v1956
      %v2027 = vpack.c.bf16 %v1959, %v1958
      %v2028 = vpack.c.bf16 %v1961, %v1960
      %v2029 = vpack.c.bf16 %v1963, %v1962
      %v2030 = vpack.c.bf16 %v1965, %v1964
      %v2031 = vpack.c.bf16 %v1967, %v1966
      %v2032 = vld [vmem:[%s3] sm:$0xf]
      %v2033 = vld [vmem:[%s3 + $0x4] sm:$0xf]
      %v2034 = vld [vmem:[%s3 + $0x8] sm:$0xf]
      %v2035 = vld [vmem:[%s3 + $0xc] sm:$0xf]
      %v2036 = vld [vmem:[%s3 + $0x10] sm:$0xf]
      %v2037 = vld [vmem:[%s3 + $0x14] sm:$0xf]
      %v2038 = vld [vmem:[%s3 + $0x18] sm:$0xf]
      %v2039 = vld [vmem:[%s3 + $0x1c] sm:$0xf]
      %v2040 = vld [vmem:[%s4] sm:$0x1]
      %v2042 = vlaneseq
      %v2043 = vshrl.u32 %v2042, 7
      %v2044 = vsub.s32 0, %v2043
      %v2045 = vrot.slane %v2040, %v2044
      %v2055 = vunpack.c.l.b16 %v2032
      %v2056 = vunpack.c.l.b16 %v2033
      %v2057 = vunpack.c.l.b16 %v2034
      %v2058 = vunpack.c.l.b16 %v2035
      %v2059 = vunpack.c.l.b16 %v2036
      %v2060 = vunpack.c.l.b16 %v2037
      %v2061 = vunpack.c.l.b16 %v2038
      %v2062 = vunpack.c.l.b16 %v2039
      %v2063 = vpack.c.b16 %v2056, %v2055
      %v2064 = vpack.c.b16 %v2058, %v2057
      %v2065 = vpack.c.b16 %v2060, %v2059
      %v2066 = vpack.c.b16 %v2062, %v2061
      %vm2071 = vcmask 523264
      %v2073 = vsel %vm2071, %v1968, 0
      %v2076 = vsel %vm2071, %v1969, 0
      %v2079 = vsel %vm2071, %v1970, 0
      %v2082 = vsel %vm2071, %v1971, 0
      %v2085 = vsel %vm2071, %v1972, 0
      %v2088 = vsel %vm2071, %v1973, 0
      %v2091 = vsel %vm2071, %v1974, 0
      %v2094 = vsel %vm2071, %v1975, 0
      %v2097 = vsel %vm2071, %v1976, 0
      %v2100 = vsel %vm2071, %v1977, 0
      %v2103 = vsel %vm2071, %v1978, 0
      %v2106 = vsel %vm2071, %v1979, 0
      %v2109 = vsel %vm2071, %v1980, 0
      %v2112 = vsel %vm2071, %v1981, 0
      %v2115 = vsel %vm2071, %v1982, 0
      %v2118 = vsel %vm2071, %v1983, 0
      %v2121 = vsel %vm2071, %v1984, 0
      %v2124 = vsel %vm2071, %v1985, 0
      %v2127 = vsel %vm2071, %v1986, 0
      %v2130 = vsel %vm2071, %v1987, 0
      %v2133 = vsel %vm2071, %v1988, 0
      %v2136 = vsel %vm2071, %v1989, 0
      %v2139 = vsel %vm2071, %v1990, 0
      %v2142 = vsel %vm2071, %v1991, 0
      %v2145 = vsel %vm2071, %v1992, 0
      %v2148 = vsel %vm2071, %v1993, 0
      %v2151 = vsel %vm2071, %v1994, 0
      %v2154 = vsel %vm2071, %v1995, 0
      %v2157 = vsel %vm2071, %v1996, 0
      %v2160 = vsel %vm2071, %v1997, 0
      %v2163 = vsel %vm2071, %v1998, 0
      %v2166 = vsel %vm2071, %v1999, 0
      %v2169 = vsel %vm2071, %v2000, 0
      %v2172 = vsel %vm2071, %v2001, 0
      %v2175 = vsel %vm2071, %v2002, 0
      %v2178 = vsel %vm2071, %v2003, 0
      %v2181 = vsel %vm2071, %v2004, 0
      %v2184 = vsel %vm2071, %v2005, 0
      %v2187 = vsel %vm2071, %v2006, 0
      %v2190 = vsel %vm2071, %v2007, 0
      %v2193 = vsel %vm2071, %v2008, 0
      %v2196 = vsel %vm2071, %v2009, 0
      %v2199 = vsel %vm2071, %v2010, 0
      %v2202 = vsel %vm2071, %v2011, 0
      %v2205 = vsel %vm2071, %v2012, 0
      %v2208 = vsel %vm2071, %v2013, 0
      %v2211 = vsel %vm2071, %v2014, 0
      %v2214 = vsel %vm2071, %v2015, 0
      %v2217 = vsel %vm2071, %v2016, 0
      %v2220 = vsel %vm2071, %v2017, 0
      %v2223 = vsel %vm2071, %v2018, 0
      %v2226 = vsel %vm2071, %v2019, 0
      %v2229 = vsel %vm2071, %v2020, 0
      %v2232 = vsel %vm2071, %v2021, 0
      %v2235 = vsel %vm2071, %v2022, 0
      %v2238 = vsel %vm2071, %v2023, 0
      %v2241 = vsel %vm2071, %v2024, 0
      %v2244 = vsel %vm2071, %v2025, 0
      %v2247 = vsel %vm2071, %v2026, 0
      %v2250 = vsel %vm2071, %v2027, 0
      %v2253 = vsel %vm2071, %v2028, 0
      %v2256 = vsel %vm2071, %v2029, 0
      %v2259 = vsel %vm2071, %v2030, 0
      %v2262 = vsel %vm2071, %v2031, 0
      %2264 = vmatprep.subr.bf16.mxu0 0
      %2265 = vmatpush1.bf16.msra.mxu0 %v2063
      %2266 = vmatprep.subr.bf16.mxu0 0
      %2267 = vmatpush1.bf16.msra.mxu0 %v2064
      %2268 = vmatprep.subr.bf16.mxu0 0
      %2269 = vmatpush1.bf16.msra.mxu0 %v2065
      %2270 = vmatprep.subr.bf16.mxu0 0
      %2271 = vmatpush1.bf16.msra.mxu0 %v2066
      %2272 = vmatprep.subr.bf16.mxu0 0
      %2273 = vmatpush1.bf16.msra.mxu0 0
      %2274 = vmatprep.subr.bf16.mxu0 0
      %2275 = vmatpush1.bf16.msra.mxu0 0
      %2276 = vmatprep.subr.bf16.mxu0 0
      %2277 = vmatpush1.bf16.msra.mxu0 0
      %2278 = vmatprep.subr.bf16.mxu0 0
      %2279 = vmatpush1.bf16.msra.mxu0 0
      %2280 = vmatprep.subr.bf16.mxu0 0
      %2281 = vmatpush1.bf16.msra.mxu0 0
      %2282 = vmatprep.subr.bf16.mxu0 0
      %2283 = vmatpush1.bf16.msra.mxu0 0
      %2284 = vmatprep.subr.bf16.mxu0 0
      %2285 = vmatpush1.bf16.msra.mxu0 0
      %2286 = vmatprep.subr.bf16.mxu0 0
      %2287 = vmatpush1.bf16.msra.mxu0 0
      %2288 = vmatprep.subr.bf16.mxu0 0
      %2289 = vmatpush1.bf16.msra.mxu0 0
      %2290 = vmatprep.subr.bf16.mxu0 0
      %2291 = vmatpush1.bf16.msra.mxu0 0
      %2292 = vmatprep.subr.bf16.mxu0 0
      %2293 = vmatpush1.bf16.msra.mxu0 0
      %2294 = vmatprep.subr.bf16.mxu0 0
      %2295 = vmatpush1.bf16.msra.mxu0 0
      %2296 = vmatprep.mubr.bf16.mxu0 0
      %2297 = vmatmul.mubr.bf16.gmra.mrb[0].mxu0 %v2073
      %v2298 = vpop.f32.mrb[0].mxu0
      %v2299 = vadd.f32 %v2045, %v2298
      %v2300 = vpop.f32.mrb[0].mxu0
      %v2301 = vpop.f32.mrb[0].mxu0
      %v2302 = vadd.f32 %v2045, %v2301
      %v2303 = vpop.f32.mrb[0].mxu0
      %2304 = vmatprep.mubr.bf16.mxu0 0
      %2305 = vmatmul.mubr.bf16.gmra.mrb[0].mxu0 %v2076
      %v2306 = vpop.f32.mrb[0].mxu0
      %v2307 = vadd.f32 %v2045, %v2306
      %v2308 = vpop.f32.mrb[0].mxu0
      %v2309 = vpop.f32.mrb[0].mxu0
      %v2310 = vadd.f32 %v2045, %v2309
      %v2311 = vpop.f32.mrb[0].mxu0
      %2312 = vmatprep.mubr.bf16.mxu0 0
      %2313 = vmatmul.mubr.bf16.gmra.mrb[0].mxu0 %v2079
      %v2314 = vpop.f32.mrb[0].mxu0
      %v2315 = vadd.f32 %v2045, %v2314
      %v2316 = vpop.f32.mrb[0].mxu0
      %v2317 = vpop.f32.mrb[0].mxu0
      %v2318 = vadd.f32 %v2045, %v2317
      %v2319 = vpop.f32.mrb[0].mxu0
      %2320 = vmatprep.mubr.bf16.mxu0 0
      %2321 = vmatmul.mubr.bf16.gmra.mrb[0].mxu0 %v2082
      %v2322 = vpop.f32.mrb[0].mxu0
      %v2323 = vadd.f32 %v2045, %v2322
      %v2324 = vpop.f32.mrb[0].mxu0
      %v2325 = vpop.f32.mrb[0].mxu0
      %v2326 = vadd.f32 %v2045, %v2325
      %v2327 = vpop.f32.mrb[0].mxu0
      %2328 = vmatprep.mubr.bf16.mxu0 0
      %2329 = vmatmul.mubr.bf16.gmra.mrb[0].mxu0 %v2085
      %v2330 = vpop.f32.mrb[0].mxu0
      %v2331 = vadd.f32 %v2045, %v2330
      %v2332 = vpop.f32.mrb[0].mxu0
      %v2333 = vpop.f32.mrb[0].mxu0
      %v2334 = vadd.f32 %v2045, %v2333
      %v2335 = vpop.f32.mrb[0].mxu0
      %2336 = vmatprep.mubr.bf16.mxu0 0
      %2337 = vmatmul.mubr.bf16.gmra.mrb[0].mxu0 %v2088
      %v2338 = vpop.f32.mrb[0].mxu0
      %v2339 = vadd.f32 %v2045, %v2338
      %v2340 = vpop.f32.mrb[0].mxu0
      %v2341 = vpop.f32.mrb[0].mxu0
      %v2342 = vadd.f32 %v2045, %v2341
      %v2343 = vpop.f32.mrb[0].mxu0
      %2344 = vmatprep.mubr.bf16.mxu0 0
      %2345 = vmatmul.mubr.bf16.gmra.mrb[0].mxu0 %v2091
      %v2346 = vpop.f32.mrb[0].mxu0
      %v2347 = vadd.f32 %v2045, %v2346
      %v2348 = vpop.f32.mrb[0].mxu0
      %v2349 = vpop.f32.mrb[0].mxu0
      %v2350 = vadd.f32 %v2045, %v2349
      %v2351 = vpop.f32.mrb[0].mxu0
      %2352 = vmatprep.mubr.bf16.mxu0 0
      %2353 = vmatmul.mubr.bf16.gmra.mrb[0].mxu0 %v2094
      %v2354 = vpop.f32.mrb[0].mxu0
      %v2355 = vadd.f32 %v2045, %v2354
      %v2356 = vpop.f32.mrb[0].mxu0
      %v2357 = vpop.f32.mrb[0].mxu0
      %v2358 = vadd.f32 %v2045, %v2357
      %v2359 = vpop.f32.mrb[0].mxu0
      %2360 = vmatprep.mubr.bf16.mxu0 0
      %2361 = vmatmul.mubr.bf16.gmra.mrb[0].mxu0 %v2097
      %v2362 = vpop.f32.mrb[0].mxu0
      %v2363 = vadd.f32 %v2045, %v2362
      %v2364 = vpop.f32.mrb[0].mxu0
      %v2365 = vpop.f32.mrb[0].mxu0
      %v2366 = vadd.f32 %v2045, %v2365
      %v2367 = vpop.f32.mrb[0].mxu0
      %2368 = vmatprep.mubr.bf16.mxu0 0
      %2369 = vmatmul.mubr.bf16.gmra.mrb[0].mxu0 %v2100
      %v2370 = vpop.f32.mrb[0].mxu0
      %v2371 = vadd.f32 %v2045, %v2370
      %v2372 = vpop.f32.mrb[0].mxu0
      %v2373 = vpop.f32.mrb[0].mxu0
      %v2374 = vadd.f32 %v2045, %v2373
      %v2375 = vpop.f32.mrb[0].mxu0
      %2376 = vmatprep.mubr.bf16.mxu0 0
      %2377 = vmatmul.mubr.bf16.gmra.mrb[0].mxu0 %v2103
      %v2378 = vpop.f32.mrb[0].mxu0
      %v2379 = vadd.f32 %v2045, %v2378
      %v2380 = vpop.f32.mrb[0].mxu0
      %v2381 = vpop.f32.mrb[0].mxu0
      %v2382 = vadd.f32 %v2045, %v2381
      %v2383 = vpop.f32.mrb[0].mxu0
      %2384 = vmatprep.mubr.bf16.mxu0 0
      %2385 = vmatmul.mubr.bf16.gmra.mrb[0].mxu0 %v2106
      %v2386 = vpop.f32.mrb[0].mxu0
      %v2387 = vadd.f32 %v2045, %v2386
      %v2388 = vpop.f32.mrb[0].mxu0
      %v2389 = vpop.f32.mrb[0].mxu0
      %v2390 = vadd.f32 %v2045, %v2389
      %v2391 = vpop.f32.mrb[0].mxu0
      %2392 = vmatprep.mubr.bf16.mxu0 0
      %2393 = vmatmul.mubr.bf16.gmra.mrb[0].mxu0 %v2109
      %v2394 = vpop.f32.mrb[0].mxu0
      %v2395 = vadd.f32 %v2045, %v2394
      %v2396 = vpop.f32.mrb[0].mxu0
      %v2397 = vpop.f32.mrb[0].mxu0
      %v2398 = vadd.f32 %v2045, %v2397
      %v2399 = vpop.f32.mrb[0].mxu0
      %2400 = vmatprep.mubr.bf16.mxu0 0
      %2401 = vmatmul.mubr.bf16.gmra.mrb[0].mxu0 %v2112
      %v2402 = vpop.f32.mrb[0].mxu0
      %v2403 = vadd.f32 %v2045, %v2402
      %v2404 = vpop.f32.mrb[0].mxu0
      %v2405 = vpop.f32.mrb[0].mxu0
      %v2406 = vadd.f32 %v2045, %v2405
      %v2407 = vpop.f32.mrb[0].mxu0
      %2408 = vmatprep.mubr.bf16.mxu0 0
      %2409 = vmatmul.mubr.bf16.gmra.mrb[0].mxu0 %v2115
      %v2410 = vpop.f32.mrb[0].mxu0
      %v2411 = vadd.f32 %v2045, %v2410
      %v2412 = vpop.f32.mrb[0].mxu0
      %v2413 = vpop.f32.mrb[0].mxu0
      %v2414 = vadd.f32 %v2045, %v2413
      %v2415 = vpop.f32.mrb[0].mxu0
      %2416 = vmatprep.mubr.bf16.mxu0 0
      %2417 = vmatmul.mubr.bf16.gmra.mrb[0].mxu0 %v2118
      %v2418 = vpop.f32.mrb[0].mxu0
      %v2419 = vadd.f32 %v2045, %v2418
      %v2420 = vpop.f32.mrb[0].mxu0
      %v2421 = vpop.f32.mrb[0].mxu0
      %v2422 = vadd.f32 %v2045, %v2421
      %v2423 = vpop.f32.mrb[0].mxu0
      %2424 = vmatprep.mubr.bf16.mxu0 0
      %2425 = vmatmul.mubr.bf16.gmra.mrb[0].mxu0 %v2121
      %v2426 = vpop.f32.mrb[0].mxu0
      %v2427 = vadd.f32 %v2045, %v2426
      %v2428 = vpop.f32.mrb[0].mxu0
      %v2429 = vpop.f32.mrb[0].mxu0
      %v2430 = vadd.f32 %v2045, %v2429
      %v2431 = vpop.f32.mrb[0].mxu0
      %2432 = vmatprep.mubr.bf16.mxu0 0
      %2433 = vmatmul.mubr.bf16.gmra.mrb[0].mxu0 %v2124
      %v2434 = vpop.f32.mrb[0].mxu0
      %v2435 = vadd.f32 %v2045, %v2434
      %v2436 = vpop.f32.mrb[0].mxu0
      %v2437 = vpop.f32.mrb[0].mxu0
      %v2438 = vadd.f32 %v2045, %v2437
      %v2439 = vpop.f32.mrb[0].mxu0
      %2440 = vmatprep.mubr.bf16.mxu0 0
      %2441 = vmatmul.mubr.bf16.gmra.mrb[0].mxu0 %v2127
      %v2442 = vpop.f32.mrb[0].mxu0
      %v2443 = vadd.f32 %v2045, %v2442
      %v2444 = vpop.f32.mrb[0].mxu0
      %v2445 = vpop.f32.mrb[0].mxu0
      %v2446 = vadd.f32 %v2045, %v2445
      %v2447 = vpop.f32.mrb[0].mxu0
      %2448 = vmatprep.mubr.bf16.mxu0 0
      %2449 = vmatmul.mubr.bf16.gmra.mrb[0].mxu0 %v2130
      %v2450 = vpop.f32.mrb[0].mxu0
      %v2451 = vadd.f32 %v2045, %v2450
      %v2452 = vpop.f32.mrb[0].mxu0
      %v2453 = vpop.f32.mrb[0].mxu0
      %v2454 = vadd.f32 %v2045, %v2453
      %v2455 = vpop.f32.mrb[0].mxu0
      %2456 = vmatprep.mubr.bf16.mxu0 0
      %2457 = vmatmul.mubr.bf16.gmra.mrb[0].mxu0 %v2133
      %v2458 = vpop.f32.mrb[0].mxu0
      %v2459 = vadd.f32 %v2045, %v2458
      %v2460 = vpop.f32.mrb[0].mxu0
      %v2461 = vpop.f32.mrb[0].mxu0
      %v2462 = vadd.f32 %v2045, %v2461
      %v2463 = vpop.f32.mrb[0].mxu0
      %2464 = vmatprep.mubr.bf16.mxu0 0
      %2465 = vmatmul.mubr.bf16.gmra.mrb[0].mxu0 %v2136
      %v2466 = vpop.f32.mrb[0].mxu0
      %v2467 = vadd.f32 %v2045, %v2466
      %v2468 = vpop.f32.mrb[0].mxu0
      %v2469 = vpop.f32.mrb[0].mxu0
      %v2470 = vadd.f32 %v2045, %v2469
      %v2471 = vpop.f32.mrb[0].mxu0
      %2472 = vmatprep.mubr.bf16.mxu0 0
      %2473 = vmatmul.mubr.bf16.gmra.mrb[0].mxu0 %v2139
      %v2474 = vpop.f32.mrb[0].mxu0
      %v2475 = vadd.f32 %v2045, %v2474
      %v2476 = vpop.f32.mrb[0].mxu0
      %v2477 = vpop.f32.mrb[0].mxu0
      %v2478 = vadd.f32 %v2045, %v2477
      %v2479 = vpop.f32.mrb[0].mxu0
      %2480 = vmatprep.mubr.bf16.mxu0 0
      %2481 = vmatmul.mubr.bf16.gmra.mrb[0].mxu0 %v2142
      %v2482 = vpop.f32.mrb[0].mxu0
      %v2483 = vadd.f32 %v2045, %v2482
      %v2484 = vpop.f32.mrb[0].mxu0
      %v2485 = vpop.f32.mrb[0].mxu0
      %v2486 = vadd.f32 %v2045, %v2485
      %v2487 = vpop.f32.mrb[0].mxu0
      %2488 = vmatprep.mubr.bf16.mxu0 0
      %2489 = vmatmul.mubr.bf16.gmra.mrb[0].mxu0 %v2145
      %v2490 = vpop.f32.mrb[0].mxu0
      %v2491 = vadd.f32 %v2045, %v2490
      %v2492 = vpop.f32.mrb[0].mxu0
      %v2493 = vpop.f32.mrb[0].mxu0
      %v2494 = vadd.f32 %v2045, %v2493
      %v2495 = vpop.f32.mrb[0].mxu0
      %2496 = vmatprep.mubr.bf16.mxu0 0
      %2497 = vmatmul.mubr.bf16.gmra.mrb[0].mxu0 %v2148
      %v2498 = vpop.f32.mrb[0].mxu0
      %v2499 = vadd.f32 %v2045, %v2498
      %v2500 = vpop.f32.mrb[0].mxu0
      %v2501 = vpop.f32.mrb[0].mxu0
      %v2502 = vadd.f32 %v2045, %v2501
      %v2503 = vpop.f32.mrb[0].mxu0
      %2504 = vmatprep.mubr.bf16.mxu0 0
      %2505 = vmatmul.mubr.bf16.gmra.mrb[0].mxu0 %v2151
      %v2506 = vpop.f32.mrb[0].mxu0
      %v2507 = vadd.f32 %v2045, %v2506
      %v2508 = vpop.f32.mrb[0].mxu0
      %v2509 = vpop.f32.mrb[0].mxu0
      %v2510 = vadd.f32 %v2045, %v2509
      %v2511 = vpop.f32.mrb[0].mxu0
      %2512 = vmatprep.mubr.bf16.mxu0 0
      %2513 = vmatmul.mubr.bf16.gmra.mrb[0].mxu0 %v2154
      %v2514 = vpop.f32.mrb[0].mxu0
      %v2515 = vadd.f32 %v2045, %v2514
      %v2516 = vpop.f32.mrb[0].mxu0
      %v2517 = vpop.f32.mrb[0].mxu0
      %v2518 = vadd.f32 %v2045, %v2517
      %v2519 = vpop.f32.mrb[0].mxu0
      %2520 = vmatprep.mubr.bf16.mxu0 0
      %2521 = vmatmul.mubr.bf16.gmra.mrb[0].mxu0 %v2157
      %v2522 = vpop.f32.mrb[0].mxu0
      %v2523 = vadd.f32 %v2045, %v2522
      %v2524 = vpop.f32.mrb[0].mxu0
      %v2525 = vpop.f32.mrb[0].mxu0
      %v2526 = vadd.f32 %v2045, %v2525
      %v2527 = vpop.f32.mrb[0].mxu0
      %2528 = vmatprep.mubr.bf16.mxu0 0
      %2529 = vmatmul.mubr.bf16.gmra.mrb[0].mxu0 %v2160
      %v2530 = vpop.f32.mrb[0].mxu0
      %v2531 = vadd.f32 %v2045, %v2530
      %v2532 = vpop.f32.mrb[0].mxu0
      %v2533 = vpop.f32.mrb[0].mxu0
      %v2534 = vadd.f32 %v2045, %v2533
      %v2535 = vpop.f32.mrb[0].mxu0
      %2536 = vmatprep.mubr.bf16.mxu0 0
      %2537 = vmatmul.mubr.bf16.gmra.mrb[0].mxu0 %v2163
      %v2538 = vpop.f32.mrb[0].mxu0
      %v2539 = vadd.f32 %v2045, %v2538
      %v2540 = vpop.f32.mrb[0].mxu0
      %v2541 = vpop.f32.mrb[0].mxu0
      %v2542 = vadd.f32 %v2045, %v2541
      %v2543 = vpop.f32.mrb[0].mxu0
      %2544 = vmatprep.mubr.bf16.mxu0 0
      %2545 = vmatmul.mubr.bf16.gmra.mrb[0].mxu0 %v2166
      %v2546 = vpop.f32.mrb[0].mxu0
      %v2547 = vadd.f32 %v2045, %v2546
      %v2548 = vpop.f32.mrb[0].mxu0
      %v2549 = vpop.f32.mrb[0].mxu0
      %v2550 = vadd.f32 %v2045, %v2549
      %v2551 = vpop.f32.mrb[0].mxu0
      %2552 = vmatprep.mubr.bf16.mxu0 0
      %2553 = vmatmul.mubr.bf16.gmra.mrb[0].mxu0 %v2169
      %v2554 = vpop.f32.mrb[0].mxu0
      %v2555 = vadd.f32 %v2045, %v2554
      %v2556 = vpop.f32.mrb[0].mxu0
      %v2557 = vpop.f32.mrb[0].mxu0
      %v2558 = vadd.f32 %v2045, %v2557
      %v2559 = vpop.f32.mrb[0].mxu0
      %2560 = vmatprep.mubr.bf16.mxu0 0
      %2561 = vmatmul.mubr.bf16.gmra.mrb[0].mxu0 %v2172
      %v2562 = vpop.f32.mrb[0].mxu0
      %v2563 = vadd.f32 %v2045, %v2562
      %v2564 = vpop.f32.mrb[0].mxu0
      %v2565 = vpop.f32.mrb[0].mxu0
      %v2566 = vadd.f32 %v2045, %v2565
      %v2567 = vpop.f32.mrb[0].mxu0
      %2568 = vmatprep.mubr.bf16.mxu0 0
      %2569 = vmatmul.mubr.bf16.gmra.mrb[0].mxu0 %v2175
      %v2570 = vpop.f32.mrb[0].mxu0
      %v2571 = vadd.f32 %v2045, %v2570
      %v2572 = vpop.f32.mrb[0].mxu0
      %v2573 = vpop.f32.mrb[0].mxu0
      %v2574 = vadd.f32 %v2045, %v2573
      %v2575 = vpop.f32.mrb[0].mxu0
      %2576 = vmatprep.mubr.bf16.mxu0 0
      %2577 = vmatmul.mubr.bf16.gmra.mrb[0].mxu0 %v2178
      %v2578 = vpop.f32.mrb[0].mxu0
      %v2579 = vadd.f32 %v2045, %v2578
      %v2580 = vpop.f32.mrb[0].mxu0
      %v2581 = vpop.f32.mrb[0].mxu0
      %v2582 = vadd.f32 %v2045, %v2581
      %v2583 = vpop.f32.mrb[0].mxu0
      %2584 = vmatprep.mubr.bf16.mxu0 0
      %2585 = vmatmul.mubr.bf16.gmra.mrb[0].mxu0 %v2181
      %v2586 = vpop.f32.mrb[0].mxu0
      %v2587 = vadd.f32 %v2045, %v2586
      %v2588 = vpop.f32.mrb[0].mxu0
      %v2589 = vpop.f32.mrb[0].mxu0
      %v2590 = vadd.f32 %v2045, %v2589
      %v2591 = vpop.f32.mrb[0].mxu0
      %2592 = vmatprep.mubr.bf16.mxu0 0
      %2593 = vmatmul.mubr.bf16.gmra.mrb[0].mxu0 %v2184
      %v2594 = vpop.f32.mrb[0].mxu0
      %v2595 = vadd.f32 %v2045, %v2594
      %v2596 = vpop.f32.mrb[0].mxu0
      %v2597 = vpop.f32.mrb[0].mxu0
      %v2598 = vadd.f32 %v2045, %v2597
      %v2599 = vpop.f32.mrb[0].mxu0
      %2600 = vmatprep.mubr.bf16.mxu0 0
      %2601 = vmatmul.mubr.bf16.gmra.mrb[0].mxu0 %v2187
      %v2602 = vpop.f32.mrb[0].mxu0
      %v2603 = vadd.f32 %v2045, %v2602
      %v2604 = vpop.f32.mrb[0].mxu0
      %v2605 = vpop.f32.mrb[0].mxu0
      %v2606 = vadd.f32 %v2045, %v2605
      %v2607 = vpop.f32.mrb[0].mxu0
      %2608 = vmatprep.mubr.bf16.mxu0 0
      %2609 = vmatmul.mubr.bf16.gmra.mrb[0].mxu0 %v2190
      %v2610 = vpop.f32.mrb[0].mxu0
      %v2611 = vadd.f32 %v2045, %v2610
      %v2612 = vpop.f32.mrb[0].mxu0
      %v2613 = vpop.f32.mrb[0].mxu0
      %v2614 = vadd.f32 %v2045, %v2613
      %v2615 = vpop.f32.mrb[0].mxu0
      %2616 = vmatprep.mubr.bf16.mxu0 0
      %2617 = vmatmul.mubr.bf16.gmra.mrb[0].mxu0 %v2193
      %v2618 = vpop.f32.mrb[0].mxu0
      %v2619 = vadd.f32 %v2045, %v2618
      %v2620 = vpop.f32.mrb[0].mxu0
      %v2621 = vpop.f32.mrb[0].mxu0
      %v2622 = vadd.f32 %v2045, %v2621
      %v2623 = vpop.f32.mrb[0].mxu0
      %2624 = vmatprep.mubr.bf16.mxu0 0
      %2625 = vmatmul.mubr.bf16.gmra.mrb[0].mxu0 %v2196
      %v2626 = vpop.f32.mrb[0].mxu0
      %v2627 = vadd.f32 %v2045, %v2626
      %v2628 = vpop.f32.mrb[0].mxu0
      %v2629 = vpop.f32.mrb[0].mxu0
      %v2630 = vadd.f32 %v2045, %v2629
      %v2631 = vpop.f32.mrb[0].mxu0
      %2632 = vmatprep.mubr.bf16.mxu0 0
      %2633 = vmatmul.mubr.bf16.gmra.mrb[0].mxu0 %v2199
      %v2634 = vpop.f32.mrb[0].mxu0
      %v2635 = vadd.f32 %v2045, %v2634
      %v2636 = vpop.f32.mrb[0].mxu0
      %v2637 = vpop.f32.mrb[0].mxu0
      %v2638 = vadd.f32 %v2045, %v2637
      %v2639 = vpop.f32.mrb[0].mxu0
      %2640 = vmatprep.mubr.bf16.mxu0 0
      %2641 = vmatmul.mubr.bf16.gmra.mrb[0].mxu0 %v2202
      %v2642 = vpop.f32.mrb[0].mxu0
      %v2643 = vadd.f32 %v2045, %v2642
      %v2644 = vpop.f32.mrb[0].mxu0
      %v2645 = vpop.f32.mrb[0].mxu0
      %v2646 = vadd.f32 %v2045, %v2645
      %v2647 = vpop.f32.mrb[0].mxu0
      %2648 = vmatprep.mubr.bf16.mxu0 0
      %2649 = vmatmul.mubr.bf16.gmra.mrb[0].mxu0 %v2205
      %v2650 = vpop.f32.mrb[0].mxu0
      %v2651 = vadd.f32 %v2045, %v2650
      %v2652 = vpop.f32.mrb[0].mxu0
      %v2653 = vpop.f32.mrb[0].mxu0
      %v2654 = vadd.f32 %v2045, %v2653
      %v2655 = vpop.f32.mrb[0].mxu0
      %2656 = vmatprep.mubr.bf16.mxu0 0
      %2657 = vmatmul.mubr.bf16.gmra.mrb[0].mxu0 %v2208
      %v2658 = vpop.f32.mrb[0].mxu0
      %v2659 = vadd.f32 %v2045, %v2658
      %v2660 = vpop.f32.mrb[0].mxu0
      %v2661 = vpop.f32.mrb[0].mxu0
      %v2662 = vadd.f32 %v2045, %v2661
      %v2663 = vpop.f32.mrb[0].mxu0
      %2664 = vmatprep.mubr.bf16.mxu0 0
      %2665 = vmatmul.mubr.bf16.gmra.mrb[0].mxu0 %v2211
      %v2666 = vpop.f32.mrb[0].mxu0
      %v2667 = vadd.f32 %v2045, %v2666
      %v2668 = vpop.f32.mrb[0].mxu0
      %v2669 = vpop.f32.mrb[0].mxu0
      %v2670 = vadd.f32 %v2045, %v2669
      %v2671 = vpop.f32.mrb[0].mxu0
      %2672 = vmatprep.mubr.bf16.mxu0 0
      %2673 = vmatmul.mubr.bf16.gmra.mrb[0].mxu0 %v2214
      %v2674 = vpop.f32.mrb[0].mxu0
      %v2675 = vadd.f32 %v2045, %v2674
      %v2676 = vpop.f32.mrb[0].mxu0
      %v2677 = vpop.f32.mrb[0].mxu0
      %v2678 = vadd.f32 %v2045, %v2677
      %v2679 = vpop.f32.mrb[0].mxu0
      %2680 = vmatprep.mubr.bf16.mxu0 0
      %2681 = vmatmul.mubr.bf16.gmra.mrb[0].mxu0 %v2217
      %v2682 = vpop.f32.mrb[0].mxu0
      %v2683 = vadd.f32 %v2045, %v2682
      %v2684 = vpop.f32.mrb[0].mxu0
      %v2685 = vpop.f32.mrb[0].mxu0
      %v2686 = vadd.f32 %v2045, %v2685
      %v2687 = vpop.f32.mrb[0].mxu0
      %2688 = vmatprep.mubr.bf16.mxu0 0
      %2689 = vmatmul.mubr.bf16.gmra.mrb[0].mxu0 %v2220
      %v2690 = vpop.f32.mrb[0].mxu0
      %v2691 = vadd.f32 %v2045, %v2690
      %v2692 = vpop.f32.mrb[0].mxu0
      %v2693 = vpop.f32.mrb[0].mxu0
      %v2694 = vadd.f32 %v2045, %v2693
      %v2695 = vpop.f32.mrb[0].mxu0
      %2696 = vmatprep.mubr.bf16.mxu0 0
      %2697 = vmatmul.mubr.bf16.gmra.mrb[0].mxu0 %v2223
      %v2698 = vpop.f32.mrb[0].mxu0
      %v2699 = vadd.f32 %v2045, %v2698
      %v2700 = vpop.f32.mrb[0].mxu0
      %v2701 = vpop.f32.mrb[0].mxu0
      %v2702 = vadd.f32 %v2045, %v2701
      %v2703 = vpop.f32.mrb[0].mxu0
      %2704 = vmatprep.mubr.bf16.mxu0 0
      %2705 = vmatmul.mubr.bf16.gmra.mrb[0].mxu0 %v2226
      %v2706 = vpop.f32.mrb[0].mxu0
      %v2707 = vadd.f32 %v2045, %v2706
      %v2708 = vpop.f32.mrb[0].mxu0
      %v2709 = vpop.f32.mrb[0].mxu0
      %v2710 = vadd.f32 %v2045, %v2709
      %v2711 = vpop.f32.mrb[0].mxu0
      %2712 = vmatprep.mubr.bf16.mxu0 0
      %2713 = vmatmul.mubr.bf16.gmra.mrb[0].mxu0 %v2229
      %v2714 = vpop.f32.mrb[0].mxu0
      %v2715 = vadd.f32 %v2045, %v2714
      %v2716 = vpop.f32.mrb[0].mxu0
      %v2717 = vpop.f32.mrb[0].mxu0
      %v2718 = vadd.f32 %v2045, %v2717
      %v2719 = vpop.f32.mrb[0].mxu0
      %2720 = vmatprep.mubr.bf16.mxu0 0
      %2721 = vmatmul.mubr.bf16.gmra.mrb[0].mxu0 %v2232
      %v2722 = vpop.f32.mrb[0].mxu0
      %v2723 = vadd.f32 %v2045, %v2722
      %v2724 = vpop.f32.mrb[0].mxu0
      %v2725 = vpop.f32.mrb[0].mxu0
      %v2726 = vadd.f32 %v2045, %v2725
      %v2727 = vpop.f32.mrb[0].mxu0
      %2728 = vmatprep.mubr.bf16.mxu0 0
      %2729 = vmatmul.mubr.bf16.gmra.mrb[0].mxu0 %v2235
      %v2730 = vpop.f32.mrb[0].mxu0
      %v2731 = vadd.f32 %v2045, %v2730
      %v2732 = vpop.f32.mrb[0].mxu0
      %v2733 = vpop.f32.mrb[0].mxu0
      %v2734 = vadd.f32 %v2045, %v2733
      %v2735 = vpop.f32.mrb[0].mxu0
      %2736 = vmatprep.mubr.bf16.mxu0 0
      %2737 = vmatmul.mubr.bf16.gmra.mrb[0].mxu0 %v2238
      %v2738 = vpop.f32.mrb[0].mxu0
      %v2739 = vadd.f32 %v2045, %v2738
      %v2740 = vpop.f32.mrb[0].mxu0
      %v2741 = vpop.f32.mrb[0].mxu0
      %v2742 = vadd.f32 %v2045, %v2741
      %v2743 = vpop.f32.mrb[0].mxu0
      %2744 = vmatprep.mubr.bf16.mxu0 0
      %2745 = vmatmul.mubr.bf16.gmra.mrb[0].mxu0 %v2241
      %v2746 = vpop.f32.mrb[0].mxu0
      %v2747 = vadd.f32 %v2045, %v2746
      %v2748 = vpop.f32.mrb[0].mxu0
      %v2749 = vpop.f32.mrb[0].mxu0
      %v2750 = vadd.f32 %v2045, %v2749
      %v2751 = vpop.f32.mrb[0].mxu0
      %2752 = vmatprep.mubr.bf16.mxu0 0
      %2753 = vmatmul.mubr.bf16.gmra.mrb[0].mxu0 %v2244
      %v2754 = vpop.f32.mrb[0].mxu0
      %v2755 = vadd.f32 %v2045, %v2754
      %v2756 = vpop.f32.mrb[0].mxu0
      %v2757 = vpop.f32.mrb[0].mxu0
      %v2758 = vadd.f32 %v2045, %v2757
      %v2759 = vpop.f32.mrb[0].mxu0
      %2760 = vmatprep.mubr.bf16.mxu0 0
      %2761 = vmatmul.mubr.bf16.gmra.mrb[0].mxu0 %v2247
      %v2762 = vpop.f32.mrb[0].mxu0
      %v2763 = vadd.f32 %v2045, %v2762
      %v2764 = vpop.f32.mrb[0].mxu0
      %v2765 = vpop.f32.mrb[0].mxu0
      %v2766 = vadd.f32 %v2045, %v2765
      %v2767 = vpop.f32.mrb[0].mxu0
      %2768 = vmatprep.mubr.bf16.mxu0 0
      %2769 = vmatmul.mubr.bf16.gmra.mrb[0].mxu0 %v2250
      %v2770 = vpop.f32.mrb[0].mxu0
      %v2771 = vadd.f32 %v2045, %v2770
      %v2772 = vpop.f32.mrb[0].mxu0
      %v2773 = vpop.f32.mrb[0].mxu0
      %v2774 = vadd.f32 %v2045, %v2773
      %v2775 = vpop.f32.mrb[0].mxu0
      %2776 = vmatprep.mubr.bf16.mxu0 0
      %2777 = vmatmul.mubr.bf16.gmra.mrb[0].mxu0 %v2253
      %v2778 = vpop.f32.mrb[0].mxu0
      %v2779 = vadd.f32 %v2045, %v2778
      %v2780 = vpop.f32.mrb[0].mxu0
      %v2781 = vpop.f32.mrb[0].mxu0
      %v2782 = vadd.f32 %v2045, %v2781
      %v2783 = vpop.f32.mrb[0].mxu0
      %2784 = vmatprep.mubr.bf16.mxu0 0
      %2785 = vmatmul.mubr.bf16.gmra.mrb[0].mxu0 %v2256
      %v2786 = vpop.f32.mrb[0].mxu0
      %v2787 = vadd.f32 %v2045, %v2786
      %v2788 = vpop.f32.mrb[0].mxu0
      %v2789 = vpop.f32.mrb[0].mxu0
      %v2790 = vadd.f32 %v2045, %v2789
      %v2791 = vpop.f32.mrb[0].mxu0
      %2792 = vmatprep.mubr.bf16.mxu0 0
      %2793 = vmatmul.mubr.bf16.gmra.mrb[0].mxu0 %v2259
      %v2794 = vpop.f32.mrb[0].mxu0
      %v2795 = vadd.f32 %v2045, %v2794
      %v2796 = vpop.f32.mrb[0].mxu0
      %v2797 = vpop.f32.mrb[0].mxu0
      %v2798 = vadd.f32 %v2045, %v2797
      %v2799 = vpop.f32.mrb[0].mxu0
      %2800 = vmatprep.mubr.bf16.mxu0 0
      %2801 = vmatmul.mubr.bf16.gmra.mrb[0].mxu0 %v2262
      %v2802 = vpop.f32.mrb[0].mxu0
      %v2803 = vadd.f32 %v2045, %v2802
      %v2804 = vpop.f32.mrb[0].mxu0
      %v2805 = vpop.f32.mrb[0].mxu0
      %v2806 = vadd.f32 %v2045, %v2805
      %v2807 = vpop.f32.mrb[0].mxu0
      %2808 = vdwg.mxu0
      %v2809 = vmax.f32 %v2299, 0.0
      %v2810 = vmax.f32 %v2302, 0.0
      %v2811 = vmax.f32 %v2307, 0.0
      %v2812 = vmax.f32 %v2310, 0.0
      %v2813 = vmax.f32 %v2315, 0.0
      %v2814 = vmax.f32 %v2318, 0.0
      %v2815 = vmax.f32 %v2323, 0.0
      %v2816 = vmax.f32 %v2326, 0.0
      %v2817 = vmax.f32 %v2331, 0.0
      %v2818 = vmax.f32 %v2334, 0.0
      %v2819 = vmax.f32 %v2339, 0.0
      %v2820 = vmax.f32 %v2342, 0.0
      %v2821 = vmax.f32 %v2347, 0.0
      %v2822 = vmax.f32 %v2350, 0.0
      %v2823 = vmax.f32 %v2355, 0.0
      %v2824 = vmax.f32 %v2358, 0.0
      %v2825 = vmax.f32 %v2363, 0.0
      %v2826 = vmax.f32 %v2366, 0.0
      %v2827 = vmax.f32 %v2371, 0.0
      %v2828 = vmax.f32 %v2374, 0.0
      %v2829 = vmax.f32 %v2379, 0.0
      %v2830 = vmax.f32 %v2382, 0.0
      %v2831 = vmax.f32 %v2387, 0.0
      %v2832 = vmax.f32 %v2390, 0.0
      %v2833 = vmax.f32 %v2395, 0.0
      %v2834 = vmax.f32 %v2398, 0.0
      %v2835 = vmax.f32 %v2403, 0.0
      %v2836 = vmax.f32 %v2406, 0.0
      %v2837 = vmax.f32 %v2411, 0.0
      %v2838 = vmax.f32 %v2414, 0.0
      %v2839 = vmax.f32 %v2419, 0.0
      %v2840 = vmax.f32 %v2422, 0.0
      %v2841 = vmax.f32 %v2427, 0.0
      %v2842 = vmax.f32 %v2430, 0.0
      %v2843 = vmax.f32 %v2435, 0.0
      %v2844 = vmax.f32 %v2438, 0.0
      %v2845 = vmax.f32 %v2443, 0.0
      %v2846 = vmax.f32 %v2446, 0.0
      %v2847 = vmax.f32 %v2451, 0.0
      %v2848 = vmax.f32 %v2454, 0.0
      %v2849 = vmax.f32 %v2459, 0.0
      %v2850 = vmax.f32 %v2462, 0.0
      %v2851 = vmax.f32 %v2467, 0.0
      %v2852 = vmax.f32 %v2470, 0.0
      %v2853 = vmax.f32 %v2475, 0.0
      %v2854 = vmax.f32 %v2478, 0.0
      %v2855 = vmax.f32 %v2483, 0.0
      %v2856 = vmax.f32 %v2486, 0.0
      %v2857 = vmax.f32 %v2491, 0.0
      %v2858 = vmax.f32 %v2494, 0.0
      %v2859 = vmax.f32 %v2499, 0.0
      %v2860 = vmax.f32 %v2502, 0.0
      %v2861 = vmax.f32 %v2507, 0.0
      %v2862 = vmax.f32 %v2510, 0.0
      %v2863 = vmax.f32 %v2515, 0.0
      %v2864 = vmax.f32 %v2518, 0.0
      %v2865 = vmax.f32 %v2523, 0.0
      %v2866 = vmax.f32 %v2526, 0.0
      %v2867 = vmax.f32 %v2531, 0.0
      %v2868 = vmax.f32 %v2534, 0.0
      %v2869 = vmax.f32 %v2539, 0.0
      %v2870 = vmax.f32 %v2542, 0.0
      %v2871 = vmax.f32 %v2547, 0.0
      %v2872 = vmax.f32 %v2550, 0.0
      %v2873 = vmax.f32 %v2555, 0.0
      %v2874 = vmax.f32 %v2558, 0.0
      %v2875 = vmax.f32 %v2563, 0.0
      %v2876 = vmax.f32 %v2566, 0.0
      %v2877 = vmax.f32 %v2571, 0.0
      %v2878 = vmax.f32 %v2574, 0.0
      %v2879 = vmax.f32 %v2579, 0.0
      %v2880 = vmax.f32 %v2582, 0.0
      %v2881 = vmax.f32 %v2587, 0.0
      %v2882 = vmax.f32 %v2590, 0.0
      %v2883 = vmax.f32 %v2595, 0.0
      %v2884 = vmax.f32 %v2598, 0.0
      %v2885 = vmax.f32 %v2603, 0.0
      %v2886 = vmax.f32 %v2606, 0.0
      %v2887 = vmax.f32 %v2611, 0.0
      %v2888 = vmax.f32 %v2614, 0.0
      %v2889 = vmax.f32 %v2619, 0.0
      %v2890 = vmax.f32 %v2622, 0.0
      %v2891 = vmax.f32 %v2627, 0.0
      %v2892 = vmax.f32 %v2630, 0.0
      %v2893 = vmax.f32 %v2635, 0.0
      %v2894 = vmax.f32 %v2638, 0.0
      %v2895 = vmax.f32 %v2643, 0.0
      %v2896 = vmax.f32 %v2646, 0.0
      %v2897 = vmax.f32 %v2651, 0.0
      %v2898 = vmax.f32 %v2654, 0.0
      %v2899 = vmax.f32 %v2659, 0.0
      %v2900 = vmax.f32 %v2662, 0.0
      %v2901 = vmax.f32 %v2667, 0.0
      %v2902 = vmax.f32 %v2670, 0.0
      %v2903 = vmax.f32 %v2675, 0.0
      %v2904 = vmax.f32 %v2678, 0.0
      %v2905 = vmax.f32 %v2683, 0.0
      %v2906 = vmax.f32 %v2686, 0.0
      %v2907 = vmax.f32 %v2691, 0.0
      %v2908 = vmax.f32 %v2694, 0.0
      %v2909 = vmax.f32 %v2699, 0.0
      %v2910 = vmax.f32 %v2702, 0.0
      %v2911 = vmax.f32 %v2707, 0.0
      %v2912 = vmax.f32 %v2710, 0.0
      %v2913 = vmax.f32 %v2715, 0.0
      %v2914 = vmax.f32 %v2718, 0.0
      %v2915 = vmax.f32 %v2723, 0.0
      %v2916 = vmax.f32 %v2726, 0.0
      %v2917 = vmax.f32 %v2731, 0.0
      %v2918 = vmax.f32 %v2734, 0.0
      %v2919 = vmax.f32 %v2739, 0.0
      %v2920 = vmax.f32 %v2742, 0.0
      %v2921 = vmax.f32 %v2747, 0.0
      %v2922 = vmax.f32 %v2750, 0.0
      %v2923 = vmax.f32 %v2755, 0.0
      %v2924 = vmax.f32 %v2758, 0.0
      %v2925 = vmax.f32 %v2763, 0.0
      %v2926 = vmax.f32 %v2766, 0.0
      %v2927 = vmax.f32 %v2771, 0.0
      %v2928 = vmax.f32 %v2774, 0.0
      %v2929 = vmax.f32 %v2779, 0.0
      %v2930 = vmax.f32 %v2782, 0.0
      %v2931 = vmax.f32 %v2787, 0.0
      %v2932 = vmax.f32 %v2790, 0.0
      %v2933 = vmax.f32 %v2795, 0.0
      %v2934 = vmax.f32 %v2798, 0.0
      %v2935 = vmax.f32 %v2803, 0.0
      %v2936 = vmax.f32 %v2806, 0.0
      %v2937 = vpack.c.bf16 %v2810, %v2809
      %v2938 = vpack.c.bf16 %v2812, %v2811
      %v2939 = vpack.c.bf16 %v2814, %v2813
      %v2940 = vpack.c.bf16 %v2816, %v2815
      %v2941 = vpack.c.bf16 %v2818, %v2817
      %v2942 = vpack.c.bf16 %v2820, %v2819
      %v2943 = vpack.c.bf16 %v2822, %v2821
      %v2944 = vpack.c.bf16 %v2824, %v2823
      %v2945 = vpack.c.bf16 %v2826, %v2825
      %v2946 = vpack.c.bf16 %v2828, %v2827
      %v2947 = vpack.c.bf16 %v2830, %v2829
      %v2948 = vpack.c.bf16 %v2832, %v2831
      %v2949 = vpack.c.bf16 %v2834, %v2833
      %v2950 = vpack.c.bf16 %v2836, %v2835
      %v2951 = vpack.c.bf16 %v2838, %v2837
      %v2952 = vpack.c.bf16 %v2840, %v2839
      %v2953 = vpack.c.bf16 %v2842, %v2841
      %v2954 = vpack.c.bf16 %v2844, %v2843
      %v2955 = vpack.c.bf16 %v2846, %v2845
      %v2956 = vpack.c.bf16 %v2848, %v2847
      %v2957 = vpack.c.bf16 %v2850, %v2849
      %v2958 = vpack.c.bf16 %v2852, %v2851
      %v2959 = vpack.c.bf16 %v2854, %v2853
      %v2960 = vpack.c.bf16 %v2856, %v2855
      %v2961 = vpack.c.bf16 %v2858, %v2857
      %v2962 = vpack.c.bf16 %v2860, %v2859
      %v2963 = vpack.c.bf16 %v2862, %v2861
      %v2964 = vpack.c.bf16 %v2864, %v2863
      %v2965 = vpack.c.bf16 %v2866, %v2865
      %v2966 = vpack.c.bf16 %v2868, %v2867
      %v2967 = vpack.c.bf16 %v2870, %v2869
      %v2968 = vpack.c.bf16 %v2872, %v2871
      %v2969 = vpack.c.bf16 %v2874, %v2873
      %v2970 = vpack.c.bf16 %v2876, %v2875
      %v2971 = vpack.c.bf16 %v2878, %v2877
      %v2972 = vpack.c.bf16 %v2880, %v2879
      %v2973 = vpack.c.bf16 %v2882, %v2881
      %v2974 = vpack.c.bf16 %v2884, %v2883
      %v2975 = vpack.c.bf16 %v2886, %v2885
      %v2976 = vpack.c.bf16 %v2888, %v2887
      %v2977 = vpack.c.bf16 %v2890, %v2889
      %v2978 = vpack.c.bf16 %v2892, %v2891
      %v2979 = vpack.c.bf16 %v2894, %v2893
      %v2980 = vpack.c.bf16 %v2896, %v2895
      %v2981 = vpack.c.bf16 %v2898, %v2897
      %v2982 = vpack.c.bf16 %v2900, %v2899
      %v2983 = vpack.c.bf16 %v2902, %v2901
      %v2984 = vpack.c.bf16 %v2904, %v2903
      %v2985 = vpack.c.bf16 %v2906, %v2905
      %v2986 = vpack.c.bf16 %v2908, %v2907
      %v2987 = vpack.c.bf16 %v2910, %v2909
      %v2988 = vpack.c.bf16 %v2912, %v2911
      %v2989 = vpack.c.bf16 %v2914, %v2913
      %v2990 = vpack.c.bf16 %v2916, %v2915
      %v2991 = vpack.c.bf16 %v2918, %v2917
      %v2992 = vpack.c.bf16 %v2920, %v2919
      %v2993 = vpack.c.bf16 %v2922, %v2921
      %v2994 = vpack.c.bf16 %v2924, %v2923
      %v2995 = vpack.c.bf16 %v2926, %v2925
      %v2996 = vpack.c.bf16 %v2928, %v2927
      %v2997 = vpack.c.bf16 %v2930, %v2929
      %v2998 = vpack.c.bf16 %v2932, %v2931
      %v2999 = vpack.c.bf16 %v2934, %v2933
      %v3000 = vpack.c.bf16 %v2936, %v2935
      %v3001 = vld [vmem:[%s5] sm:$0xff]
      %v3002 = vld [vmem:[%s5 + $0x8] sm:$0xff]
      %v3003 = vld [vmem:[%s5 + $0x10] sm:$0xff]
      %v3004 = vld [vmem:[%s5 + $0x18] sm:$0xff]
      %v3005 = vld [vmem:[%s5 + $0x20] sm:$0xff]
      %v3006 = vld [vmem:[%s5 + $0x28] sm:$0xff]
      %v3007 = vld [vmem:[%s5 + $0x30] sm:$0xff]
      %v3008 = vld [vmem:[%s5 + $0x38] sm:$0xff]
      %v3009 = vld [vmem:[%s5 + $0x40] sm:$0xff]
      %v3010 = vld [vmem:[%s5 + $0x48] sm:$0xff]
      %v3011 = vld [vmem:[%s5 + $0x50] sm:$0xff]
      %v3012 = vld [vmem:[%s5 + $0x58] sm:$0xff]
      %v3013 = vld [vmem:[%s5 + $0x60] sm:$0xff]
      %v3014 = vld [vmem:[%s5 + $0x68] sm:$0xff]
      %v3015 = vld [vmem:[%s5 + $0x70] sm:$0xff]
      %v3016 = vld [vmem:[%s5 + $0x78] sm:$0xff]
      %v3017 = vld [vmem:[%s5 + $0x80] sm:$0xff]
      %v3018 = vld [vmem:[%s5 + $0x88] sm:$0xff]
      %v3019 = vld [vmem:[%s5 + $0x90] sm:$0xff]
      %v3020 = vld [vmem:[%s5 + $0x98] sm:$0xff]
      %v3021 = vld [vmem:[%s5 + $0xa0] sm:$0xff]
      %v3022 = vld [vmem:[%s5 + $0xa8] sm:$0xff]
      %v3023 = vld [vmem:[%s5 + $0xb0] sm:$0xff]
      %v3024 = vld [vmem:[%s5 + $0xb8] sm:$0xff]
      %v3025 = vld [vmem:[%s5 + $0xc0] sm:$0xff]
      %v3026 = vld [vmem:[%s5 + $0xc8] sm:$0xff]
      %v3027 = vld [vmem:[%s5 + $0xd0] sm:$0xff]
      %v3028 = vld [vmem:[%s5 + $0xd8] sm:$0xff]
      %v3029 = vld [vmem:[%s5 + $0xe0] sm:$0xff]
      %v3030 = vld [vmem:[%s5 + $0xe8] sm:$0xff]
      %v3031 = vld [vmem:[%s5 + $0xf0] sm:$0xff]
      %v3032 = vld [vmem:[%s5 + $0xf8] sm:$0xff]
      %v3033 = vld [vmem:[%s5 + $0x100] sm:$0xff]
      %v3034 = vld [vmem:[%s5 + $0x108] sm:$0xff]
      %v3035 = vld [vmem:[%s5 + $0x110] sm:$0xff]
      %v3036 = vld [vmem:[%s5 + $0x118] sm:$0xff]
      %v3037 = vld [vmem:[%s5 + $0x120] sm:$0xff]
      %v3038 = vld [vmem:[%s5 + $0x128] sm:$0xff]
      %v3039 = vld [vmem:[%s5 + $0x130] sm:$0xff]
      %v3040 = vld [vmem:[%s5 + $0x138] sm:$0xff]
      %v3041 = vld [vmem:[%s5 + $0x140] sm:$0xff]
      %v3042 = vld [vmem:[%s5 + $0x148] sm:$0xff]
      %v3043 = vld [vmem:[%s5 + $0x150] sm:$0xff]
      %v3044 = vld [vmem:[%s5 + $0x158] sm:$0xff]
      %v3045 = vld [vmem:[%s5 + $0x160] sm:$0xff]
      %v3046 = vld [vmem:[%s5 + $0x168] sm:$0xff]
      %v3047 = vld [vmem:[%s5 + $0x170] sm:$0xff]
      %v3048 = vld [vmem:[%s5 + $0x178] sm:$0xff]
      %v3049 = vld [vmem:[%s5 + $0x180] sm:$0xff]
      %v3050 = vld [vmem:[%s5 + $0x188] sm:$0xff]
      %v3051 = vld [vmem:[%s5 + $0x190] sm:$0xff]
      %v3052 = vld [vmem:[%s5 + $0x198] sm:$0xff]
      %v3053 = vld [vmem:[%s5 + $0x1a0] sm:$0xff]
      %v3054 = vld [vmem:[%s5 + $0x1a8] sm:$0xff]
      %v3055 = vld [vmem:[%s5 + $0x1b0] sm:$0xff]
      %v3056 = vld [vmem:[%s5 + $0x1b8] sm:$0xff]
      %v3057 = vld [vmem:[%s5 + $0x1c0] sm:$0xff]
      %v3058 = vld [vmem:[%s5 + $0x1c8] sm:$0xff]
      %v3059 = vld [vmem:[%s5 + $0x1d0] sm:$0xff]
      %v3060 = vld [vmem:[%s5 + $0x1d8] sm:$0xff]
      %v3061 = vld [vmem:[%s5 + $0x1e0] sm:$0xff]
      %v3062 = vld [vmem:[%s5 + $0x1e8] sm:$0xff]
      %v3063 = vld [vmem:[%s5 + $0x1f0] sm:$0xff]
      %v3064 = vld [vmem:[%s5 + $0x1f8] sm:$0xff]
      %v3065 = vld [vmem:[%s6] sm:$0xff]
      %v3067 = vlaneseq
      %v3068 = vshrl.u32 %v3067, 7
      %v3069 = vsub.s32 0, %v3068
      %v3070 = vrot.slane %v3065, %v3069
      %v3071 = vlaneseq
      %v3072 = vshrl.u32 %v3071, 7
      %v3073 = vsub.s32 1, %v3072
      %v3074 = vrot.slane %v3065, %v3073
      %v3075 = vlaneseq
      %v3076 = vshrl.u32 %v3075, 7
      %v3077 = vsub.s32 2, %v3076
      %v3078 = vrot.slane %v3065, %v3077
      %v3079 = vlaneseq
      %v3080 = vshrl.u32 %v3079, 7
      %v3081 = vsub.s32 3, %v3080
      %v3082 = vrot.slane %v3065, %v3081
      %v3083 = vlaneseq
      %v3084 = vshrl.u32 %v3083, 7
      %v3085 = vsub.s32 4, %v3084
      %v3086 = vrot.slane %v3065, %v3085
      %v3087 = vlaneseq
      %v3088 = vshrl.u32 %v3087, 7
      %v3089 = vsub.s32 5, %v3088
      %v3090 = vrot.slane %v3065, %v3089
      %v3091 = vlaneseq
      %v3092 = vshrl.u32 %v3091, 7
      %v3093 = vsub.s32 6, %v3092
      %v3094 = vrot.slane %v3065, %v3093
      %v3095 = vlaneseq
      %v3096 = vshrl.u32 %v3095, 7
      %v3097 = vsub.s32 7, %v3096
      %v3098 = vrot.slane %v3065, %v3097
      %v3171 = vunpack.c.l.b16 %v3001
      %v3172 = vunpack.c.h.b16 %v3001
      %v3173 = vunpack.c.l.b16 %v3002
      %v3174 = vunpack.c.h.b16 %v3002
      %v3175 = vunpack.c.l.b16 %v3003
      %v3176 = vunpack.c.h.b16 %v3003
      %v3177 = vunpack.c.l.b16 %v3004
      %v3178 = vunpack.c.h.b16 %v3004
      %v3179 = vunpack.c.l.b16 %v3005
      %v3180 = vunpack.c.h.b16 %v3005
      %v3181 = vunpack.c.l.b16 %v3006
      %v3182 = vunpack.c.h.b16 %v3006
      %v3183 = vunpack.c.l.b16 %v3007
      %v3184 = vunpack.c.h.b16 %v3007
      %v3185 = vunpack.c.l.b16 %v3008
      %v3186 = vunpack.c.h.b16 %v3008
      %v3187 = vunpack.c.l.b16 %v3009
      %v3188 = vunpack.c.h.b16 %v3009
      %v3189 = vunpack.c.l.b16 %v3010
      %v3190 = vunpack.c.h.b16 %v3010
      %v3191 = vunpack.c.l.b16 %v3011
      %v3192 = vunpack.c.h.b16 %v3011
      %v3193 = vunpack.c.l.b16 %v3012
      %v3194 = vunpack.c.h.b16 %v3012
      %v3195 = vunpack.c.l.b16 %v3013
      %v3196 = vunpack.c.h.b16 %v3013
      %v3197 = vunpack.c.l.b16 %v3014
      %v3198 = vunpack.c.h.b16 %v3014
      %v3199 = vunpack.c.l.b16 %v3015
      %v3200 = vunpack.c.h.b16 %v3015
      %v3201 = vunpack.c.l.b16 %v3016
      %v3202 = vunpack.c.h.b16 %v3016
      %v3203 = vunpack.c.l.b16 %v3017
      %v3204 = vunpack.c.h.b16 %v3017
      %v3205 = vunpack.c.l.b16 %v3018
      %v3206 = vunpack.c.h.b16 %v3018
      %v3207 = vunpack.c.l.b16 %v3019
      %v3208 = vunpack.c.h.b16 %v3019
      %v3209 = vunpack.c.l.b16 %v3020
      %v3210 = vunpack.c.h.b16 %v3020
      %v3211 = vunpack.c.l.b16 %v3021
      %v3212 = vunpack.c.h.b16 %v3021
      %v3213 = vunpack.c.l.b16 %v3022
      %v3214 = vunpack.c.h.b16 %v3022
      %v3215 = vunpack.c.l.b16 %v3023
      %v3216 = vunpack.c.h.b16 %v3023
      %v3217 = vunpack.c.l.b16 %v3024
      %v3218 = vunpack.c.h.b16 %v3024
      %v3219 = vunpack.c.l.b16 %v3025
      %v3220 = vunpack.c.h.b16 %v3025
      %v3221 = vunpack.c.l.b16 %v3026
      %v3222 = vunpack.c.h.b16 %v3026
      %v3223 = vunpack.c.l.b16 %v3027
      %v3224 = vunpack.c.h.b16 %v3027
      %v3225 = vunpack.c.l.b16 %v3028
      %v3226 = vunpack.c.h.b16 %v3028
      %v3227 = vunpack.c.l.b16 %v3029
      %v3228 = vunpack.c.h.b16 %v3029
      %v3229 = vunpack.c.l.b16 %v3030
      %v3230 = vunpack.c.h.b16 %v3030
      %v3231 = vunpack.c.l.b16 %v3031
      %v3232 = vunpack.c.h.b16 %v3031
      %v3233 = vunpack.c.l.b16 %v3032
      %v3234 = vunpack.c.h.b16 %v3032
      %v3235 = vunpack.c.l.b16 %v3033
      %v3236 = vunpack.c.h.b16 %v3033
      %v3237 = vunpack.c.l.b16 %v3034
      %v3238 = vunpack.c.h.b16 %v3034
      %v3239 = vunpack.c.l.b16 %v3035
      %v3240 = vunpack.c.h.b16 %v3035
      %v3241 = vunpack.c.l.b16 %v3036
      %v3242 = vunpack.c.h.b16 %v3036
      %v3243 = vunpack.c.l.b16 %v3037
      %v3244 = vunpack.c.h.b16 %v3037
      %v3245 = vunpack.c.l.b16 %v3038
      %v3246 = vunpack.c.h.b16 %v3038
      %v3247 = vunpack.c.l.b16 %v3039
      %v3248 = vunpack.c.h.b16 %v3039
      %v3249 = vunpack.c.l.b16 %v3040
      %v3250 = vunpack.c.h.b16 %v3040
      %v3251 = vunpack.c.l.b16 %v3041
      %v3252 = vunpack.c.h.b16 %v3041
      %v3253 = vunpack.c.l.b16 %v3042
      %v3254 = vunpack.c.h.b16 %v3042
      %v3255 = vunpack.c.l.b16 %v3043
      %v3256 = vunpack.c.h.b16 %v3043
      %v3257 = vunpack.c.l.b16 %v3044
      %v3258 = vunpack.c.h.b16 %v3044
      %v3259 = vunpack.c.l.b16 %v3045
      %v3260 = vunpack.c.h.b16 %v3045
      %v3261 = vunpack.c.l.b16 %v3046
      %v3262 = vunpack.c.h.b16 %v3046
      %v3263 = vunpack.c.l.b16 %v3047
      %v3264 = vunpack.c.h.b16 %v3047
      %v3265 = vunpack.c.l.b16 %v3048
      %v3266 = vunpack.c.h.b16 %v3048
      %v3267 = vunpack.c.l.b16 %v3049
      %v3268 = vunpack.c.h.b16 %v3049
      %v3269 = vunpack.c.l.b16 %v3050
      %v3270 = vunpack.c.h.b16 %v3050
      %v3271 = vunpack.c.l.b16 %v3051
      %v3272 = vunpack.c.h.b16 %v3051
      %v3273 = vunpack.c.l.b16 %v3052
      %v3274 = vunpack.c.h.b16 %v3052
      %v3275 = vunpack.c.l.b16 %v3053
      %v3276 = vunpack.c.h.b16 %v3053
      %v3277 = vunpack.c.l.b16 %v3054
      %v3278 = vunpack.c.h.b16 %v3054
      %v3279 = vunpack.c.l.b16 %v3055
      %v3280 = vunpack.c.h.b16 %v3055
      %v3281 = vunpack.c.l.b16 %v3056
      %v3282 = vunpack.c.h.b16 %v3056
      %v3283 = vunpack.c.l.b16 %v3057
      %v3284 = vunpack.c.h.b16 %v3057
      %v3285 = vunpack.c.l.b16 %v3058
      %v3286 = vunpack.c.h.b16 %v3058
      %v3287 = vunpack.c.l.b16 %v3059
      %v3288 = vunpack.c.h.b16 %v3059
      %v3289 = vunpack.c.l.b16 %v3060
      %v3290 = vunpack.c.h.b16 %v3060
      %v3291 = vunpack.c.l.b16 %v3061
      %v3292 = vunpack.c.h.b16 %v3061
      %v3293 = vunpack.c.l.b16 %v3062
      %v3294 = vunpack.c.h.b16 %v3062
      %v3295 = vunpack.c.l.b16 %v3063
      %v3296 = vunpack.c.h.b16 %v3063
      %v3297 = vunpack.c.l.b16 %v3064
      %v3298 = vunpack.c.h.b16 %v3064
      %v3299 = vpack.c.b16 %v3179, %v3171
      %v3300 = vpack.c.b16 %v3180, %v3172
      %v3301 = vpack.c.b16 %v3181, %v3173
      %v3302 = vpack.c.b16 %v3182, %v3174
      %v3303 = vpack.c.b16 %v3183, %v3175
      %v3304 = vpack.c.b16 %v3184, %v3176
      %v3305 = vpack.c.b16 %v3185, %v3177
      %v3306 = vpack.c.b16 %v3186, %v3178
      %v3307 = vpack.c.b16 %v3195, %v3187
      %v3308 = vpack.c.b16 %v3196, %v3188
      %v3309 = vpack.c.b16 %v3197, %v3189
      %v3310 = vpack.c.b16 %v3198, %v3190
      %v3311 = vpack.c.b16 %v3199, %v3191
      %v3312 = vpack.c.b16 %v3200, %v3192
      %v3313 = vpack.c.b16 %v3201, %v3193
      %v3314 = vpack.c.b16 %v3202, %v3194
      %v3315 = vpack.c.b16 %v3211, %v3203
      %v3316 = vpack.c.b16 %v3212, %v3204
      %v3317 = vpack.c.b16 %v3213, %v3205
      %v3318 = vpack.c.b16 %v3214, %v3206
      %v3319 = vpack.c.b16 %v3215, %v3207
      %v3320 = vpack.c.b16 %v3216, %v3208
      %v3321 = vpack.c.b16 %v3217, %v3209
      %v3322 = vpack.c.b16 %v3218, %v3210
      %v3323 = vpack.c.b16 %v3227, %v3219
      %v3324 = vpack.c.b16 %v3228, %v3220
      %v3325 = vpack.c.b16 %v3229, %v3221
      %v3326 = vpack.c.b16 %v3230, %v3222
      %v3327 = vpack.c.b16 %v3231, %v3223
      %v3328 = vpack.c.b16 %v3232, %v3224
      %v3329 = vpack.c.b16 %v3233, %v3225
      %v3330 = vpack.c.b16 %v3234, %v3226
      %v3331 = vpack.c.b16 %v3243, %v3235
      %v3332 = vpack.c.b16 %v3244, %v3236
      %v3333 = vpack.c.b16 %v3245, %v3237
      %v3334 = vpack.c.b16 %v3246, %v3238
      %v3335 = vpack.c.b16 %v3247, %v3239
      %v3336 = vpack.c.b16 %v3248, %v3240
      %v3337 = vpack.c.b16 %v3249, %v3241
      %v3338 = vpack.c.b16 %v3250, %v3242
      %v3339 = vpack.c.b16 %v3259, %v3251
      %v3340 = vpack.c.b16 %v3260, %v3252
      %v3341 = vpack.c.b16 %v3261, %v3253
      %v3342 = vpack.c.b16 %v3262, %v3254
      %v3343 = vpack.c.b16 %v3263, %v3255
      %v3344 = vpack.c.b16 %v3264, %v3256
      %v3345 = vpack.c.b16 %v3265, %v3257
      %v3346 = vpack.c.b16 %v3266, %v3258
      %v3347 = vpack.c.b16 %v3275, %v3267
      %v3348 = vpack.c.b16 %v3276, %v3268
      %v3349 = vpack.c.b16 %v3277, %v3269
      %v3350 = vpack.c.b16 %v3278, %v3270
      %v3351 = vpack.c.b16 %v3279, %v3271
      %v3352 = vpack.c.b16 %v3280, %v3272
      %v3353 = vpack.c.b16 %v3281, %v3273
      %v3354 = vpack.c.b16 %v3282, %v3274
      %v3355 = vpack.c.b16 %v3291, %v3283
      %v3356 = vpack.c.b16 %v3292, %v3284
      %v3357 = vpack.c.b16 %v3293, %v3285
      %v3358 = vpack.c.b16 %v3294, %v3286
      %v3359 = vpack.c.b16 %v3295, %v3287
      %v3360 = vpack.c.b16 %v3296, %v3288
      %v3361 = vpack.c.b16 %v3297, %v3289
      %v3362 = vpack.c.b16 %v3298, %v3290
      %3427 = vmatprep.subr.bf16.mxu0 %v3300
      %3428 = vmatpush1.bf16.msra.mxu0 %v3299
      %3429 = vmatprep.subr.bf16.mxu0 %v3308
      %3430 = vmatpush1.bf16.msra.mxu0 %v3307
      %3431 = vmatprep.subr.bf16.mxu0 %v3316
      %3432 = vmatpush1.bf16.msra.mxu0 %v3315
      %3433 = vmatprep.subr.bf16.mxu0 %v3324
      %3434 = vmatpush1.bf16.msra.mxu0 %v3323
      %3435 = vmatprep.subr.bf16.mxu0 %v3332
      %3436 = vmatpush1.bf16.msra.mxu0 %v3331
      %3437 = vmatprep.subr.bf16.mxu0 %v3340
      %3438 = vmatpush1.bf16.msra.mxu0 %v3339
      %3439 = vmatprep.subr.bf16.mxu0 %v3348
      %3440 = vmatpush1.bf16.msra.mxu0 %v3347
      %3441 = vmatprep.subr.bf16.mxu0 %v3356
      %3442 = vmatpush1.bf16.msra.mxu0 %v3355
      %3443 = vmatprep.subr.bf16.mxu0 0
      %3444 = vmatpush1.bf16.msra.mxu0 0
      %3445 = vmatprep.subr.bf16.mxu0 0
      %3446 = vmatpush1.bf16.msra.mxu0 0
      %3447 = vmatprep.subr.bf16.mxu0 0
      %3448 = vmatpush1.bf16.msra.mxu0 0
      %3449 = vmatprep.subr.bf16.mxu0 0
      %3450 = vmatpush1.bf16.msra.mxu0 0
      %3451 = vmatprep.subr.bf16.mxu0 0
      %3452 = vmatpush1.bf16.msra.mxu0 0
      %3453 = vmatprep.subr.bf16.mxu0 0
      %3454 = vmatpush1.bf16.msra.mxu0 0
      %3455 = vmatprep.subr.bf16.mxu0 0
      %3456 = vmatpush1.bf16.msra.mxu0 0
      %3457 = vmatprep.subr.bf16.mxu0 0
      %3458 = vmatpush1.bf16.msra.mxu0 0
      %3459 = vmatprep.mubr.bf16.mxu0 0
      %3460 = vmatmul.mubr.bf16.gmra.mrb[0].mxu0 %v2937
      %v3461 = vpop.f32.mrb[0].mxu0
      %v3462 = vadd.f32 %v3070, %v3461
      %v3463 = vpop.f32.mrb[0].mxu0
      %v3464 = vadd.f32 %v3074, %v3463
      %v3465 = vpop.f32.mrb[0].mxu0
      %v3466 = vadd.f32 %v3070, %v3465
      %v3467 = vpop.f32.mrb[0].mxu0
      %v3468 = vadd.f32 %v3074, %v3467
      %3469 = vmatprep.mubr.bf16.mxu0 0
      %3470 = vmatmul.mubr.bf16.gmra.mrb[0].mxu0 %v2938
      %v3471 = vpop.f32.mrb[0].mxu0
      %v3472 = vadd.f32 %v3070, %v3471
      %v3473 = vpop.f32.mrb[0].mxu0
      %v3474 = vadd.f32 %v3074, %v3473
      %v3475 = vpop.f32.mrb[0].mxu0
      %v3476 = vadd.f32 %v3070, %v3475
      %v3477 = vpop.f32.mrb[0].mxu0
      %v3478 = vadd.f32 %v3074, %v3477
      %3479 = vmatprep.mubr.bf16.mxu0 0
      %3480 = vmatmul.mubr.bf16.gmra.mrb[0].mxu0 %v2939
      %v3481 = vpop.f32.mrb[0].mxu0
      %v3482 = vadd.f32 %v3070, %v3481
      %v3483 = vpop.f32.mrb[0].mxu0
      %v3484 = vadd.f32 %v3074, %v3483
      %v3485 = vpop.f32.mrb[0].mxu0
      %v3486 = vadd.f32 %v3070, %v3485
      %v3487 = vpop.f32.mrb[0].mxu0
      %v3488 = vadd.f32 %v3074, %v3487
      %3489 = vmatprep.mubr.bf16.mxu0 0
      %3490 = vmatmul.mubr.bf16.gmra.mrb[0].mxu0 %v2940
      %v3491 = vpop.f32.mrb[0].mxu0
      %v3492 = vadd.f32 %v3070, %v3491
      %v3493 = vpop.f32.mrb[0].mxu0
      %v3494 = vadd.f32 %v3074, %v3493
      %v3495 = vpop.f32.mrb[0].mxu0
      %v3496 = vadd.f32 %v3070, %v3495
      %v3497 = vpop.f32.mrb[0].mxu0
      %v3498 = vadd.f32 %v3074, %v3497
      %3499 = vmatprep.mubr.bf16.mxu0 0
      %3500 = vmatmul.mubr.bf16.gmra.mrb[0].mxu0 %v2941
      %v3501 = vpop.f32.mrb[0].mxu0
      %v3502 = vadd.f32 %v3070, %v3501
      %v3503 = vpop.f32.mrb[0].mxu0
      %v3504 = vadd.f32 %v3074, %v3503
      %v3505 = vpop.f32.mrb[0].mxu0
      %v3506 = vadd.f32 %v3070, %v3505
      %v3507 = vpop.f32.mrb[0].mxu0
      %v3508 = vadd.f32 %v3074, %v3507
      %3509 = vmatprep.mubr.bf16.mxu0 0
      %3510 = vmatmul.mubr.bf16.gmra.mrb[0].mxu0 %v2942
      %v3511 = vpop.f32.mrb[0].mxu0
      %v3512 = vadd.f32 %v3070, %v3511
      %v3513 = vpop.f32.mrb[0].mxu0
      %v3514 = vadd.f32 %v3074, %v3513
      %v3515 = vpop.f32.mrb[0].mxu0
      %v3516 = vadd.f32 %v3070, %v3515
      %v3517 = vpop.f32.mrb[0].mxu0
      %v3518 = vadd.f32 %v3074, %v3517
      %3519 = vmatprep.mubr.bf16.mxu0 0
      %3520 = vmatmul.mubr.bf16.gmra.mrb[0].mxu0 %v2943
      %v3521 = vpop.f32.mrb[0].mxu0
      %v3522 = vadd.f32 %v3070, %v3521
      %v3523 = vpop.f32.mrb[0].mxu0
      %v3524 = vadd.f32 %v3074, %v3523
      %v3525 = vpop.f32.mrb[0].mxu0
      %v3526 = vadd.f32 %v3070, %v3525
      %v3527 = vpop.f32.mrb[0].mxu0
      %v3528 = vadd.f32 %v3074, %v3527
      %3529 = vmatprep.mubr.bf16.mxu0 0
      %3530 = vmatmul.mubr.bf16.gmra.mrb[0].mxu0 %v2944
      %v3531 = vpop.f32.mrb[0].mxu0
      %v3532 = vadd.f32 %v3070, %v3531
      %v3533 = vpop.f32.mrb[0].mxu0
      %v3534 = vadd.f32 %v3074, %v3533
      %v3535 = vpop.f32.mrb[0].mxu0
      %v3536 = vadd.f32 %v3070, %v3535
      %v3537 = vpop.f32.mrb[0].mxu0
      %v3538 = vadd.f32 %v3074, %v3537
      %3539 = vmatprep.mubr.bf16.mxu0 0
      %3540 = vmatmul.mubr.bf16.gmra.mrb[0].mxu0 %v2945
      %v3541 = vpop.f32.mrb[0].mxu0
      %v3542 = vadd.f32 %v3070, %v3541
      %v3543 = vpop.f32.mrb[0].mxu0
      %v3544 = vadd.f32 %v3074, %v3543
      %v3545 = vpop.f32.mrb[0].mxu0
      %v3546 = vadd.f32 %v3070, %v3545
      %v3547 = vpop.f32.mrb[0].mxu0
      %v3548 = vadd.f32 %v3074, %v3547
      %3549 = vmatprep.mubr.bf16.mxu0 0
      %3550 = vmatmul.mubr.bf16.gmra.mrb[0].mxu0 %v2946
      %v3551 = vpop.f32.mrb[0].mxu0
      %v3552 = vadd.f32 %v3070, %v3551
      %v3553 = vpop.f32.mrb[0].mxu0
      %v3554 = vadd.f32 %v3074, %v3553
      %v3555 = vpop.f32.mrb[0].mxu0
      %v3556 = vadd.f32 %v3070, %v3555
      %v3557 = vpop.f32.mrb[0].mxu0
      %v3558 = vadd.f32 %v3074, %v3557
      %3559 = vmatprep.mubr.bf16.mxu0 0
      %3560 = vmatmul.mubr.bf16.gmra.mrb[0].mxu0 %v2947
      %v3561 = vpop.f32.mrb[0].mxu0
      %v3562 = vadd.f32 %v3070, %v3561
      %v3563 = vpop.f32.mrb[0].mxu0
      %v3564 = vadd.f32 %v3074, %v3563
      %v3565 = vpop.f32.mrb[0].mxu0
      %v3566 = vadd.f32 %v3070, %v3565
      %v3567 = vpop.f32.mrb[0].mxu0
      %v3568 = vadd.f32 %v3074, %v3567
      %3569 = vmatprep.mubr.bf16.mxu0 0
      %3570 = vmatmul.mubr.bf16.gmra.mrb[0].mxu0 %v2948
      %v3571 = vpop.f32.mrb[0].mxu0
      %v3572 = vadd.f32 %v3070, %v3571
      %v3573 = vpop.f32.mrb[0].mxu0
      %v3574 = vadd.f32 %v3074, %v3573
      %v3575 = vpop.f32.mrb[0].mxu0
      %v3576 = vadd.f32 %v3070, %v3575
      %v3577 = vpop.f32.mrb[0].mxu0
      %v3578 = vadd.f32 %v3074, %v3577
      %3579 = vmatprep.mubr.bf16.mxu0 0
      %3580 = vmatmul.mubr.bf16.gmra.mrb[0].mxu0 %v2949
      %v3581 = vpop.f32.mrb[0].mxu0
      %v3582 = vadd.f32 %v3070, %v3581
      %v3583 = vpop.f32.mrb[0].mxu0
      %v3584 = vadd.f32 %v3074, %v3583
      %v3585 = vpop.f32.mrb[0].mxu0
      %v3586 = vadd.f32 %v3070, %v3585
      %v3587 = vpop.f32.mrb[0].mxu0
      %v3588 = vadd.f32 %v3074, %v3587
      %3589 = vmatprep.mubr.bf16.mxu0 0
      %3590 = vmatmul.mubr.bf16.gmra.mrb[0].mxu0 %v2950
      %v3591 = vpop.f32.mrb[0].mxu0
      %v3592 = vadd.f32 %v3070, %v3591
      %v3593 = vpop.f32.mrb[0].mxu0
      %v3594 = vadd.f32 %v3074, %v3593
      %v3595 = vpop.f32.mrb[0].mxu0
      %v3596 = vadd.f32 %v3070, %v3595
      %v3597 = vpop.f32.mrb[0].mxu0
      %v3598 = vadd.f32 %v3074, %v3597
      %3599 = vmatprep.mubr.bf16.mxu0 0
      %3600 = vmatmul.mubr.bf16.gmra.mrb[0].mxu0 %v2951
      %v3601 = vpop.f32.mrb[0].mxu0
      %v3602 = vadd.f32 %v3070, %v3601
      %v3603 = vpop.f32.mrb[0].mxu0
      %v3604 = vadd.f32 %v3074, %v3603
      %v3605 = vpop.f32.mrb[0].mxu0
      %v3606 = vadd.f32 %v3070, %v3605
      %v3607 = vpop.f32.mrb[0].mxu0
      %v3608 = vadd.f32 %v3074, %v3607
      %3609 = vmatprep.mubr.bf16.mxu0 0
      %3610 = vmatmul.mubr.bf16.gmra.mrb[0].mxu0 %v2952
      %v3611 = vpop.f32.mrb[0].mxu0
      %v3612 = vadd.f32 %v3070, %v3611
      %v3613 = vpop.f32.mrb[0].mxu0
      %v3614 = vadd.f32 %v3074, %v3613
      %v3615 = vpop.f32.mrb[0].mxu0
      %v3616 = vadd.f32 %v3070, %v3615
      %v3617 = vpop.f32.mrb[0].mxu0
      %v3618 = vadd.f32 %v3074, %v3617
      %3619 = vmatprep.mubr.bf16.mxu0 0
      %3620 = vmatmul.mubr.bf16.gmra.mrb[0].mxu0 %v2953
      %v3621 = vpop.f32.mrb[0].mxu0
      %v3622 = vadd.f32 %v3070, %v3621
      %v3623 = vpop.f32.mrb[0].mxu0
      %v3624 = vadd.f32 %v3074, %v3623
      %v3625 = vpop.f32.mrb[0].mxu0
      %v3626 = vadd.f32 %v3070, %v3625
      %v3627 = vpop.f32.mrb[0].mxu0
      %v3628 = vadd.f32 %v3074, %v3627
      %3629 = vmatprep.mubr.bf16.mxu0 0
      %3630 = vmatmul.mubr.bf16.gmra.mrb[0].mxu0 %v2954
      %v3631 = vpop.f32.mrb[0].mxu0
      %v3632 = vadd.f32 %v3070, %v3631
      %v3633 = vpop.f32.mrb[0].mxu0
      %v3634 = vadd.f32 %v3074, %v3633
      %v3635 = vpop.f32.mrb[0].mxu0
      %v3636 = vadd.f32 %v3070, %v3635
      %v3637 = vpop.f32.mrb[0].mxu0
      %v3638 = vadd.f32 %v3074, %v3637
      %3639 = vmatprep.mubr.bf16.mxu0 0
      %3640 = vmatmul.mubr.bf16.gmra.mrb[0].mxu0 %v2955
      %v3641 = vpop.f32.mrb[0].mxu0
      %v3642 = vadd.f32 %v3070, %v3641
      %v3643 = vpop.f32.mrb[0].mxu0
      %v3644 = vadd.f32 %v3074, %v3643
      %v3645 = vpop.f32.mrb[0].mxu0
      %v3646 = vadd.f32 %v3070, %v3645
      %v3647 = vpop.f32.mrb[0].mxu0
      %v3648 = vadd.f32 %v3074, %v3647
      %3649 = vmatprep.mubr.bf16.mxu0 0
      %3650 = vmatmul.mubr.bf16.gmra.mrb[0].mxu0 %v2956
      %v3651 = vpop.f32.mrb[0].mxu0
      %v3652 = vadd.f32 %v3070, %v3651
      %v3653 = vpop.f32.mrb[0].mxu0
      %v3654 = vadd.f32 %v3074, %v3653
      %v3655 = vpop.f32.mrb[0].mxu0
      %v3656 = vadd.f32 %v3070, %v3655
      %v3657 = vpop.f32.mrb[0].mxu0
      %v3658 = vadd.f32 %v3074, %v3657
      %3659 = vmatprep.mubr.bf16.mxu0 0
      %3660 = vmatmul.mubr.bf16.gmra.mrb[0].mxu0 %v2957
      %v3661 = vpop.f32.mrb[0].mxu0
      %v3662 = vadd.f32 %v3070, %v3661
      %v3663 = vpop.f32.mrb[0].mxu0
      %v3664 = vadd.f32 %v3074, %v3663
      %v3665 = vpop.f32.mrb[0].mxu0
      %v3666 = vadd.f32 %v3070, %v3665
      %v3667 = vpop.f32.mrb[0].mxu0
      %v3668 = vadd.f32 %v3074, %v3667
      %3669 = vmatprep.mubr.bf16.mxu0 0
      %3670 = vmatmul.mubr.bf16.gmra.mrb[0].mxu0 %v2958
      %v3671 = vpop.f32.mrb[0].mxu0
      %v3672 = vadd.f32 %v3070, %v3671
      %v3673 = vpop.f32.mrb[0].mxu0
      %v3674 = vadd.f32 %v3074, %v3673
      %v3675 = vpop.f32.mrb[0].mxu0
      %v3676 = vadd.f32 %v3070, %v3675
      %v3677 = vpop.f32.mrb[0].mxu0
      %v3678 = vadd.f32 %v3074, %v3677
      %3679 = vmatprep.mubr.bf16.mxu0 0
      %3680 = vmatmul.mubr.bf16.gmra.mrb[0].mxu0 %v2959
      %v3681 = vpop.f32.mrb[0].mxu0
      %v3682 = vadd.f32 %v3070, %v3681
      %v3683 = vpop.f32.mrb[0].mxu0
      %v3684 = vadd.f32 %v3074, %v3683
      %v3685 = vpop.f32.mrb[0].mxu0
      %v3686 = vadd.f32 %v3070, %v3685
      %v3687 = vpop.f32.mrb[0].mxu0
      %v3688 = vadd.f32 %v3074, %v3687
      %3689 = vmatprep.mubr.bf16.mxu0 0
      %3690 = vmatmul.mubr.bf16.gmra.mrb[0].mxu0 %v2960
      %v3691 = vpop.f32.mrb[0].mxu0
      %v3692 = vadd.f32 %v3070, %v3691
      %v3693 = vpop.f32.mrb[0].mxu0
      %v3694 = vadd.f32 %v3074, %v3693
      %v3695 = vpop.f32.mrb[0].mxu0
      %v3696 = vadd.f32 %v3070, %v3695
      %v3697 = vpop.f32.mrb[0].mxu0
      %v3698 = vadd.f32 %v3074, %v3697
      %3699 = vmatprep.mubr.bf16.mxu0 0
      %3700 = vmatmul.mubr.bf16.gmra.mrb[0].mxu0 %v2961
      %v3701 = vpop.f32.mrb[0].mxu0
      %v3702 = vadd.f32 %v3070, %v3701
      %v3703 = vpop.f32.mrb[0].mxu0
      %v3704 = vadd.f32 %v3074, %v3703
      %v3705 = vpop.f32.mrb[0].mxu0
      %v3706 = vadd.f32 %v3070, %v3705
      %v3707 = vpop.f32.mrb[0].mxu0
      %v3708 = vadd.f32 %v3074, %v3707
      %3709 = vmatprep.mubr.bf16.mxu0 0
      %3710 = vmatmul.mubr.bf16.gmra.mrb[0].mxu0 %v2962
      %v3711 = vpop.f32.mrb[0].mxu0
      %v3712 = vadd.f32 %v3070, %v3711
      %v3713 = vpop.f32.mrb[0].mxu0
      %v3714 = vadd.f32 %v3074, %v3713
      %v3715 = vpop.f32.mrb[0].mxu0
      %v3716 = vadd.f32 %v3070, %v3715
      %v3717 = vpop.f32.mrb[0].mxu0
      %v3718 = vadd.f32 %v3074, %v3717
      %3719 = vmatprep.mubr.bf16.mxu0 0
      %3720 = vmatmul.mubr.bf16.gmra.mrb[0].mxu0 %v2963
      %v3721 = vpop.f32.mrb[0].mxu0
      %v3722 = vadd.f32 %v3070, %v3721
      %v3723 = vpop.f32.mrb[0].mxu0
      %v3724 = vadd.f32 %v3074, %v3723
      %v3725 = vpop.f32.mrb[0].mxu0
      %v3726 = vadd.f32 %v3070, %v3725
      %v3727 = vpop.f32.mrb[0].mxu0
      %v3728 = vadd.f32 %v3074, %v3727
      %3729 = vmatprep.mubr.bf16.mxu0 0
      %3730 = vmatmul.mubr.bf16.gmra.mrb[0].mxu0 %v2964
      %v3731 = vpop.f32.mrb[0].mxu0
      %v3732 = vadd.f32 %v3070, %v3731
      %v3733 = vpop.f32.mrb[0].mxu0
      %v3734 = vadd.f32 %v3074, %v3733
      %v3735 = vpop.f32.mrb[0].mxu0
      %v3736 = vadd.f32 %v3070, %v3735
      %v3737 = vpop.f32.mrb[0].mxu0
      %v3738 = vadd.f32 %v3074, %v3737
      %3739 = vmatprep.mubr.bf16.mxu0 0
      %3740 = vmatmul.mubr.bf16.gmra.mrb[0].mxu0 %v2965
      %v3741 = vpop.f32.mrb[0].mxu0
      %v3742 = vadd.f32 %v3070, %v3741
      %v3743 = vpop.f32.mrb[0].mxu0
      %v3744 = vadd.f32 %v3074, %v3743
      %v3745 = vpop.f32.mrb[0].mxu0
      %v3746 = vadd.f32 %v3070, %v3745
      %v3747 = vpop.f32.mrb[0].mxu0
      %v3748 = vadd.f32 %v3074, %v3747
      %3749 = vmatprep.mubr.bf16.mxu0 0
      %3750 = vmatmul.mubr.bf16.gmra.mrb[0].mxu0 %v2966
      %v3751 = vpop.f32.mrb[0].mxu0
      %v3752 = vadd.f32 %v3070, %v3751
      %v3753 = vpop.f32.mrb[0].mxu0
      %v3754 = vadd.f32 %v3074, %v3753
      %v3755 = vpop.f32.mrb[0].mxu0
      %v3756 = vadd.f32 %v3070, %v3755
      %v3757 = vpop.f32.mrb[0].mxu0
      %v3758 = vadd.f32 %v3074, %v3757
      %3759 = vmatprep.mubr.bf16.mxu0 0
      %3760 = vmatmul.mubr.bf16.gmra.mrb[0].mxu0 %v2967
      %v3761 = vpop.f32.mrb[0].mxu0
      %v3762 = vadd.f32 %v3070, %v3761
      %v3763 = vpop.f32.mrb[0].mxu0
      %v3764 = vadd.f32 %v3074, %v3763
      %v3765 = vpop.f32.mrb[0].mxu0
      %v3766 = vadd.f32 %v3070, %v3765
      %v3767 = vpop.f32.mrb[0].mxu0
      %v3768 = vadd.f32 %v3074, %v3767
      %3769 = vmatprep.mubr.bf16.mxu0 0
      %3770 = vmatmul.mubr.bf16.gmra.mrb[0].mxu0 %v2968
      %v3771 = vpop.f32.mrb[0].mxu0
      %v3772 = vadd.f32 %v3070, %v3771
      %v3773 = vpop.f32.mrb[0].mxu0
      %v3774 = vadd.f32 %v3074, %v3773
      %v3775 = vpop.f32.mrb[0].mxu0
      %v3776 = vadd.f32 %v3070, %v3775
      %v3777 = vpop.f32.mrb[0].mxu0
      %v3778 = vadd.f32 %v3074, %v3777
      %3779 = vmatprep.mubr.bf16.mxu0 0
      %3780 = vmatmul.mubr.bf16.gmra.mrb[0].mxu0 %v2969
      %v3781 = vpop.f32.mrb[0].mxu0
      %v3782 = vadd.f32 %v3070, %v3781
      %v3783 = vpop.f32.mrb[0].mxu0
      %v3784 = vadd.f32 %v3074, %v3783
      %v3785 = vpop.f32.mrb[0].mxu0
      %v3786 = vadd.f32 %v3070, %v3785
      %v3787 = vpop.f32.mrb[0].mxu0
      %v3788 = vadd.f32 %v3074, %v3787
      %3789 = vmatprep.mubr.bf16.mxu0 0
      %3790 = vmatmul.mubr.bf16.gmra.mrb[0].mxu0 %v2970
      %v3791 = vpop.f32.mrb[0].mxu0
      %v3792 = vadd.f32 %v3070, %v3791
      %v3793 = vpop.f32.mrb[0].mxu0
      %v3794 = vadd.f32 %v3074, %v3793
      %v3795 = vpop.f32.mrb[0].mxu0
      %v3796 = vadd.f32 %v3070, %v3795
      %v3797 = vpop.f32.mrb[0].mxu0
      %v3798 = vadd.f32 %v3074, %v3797
      %3799 = vmatprep.mubr.bf16.mxu0 0
      %3800 = vmatmul.mubr.bf16.gmra.mrb[0].mxu0 %v2971
      %v3801 = vpop.f32.mrb[0].mxu0
      %v3802 = vadd.f32 %v3070, %v3801
      %v3803 = vpop.f32.mrb[0].mxu0
      %v3804 = vadd.f32 %v3074, %v3803
      %v3805 = vpop.f32.mrb[0].mxu0
      %v3806 = vadd.f32 %v3070, %v3805
      %v3807 = vpop.f32.mrb[0].mxu0
      %v3808 = vadd.f32 %v3074, %v3807
      %3809 = vmatprep.mubr.bf16.mxu0 0
      %3810 = vmatmul.mubr.bf16.gmra.mrb[0].mxu0 %v2972
      %v3811 = vpop.f32.mrb[0].mxu0
      %v3812 = vadd.f32 %v3070, %v3811
      %v3813 = vpop.f32.mrb[0].mxu0
      %v3814 = vadd.f32 %v3074, %v3813
      %v3815 = vpop.f32.mrb[0].mxu0
      %v3816 = vadd.f32 %v3070, %v3815
      %v3817 = vpop.f32.mrb[0].mxu0
      %v3818 = vadd.f32 %v3074, %v3817
      %3819 = vmatprep.mubr.bf16.mxu0 0
      %3820 = vmatmul.mubr.bf16.gmra.mrb[0].mxu0 %v2973
      %v3821 = vpop.f32.mrb[0].mxu0
      %v3822 = vadd.f32 %v3070, %v3821
      %v3823 = vpop.f32.mrb[0].mxu0
      %v3824 = vadd.f32 %v3074, %v3823
      %v3825 = vpop.f32.mrb[0].mxu0
      %v3826 = vadd.f32 %v3070, %v3825
      %v3827 = vpop.f32.mrb[0].mxu0
      %v3828 = vadd.f32 %v3074, %v3827
      %3829 = vmatprep.mubr.bf16.mxu0 0
      %3830 = vmatmul.mubr.bf16.gmra.mrb[0].mxu0 %v2974
      %v3831 = vpop.f32.mrb[0].mxu0
      %v3832 = vadd.f32 %v3070, %v3831
      %v3833 = vpop.f32.mrb[0].mxu0
      %v3834 = vadd.f32 %v3074, %v3833
      %v3835 = vpop.f32.mrb[0].mxu0
      %v3836 = vadd.f32 %v3070, %v3835
      %v3837 = vpop.f32.mrb[0].mxu0
      %v3838 = vadd.f32 %v3074, %v3837
      %3839 = vmatprep.mubr.bf16.mxu0 0
      %3840 = vmatmul.mubr.bf16.gmra.mrb[0].mxu0 %v2975
      %v3841 = vpop.f32.mrb[0].mxu0
      %v3842 = vadd.f32 %v3070, %v3841
      %v3843 = vpop.f32.mrb[0].mxu0
      %v3844 = vadd.f32 %v3074, %v3843
      %v3845 = vpop.f32.mrb[0].mxu0
      %v3846 = vadd.f32 %v3070, %v3845
      %v3847 = vpop.f32.mrb[0].mxu0
      %v3848 = vadd.f32 %v3074, %v3847
      %3849 = vmatprep.mubr.bf16.mxu0 0
      %3850 = vmatmul.mubr.bf16.gmra.mrb[0].mxu0 %v2976
      %v3851 = vpop.f32.mrb[0].mxu0
      %v3852 = vadd.f32 %v3070, %v3851
      %v3853 = vpop.f32.mrb[0].mxu0
      %v3854 = vadd.f32 %v3074, %v3853
      %v3855 = vpop.f32.mrb[0].mxu0
      %v3856 = vadd.f32 %v3070, %v3855
      %v3857 = vpop.f32.mrb[0].mxu0
      %v3858 = vadd.f32 %v3074, %v3857
      %3859 = vmatprep.mubr.bf16.mxu0 0
      %3860 = vmatmul.mubr.bf16.gmra.mrb[0].mxu0 %v2977
      %v3861 = vpop.f32.mrb[0].mxu0
      %v3862 = vadd.f32 %v3070, %v3861
      %v3863 = vpop.f32.mrb[0].mxu0
      %v3864 = vadd.f32 %v3074, %v3863
      %v3865 = vpop.f32.mrb[0].mxu0
      %v3866 = vadd.f32 %v3070, %v3865
      %v3867 = vpop.f32.mrb[0].mxu0
      %v3868 = vadd.f32 %v3074, %v3867
      %3869 = vmatprep.mubr.bf16.mxu0 0
      %3870 = vmatmul.mubr.bf16.gmra.mrb[0].mxu0 %v2978
      %v3871 = vpop.f32.mrb[0].mxu0
      %v3872 = vadd.f32 %v3070, %v3871
      %v3873 = vpop.f32.mrb[0].mxu0
      %v3874 = vadd.f32 %v3074, %v3873
      %v3875 = vpop.f32.mrb[0].mxu0
      %v3876 = vadd.f32 %v3070, %v3875
      %v3877 = vpop.f32.mrb[0].mxu0
      %v3878 = vadd.f32 %v3074, %v3877
      %3879 = vmatprep.mubr.bf16.mxu0 0
      %3880 = vmatmul.mubr.bf16.gmra.mrb[0].mxu0 %v2979
      %v3881 = vpop.f32.mrb[0].mxu0
      %v3882 = vadd.f32 %v3070, %v3881
      %v3883 = vpop.f32.mrb[0].mxu0
      %v3884 = vadd.f32 %v3074, %v3883
      %v3885 = vpop.f32.mrb[0].mxu0
      %v3886 = vadd.f32 %v3070, %v3885
      %v3887 = vpop.f32.mrb[0].mxu0
      %v3888 = vadd.f32 %v3074, %v3887
      %3889 = vmatprep.mubr.bf16.mxu0 0
      %3890 = vmatmul.mubr.bf16.gmra.mrb[0].mxu0 %v2980
      %v3891 = vpop.f32.mrb[0].mxu0
      %v3892 = vadd.f32 %v3070, %v3891
      %v3893 = vpop.f32.mrb[0].mxu0
      %v3894 = vadd.f32 %v3074, %v3893
      %v3895 = vpop.f32.mrb[0].mxu0
      %v3896 = vadd.f32 %v3070, %v3895
      %v3897 = vpop.f32.mrb[0].mxu0
      %v3898 = vadd.f32 %v3074, %v3897
      %3899 = vmatprep.mubr.bf16.mxu0 0
      %3900 = vmatmul.mubr.bf16.gmra.mrb[0].mxu0 %v2981
      %v3901 = vpop.f32.mrb[0].mxu0
      %v3902 = vadd.f32 %v3070, %v3901
      %v3903 = vpop.f32.mrb[0].mxu0
      %v3904 = vadd.f32 %v3074, %v3903
      %v3905 = vpop.f32.mrb[0].mxu0
      %v3906 = vadd.f32 %v3070, %v3905
      %v3907 = vpop.f32.mrb[0].mxu0
      %v3908 = vadd.f32 %v3074, %v3907
      %3909 = vmatprep.mubr.bf16.mxu0 0
      %3910 = vmatmul.mubr.bf16.gmra.mrb[0].mxu0 %v2982
      %v3911 = vpop.f32.mrb[0].mxu0
      %v3912 = vadd.f32 %v3070, %v3911
      %v3913 = vpop.f32.mrb[0].mxu0
      %v3914 = vadd.f32 %v3074, %v3913
      %v3915 = vpop.f32.mrb[0].mxu0
      %v3916 = vadd.f32 %v3070, %v3915
      %v3917 = vpop.f32.mrb[0].mxu0
      %v3918 = vadd.f32 %v3074, %v3917
      %3919 = vmatprep.mubr.bf16.mxu0 0
      %3920 = vmatmul.mubr.bf16.gmra.mrb[0].mxu0 %v2983
      %v3921 = vpop.f32.mrb[0].mxu0
      %v3922 = vadd.f32 %v3070, %v3921
      %v3923 = vpop.f32.mrb[0].mxu0
      %v3924 = vadd.f32 %v3074, %v3923
      %v3925 = vpop.f32.mrb[0].mxu0
      %v3926 = vadd.f32 %v3070, %v3925
      %v3927 = vpop.f32.mrb[0].mxu0
      %v3928 = vadd.f32 %v3074, %v3927
      %3929 = vmatprep.mubr.bf16.mxu0 0
      %3930 = vmatmul.mubr.bf16.gmra.mrb[0].mxu0 %v2984
      %v3931 = vpop.f32.mrb[0].mxu0
      %v3932 = vadd.f32 %v3070, %v3931
      %v3933 = vpop.f32.mrb[0].mxu0
      %v3934 = vadd.f32 %v3074, %v3933
      %v3935 = vpop.f32.mrb[0].mxu0
      %v3936 = vadd.f32 %v3070, %v3935
      %v3937 = vpop.f32.mrb[0].mxu0
      %v3938 = vadd.f32 %v3074, %v3937
      %3939 = vmatprep.mubr.bf16.mxu0 0
      %3940 = vmatmul.mubr.bf16.gmra.mrb[0].mxu0 %v2985
      %v3941 = vpop.f32.mrb[0].mxu0
      %v3942 = vadd.f32 %v3070, %v3941
      %v3943 = vpop.f32.mrb[0].mxu0
      %v3944 = vadd.f32 %v3074, %v3943
      %v3945 = vpop.f32.mrb[0].mxu0
      %v3946 = vadd.f32 %v3070, %v3945
      %v3947 = vpop.f32.mrb[0].mxu0
      %v3948 = vadd.f32 %v3074, %v3947
      %3949 = vmatprep.mubr.bf16.mxu0 0
      %3950 = vmatmul.mubr.bf16.gmra.mrb[0].mxu0 %v2986
      %v3951 = vpop.f32.mrb[0].mxu0
      %v3952 = vadd.f32 %v3070, %v3951
      %v3953 = vpop.f32.mrb[0].mxu0
      %v3954 = vadd.f32 %v3074, %v3953
      %v3955 = vpop.f32.mrb[0].mxu0
      %v3956 = vadd.f32 %v3070, %v3955
      %v3957 = vpop.f32.mrb[0].mxu0
      %v3958 = vadd.f32 %v3074, %v3957
      %3959 = vmatprep.mubr.bf16.mxu0 0
      %3960 = vmatmul.mubr.bf16.gmra.mrb[0].mxu0 %v2987
      %v3961 = vpop.f32.mrb[0].mxu0
      %v3962 = vadd.f32 %v3070, %v3961
      %v3963 = vpop.f32.mrb[0].mxu0
      %v3964 = vadd.f32 %v3074, %v3963
      %v3965 = vpop.f32.mrb[0].mxu0
      %v3966 = vadd.f32 %v3070, %v3965
      %v3967 = vpop.f32.mrb[0].mxu0
      %v3968 = vadd.f32 %v3074, %v3967
      %3969 = vmatprep.mubr.bf16.mxu0 0
      %3970 = vmatmul.mubr.bf16.gmra.mrb[0].mxu0 %v2988
      %v3971 = vpop.f32.mrb[0].mxu0
      %v3972 = vadd.f32 %v3070, %v3971
      %v3973 = vpop.f32.mrb[0].mxu0
      %v3974 = vadd.f32 %v3074, %v3973
      %v3975 = vpop.f32.mrb[0].mxu0
      %v3976 = vadd.f32 %v3070, %v3975
      %v3977 = vpop.f32.mrb[0].mxu0
      %v3978 = vadd.f32 %v3074, %v3977
      %3979 = vmatprep.mubr.bf16.mxu0 0
      %3980 = vmatmul.mubr.bf16.gmra.mrb[0].mxu0 %v2989
      %v3981 = vpop.f32.mrb[0].mxu0
      %v3982 = vadd.f32 %v3070, %v3981
      %v3983 = vpop.f32.mrb[0].mxu0
      %v3984 = vadd.f32 %v3074, %v3983
      %v3985 = vpop.f32.mrb[0].mxu0
      %v3986 = vadd.f32 %v3070, %v3985
      %v3987 = vpop.f32.mrb[0].mxu0
      %v3988 = vadd.f32 %v3074, %v3987
      %3989 = vmatprep.mubr.bf16.mxu0 0
      %3990 = vmatmul.mubr.bf16.gmra.mrb[0].mxu0 %v2990
      %v3991 = vpop.f32.mrb[0].mxu0
      %v3992 = vadd.f32 %v3070, %v3991
      %v3993 = vpop.f32.mrb[0].mxu0
      %v3994 = vadd.f32 %v3074, %v3993
      %v3995 = vpop.f32.mrb[0].mxu0
      %v3996 = vadd.f32 %v3070, %v3995
      %v3997 = vpop.f32.mrb[0].mxu0
      %v3998 = vadd.f32 %v3074, %v3997
      %3999 = vmatprep.mubr.bf16.mxu0 0
      %4000 = vmatmul.mubr.bf16.gmra.mrb[0].mxu0 %v2991
      %v4001 = vpop.f32.mrb[0].mxu0
      %v4002 = vadd.f32 %v3070, %v4001
      %v4003 = vpop.f32.mrb[0].mxu0
      %v4004 = vadd.f32 %v3074, %v4003
      %v4005 = vpop.f32.mrb[0].mxu0
      %v4006 = vadd.f32 %v3070, %v4005
      %v4007 = vpop.f32.mrb[0].mxu0
      %v4008 = vadd.f32 %v3074, %v4007
      %4009 = vmatprep.mubr.bf16.mxu0 0
      %4010 = vmatmul.mubr.bf16.gmra.mrb[0].mxu0 %v2992
      %v4011 = vpop.f32.mrb[0].mxu0
      %v4012 = vadd.f32 %v3070, %v4011
      %v4013 = vpop.f32.mrb[0].mxu0
      %v4014 = vadd.f32 %v3074, %v4013
      %v4015 = vpop.f32.mrb[0].mxu0
      %v4016 = vadd.f32 %v3070, %v4015
      %v4017 = vpop.f32.mrb[0].mxu0
      %v4018 = vadd.f32 %v3074, %v4017
      %4019 = vmatprep.mubr.bf16.mxu0 0
      %4020 = vmatmul.mubr.bf16.gmra.mrb[0].mxu0 %v2993
      %v4021 = vpop.f32.mrb[0].mxu0
      %v4022 = vadd.f32 %v3070, %v4021
      %v4023 = vpop.f32.mrb[0].mxu0
      %v4024 = vadd.f32 %v3074, %v4023
      %v4025 = vpop.f32.mrb[0].mxu0
      %v4026 = vadd.f32 %v3070, %v4025
      %v4027 = vpop.f32.mrb[0].mxu0
      %v4028 = vadd.f32 %v3074, %v4027
      %4029 = vmatprep.mubr.bf16.mxu0 0
      %4030 = vmatmul.mubr.bf16.gmra.mrb[0].mxu0 %v2994
      %v4031 = vpop.f32.mrb[0].mxu0
      %v4032 = vadd.f32 %v3070, %v4031
      %v4033 = vpop.f32.mrb[0].mxu0
      %v4034 = vadd.f32 %v3074, %v4033
      %v4035 = vpop.f32.mrb[0].mxu0
      %v4036 = vadd.f32 %v3070, %v4035
      %v4037 = vpop.f32.mrb[0].mxu0
      %v4038 = vadd.f32 %v3074, %v4037
      %4039 = vmatprep.mubr.bf16.mxu0 0
      %4040 = vmatmul.mubr.bf16.gmra.mrb[0].mxu0 %v2995
      %v4041 = vpop.f32.mrb[0].mxu0
      %v4042 = vadd.f32 %v3070, %v4041
      %v4043 = vpop.f32.mrb[0].mxu0
      %v4044 = vadd.f32 %v3074, %v4043
      %v4045 = vpop.f32.mrb[0].mxu0
      %v4046 = vadd.f32 %v3070, %v4045
      %v4047 = vpop.f32.mrb[0].mxu0
      %v4048 = vadd.f32 %v3074, %v4047
      %4049 = vmatprep.mubr.bf16.mxu0 0
      %4050 = vmatmul.mubr.bf16.gmra.mrb[0].mxu0 %v2996
      %v4051 = vpop.f32.mrb[0].mxu0
      %v4052 = vadd.f32 %v3070, %v4051
      %v4053 = vpop.f32.mrb[0].mxu0
      %v4054 = vadd.f32 %v3074, %v4053
      %v4055 = vpop.f32.mrb[0].mxu0
      %v4056 = vadd.f32 %v3070, %v4055
      %v4057 = vpop.f32.mrb[0].mxu0
      %v4058 = vadd.f32 %v3074, %v4057
      %4059 = vmatprep.mubr.bf16.mxu0 0
      %4060 = vmatmul.mubr.bf16.gmra.mrb[0].mxu0 %v2997
      %v4061 = vpop.f32.mrb[0].mxu0
      %v4062 = vadd.f32 %v3070, %v4061
      %v4063 = vpop.f32.mrb[0].mxu0
      %v4064 = vadd.f32 %v3074, %v4063
      %v4065 = vpop.f32.mrb[0].mxu0
      %v4066 = vadd.f32 %v3070, %v4065
      %v4067 = vpop.f32.mrb[0].mxu0
      %v4068 = vadd.f32 %v3074, %v4067
      %4069 = vmatprep.mubr.bf16.mxu0 0
      %4070 = vmatmul.mubr.bf16.gmra.mrb[0].mxu0 %v2998
      %v4071 = vpop.f32.mrb[0].mxu0
      %v4072 = vadd.f32 %v3070, %v4071
      %v4073 = vpop.f32.mrb[0].mxu0
      %v4074 = vadd.f32 %v3074, %v4073
      %v4075 = vpop.f32.mrb[0].mxu0
      %v4076 = vadd.f32 %v3070, %v4075
      %v4077 = vpop.f32.mrb[0].mxu0
      %v4078 = vadd.f32 %v3074, %v4077
      %4079 = vmatprep.mubr.bf16.mxu0 0
      %4080 = vmatmul.mubr.bf16.gmra.mrb[0].mxu0 %v2999
      %v4081 = vpop.f32.mrb[0].mxu0
      %v4082 = vadd.f32 %v3070, %v4081
      %v4083 = vpop.f32.mrb[0].mxu0
      %v4084 = vadd.f32 %v3074, %v4083
      %v4085 = vpop.f32.mrb[0].mxu0
      %v4086 = vadd.f32 %v3070, %v4085
      %v4087 = vpop.f32.mrb[0].mxu0
      %v4088 = vadd.f32 %v3074, %v4087
      %4089 = vmatprep.mubr.bf16.mxu0 0
      %4090 = vmatmul.mubr.bf16.gmra.mrb[0].mxu0 %v3000
      %v4091 = vpop.f32.mrb[0].mxu0
      %v4092 = vadd.f32 %v3070, %v4091
      %v4093 = vpop.f32.mrb[0].mxu0
      %v4094 = vadd.f32 %v3074, %v4093
      %v4095 = vpop.f32.mrb[0].mxu0
      %v4096 = vadd.f32 %v3070, %v4095
      %v4097 = vpop.f32.mrb[0].mxu0
      %v4098 = vadd.f32 %v3074, %v4097
      %4099 = vdwg.mxu0
      %4100 = vmatprep.subr.bf16.mxu0 %v3302
      %4101 = vmatpush1.bf16.msra.mxu0 %v3301
      %4102 = vmatprep.subr.bf16.mxu0 %v3310
      %4103 = vmatpush1.bf16.msra.mxu0 %v3309
      %4104 = vmatprep.subr.bf16.mxu0 %v3318
      %4105 = vmatpush1.bf16.msra.mxu0 %v3317
      %4106 = vmatprep.subr.bf16.mxu0 %v3326
      %4107 = vmatpush1.bf16.msra.mxu0 %v3325
      %4108 = vmatprep.subr.bf16.mxu0 %v3334
      %4109 = vmatpush1.bf16.msra.mxu0 %v3333
      %4110 = vmatprep.subr.bf16.mxu0 %v3342
      %4111 = vmatpush1.bf16.msra.mxu0 %v3341
      %4112 = vmatprep.subr.bf16.mxu0 %v3350
      %4113 = vmatpush1.bf16.msra.mxu0 %v3349
      %4114 = vmatprep.subr.bf16.mxu0 %v3358
      %4115 = vmatpush1.bf16.msra.mxu0 %v3357
      %4116 = vmatprep.subr.bf16.mxu0 0
      %4117 = vmatpush1.bf16.msra.mxu0 0
      %4118 = vmatprep.subr.bf16.mxu0 0
      %4119 = vmatpush1.bf16.msra.mxu0 0
      %4120 = vmatprep.subr.bf16.mxu0 0
      %4121 = vmatpush1.bf16.msra.mxu0 0
      %4122 = vmatprep.subr.bf16.mxu0 0
      %4123 = vmatpush1.bf16.msra.mxu0 0
      %4124 = vmatprep.subr.bf16.mxu0 0
      %4125 = vmatpush1.bf16.msra.mxu0 0
      %4126 = vmatprep.subr.bf16.mxu0 0
      %4127 = vmatpush1.bf16.msra.mxu0 0
      %4128 = vmatprep.subr.bf16.mxu0 0
      %4129 = vmatpush1.bf16.msra.mxu0 0
      %4130 = vmatprep.subr.bf16.mxu0 0
      %4131 = vmatpush1.bf16.msra.mxu0 0
      %4132 = vmatprep.mubr.bf16.mxu0 0
      %4133 = vmatmul.mubr.bf16.gmra.mrb[0].mxu0 %v2937
      %v4134 = vpop.f32.mrb[0].mxu0
      %v4135 = vadd.f32 %v3078, %v4134
      %v4136 = vpop.f32.mrb[0].mxu0
      %v4137 = vadd.f32 %v3082, %v4136
      %v4138 = vpop.f32.mrb[0].mxu0
      %v4139 = vadd.f32 %v3078, %v4138
      %v4140 = vpop.f32.mrb[0].mxu0
      %v4141 = vadd.f32 %v3082, %v4140
      %4142 = vmatprep.mubr.bf16.mxu0 0
      %4143 = vmatmul.mubr.bf16.gmra.mrb[0].mxu0 %v2938
      %v4144 = vpop.f32.mrb[0].mxu0
      %v4145 = vadd.f32 %v3078, %v4144
      %v4146 = vpop.f32.mrb[0].mxu0
      %v4147 = vadd.f32 %v3082, %v4146
      %v4148 = vpop.f32.mrb[0].mxu0
      %v4149 = vadd.f32 %v3078, %v4148
      %v4150 = vpop.f32.mrb[0].mxu0
      %v4151 = vadd.f32 %v3082, %v4150
      %4152 = vmatprep.mubr.bf16.mxu0 0
      %4153 = vmatmul.mubr.bf16.gmra.mrb[0].mxu0 %v2939
      %v4154 = vpop.f32.mrb[0].mxu0
      %v4155 = vadd.f32 %v3078, %v4154
      %v4156 = vpop.f32.mrb[0].mxu0
      %v4157 = vadd.f32 %v3082, %v4156
      %v4158 = vpop.f32.mrb[0].mxu0
      %v4159 = vadd.f32 %v3078, %v4158
      %v4160 = vpop.f32.mrb[0].mxu0
      %v4161 = vadd.f32 %v3082, %v4160
      %4162 = vmatprep.mubr.bf16.mxu0 0
      %4163 = vmatmul.mubr.bf16.gmra.mrb[0].mxu0 %v2940
      %v4164 = vpop.f32.mrb[0].mxu0
      %v4165 = vadd.f32 %v3078, %v4164
      %v4166 = vpop.f32.mrb[0].mxu0
      %v4167 = vadd.f32 %v3082, %v4166
      %v4168 = vpop.f32.mrb[0].mxu0
      %v4169 = vadd.f32 %v3078, %v4168
      %v4170 = vpop.f32.mrb[0].mxu0
      %v4171 = vadd.f32 %v3082, %v4170
      %4172 = vmatprep.mubr.bf16.mxu0 0
      %4173 = vmatmul.mubr.bf16.gmra.mrb[0].mxu0 %v2941
      %v4174 = vpop.f32.mrb[0].mxu0
      %v4175 = vadd.f32 %v3078, %v4174
      %v4176 = vpop.f32.mrb[0].mxu0
      %v4177 = vadd.f32 %v3082, %v4176
      %v4178 = vpop.f32.mrb[0].mxu0
      %v4179 = vadd.f32 %v3078, %v4178
      %v4180 = vpop.f32.mrb[0].mxu0
      %v4181 = vadd.f32 %v3082, %v4180
      %4182 = vmatprep.mubr.bf16.mxu0 0
      %4183 = vmatmul.mubr.bf16.gmra.mrb[0].mxu0 %v2942
      %v4184 = vpop.f32.mrb[0].mxu0
      %v4185 = vadd.f32 %v3078, %v4184
      %v4186 = vpop.f32.mrb[0].mxu0
      %v4187 = vadd.f32 %v3082, %v4186
      %v4188 = vpop.f32.mrb[0].mxu0
      %v4189 = vadd.f32 %v3078, %v4188
      %v4190 = vpop.f32.mrb[0].mxu0
      %v4191 = vadd.f32 %v3082, %v4190
      %4192 = vmatprep.mubr.bf16.mxu0 0
      %4193 = vmatmul.mubr.bf16.gmra.mrb[0].mxu0 %v2943
      %v4194 = vpop.f32.mrb[0].mxu0
      %v4195 = vadd.f32 %v3078, %v4194
      %v4196 = vpop.f32.mrb[0].mxu0
      %v4197 = vadd.f32 %v3082, %v4196
      %v4198 = vpop.f32.mrb[0].mxu0
      %v4199 = vadd.f32 %v3078, %v4198
      %v4200 = vpop.f32.mrb[0].mxu0
      %v4201 = vadd.f32 %v3082, %v4200
      %4202 = vmatprep.mubr.bf16.mxu0 0
      %4203 = vmatmul.mubr.bf16.gmra.mrb[0].mxu0 %v2944
      %v4204 = vpop.f32.mrb[0].mxu0
      %v4205 = vadd.f32 %v3078, %v4204
      %v4206 = vpop.f32.mrb[0].mxu0
      %v4207 = vadd.f32 %v3082, %v4206
      %v4208 = vpop.f32.mrb[0].mxu0
      %v4209 = vadd.f32 %v3078, %v4208
      %v4210 = vpop.f32.mrb[0].mxu0
      %v4211 = vadd.f32 %v3082, %v4210
      %4212 = vmatprep.mubr.bf16.mxu0 0
      %4213 = vmatmul.mubr.bf16.gmra.mrb[0].mxu0 %v2945
      %v4214 = vpop.f32.mrb[0].mxu0
      %v4215 = vadd.f32 %v3078, %v4214
      %v4216 = vpop.f32.mrb[0].mxu0
      %v4217 = vadd.f32 %v3082, %v4216
      %v4218 = vpop.f32.mrb[0].mxu0
      %v4219 = vadd.f32 %v3078, %v4218
      %v4220 = vpop.f32.mrb[0].mxu0
      %v4221 = vadd.f32 %v3082, %v4220
      %4222 = vmatprep.mubr.bf16.mxu0 0
      %4223 = vmatmul.mubr.bf16.gmra.mrb[0].mxu0 %v2946
      %v4224 = vpop.f32.mrb[0].mxu0
      %v4225 = vadd.f32 %v3078, %v4224
      %v4226 = vpop.f32.mrb[0].mxu0
      %v4227 = vadd.f32 %v3082, %v4226
      %v4228 = vpop.f32.mrb[0].mxu0
      %v4229 = vadd.f32 %v3078, %v4228
      %v4230 = vpop.f32.mrb[0].mxu0
      %v4231 = vadd.f32 %v3082, %v4230
      %4232 = vmatprep.mubr.bf16.mxu0 0
      %4233 = vmatmul.mubr.bf16.gmra.mrb[0].mxu0 %v2947
      %v4234 = vpop.f32.mrb[0].mxu0
      %v4235 = vadd.f32 %v3078, %v4234
      %v4236 = vpop.f32.mrb[0].mxu0
      %v4237 = vadd.f32 %v3082, %v4236
      %v4238 = vpop.f32.mrb[0].mxu0
      %v4239 = vadd.f32 %v3078, %v4238
      %v4240 = vpop.f32.mrb[0].mxu0
      %v4241 = vadd.f32 %v3082, %v4240
      %4242 = vmatprep.mubr.bf16.mxu0 0
      %4243 = vmatmul.mubr.bf16.gmra.mrb[0].mxu0 %v2948
      %v4244 = vpop.f32.mrb[0].mxu0
      %v4245 = vadd.f32 %v3078, %v4244
      %v4246 = vpop.f32.mrb[0].mxu0
      %v4247 = vadd.f32 %v3082, %v4246
      %v4248 = vpop.f32.mrb[0].mxu0
      %v4249 = vadd.f32 %v3078, %v4248
      %v4250 = vpop.f32.mrb[0].mxu0
      %v4251 = vadd.f32 %v3082, %v4250
      %4252 = vmatprep.mubr.bf16.mxu0 0
      %4253 = vmatmul.mubr.bf16.gmra.mrb[0].mxu0 %v2949
      %v4254 = vpop.f32.mrb[0].mxu0
      %v4255 = vadd.f32 %v3078, %v4254
      %v4256 = vpop.f32.mrb[0].mxu0
      %v4257 = vadd.f32 %v3082, %v4256
      %v4258 = vpop.f32.mrb[0].mxu0
      %v4259 = vadd.f32 %v3078, %v4258
      %v4260 = vpop.f32.mrb[0].mxu0
      %v4261 = vadd.f32 %v3082, %v4260
      %4262 = vmatprep.mubr.bf16.mxu0 0
      %4263 = vmatmul.mubr.bf16.gmra.mrb[0].mxu0 %v2950
      %v4264 = vpop.f32.mrb[0].mxu0
      %v4265 = vadd.f32 %v3078, %v4264
      %v4266 = vpop.f32.mrb[0].mxu0
      %v4267 = vadd.f32 %v3082, %v4266
      %v4268 = vpop.f32.mrb[0].mxu0
      %v4269 = vadd.f32 %v3078, %v4268
      %v4270 = vpop.f32.mrb[0].mxu0
      %v4271 = vadd.f32 %v3082, %v4270
      %4272 = vmatprep.mubr.bf16.mxu0 0
      %4273 = vmatmul.mubr.bf16.gmra.mrb[0].mxu0 %v2951
      %v4274 = vpop.f32.mrb[0].mxu0
      %v4275 = vadd.f32 %v3078, %v4274
      %v4276 = vpop.f32.mrb[0].mxu0
      %v4277 = vadd.f32 %v3082, %v4276
      %v4278 = vpop.f32.mrb[0].mxu0
      %v4279 = vadd.f32 %v3078, %v4278
      %v4280 = vpop.f32.mrb[0].mxu0
      %v4281 = vadd.f32 %v3082, %v4280
      %4282 = vmatprep.mubr.bf16.mxu0 0
      %4283 = vmatmul.mubr.bf16.gmra.mrb[0].mxu0 %v2952
      %v4284 = vpop.f32.mrb[0].mxu0
      %v4285 = vadd.f32 %v3078, %v4284
      %v4286 = vpop.f32.mrb[0].mxu0
      %v4287 = vadd.f32 %v3082, %v4286
      %v4288 = vpop.f32.mrb[0].mxu0
      %v4289 = vadd.f32 %v3078, %v4288
      %v4290 = vpop.f32.mrb[0].mxu0
      %v4291 = vadd.f32 %v3082, %v4290
      %4292 = vmatprep.mubr.bf16.mxu0 0
      %4293 = vmatmul.mubr.bf16.gmra.mrb[0].mxu0 %v2953
      %v4294 = vpop.f32.mrb[0].mxu0
      %v4295 = vadd.f32 %v3078, %v4294
      %v4296 = vpop.f32.mrb[0].mxu0
      %v4297 = vadd.f32 %v3082, %v4296
      %v4298 = vpop.f32.mrb[0].mxu0
      %v4299 = vadd.f32 %v3078, %v4298
      %v4300 = vpop.f32.mrb[0].mxu0
      %v4301 = vadd.f32 %v3082, %v4300
      %4302 = vmatprep.mubr.bf16.mxu0 0
      %4303 = vmatmul.mubr.bf16.gmra.mrb[0].mxu0 %v2954
      %v4304 = vpop.f32.mrb[0].mxu0
      %v4305 = vadd.f32 %v3078, %v4304
      %v4306 = vpop.f32.mrb[0].mxu0
      %v4307 = vadd.f32 %v3082, %v4306
      %v4308 = vpop.f32.mrb[0].mxu0
      %v4309 = vadd.f32 %v3078, %v4308
      %v4310 = vpop.f32.mrb[0].mxu0
      %v4311 = vadd.f32 %v3082, %v4310
      %4312 = vmatprep.mubr.bf16.mxu0 0
      %4313 = vmatmul.mubr.bf16.gmra.mrb[0].mxu0 %v2955
      %v4314 = vpop.f32.mrb[0].mxu0
      %v4315 = vadd.f32 %v3078, %v4314
      %v4316 = vpop.f32.mrb[0].mxu0
      %v4317 = vadd.f32 %v3082, %v4316
      %v4318 = vpop.f32.mrb[0].mxu0
      %v4319 = vadd.f32 %v3078, %v4318
      %v4320 = vpop.f32.mrb[0].mxu0
      %v4321 = vadd.f32 %v3082, %v4320
      %4322 = vmatprep.mubr.bf16.mxu0 0
      %4323 = vmatmul.mubr.bf16.gmra.mrb[0].mxu0 %v2956
      %v4324 = vpop.f32.mrb[0].mxu0
      %v4325 = vadd.f32 %v3078, %v4324
      %v4326 = vpop.f32.mrb[0].mxu0
      %v4327 = vadd.f32 %v3082, %v4326
      %v4328 = vpop.f32.mrb[0].mxu0
      %v4329 = vadd.f32 %v3078, %v4328
      %v4330 = vpop.f32.mrb[0].mxu0
      %v4331 = vadd.f32 %v3082, %v4330
      %4332 = vmatprep.mubr.bf16.mxu0 0
      %4333 = vmatmul.mubr.bf16.gmra.mrb[0].mxu0 %v2957
      %v4334 = vpop.f32.mrb[0].mxu0
      %v4335 = vadd.f32 %v3078, %v4334
      %v4336 = vpop.f32.mrb[0].mxu0
      %v4337 = vadd.f32 %v3082, %v4336
      %v4338 = vpop.f32.mrb[0].mxu0
      %v4339 = vadd.f32 %v3078, %v4338
      %v4340 = vpop.f32.mrb[0].mxu0
      %v4341 = vadd.f32 %v3082, %v4340
      %4342 = vmatprep.mubr.bf16.mxu0 0
      %4343 = vmatmul.mubr.bf16.gmra.mrb[0].mxu0 %v2958
      %v4344 = vpop.f32.mrb[0].mxu0
      %v4345 = vadd.f32 %v3078, %v4344
      %v4346 = vpop.f32.mrb[0].mxu0
      %v4347 = vadd.f32 %v3082, %v4346
      %v4348 = vpop.f32.mrb[0].mxu0
      %v4349 = vadd.f32 %v3078, %v4348
      %v4350 = vpop.f32.mrb[0].mxu0
      %v4351 = vadd.f32 %v3082, %v4350
      %4352 = vmatprep.mubr.bf16.mxu0 0
      %4353 = vmatmul.mubr.bf16.gmra.mrb[0].mxu0 %v2959
      %v4354 = vpop.f32.mrb[0].mxu0
      %v4355 = vadd.f32 %v3078, %v4354
      %v4356 = vpop.f32.mrb[0].mxu0
      %v4357 = vadd.f32 %v3082, %v4356
      %v4358 = vpop.f32.mrb[0].mxu0
      %v4359 = vadd.f32 %v3078, %v4358
      %v4360 = vpop.f32.mrb[0].mxu0
      %v4361 = vadd.f32 %v3082, %v4360
      %4362 = vmatprep.mubr.bf16.mxu0 0
      %4363 = vmatmul.mubr.bf16.gmra.mrb[0].mxu0 %v2960
      %v4364 = vpop.f32.mrb[0].mxu0
      %v4365 = vadd.f32 %v3078, %v4364
      %v4366 = vpop.f32.mrb[0].mxu0
      %v4367 = vadd.f32 %v3082, %v4366
      %v4368 = vpop.f32.mrb[0].mxu0
      %v4369 = vadd.f32 %v3078, %v4368
      %v4370 = vpop.f32.mrb[0].mxu0
      %v4371 = vadd.f32 %v3082, %v4370
      %4372 = vmatprep.mubr.bf16.mxu0 0
      %4373 = vmatmul.mubr.bf16.gmra.mrb[0].mxu0 %v2961
      %v4374 = vpop.f32.mrb[0].mxu0
      %v4375 = vadd.f32 %v3078, %v4374
      %v4376 = vpop.f32.mrb[0].mxu0
      %v4377 = vadd.f32 %v3082, %v4376
      %v4378 = vpop.f32.mrb[0].mxu0
      %v4379 = vadd.f32 %v3078, %v4378
      %v4380 = vpop.f32.mrb[0].mxu0
      %v4381 = vadd.f32 %v3082, %v4380
      %4382 = vmatprep.mubr.bf16.mxu0 0
      %4383 = vmatmul.mubr.bf16.gmra.mrb[0].mxu0 %v2962
      %v4384 = vpop.f32.mrb[0].mxu0
      %v4385 = vadd.f32 %v3078, %v4384
      %v4386 = vpop.f32.mrb[0].mxu0
      %v4387 = vadd.f32 %v3082, %v4386
      %v4388 = vpop.f32.mrb[0].mxu0
      %v4389 = vadd.f32 %v3078, %v4388
      %v4390 = vpop.f32.mrb[0].mxu0
      %v4391 = vadd.f32 %v3082, %v4390
      %4392 = vmatprep.mubr.bf16.mxu0 0
      %4393 = vmatmul.mubr.bf16.gmra.mrb[0].mxu0 %v2963
      %v4394 = vpop.f32.mrb[0].mxu0
      %v4395 = vadd.f32 %v3078, %v4394
      %v4396 = vpop.f32.mrb[0].mxu0
      %v4397 = vadd.f32 %v3082, %v4396
      %v4398 = vpop.f32.mrb[0].mxu0
      %v4399 = vadd.f32 %v3078, %v4398
      %v4400 = vpop.f32.mrb[0].mxu0
      %v4401 = vadd.f32 %v3082, %v4400
      %4402 = vmatprep.mubr.bf16.mxu0 0
      %4403 = vmatmul.mubr.bf16.gmra.mrb[0].mxu0 %v2964
      %v4404 = vpop.f32.mrb[0].mxu0
      %v4405 = vadd.f32 %v3078, %v4404
      %v4406 = vpop.f32.mrb[0].mxu0
      %v4407 = vadd.f32 %v3082, %v4406
      %v4408 = vpop.f32.mrb[0].mxu0
      %v4409 = vadd.f32 %v3078, %v4408
      %v4410 = vpop.f32.mrb[0].mxu0
      %v4411 = vadd.f32 %v3082, %v4410
      %4412 = vmatprep.mubr.bf16.mxu0 0
      %4413 = vmatmul.mubr.bf16.gmra.mrb[0].mxu0 %v2965
      %v4414 = vpop.f32.mrb[0].mxu0
      %v4415 = vadd.f32 %v3078, %v4414
      %v4416 = vpop.f32.mrb[0].mxu0
      %v4417 = vadd.f32 %v3082, %v4416
      %v4418 = vpop.f32.mrb[0].mxu0
      %v4419 = vadd.f32 %v3078, %v4418
      %v4420 = vpop.f32.mrb[0].mxu0
      %v4421 = vadd.f32 %v3082, %v4420
      %4422 = vmatprep.mubr.bf16.mxu0 0
      %4423 = vmatmul.mubr.bf16.gmra.mrb[0].mxu0 %v2966
      %v4424 = vpop.f32.mrb[0].mxu0
      %v4425 = vadd.f32 %v3078, %v4424
      %v4426 = vpop.f32.mrb[0].mxu0
      %v4427 = vadd.f32 %v3082, %v4426
      %v4428 = vpop.f32.mrb[0].mxu0
      %v4429 = vadd.f32 %v3078, %v4428
      %v4430 = vpop.f32.mrb[0].mxu0
      %v4431 = vadd.f32 %v3082, %v4430
      %4432 = vmatprep.mubr.bf16.mxu0 0
      %4433 = vmatmul.mubr.bf16.gmra.mrb[0].mxu0 %v2967
      %v4434 = vpop.f32.mrb[0].mxu0
      %v4435 = vadd.f32 %v3078, %v4434
      %v4436 = vpop.f32.mrb[0].mxu0
      %v4437 = vadd.f32 %v3082, %v4436
      %v4438 = vpop.f32.mrb[0].mxu0
      %v4439 = vadd.f32 %v3078, %v4438
      %v4440 = vpop.f32.mrb[0].mxu0
      %v4441 = vadd.f32 %v3082, %v4440
      %4442 = vmatprep.mubr.bf16.mxu0 0
      %4443 = vmatmul.mubr.bf16.gmra.mrb[0].mxu0 %v2968
      %v4444 = vpop.f32.mrb[0].mxu0
      %v4445 = vadd.f32 %v3078, %v4444
      %v4446 = vpop.f32.mrb[0].mxu0
      %v4447 = vadd.f32 %v3082, %v4446
      %v4448 = vpop.f32.mrb[0].mxu0
      %v4449 = vadd.f32 %v3078, %v4448
      %v4450 = vpop.f32.mrb[0].mxu0
      %v4451 = vadd.f32 %v3082, %v4450
      %4452 = vmatprep.mubr.bf16.mxu0 0
      %4453 = vmatmul.mubr.bf16.gmra.mrb[0].mxu0 %v2969
      %v4454 = vpop.f32.mrb[0].mxu0
      %v4455 = vadd.f32 %v3078, %v4454
      %v4456 = vpop.f32.mrb[0].mxu0
      %v4457 = vadd.f32 %v3082, %v4456
      %v4458 = vpop.f32.mrb[0].mxu0
      %v4459 = vadd.f32 %v3078, %v4458
      %v4460 = vpop.f32.mrb[0].mxu0
      %v4461 = vadd.f32 %v3082, %v4460
      %4462 = vmatprep.mubr.bf16.mxu0 0
      %4463 = vmatmul.mubr.bf16.gmra.mrb[0].mxu0 %v2970
      %v4464 = vpop.f32.mrb[0].mxu0
      %v4465 = vadd.f32 %v3078, %v4464
      %v4466 = vpop.f32.mrb[0].mxu0
      %v4467 = vadd.f32 %v3082, %v4466
      %v4468 = vpop.f32.mrb[0].mxu0
      %v4469 = vadd.f32 %v3078, %v4468
      %v4470 = vpop.f32.mrb[0].mxu0
      %v4471 = vadd.f32 %v3082, %v4470
      %4472 = vmatprep.mubr.bf16.mxu0 0
      %4473 = vmatmul.mubr.bf16.gmra.mrb[0].mxu0 %v2971
      %v4474 = vpop.f32.mrb[0].mxu0
      %v4475 = vadd.f32 %v3078, %v4474
      %v4476 = vpop.f32.mrb[0].mxu0
      %v4477 = vadd.f32 %v3082, %v4476
      %v4478 = vpop.f32.mrb[0].mxu0
      %v4479 = vadd.f32 %v3078, %v4478
      %v4480 = vpop.f32.mrb[0].mxu0
      %v4481 = vadd.f32 %v3082, %v4480
      %4482 = vmatprep.mubr.bf16.mxu0 0
      %4483 = vmatmul.mubr.bf16.gmra.mrb[0].mxu0 %v2972
      %v4484 = vpop.f32.mrb[0].mxu0
      %v4485 = vadd.f32 %v3078, %v4484
      %v4486 = vpop.f32.mrb[0].mxu0
      %v4487 = vadd.f32 %v3082, %v4486
      %v4488 = vpop.f32.mrb[0].mxu0
      %v4489 = vadd.f32 %v3078, %v4488
      %v4490 = vpop.f32.mrb[0].mxu0
      %v4491 = vadd.f32 %v3082, %v4490
      %4492 = vmatprep.mubr.bf16.mxu0 0
      %4493 = vmatmul.mubr.bf16.gmra.mrb[0].mxu0 %v2973
      %v4494 = vpop.f32.mrb[0].mxu0
      %v4495 = vadd.f32 %v3078, %v4494
      %v4496 = vpop.f32.mrb[0].mxu0
      %v4497 = vadd.f32 %v3082, %v4496
      %v4498 = vpop.f32.mrb[0].mxu0
      %v4499 = vadd.f32 %v3078, %v4498
      %v4500 = vpop.f32.mrb[0].mxu0
      %v4501 = vadd.f32 %v3082, %v4500
      %4502 = vmatprep.mubr.bf16.mxu0 0
      %4503 = vmatmul.mubr.bf16.gmra.mrb[0].mxu0 %v2974
      %v4504 = vpop.f32.mrb[0].mxu0
      %v4505 = vadd.f32 %v3078, %v4504
      %v4506 = vpop.f32.mrb[0].mxu0
      %v4507 = vadd.f32 %v3082, %v4506
      %v4508 = vpop.f32.mrb[0].mxu0
      %v4509 = vadd.f32 %v3078, %v4508
      %v4510 = vpop.f32.mrb[0].mxu0
      %v4511 = vadd.f32 %v3082, %v4510
      %4512 = vmatprep.mubr.bf16.mxu0 0
      %4513 = vmatmul.mubr.bf16.gmra.mrb[0].mxu0 %v2975
      %v4514 = vpop.f32.mrb[0].mxu0
      %v4515 = vadd.f32 %v3078, %v4514
      %v4516 = vpop.f32.mrb[0].mxu0
      %v4517 = vadd.f32 %v3082, %v4516
      %v4518 = vpop.f32.mrb[0].mxu0
      %v4519 = vadd.f32 %v3078, %v4518
      %v4520 = vpop.f32.mrb[0].mxu0
      %v4521 = vadd.f32 %v3082, %v4520
      %4522 = vmatprep.mubr.bf16.mxu0 0
      %4523 = vmatmul.mubr.bf16.gmra.mrb[0].mxu0 %v2976
      %v4524 = vpop.f32.mrb[0].mxu0
      %v4525 = vadd.f32 %v3078, %v4524
      %v4526 = vpop.f32.mrb[0].mxu0
      %v4527 = vadd.f32 %v3082, %v4526
      %v4528 = vpop.f32.mrb[0].mxu0
      %v4529 = vadd.f32 %v3078, %v4528
      %v4530 = vpop.f32.mrb[0].mxu0
      %v4531 = vadd.f32 %v3082, %v4530
      %4532 = vmatprep.mubr.bf16.mxu0 0
      %4533 = vmatmul.mubr.bf16.gmra.mrb[0].mxu0 %v2977
      %v4534 = vpop.f32.mrb[0].mxu0
      %v4535 = vadd.f32 %v3078, %v4534
      %v4536 = vpop.f32.mrb[0].mxu0
      %v4537 = vadd.f32 %v3082, %v4536
      %v4538 = vpop.f32.mrb[0].mxu0
      %v4539 = vadd.f32 %v3078, %v4538
      %v4540 = vpop.f32.mrb[0].mxu0
      %v4541 = vadd.f32 %v3082, %v4540
      %4542 = vmatprep.mubr.bf16.mxu0 0
      %4543 = vmatmul.mubr.bf16.gmra.mrb[0].mxu0 %v2978
      %v4544 = vpop.f32.mrb[0].mxu0
      %v4545 = vadd.f32 %v3078, %v4544
      %v4546 = vpop.f32.mrb[0].mxu0
      %v4547 = vadd.f32 %v3082, %v4546
      %v4548 = vpop.f32.mrb[0].mxu0
      %v4549 = vadd.f32 %v3078, %v4548
      %v4550 = vpop.f32.mrb[0].mxu0
      %v4551 = vadd.f32 %v3082, %v4550
      %4552 = vmatprep.mubr.bf16.mxu0 0
      %4553 = vmatmul.mubr.bf16.gmra.mrb[0].mxu0 %v2979
      %v4554 = vpop.f32.mrb[0].mxu0
      %v4555 = vadd.f32 %v3078, %v4554
      %v4556 = vpop.f32.mrb[0].mxu0
      %v4557 = vadd.f32 %v3082, %v4556
      %v4558 = vpop.f32.mrb[0].mxu0
      %v4559 = vadd.f32 %v3078, %v4558
      %v4560 = vpop.f32.mrb[0].mxu0
      %v4561 = vadd.f32 %v3082, %v4560
      %4562 = vmatprep.mubr.bf16.mxu0 0
      %4563 = vmatmul.mubr.bf16.gmra.mrb[0].mxu0 %v2980
      %v4564 = vpop.f32.mrb[0].mxu0
      %v4565 = vadd.f32 %v3078, %v4564
      %v4566 = vpop.f32.mrb[0].mxu0
      %v4567 = vadd.f32 %v3082, %v4566
      %v4568 = vpop.f32.mrb[0].mxu0
      %v4569 = vadd.f32 %v3078, %v4568
      %v4570 = vpop.f32.mrb[0].mxu0
      %v4571 = vadd.f32 %v3082, %v4570
      %4572 = vmatprep.mubr.bf16.mxu0 0
      %4573 = vmatmul.mubr.bf16.gmra.mrb[0].mxu0 %v2981
      %v4574 = vpop.f32.mrb[0].mxu0
      %v4575 = vadd.f32 %v3078, %v4574
      %v4576 = vpop.f32.mrb[0].mxu0
      %v4577 = vadd.f32 %v3082, %v4576
      %v4578 = vpop.f32.mrb[0].mxu0
      %v4579 = vadd.f32 %v3078, %v4578
      %v4580 = vpop.f32.mrb[0].mxu0
      %v4581 = vadd.f32 %v3082, %v4580
      %4582 = vmatprep.mubr.bf16.mxu0 0
      %4583 = vmatmul.mubr.bf16.gmra.mrb[0].mxu0 %v2982
      %v4584 = vpop.f32.mrb[0].mxu0
      %v4585 = vadd.f32 %v3078, %v4584
      %v4586 = vpop.f32.mrb[0].mxu0
      %v4587 = vadd.f32 %v3082, %v4586
      %v4588 = vpop.f32.mrb[0].mxu0
      %v4589 = vadd.f32 %v3078, %v4588
      %v4590 = vpop.f32.mrb[0].mxu0
      %v4591 = vadd.f32 %v3082, %v4590
      %4592 = vmatprep.mubr.bf16.mxu0 0
      %4593 = vmatmul.mubr.bf16.gmra.mrb[0].mxu0 %v2983
      %v4594 = vpop.f32.mrb[0].mxu0
      %v4595 = vadd.f32 %v3078, %v4594
      %v4596 = vpop.f32.mrb[0].mxu0
      %v4597 = vadd.f32 %v3082, %v4596
      %v4598 = vpop.f32.mrb[0].mxu0
      %v4599 = vadd.f32 %v3078, %v4598
      %v4600 = vpop.f32.mrb[0].mxu0
      %v4601 = vadd.f32 %v3082, %v4600
      %4602 = vmatprep.mubr.bf16.mxu0 0
      %4603 = vmatmul.mubr.bf16.gmra.mrb[0].mxu0 %v2984
      %v4604 = vpop.f32.mrb[0].mxu0
      %v4605 = vadd.f32 %v3078, %v4604
      %v4606 = vpop.f32.mrb[0].mxu0
      %v4607 = vadd.f32 %v3082, %v4606
      %v4608 = vpop.f32.mrb[0].mxu0
      %v4609 = vadd.f32 %v3078, %v4608
      %v4610 = vpop.f32.mrb[0].mxu0
      %v4611 = vadd.f32 %v3082, %v4610
      %4612 = vmatprep.mubr.bf16.mxu0 0
      %4613 = vmatmul.mubr.bf16.gmra.mrb[0].mxu0 %v2985
      %v4614 = vpop.f32.mrb[0].mxu0
      %v4615 = vadd.f32 %v3078, %v4614
      %v4616 = vpop.f32.mrb[0].mxu0
      %v4617 = vadd.f32 %v3082, %v4616
      %v4618 = vpop.f32.mrb[0].mxu0
      %v4619 = vadd.f32 %v3078, %v4618
      %v4620 = vpop.f32.mrb[0].mxu0
      %v4621 = vadd.f32 %v3082, %v4620
      %4622 = vmatprep.mubr.bf16.mxu0 0
      %4623 = vmatmul.mubr.bf16.gmra.mrb[0].mxu0 %v2986
      %v4624 = vpop.f32.mrb[0].mxu0
      %v4625 = vadd.f32 %v3078, %v4624
      %v4626 = vpop.f32.mrb[0].mxu0
      %v4627 = vadd.f32 %v3082, %v4626
      %v4628 = vpop.f32.mrb[0].mxu0
      %v4629 = vadd.f32 %v3078, %v4628
      %v4630 = vpop.f32.mrb[0].mxu0
      %v4631 = vadd.f32 %v3082, %v4630
      %4632 = vmatprep.mubr.bf16.mxu0 0
      %4633 = vmatmul.mubr.bf16.gmra.mrb[0].mxu0 %v2987
      %v4634 = vpop.f32.mrb[0].mxu0
      %v4635 = vadd.f32 %v3078, %v4634
      %v4636 = vpop.f32.mrb[0].mxu0
      %v4637 = vadd.f32 %v3082, %v4636
      %v4638 = vpop.f32.mrb[0].mxu0
      %v4639 = vadd.f32 %v3078, %v4638
      %v4640 = vpop.f32.mrb[0].mxu0
      %v4641 = vadd.f32 %v3082, %v4640
      %4642 = vmatprep.mubr.bf16.mxu0 0
      %4643 = vmatmul.mubr.bf16.gmra.mrb[0].mxu0 %v2988
      %v4644 = vpop.f32.mrb[0].mxu0
      %v4645 = vadd.f32 %v3078, %v4644
      %v4646 = vpop.f32.mrb[0].mxu0
      %v4647 = vadd.f32 %v3082, %v4646
      %v4648 = vpop.f32.mrb[0].mxu0
      %v4649 = vadd.f32 %v3078, %v4648
      %v4650 = vpop.f32.mrb[0].mxu0
      %v4651 = vadd.f32 %v3082, %v4650
      %4652 = vmatprep.mubr.bf16.mxu0 0
      %4653 = vmatmul.mubr.bf16.gmra.mrb[0].mxu0 %v2989
      %v4654 = vpop.f32.mrb[0].mxu0
      %v4655 = vadd.f32 %v3078, %v4654
      %v4656 = vpop.f32.mrb[0].mxu0
      %v4657 = vadd.f32 %v3082, %v4656
      %v4658 = vpop.f32.mrb[0].mxu0
      %v4659 = vadd.f32 %v3078, %v4658
      %v4660 = vpop.f32.mrb[0].mxu0
      %v4661 = vadd.f32 %v3082, %v4660
      %4662 = vmatprep.mubr.bf16.mxu0 0
      %4663 = vmatmul.mubr.bf16.gmra.mrb[0].mxu0 %v2990
      %v4664 = vpop.f32.mrb[0].mxu0
      %v4665 = vadd.f32 %v3078, %v4664
      %v4666 = vpop.f32.mrb[0].mxu0
      %v4667 = vadd.f32 %v3082, %v4666
      %v4668 = vpop.f32.mrb[0].mxu0
      %v4669 = vadd.f32 %v3078, %v4668
      %v4670 = vpop.f32.mrb[0].mxu0
      %v4671 = vadd.f32 %v3082, %v4670
      %4672 = vmatprep.mubr.bf16.mxu0 0
      %4673 = vmatmul.mubr.bf16.gmra.mrb[0].mxu0 %v2991
      %v4674 = vpop.f32.mrb[0].mxu0
      %v4675 = vadd.f32 %v3078, %v4674
      %v4676 = vpop.f32.mrb[0].mxu0
      %v4677 = vadd.f32 %v3082, %v4676
      %v4678 = vpop.f32.mrb[0].mxu0
      %v4679 = vadd.f32 %v3078, %v4678
      %v4680 = vpop.f32.mrb[0].mxu0
      %v4681 = vadd.f32 %v3082, %v4680
      %4682 = vmatprep.mubr.bf16.mxu0 0
      %4683 = vmatmul.mubr.bf16.gmra.mrb[0].mxu0 %v2992
      %v4684 = vpop.f32.mrb[0].mxu0
      %v4685 = vadd.f32 %v3078, %v4684
      %v4686 = vpop.f32.mrb[0].mxu0
      %v4687 = vadd.f32 %v3082, %v4686
      %v4688 = vpop.f32.mrb[0].mxu0
      %v4689 = vadd.f32 %v3078, %v4688
      %v4690 = vpop.f32.mrb[0].mxu0
      %v4691 = vadd.f32 %v3082, %v4690
      %4692 = vmatprep.mubr.bf16.mxu0 0
      %4693 = vmatmul.mubr.bf16.gmra.mrb[0].mxu0 %v2993
      %v4694 = vpop.f32.mrb[0].mxu0
      %v4695 = vadd.f32 %v3078, %v4694
      %v4696 = vpop.f32.mrb[0].mxu0
      %v4697 = vadd.f32 %v3082, %v4696
      %v4698 = vpop.f32.mrb[0].mxu0
      %v4699 = vadd.f32 %v3078, %v4698
      %v4700 = vpop.f32.mrb[0].mxu0
      %v4701 = vadd.f32 %v3082, %v4700
      %4702 = vmatprep.mubr.bf16.mxu0 0
      %4703 = vmatmul.mubr.bf16.gmra.mrb[0].mxu0 %v2994
      %v4704 = vpop.f32.mrb[0].mxu0
      %v4705 = vadd.f32 %v3078, %v4704
      %v4706 = vpop.f32.mrb[0].mxu0
      %v4707 = vadd.f32 %v3082, %v4706
      %v4708 = vpop.f32.mrb[0].mxu0
      %v4709 = vadd.f32 %v3078, %v4708
      %v4710 = vpop.f32.mrb[0].mxu0
      %v4711 = vadd.f32 %v3082, %v4710
      %4712 = vmatprep.mubr.bf16.mxu0 0
      %4713 = vmatmul.mubr.bf16.gmra.mrb[0].mxu0 %v2995
      %v4714 = vpop.f32.mrb[0].mxu0
      %v4715 = vadd.f32 %v3078, %v4714
      %v4716 = vpop.f32.mrb[0].mxu0
      %v4717 = vadd.f32 %v3082, %v4716
      %v4718 = vpop.f32.mrb[0].mxu0
      %v4719 = vadd.f32 %v3078, %v4718
      %v4720 = vpop.f32.mrb[0].mxu0
      %v4721 = vadd.f32 %v3082, %v4720
      %4722 = vmatprep.mubr.bf16.mxu0 0
      %4723 = vmatmul.mubr.bf16.gmra.mrb[0].mxu0 %v2996
      %v4724 = vpop.f32.mrb[0].mxu0
      %v4725 = vadd.f32 %v3078, %v4724
      %v4726 = vpop.f32.mrb[0].mxu0
      %v4727 = vadd.f32 %v3082, %v4726
      %v4728 = vpop.f32.mrb[0].mxu0
      %v4729 = vadd.f32 %v3078, %v4728
      %v4730 = vpop.f32.mrb[0].mxu0
      %v4731 = vadd.f32 %v3082, %v4730
      %4732 = vmatprep.mubr.bf16.mxu0 0
      %4733 = vmatmul.mubr.bf16.gmra.mrb[0].mxu0 %v2997
      %v4734 = vpop.f32.mrb[0].mxu0
      %v4735 = vadd.f32 %v3078, %v4734
      %v4736 = vpop.f32.mrb[0].mxu0
      %v4737 = vadd.f32 %v3082, %v4736
      %v4738 = vpop.f32.mrb[0].mxu0
      %v4739 = vadd.f32 %v3078, %v4738
      %v4740 = vpop.f32.mrb[0].mxu0
      %v4741 = vadd.f32 %v3082, %v4740
      %4742 = vmatprep.mubr.bf16.mxu0 0
      %4743 = vmatmul.mubr.bf16.gmra.mrb[0].mxu0 %v2998
      %v4744 = vpop.f32.mrb[0].mxu0
      %v4745 = vadd.f32 %v3078, %v4744
      %v4746 = vpop.f32.mrb[0].mxu0
      %v4747 = vadd.f32 %v3082, %v4746
      %v4748 = vpop.f32.mrb[0].mxu0
      %v4749 = vadd.f32 %v3078, %v4748
      %v4750 = vpop.f32.mrb[0].mxu0
      %v4751 = vadd.f32 %v3082, %v4750
      %4752 = vmatprep.mubr.bf16.mxu0 0
      %4753 = vmatmul.mubr.bf16.gmra.mrb[0].mxu0 %v2999
      %v4754 = vpop.f32.mrb[0].mxu0
      %v4755 = vadd.f32 %v3078, %v4754
      %v4756 = vpop.f32.mrb[0].mxu0
      %v4757 = vadd.f32 %v3082, %v4756
      %v4758 = vpop.f32.mrb[0].mxu0
      %v4759 = vadd.f32 %v3078, %v4758
      %v4760 = vpop.f32.mrb[0].mxu0
      %v4761 = vadd.f32 %v3082, %v4760
      %4762 = vmatprep.mubr.bf16.mxu0 0
      %4763 = vmatmul.mubr.bf16.gmra.mrb[0].mxu0 %v3000
      %v4764 = vpop.f32.mrb[0].mxu0
      %v4765 = vadd.f32 %v3078, %v4764
      %v4766 = vpop.f32.mrb[0].mxu0
      %v4767 = vadd.f32 %v3082, %v4766
      %v4768 = vpop.f32.mrb[0].mxu0
      %v4769 = vadd.f32 %v3078, %v4768
      %v4770 = vpop.f32.mrb[0].mxu0
      %v4771 = vadd.f32 %v3082, %v4770
      %4772 = vdwg.mxu0
      %4773 = vmatprep.subr.bf16.mxu0 %v3304
      %4774 = vmatpush1.bf16.msra.mxu0 %v3303
      %4775 = vmatprep.subr.bf16.mxu0 %v3312
      %4776 = vmatpush1.bf16.msra.mxu0 %v3311
      %4777 = vmatprep.subr.bf16.mxu0 %v3320
      %4778 = vmatpush1.bf16.msra.mxu0 %v3319
      %4779 = vmatprep.subr.bf16.mxu0 %v3328
      %4780 = vmatpush1.bf16.msra.mxu0 %v3327
      %4781 = vmatprep.subr.bf16.mxu0 %v3336
      %4782 = vmatpush1.bf16.msra.mxu0 %v3335
      %4783 = vmatprep.subr.bf16.mxu0 %v3344
      %4784 = vmatpush1.bf16.msra.mxu0 %v3343
      %4785 = vmatprep.subr.bf16.mxu0 %v3352
      %4786 = vmatpush1.bf16.msra.mxu0 %v3351
      %4787 = vmatprep.subr.bf16.mxu0 %v3360
      %4788 = vmatpush1.bf16.msra.mxu0 %v3359
      %4789 = vmatprep.subr.bf16.mxu0 0
      %4790 = vmatpush1.bf16.msra.mxu0 0
      %4791 = vmatprep.subr.bf16.mxu0 0
      %4792 = vmatpush1.bf16.msra.mxu0 0
      %4793 = vmatprep.subr.bf16.mxu0 0
      %4794 = vmatpush1.bf16.msra.mxu0 0
      %4795 = vmatprep.subr.bf16.mxu0 0
      %4796 = vmatpush1.bf16.msra.mxu0 0
      %4797 = vmatprep.subr.bf16.mxu0 0
      %4798 = vmatpush1.bf16.msra.mxu0 0
      %4799 = vmatprep.subr.bf16.mxu0 0
      %4800 = vmatpush1.bf16.msra.mxu0 0
      %4801 = vmatprep.subr.bf16.mxu0 0
      %4802 = vmatpush1.bf16.msra.mxu0 0
      %4803 = vmatprep.subr.bf16.mxu0 0
      %4804 = vmatpush1.bf16.msra.mxu0 0
      %4805 = vmatprep.mubr.bf16.mxu0 0
      %4806 = vmatmul.mubr.bf16.gmra.mrb[0].mxu0 %v2937
      %v4807 = vpop.f32.mrb[0].mxu0
      %v4808 = vadd.f32 %v3086, %v4807
      %v4809 = vpop.f32.mrb[0].mxu0
      %v4810 = vadd.f32 %v3090, %v4809
      %v4811 = vpop.f32.mrb[0].mxu0
      %v4812 = vadd.f32 %v3086, %v4811
      %v4813 = vpop.f32.mrb[0].mxu0
      %v4814 = vadd.f32 %v3090, %v4813
      %4815 = vmatprep.mubr.bf16.mxu0 0
      %4816 = vmatmul.mubr.bf16.gmra.mrb[0].mxu0 %v2938
      %v4817 = vpop.f32.mrb[0].mxu0
      %v4818 = vadd.f32 %v3086, %v4817
      %v4819 = vpop.f32.mrb[0].mxu0
      %v4820 = vadd.f32 %v3090, %v4819
      %v4821 = vpop.f32.mrb[0].mxu0
      %v4822 = vadd.f32 %v3086, %v4821
      %v4823 = vpop.f32.mrb[0].mxu0
      %v4824 = vadd.f32 %v3090, %v4823
      %4825 = vmatprep.mubr.bf16.mxu0 0
      %4826 = vmatmul.mubr.bf16.gmra.mrb[0].mxu0 %v2939
      %v4827 = vpop.f32.mrb[0].mxu0
      %v4828 = vadd.f32 %v3086, %v4827
      %v4829 = vpop.f32.mrb[0].mxu0
      %v4830 = vadd.f32 %v3090, %v4829
      %v4831 = vpop.f32.mrb[0].mxu0
      %v4832 = vadd.f32 %v3086, %v4831
      %v4833 = vpop.f32.mrb[0].mxu0
      %v4834 = vadd.f32 %v3090, %v4833
      %4835 = vmatprep.mubr.bf16.mxu0 0
      %4836 = vmatmul.mubr.bf16.gmra.mrb[0].mxu0 %v2940
      %v4837 = vpop.f32.mrb[0].mxu0
      %v4838 = vadd.f32 %v3086, %v4837
      %v4839 = vpop.f32.mrb[0].mxu0
      %v4840 = vadd.f32 %v3090, %v4839
      %v4841 = vpop.f32.mrb[0].mxu0
      %v4842 = vadd.f32 %v3086, %v4841
      %v4843 = vpop.f32.mrb[0].mxu0
      %v4844 = vadd.f32 %v3090, %v4843
      %4845 = vmatprep.mubr.bf16.mxu0 0
      %4846 = vmatmul.mubr.bf16.gmra.mrb[0].mxu0 %v2941
      %v4847 = vpop.f32.mrb[0].mxu0
      %v4848 = vadd.f32 %v3086, %v4847
      %v4849 = vpop.f32.mrb[0].mxu0
      %v4850 = vadd.f32 %v3090, %v4849
      %v4851 = vpop.f32.mrb[0].mxu0
      %v4852 = vadd.f32 %v3086, %v4851
      %v4853 = vpop.f32.mrb[0].mxu0
      %v4854 = vadd.f32 %v3090, %v4853
      %4855 = vmatprep.mubr.bf16.mxu0 0
      %4856 = vmatmul.mubr.bf16.gmra.mrb[0].mxu0 %v2942
      %v4857 = vpop.f32.mrb[0].mxu0
      %v4858 = vadd.f32 %v3086, %v4857
      %v4859 = vpop.f32.mrb[0].mxu0
      %v4860 = vadd.f32 %v3090, %v4859
      %v4861 = vpop.f32.mrb[0].mxu0
      %v4862 = vadd.f32 %v3086, %v4861
      %v4863 = vpop.f32.mrb[0].mxu0
      %v4864 = vadd.f32 %v3090, %v4863
      %4865 = vmatprep.mubr.bf16.mxu0 0
      %4866 = vmatmul.mubr.bf16.gmra.mrb[0].mxu0 %v2943
      %v4867 = vpop.f32.mrb[0].mxu0
      %v4868 = vadd.f32 %v3086, %v4867
      %v4869 = vpop.f32.mrb[0].mxu0
      %v4870 = vadd.f32 %v3090, %v4869
      %v4871 = vpop.f32.mrb[0].mxu0
      %v4872 = vadd.f32 %v3086, %v4871
      %v4873 = vpop.f32.mrb[0].mxu0
      %v4874 = vadd.f32 %v3090, %v4873
      %4875 = vmatprep.mubr.bf16.mxu0 0
      %4876 = vmatmul.mubr.bf16.gmra.mrb[0].mxu0 %v2944
      %v4877 = vpop.f32.mrb[0].mxu0
      %v4878 = vadd.f32 %v3086, %v4877
      %v4879 = vpop.f32.mrb[0].mxu0
      %v4880 = vadd.f32 %v3090, %v4879
      %v4881 = vpop.f32.mrb[0].mxu0
      %v4882 = vadd.f32 %v3086, %v4881
      %v4883 = vpop.f32.mrb[0].mxu0
      %v4884 = vadd.f32 %v3090, %v4883
      %4885 = vmatprep.mubr.bf16.mxu0 0
      %4886 = vmatmul.mubr.bf16.gmra.mrb[0].mxu0 %v2945
      %v4887 = vpop.f32.mrb[0].mxu0
      %v4888 = vadd.f32 %v3086, %v4887
      %v4889 = vpop.f32.mrb[0].mxu0
      %v4890 = vadd.f32 %v3090, %v4889
      %v4891 = vpop.f32.mrb[0].mxu0
      %v4892 = vadd.f32 %v3086, %v4891
      %v4893 = vpop.f32.mrb[0].mxu0
      %v4894 = vadd.f32 %v3090, %v4893
      %4895 = vmatprep.mubr.bf16.mxu0 0
      %4896 = vmatmul.mubr.bf16.gmra.mrb[0].mxu0 %v2946
      %v4897 = vpop.f32.mrb[0].mxu0
      %v4898 = vadd.f32 %v3086, %v4897
      %v4899 = vpop.f32.mrb[0].mxu0
      %v4900 = vadd.f32 %v3090, %v4899
      %v4901 = vpop.f32.mrb[0].mxu0
      %v4902 = vadd.f32 %v3086, %v4901
      %v4903 = vpop.f32.mrb[0].mxu0
      %v4904 = vadd.f32 %v3090, %v4903
      %4905 = vmatprep.mubr.bf16.mxu0 0
      %4906 = vmatmul.mubr.bf16.gmra.mrb[0].mxu0 %v2947
      %v4907 = vpop.f32.mrb[0].mxu0
      %v4908 = vadd.f32 %v3086, %v4907
      %v4909 = vpop.f32.mrb[0].mxu0
      %v4910 = vadd.f32 %v3090, %v4909
      %v4911 = vpop.f32.mrb[0].mxu0
      %v4912 = vadd.f32 %v3086, %v4911
      %v4913 = vpop.f32.mrb[0].mxu0
      %v4914 = vadd.f32 %v3090, %v4913
      %4915 = vmatprep.mubr.bf16.mxu0 0
      %4916 = vmatmul.mubr.bf16.gmra.mrb[0].mxu0 %v2948
      %v4917 = vpop.f32.mrb[0].mxu0
      %v4918 = vadd.f32 %v3086, %v4917
      %v4919 = vpop.f32.mrb[0].mxu0
      %v4920 = vadd.f32 %v3090, %v4919
      %v4921 = vpop.f32.mrb[0].mxu0
      %v4922 = vadd.f32 %v3086, %v4921
      %v4923 = vpop.f32.mrb[0].mxu0
      %v4924 = vadd.f32 %v3090, %v4923
      %4925 = vmatprep.mubr.bf16.mxu0 0
      %4926 = vmatmul.mubr.bf16.gmra.mrb[0].mxu0 %v2949
      %v4927 = vpop.f32.mrb[0].mxu0
      %v4928 = vadd.f32 %v3086, %v4927
      %v4929 = vpop.f32.mrb[0].mxu0
      %v4930 = vadd.f32 %v3090, %v4929
      %v4931 = vpop.f32.mrb[0].mxu0
      %v4932 = vadd.f32 %v3086, %v4931
      %v4933 = vpop.f32.mrb[0].mxu0
      %v4934 = vadd.f32 %v3090, %v4933
      %4935 = vmatprep.mubr.bf16.mxu0 0
      %4936 = vmatmul.mubr.bf16.gmra.mrb[0].mxu0 %v2950
      %v4937 = vpop.f32.mrb[0].mxu0
      %v4938 = vadd.f32 %v3086, %v4937
      %v4939 = vpop.f32.mrb[0].mxu0
      %v4940 = vadd.f32 %v3090, %v4939
      %v4941 = vpop.f32.mrb[0].mxu0
      %v4942 = vadd.f32 %v3086, %v4941
      %v4943 = vpop.f32.mrb[0].mxu0
      %v4944 = vadd.f32 %v3090, %v4943
      %4945 = vmatprep.mubr.bf16.mxu0 0
      %4946 = vmatmul.mubr.bf16.gmra.mrb[0].mxu0 %v2951
      %v4947 = vpop.f32.mrb[0].mxu0
      %v4948 = vadd.f32 %v3086, %v4947
      %v4949 = vpop.f32.mrb[0].mxu0
      %v4950 = vadd.f32 %v3090, %v4949
      %v4951 = vpop.f32.mrb[0].mxu0
      %v4952 = vadd.f32 %v3086, %v4951
      %v4953 = vpop.f32.mrb[0].mxu0
      %v4954 = vadd.f32 %v3090, %v4953
      %4955 = vmatprep.mubr.bf16.mxu0 0
      %4956 = vmatmul.mubr.bf16.gmra.mrb[0].mxu0 %v2952
      %v4957 = vpop.f32.mrb[0].mxu0
      %v4958 = vadd.f32 %v3086, %v4957
      %v4959 = vpop.f32.mrb[0].mxu0
      %v4960 = vadd.f32 %v3090, %v4959
      %v4961 = vpop.f32.mrb[0].mxu0
      %v4962 = vadd.f32 %v3086, %v4961
      %v4963 = vpop.f32.mrb[0].mxu0
      %v4964 = vadd.f32 %v3090, %v4963
      %4965 = vmatprep.mubr.bf16.mxu0 0
      %4966 = vmatmul.mubr.bf16.gmra.mrb[0].mxu0 %v2953
      %v4967 = vpop.f32.mrb[0].mxu0
      %v4968 = vadd.f32 %v3086, %v4967
      %v4969 = vpop.f32.mrb[0].mxu0
      %v4970 = vadd.f32 %v3090, %v4969
      %v4971 = vpop.f32.mrb[0].mxu0
      %v4972 = vadd.f32 %v3086, %v4971
      %v4973 = vpop.f32.mrb[0].mxu0
      %v4974 = vadd.f32 %v3090, %v4973
      %4975 = vmatprep.mubr.bf16.mxu0 0
      %4976 = vmatmul.mubr.bf16.gmra.mrb[0].mxu0 %v2954
      %v4977 = vpop.f32.mrb[0].mxu0
      %v4978 = vadd.f32 %v3086, %v4977
      %v4979 = vpop.f32.mrb[0].mxu0
      %v4980 = vadd.f32 %v3090, %v4979
      %v4981 = vpop.f32.mrb[0].mxu0
      %v4982 = vadd.f32 %v3086, %v4981
      %v4983 = vpop.f32.mrb[0].mxu0
      %v4984 = vadd.f32 %v3090, %v4983
      %4985 = vmatprep.mubr.bf16.mxu0 0
      %4986 = vmatmul.mubr.bf16.gmra.mrb[0].mxu0 %v2955
      %v4987 = vpop.f32.mrb[0].mxu0
      %v4988 = vadd.f32 %v3086, %v4987
      %v4989 = vpop.f32.mrb[0].mxu0
      %v4990 = vadd.f32 %v3090, %v4989
      %v4991 = vpop.f32.mrb[0].mxu0
      %v4992 = vadd.f32 %v3086, %v4991
      %v4993 = vpop.f32.mrb[0].mxu0
      %v4994 = vadd.f32 %v3090, %v4993
      %4995 = vmatprep.mubr.bf16.mxu0 0
      %4996 = vmatmul.mubr.bf16.gmra.mrb[0].mxu0 %v2956
      %v4997 = vpop.f32.mrb[0].mxu0
      %v4998 = vadd.f32 %v3086, %v4997
      %v4999 = vpop.f32.mrb[0].mxu0
      %v5000 = vadd.f32 %v3090, %v4999
      %v5001 = vpop.f32.mrb[0].mxu0
      %v5002 = vadd.f32 %v3086, %v5001
      %v5003 = vpop.f32.mrb[0].mxu0
      %v5004 = vadd.f32 %v3090, %v5003
      %5005 = vmatprep.mubr.bf16.mxu0 0
      %5006 = vmatmul.mubr.bf16.gmra.mrb[0].mxu0 %v2957
      %v5007 = vpop.f32.mrb[0].mxu0
      %v5008 = vadd.f32 %v3086, %v5007
      %v5009 = vpop.f32.mrb[0].mxu0
      %v5010 = vadd.f32 %v3090, %v5009
      %v5011 = vpop.f32.mrb[0].mxu0
      %v5012 = vadd.f32 %v3086, %v5011
      %v5013 = vpop.f32.mrb[0].mxu0
      %v5014 = vadd.f32 %v3090, %v5013
      %5015 = vmatprep.mubr.bf16.mxu0 0
      %5016 = vmatmul.mubr.bf16.gmra.mrb[0].mxu0 %v2958
      %v5017 = vpop.f32.mrb[0].mxu0
      %v5018 = vadd.f32 %v3086, %v5017
      %v5019 = vpop.f32.mrb[0].mxu0
      %v5020 = vadd.f32 %v3090, %v5019
      %v5021 = vpop.f32.mrb[0].mxu0
      %v5022 = vadd.f32 %v3086, %v5021
      %v5023 = vpop.f32.mrb[0].mxu0
      %v5024 = vadd.f32 %v3090, %v5023
      %5025 = vmatprep.mubr.bf16.mxu0 0
      %5026 = vmatmul.mubr.bf16.gmra.mrb[0].mxu0 %v2959
      %v5027 = vpop.f32.mrb[0].mxu0
      %v5028 = vadd.f32 %v3086, %v5027
      %v5029 = vpop.f32.mrb[0].mxu0
      %v5030 = vadd.f32 %v3090, %v5029
      %v5031 = vpop.f32.mrb[0].mxu0
      %v5032 = vadd.f32 %v3086, %v5031
      %v5033 = vpop.f32.mrb[0].mxu0
      %v5034 = vadd.f32 %v3090, %v5033
      %5035 = vmatprep.mubr.bf16.mxu0 0
      %5036 = vmatmul.mubr.bf16.gmra.mrb[0].mxu0 %v2960
      %v5037 = vpop.f32.mrb[0].mxu0
      %v5038 = vadd.f32 %v3086, %v5037
      %v5039 = vpop.f32.mrb[0].mxu0
      %v5040 = vadd.f32 %v3090, %v5039
      %v5041 = vpop.f32.mrb[0].mxu0
      %v5042 = vadd.f32 %v3086, %v5041
      %v5043 = vpop.f32.mrb[0].mxu0
      %v5044 = vadd.f32 %v3090, %v5043
      %5045 = vmatprep.mubr.bf16.mxu0 0
      %5046 = vmatmul.mubr.bf16.gmra.mrb[0].mxu0 %v2961
      %v5047 = vpop.f32.mrb[0].mxu0
      %v5048 = vadd.f32 %v3086, %v5047
      %v5049 = vpop.f32.mrb[0].mxu0
      %v5050 = vadd.f32 %v3090, %v5049
      %v5051 = vpop.f32.mrb[0].mxu0
      %v5052 = vadd.f32 %v3086, %v5051
      %v5053 = vpop.f32.mrb[0].mxu0
      %v5054 = vadd.f32 %v3090, %v5053
      %5055 = vmatprep.mubr.bf16.mxu0 0
      %5056 = vmatmul.mubr.bf16.gmra.mrb[0].mxu0 %v2962
      %v5057 = vpop.f32.mrb[0].mxu0
      %v5058 = vadd.f32 %v3086, %v5057
      %v5059 = vpop.f32.mrb[0].mxu0
      %v5060 = vadd.f32 %v3090, %v5059
      %v5061 = vpop.f32.mrb[0].mxu0
      %v5062 = vadd.f32 %v3086, %v5061
      %v5063 = vpop.f32.mrb[0].mxu0
      %v5064 = vadd.f32 %v3090, %v5063
      %5065 = vmatprep.mubr.bf16.mxu0 0
      %5066 = vmatmul.mubr.bf16.gmra.mrb[0].mxu0 %v2963
      %v5067 = vpop.f32.mrb[0].mxu0
      %v5068 = vadd.f32 %v3086, %v5067
      %v5069 = vpop.f32.mrb[0].mxu0
      %v5070 = vadd.f32 %v3090, %v5069
      %v5071 = vpop.f32.mrb[0].mxu0
      %v5072 = vadd.f32 %v3086, %v5071
      %v5073 = vpop.f32.mrb[0].mxu0
      %v5074 = vadd.f32 %v3090, %v5073
      %5075 = vmatprep.mubr.bf16.mxu0 0
      %5076 = vmatmul.mubr.bf16.gmra.mrb[0].mxu0 %v2964
      %v5077 = vpop.f32.mrb[0].mxu0
      %v5078 = vadd.f32 %v3086, %v5077
      %v5079 = vpop.f32.mrb[0].mxu0
      %v5080 = vadd.f32 %v3090, %v5079
      %v5081 = vpop.f32.mrb[0].mxu0
      %v5082 = vadd.f32 %v3086, %v5081
      %v5083 = vpop.f32.mrb[0].mxu0
      %v5084 = vadd.f32 %v3090, %v5083
      %5085 = vmatprep.mubr.bf16.mxu0 0
      %5086 = vmatmul.mubr.bf16.gmra.mrb[0].mxu0 %v2965
      %v5087 = vpop.f32.mrb[0].mxu0
      %v5088 = vadd.f32 %v3086, %v5087
      %v5089 = vpop.f32.mrb[0].mxu0
      %v5090 = vadd.f32 %v3090, %v5089
      %v5091 = vpop.f32.mrb[0].mxu0
      %v5092 = vadd.f32 %v3086, %v5091
      %v5093 = vpop.f32.mrb[0].mxu0
      %v5094 = vadd.f32 %v3090, %v5093
      %5095 = vmatprep.mubr.bf16.mxu0 0
      %5096 = vmatmul.mubr.bf16.gmra.mrb[0].mxu0 %v2966
      %v5097 = vpop.f32.mrb[0].mxu0
      %v5098 = vadd.f32 %v3086, %v5097
      %v5099 = vpop.f32.mrb[0].mxu0
      %v5100 = vadd.f32 %v3090, %v5099
      %v5101 = vpop.f32.mrb[0].mxu0
      %v5102 = vadd.f32 %v3086, %v5101
      %v5103 = vpop.f32.mrb[0].mxu0
      %v5104 = vadd.f32 %v3090, %v5103
      %5105 = vmatprep.mubr.bf16.mxu0 0
      %5106 = vmatmul.mubr.bf16.gmra.mrb[0].mxu0 %v2967
      %v5107 = vpop.f32.mrb[0].mxu0
      %v5108 = vadd.f32 %v3086, %v5107
      %v5109 = vpop.f32.mrb[0].mxu0
      %v5110 = vadd.f32 %v3090, %v5109
      %v5111 = vpop.f32.mrb[0].mxu0
      %v5112 = vadd.f32 %v3086, %v5111
      %v5113 = vpop.f32.mrb[0].mxu0
      %v5114 = vadd.f32 %v3090, %v5113
      %5115 = vmatprep.mubr.bf16.mxu0 0
      %5116 = vmatmul.mubr.bf16.gmra.mrb[0].mxu0 %v2968
      %v5117 = vpop.f32.mrb[0].mxu0
      %v5118 = vadd.f32 %v3086, %v5117
      %v5119 = vpop.f32.mrb[0].mxu0
      %v5120 = vadd.f32 %v3090, %v5119
      %v5121 = vpop.f32.mrb[0].mxu0
      %v5122 = vadd.f32 %v3086, %v5121
      %v5123 = vpop.f32.mrb[0].mxu0
      %v5124 = vadd.f32 %v3090, %v5123
      %5125 = vmatprep.mubr.bf16.mxu0 0
      %5126 = vmatmul.mubr.bf16.gmra.mrb[0].mxu0 %v2969
      %v5127 = vpop.f32.mrb[0].mxu0
      %v5128 = vadd.f32 %v3086, %v5127
      %v5129 = vpop.f32.mrb[0].mxu0
      %v5130 = vadd.f32 %v3090, %v5129
      %v5131 = vpop.f32.mrb[0].mxu0
      %v5132 = vadd.f32 %v3086, %v5131
      %v5133 = vpop.f32.mrb[0].mxu0
      %v5134 = vadd.f32 %v3090, %v5133
      %5135 = vmatprep.mubr.bf16.mxu0 0
      %5136 = vmatmul.mubr.bf16.gmra.mrb[0].mxu0 %v2970
      %v5137 = vpop.f32.mrb[0].mxu0
      %v5138 = vadd.f32 %v3086, %v5137
      %v5139 = vpop.f32.mrb[0].mxu0
      %v5140 = vadd.f32 %v3090, %v5139
      %v5141 = vpop.f32.mrb[0].mxu0
      %v5142 = vadd.f32 %v3086, %v5141
      %v5143 = vpop.f32.mrb[0].mxu0
      %v5144 = vadd.f32 %v3090, %v5143
      %5145 = vmatprep.mubr.bf16.mxu0 0
      %5146 = vmatmul.mubr.bf16.gmra.mrb[0].mxu0 %v2971
      %v5147 = vpop.f32.mrb[0].mxu0
      %v5148 = vadd.f32 %v3086, %v5147
      %v5149 = vpop.f32.mrb[0].mxu0
      %v5150 = vadd.f32 %v3090, %v5149
      %v5151 = vpop.f32.mrb[0].mxu0
      %v5152 = vadd.f32 %v3086, %v5151
      %v5153 = vpop.f32.mrb[0].mxu0
      %v5154 = vadd.f32 %v3090, %v5153
      %5155 = vmatprep.mubr.bf16.mxu0 0
      %5156 = vmatmul.mubr.bf16.gmra.mrb[0].mxu0 %v2972
      %v5157 = vpop.f32.mrb[0].mxu0
      %v5158 = vadd.f32 %v3086, %v5157
      %v5159 = vpop.f32.mrb[0].mxu0
      %v5160 = vadd.f32 %v3090, %v5159
      %v5161 = vpop.f32.mrb[0].mxu0
      %v5162 = vadd.f32 %v3086, %v5161
      %v5163 = vpop.f32.mrb[0].mxu0
      %v5164 = vadd.f32 %v3090, %v5163
      %5165 = vmatprep.mubr.bf16.mxu0 0
      %5166 = vmatmul.mubr.bf16.gmra.mrb[0].mxu0 %v2973
      %v5167 = vpop.f32.mrb[0].mxu0
      %v5168 = vadd.f32 %v3086, %v5167
      %v5169 = vpop.f32.mrb[0].mxu0
      %v5170 = vadd.f32 %v3090, %v5169
      %v5171 = vpop.f32.mrb[0].mxu0
      %v5172 = vadd.f32 %v3086, %v5171
      %v5173 = vpop.f32.mrb[0].mxu0
      %v5174 = vadd.f32 %v3090, %v5173
      %5175 = vmatprep.mubr.bf16.mxu0 0
      %5176 = vmatmul.mubr.bf16.gmra.mrb[0].mxu0 %v2974
      %v5177 = vpop.f32.mrb[0].mxu0
      %v5178 = vadd.f32 %v3086, %v5177
      %v5179 = vpop.f32.mrb[0].mxu0
      %v5180 = vadd.f32 %v3090, %v5179
      %v5181 = vpop.f32.mrb[0].mxu0
      %v5182 = vadd.f32 %v3086, %v5181
      %v5183 = vpop.f32.mrb[0].mxu0
      %v5184 = vadd.f32 %v3090, %v5183
      %5185 = vmatprep.mubr.bf16.mxu0 0
      %5186 = vmatmul.mubr.bf16.gmra.mrb[0].mxu0 %v2975
      %v5187 = vpop.f32.mrb[0].mxu0
      %v5188 = vadd.f32 %v3086, %v5187
      %v5189 = vpop.f32.mrb[0].mxu0
      %v5190 = vadd.f32 %v3090, %v5189
      %v5191 = vpop.f32.mrb[0].mxu0
      %v5192 = vadd.f32 %v3086, %v5191
      %v5193 = vpop.f32.mrb[0].mxu0
      %v5194 = vadd.f32 %v3090, %v5193
      %5195 = vmatprep.mubr.bf16.mxu0 0
      %5196 = vmatmul.mubr.bf16.gmra.mrb[0].mxu0 %v2976
      %v5197 = vpop.f32.mrb[0].mxu0
      %v5198 = vadd.f32 %v3086, %v5197
      %v5199 = vpop.f32.mrb[0].mxu0
      %v5200 = vadd.f32 %v3090, %v5199
      %v5201 = vpop.f32.mrb[0].mxu0
      %v5202 = vadd.f32 %v3086, %v5201
      %v5203 = vpop.f32.mrb[0].mxu0
      %v5204 = vadd.f32 %v3090, %v5203
      %5205 = vmatprep.mubr.bf16.mxu0 0
      %5206 = vmatmul.mubr.bf16.gmra.mrb[0].mxu0 %v2977
      %v5207 = vpop.f32.mrb[0].mxu0
      %v5208 = vadd.f32 %v3086, %v5207
      %v5209 = vpop.f32.mrb[0].mxu0
      %v5210 = vadd.f32 %v3090, %v5209
      %v5211 = vpop.f32.mrb[0].mxu0
      %v5212 = vadd.f32 %v3086, %v5211
      %v5213 = vpop.f32.mrb[0].mxu0
      %v5214 = vadd.f32 %v3090, %v5213
      %5215 = vmatprep.mubr.bf16.mxu0 0
      %5216 = vmatmul.mubr.bf16.gmra.mrb[0].mxu0 %v2978
      %v5217 = vpop.f32.mrb[0].mxu0
      %v5218 = vadd.f32 %v3086, %v5217
      %v5219 = vpop.f32.mrb[0].mxu0
      %v5220 = vadd.f32 %v3090, %v5219
      %v5221 = vpop.f32.mrb[0].mxu0
      %v5222 = vadd.f32 %v3086, %v5221
      %v5223 = vpop.f32.mrb[0].mxu0
      %v5224 = vadd.f32 %v3090, %v5223
      %5225 = vmatprep.mubr.bf16.mxu0 0
      %5226 = vmatmul.mubr.bf16.gmra.mrb[0].mxu0 %v2979
      %v5227 = vpop.f32.mrb[0].mxu0
      %v5228 = vadd.f32 %v3086, %v5227
      %v5229 = vpop.f32.mrb[0].mxu0
      %v5230 = vadd.f32 %v3090, %v5229
      %v5231 = vpop.f32.mrb[0].mxu0
      %v5232 = vadd.f32 %v3086, %v5231
      %v5233 = vpop.f32.mrb[0].mxu0
      %v5234 = vadd.f32 %v3090, %v5233
      %5235 = vmatprep.mubr.bf16.mxu0 0
      %5236 = vmatmul.mubr.bf16.gmra.mrb[0].mxu0 %v2980
      %v5237 = vpop.f32.mrb[0].mxu0
      %v5238 = vadd.f32 %v3086, %v5237
      %v5239 = vpop.f32.mrb[0].mxu0
      %v5240 = vadd.f32 %v3090, %v5239
      %v5241 = vpop.f32.mrb[0].mxu0
      %v5242 = vadd.f32 %v3086, %v5241
      %v5243 = vpop.f32.mrb[0].mxu0
      %v5244 = vadd.f32 %v3090, %v5243
      %5245 = vmatprep.mubr.bf16.mxu0 0
      %5246 = vmatmul.mubr.bf16.gmra.mrb[0].mxu0 %v2981
      %v5247 = vpop.f32.mrb[0].mxu0
      %v5248 = vadd.f32 %v3086, %v5247
      %v5249 = vpop.f32.mrb[0].mxu0
      %v5250 = vadd.f32 %v3090, %v5249
      %v5251 = vpop.f32.mrb[0].mxu0
      %v5252 = vadd.f32 %v3086, %v5251
      %v5253 = vpop.f32.mrb[0].mxu0
      %v5254 = vadd.f32 %v3090, %v5253
      %5255 = vmatprep.mubr.bf16.mxu0 0
      %5256 = vmatmul.mubr.bf16.gmra.mrb[0].mxu0 %v2982
      %v5257 = vpop.f32.mrb[0].mxu0
      %v5258 = vadd.f32 %v3086, %v5257
      %v5259 = vpop.f32.mrb[0].mxu0
      %v5260 = vadd.f32 %v3090, %v5259
      %v5261 = vpop.f32.mrb[0].mxu0
      %v5262 = vadd.f32 %v3086, %v5261
      %v5263 = vpop.f32.mrb[0].mxu0
      %v5264 = vadd.f32 %v3090, %v5263
      %5265 = vmatprep.mubr.bf16.mxu0 0
      %5266 = vmatmul.mubr.bf16.gmra.mrb[0].mxu0 %v2983
      %v5267 = vpop.f32.mrb[0].mxu0
      %v5268 = vadd.f32 %v3086, %v5267
      %v5269 = vpop.f32.mrb[0].mxu0
      %v5270 = vadd.f32 %v3090, %v5269
      %v5271 = vpop.f32.mrb[0].mxu0
      %v5272 = vadd.f32 %v3086, %v5271
      %v5273 = vpop.f32.mrb[0].mxu0
      %v5274 = vadd.f32 %v3090, %v5273
      %5275 = vmatprep.mubr.bf16.mxu0 0
      %5276 = vmatmul.mubr.bf16.gmra.mrb[0].mxu0 %v2984
      %v5277 = vpop.f32.mrb[0].mxu0
      %v5278 = vadd.f32 %v3086, %v5277
      %v5279 = vpop.f32.mrb[0].mxu0
      %v5280 = vadd.f32 %v3090, %v5279
      %v5281 = vpop.f32.mrb[0].mxu0
      %v5282 = vadd.f32 %v3086, %v5281
      %v5283 = vpop.f32.mrb[0].mxu0
      %v5284 = vadd.f32 %v3090, %v5283
      %5285 = vmatprep.mubr.bf16.mxu0 0
      %5286 = vmatmul.mubr.bf16.gmra.mrb[0].mxu0 %v2985
      %v5287 = vpop.f32.mrb[0].mxu0
      %v5288 = vadd.f32 %v3086, %v5287
      %v5289 = vpop.f32.mrb[0].mxu0
      %v5290 = vadd.f32 %v3090, %v5289
      %v5291 = vpop.f32.mrb[0].mxu0
      %v5292 = vadd.f32 %v3086, %v5291
      %v5293 = vpop.f32.mrb[0].mxu0
      %v5294 = vadd.f32 %v3090, %v5293
      %5295 = vmatprep.mubr.bf16.mxu0 0
      %5296 = vmatmul.mubr.bf16.gmra.mrb[0].mxu0 %v2986
      %v5297 = vpop.f32.mrb[0].mxu0
      %v5298 = vadd.f32 %v3086, %v5297
      %v5299 = vpop.f32.mrb[0].mxu0
      %v5300 = vadd.f32 %v3090, %v5299
      %v5301 = vpop.f32.mrb[0].mxu0
      %v5302 = vadd.f32 %v3086, %v5301
      %v5303 = vpop.f32.mrb[0].mxu0
      %v5304 = vadd.f32 %v3090, %v5303
      %5305 = vmatprep.mubr.bf16.mxu0 0
      %5306 = vmatmul.mubr.bf16.gmra.mrb[0].mxu0 %v2987
      %v5307 = vpop.f32.mrb[0].mxu0
      %v5308 = vadd.f32 %v3086, %v5307
      %v5309 = vpop.f32.mrb[0].mxu0
      %v5310 = vadd.f32 %v3090, %v5309
      %v5311 = vpop.f32.mrb[0].mxu0
      %v5312 = vadd.f32 %v3086, %v5311
      %v5313 = vpop.f32.mrb[0].mxu0
      %v5314 = vadd.f32 %v3090, %v5313
      %5315 = vmatprep.mubr.bf16.mxu0 0
      %5316 = vmatmul.mubr.bf16.gmra.mrb[0].mxu0 %v2988
      %v5317 = vpop.f32.mrb[0].mxu0
      %v5318 = vadd.f32 %v3086, %v5317
      %v5319 = vpop.f32.mrb[0].mxu0
      %v5320 = vadd.f32 %v3090, %v5319
      %v5321 = vpop.f32.mrb[0].mxu0
      %v5322 = vadd.f32 %v3086, %v5321
      %v5323 = vpop.f32.mrb[0].mxu0
      %v5324 = vadd.f32 %v3090, %v5323
      %5325 = vmatprep.mubr.bf16.mxu0 0
      %5326 = vmatmul.mubr.bf16.gmra.mrb[0].mxu0 %v2989
      %v5327 = vpop.f32.mrb[0].mxu0
      %v5328 = vadd.f32 %v3086, %v5327
      %v5329 = vpop.f32.mrb[0].mxu0
      %v5330 = vadd.f32 %v3090, %v5329
      %v5331 = vpop.f32.mrb[0].mxu0
      %v5332 = vadd.f32 %v3086, %v5331
      %v5333 = vpop.f32.mrb[0].mxu0
      %v5334 = vadd.f32 %v3090, %v5333
      %5335 = vmatprep.mubr.bf16.mxu0 0
      %5336 = vmatmul.mubr.bf16.gmra.mrb[0].mxu0 %v2990
      %v5337 = vpop.f32.mrb[0].mxu0
      %v5338 = vadd.f32 %v3086, %v5337
      %v5339 = vpop.f32.mrb[0].mxu0
      %v5340 = vadd.f32 %v3090, %v5339
      %v5341 = vpop.f32.mrb[0].mxu0
      %v5342 = vadd.f32 %v3086, %v5341
      %v5343 = vpop.f32.mrb[0].mxu0
      %v5344 = vadd.f32 %v3090, %v5343
      %5345 = vmatprep.mubr.bf16.mxu0 0
      %5346 = vmatmul.mubr.bf16.gmra.mrb[0].mxu0 %v2991
      %v5347 = vpop.f32.mrb[0].mxu0
      %v5348 = vadd.f32 %v3086, %v5347
      %v5349 = vpop.f32.mrb[0].mxu0
      %v5350 = vadd.f32 %v3090, %v5349
      %v5351 = vpop.f32.mrb[0].mxu0
      %v5352 = vadd.f32 %v3086, %v5351
      %v5353 = vpop.f32.mrb[0].mxu0
      %v5354 = vadd.f32 %v3090, %v5353
      %5355 = vmatprep.mubr.bf16.mxu0 0
      %5356 = vmatmul.mubr.bf16.gmra.mrb[0].mxu0 %v2992
      %v5357 = vpop.f32.mrb[0].mxu0
      %v5358 = vadd.f32 %v3086, %v5357
      %v5359 = vpop.f32.mrb[0].mxu0
      %v5360 = vadd.f32 %v3090, %v5359
      %v5361 = vpop.f32.mrb[0].mxu0
      %v5362 = vadd.f32 %v3086, %v5361
      %v5363 = vpop.f32.mrb[0].mxu0
      %v5364 = vadd.f32 %v3090, %v5363
      %5365 = vmatprep.mubr.bf16.mxu0 0
      %5366 = vmatmul.mubr.bf16.gmra.mrb[0].mxu0 %v2993
      %v5367 = vpop.f32.mrb[0].mxu0
      %v5368 = vadd.f32 %v3086, %v5367
      %v5369 = vpop.f32.mrb[0].mxu0
      %v5370 = vadd.f32 %v3090, %v5369
      %v5371 = vpop.f32.mrb[0].mxu0
      %v5372 = vadd.f32 %v3086, %v5371
      %v5373 = vpop.f32.mrb[0].mxu0
      %v5374 = vadd.f32 %v3090, %v5373
      %5375 = vmatprep.mubr.bf16.mxu0 0
      %5376 = vmatmul.mubr.bf16.gmra.mrb[0].mxu0 %v2994
      %v5377 = vpop.f32.mrb[0].mxu0
      %v5378 = vadd.f32 %v3086, %v5377
      %v5379 = vpop.f32.mrb[0].mxu0
      %v5380 = vadd.f32 %v3090, %v5379
      %v5381 = vpop.f32.mrb[0].mxu0
      %v5382 = vadd.f32 %v3086, %v5381
      %v5383 = vpop.f32.mrb[0].mxu0
      %v5384 = vadd.f32 %v3090, %v5383
      %5385 = vmatprep.mubr.bf16.mxu0 0
      %5386 = vmatmul.mubr.bf16.gmra.mrb[0].mxu0 %v2995
      %v5387 = vpop.f32.mrb[0].mxu0
      %v5388 = vadd.f32 %v3086, %v5387
      %v5389 = vpop.f32.mrb[0].mxu0
      %v5390 = vadd.f32 %v3090, %v5389
      %v5391 = vpop.f32.mrb[0].mxu0
      %v5392 = vadd.f32 %v3086, %v5391
      %v5393 = vpop.f32.mrb[0].mxu0
      %v5394 = vadd.f32 %v3090, %v5393
      %5395 = vmatprep.mubr.bf16.mxu0 0
      %5396 = vmatmul.mubr.bf16.gmra.mrb[0].mxu0 %v2996
      %v5397 = vpop.f32.mrb[0].mxu0
      %v5398 = vadd.f32 %v3086, %v5397
      %v5399 = vpop.f32.mrb[0].mxu0
      %v5400 = vadd.f32 %v3090, %v5399
      %v5401 = vpop.f32.mrb[0].mxu0
      %v5402 = vadd.f32 %v3086, %v5401
      %v5403 = vpop.f32.mrb[0].mxu0
      %v5404 = vadd.f32 %v3090, %v5403
      %5405 = vmatprep.mubr.bf16.mxu0 0
      %5406 = vmatmul.mubr.bf16.gmra.mrb[0].mxu0 %v2997
      %v5407 = vpop.f32.mrb[0].mxu0
      %v5408 = vadd.f32 %v3086, %v5407
      %v5409 = vpop.f32.mrb[0].mxu0
      %v5410 = vadd.f32 %v3090, %v5409
      %v5411 = vpop.f32.mrb[0].mxu0
      %v5412 = vadd.f32 %v3086, %v5411
      %v5413 = vpop.f32.mrb[0].mxu0
      %v5414 = vadd.f32 %v3090, %v5413
      %5415 = vmatprep.mubr.bf16.mxu0 0
      %5416 = vmatmul.mubr.bf16.gmra.mrb[0].mxu0 %v2998
      %v5417 = vpop.f32.mrb[0].mxu0
      %v5418 = vadd.f32 %v3086, %v5417
      %v5419 = vpop.f32.mrb[0].mxu0
      %v5420 = vadd.f32 %v3090, %v5419
      %v5421 = vpop.f32.mrb[0].mxu0
      %v5422 = vadd.f32 %v3086, %v5421
      %v5423 = vpop.f32.mrb[0].mxu0
      %v5424 = vadd.f32 %v3090, %v5423
      %5425 = vmatprep.mubr.bf16.mxu0 0
      %5426 = vmatmul.mubr.bf16.gmra.mrb[0].mxu0 %v2999
      %v5427 = vpop.f32.mrb[0].mxu0
      %v5428 = vadd.f32 %v3086, %v5427
      %v5429 = vpop.f32.mrb[0].mxu0
      %v5430 = vadd.f32 %v3090, %v5429
      %v5431 = vpop.f32.mrb[0].mxu0
      %v5432 = vadd.f32 %v3086, %v5431
      %v5433 = vpop.f32.mrb[0].mxu0
      %v5434 = vadd.f32 %v3090, %v5433
      %5435 = vmatprep.mubr.bf16.mxu0 0
      %5436 = vmatmul.mubr.bf16.gmra.mrb[0].mxu0 %v3000
      %v5437 = vpop.f32.mrb[0].mxu0
      %v5438 = vadd.f32 %v3086, %v5437
      %v5439 = vpop.f32.mrb[0].mxu0
      %v5440 = vadd.f32 %v3090, %v5439
      %v5441 = vpop.f32.mrb[0].mxu0
      %v5442 = vadd.f32 %v3086, %v5441
      %v5443 = vpop.f32.mrb[0].mxu0
      %v5444 = vadd.f32 %v3090, %v5443
      %5445 = vdwg.mxu0
      %5446 = vmatprep.subr.bf16.mxu0 %v3306
      %5447 = vmatpush1.bf16.msra.mxu0 %v3305
      %5448 = vmatprep.subr.bf16.mxu0 %v3314
      %5449 = vmatpush1.bf16.msra.mxu0 %v3313
      %5450 = vmatprep.subr.bf16.mxu0 %v3322
      %5451 = vmatpush1.bf16.msra.mxu0 %v3321
      %5452 = vmatprep.subr.bf16.mxu0 %v3330
      %5453 = vmatpush1.bf16.msra.mxu0 %v3329
      %5454 = vmatprep.subr.bf16.mxu0 %v3338
      %5455 = vmatpush1.bf16.msra.mxu0 %v3337
      %5456 = vmatprep.subr.bf16.mxu0 %v3346
      %5457 = vmatpush1.bf16.msra.mxu0 %v3345
      %5458 = vmatprep.subr.bf16.mxu0 %v3354
      %5459 = vmatpush1.bf16.msra.mxu0 %v3353
      %5460 = vmatprep.subr.bf16.mxu0 %v3362
      %5461 = vmatpush1.bf16.msra.mxu0 %v3361
      %5462 = vmatprep.subr.bf16.mxu0 0
      %5463 = vmatpush1.bf16.msra.mxu0 0
      %5464 = vmatprep.subr.bf16.mxu0 0
      %5465 = vmatpush1.bf16.msra.mxu0 0
      %5466 = vmatprep.subr.bf16.mxu0 0
      %5467 = vmatpush1.bf16.msra.mxu0 0
      %5468 = vmatprep.subr.bf16.mxu0 0
      %5469 = vmatpush1.bf16.msra.mxu0 0
      %5470 = vmatprep.subr.bf16.mxu0 0
      %5471 = vmatpush1.bf16.msra.mxu0 0
      %5472 = vmatprep.subr.bf16.mxu0 0
      %5473 = vmatpush1.bf16.msra.mxu0 0
      %5474 = vmatprep.subr.bf16.mxu0 0
      %5475 = vmatpush1.bf16.msra.mxu0 0
      %5476 = vmatprep.subr.bf16.mxu0 0
      %5477 = vmatpush1.bf16.msra.mxu0 0
      %5478 = vmatprep.mubr.bf16.mxu0 0
      %5479 = vmatmul.mubr.bf16.gmra.mrb[0].mxu0 %v2937
      %v5480 = vpop.f32.mrb[0].mxu0
      %v5481 = vadd.f32 %v3094, %v5480
      %v5482 = vpop.f32.mrb[0].mxu0
      %v5483 = vadd.f32 %v3098, %v5482
      %v5484 = vpop.f32.mrb[0].mxu0
      %v5485 = vadd.f32 %v3094, %v5484
      %v5486 = vpop.f32.mrb[0].mxu0
      %v5487 = vadd.f32 %v3098, %v5486
      %5488 = vmatprep.mubr.bf16.mxu0 0
      %5489 = vmatmul.mubr.bf16.gmra.mrb[0].mxu0 %v2938
      %v5490 = vpop.f32.mrb[0].mxu0
      %v5491 = vadd.f32 %v3094, %v5490
      %v5492 = vpop.f32.mrb[0].mxu0
      %v5493 = vadd.f32 %v3098, %v5492
      %v5494 = vpop.f32.mrb[0].mxu0
      %v5495 = vadd.f32 %v3094, %v5494
      %v5496 = vpop.f32.mrb[0].mxu0
      %v5497 = vadd.f32 %v3098, %v5496
      %5498 = vmatprep.mubr.bf16.mxu0 0
      %5499 = vmatmul.mubr.bf16.gmra.mrb[0].mxu0 %v2939
      %v5500 = vpop.f32.mrb[0].mxu0
      %v5501 = vadd.f32 %v3094, %v5500
      %v5502 = vpop.f32.mrb[0].mxu0
      %v5503 = vadd.f32 %v3098, %v5502
      %v5504 = vpop.f32.mrb[0].mxu0
      %v5505 = vadd.f32 %v3094, %v5504
      %v5506 = vpop.f32.mrb[0].mxu0
      %v5507 = vadd.f32 %v3098, %v5506
      %5508 = vmatprep.mubr.bf16.mxu0 0
      %5509 = vmatmul.mubr.bf16.gmra.mrb[0].mxu0 %v2940
      %v5510 = vpop.f32.mrb[0].mxu0
      %v5511 = vadd.f32 %v3094, %v5510
      %v5512 = vpop.f32.mrb[0].mxu0
      %v5513 = vadd.f32 %v3098, %v5512
      %v5514 = vpop.f32.mrb[0].mxu0
      %v5515 = vadd.f32 %v3094, %v5514
      %v5516 = vpop.f32.mrb[0].mxu0
      %v5517 = vadd.f32 %v3098, %v5516
      %5518 = vmatprep.mubr.bf16.mxu0 0
      %5519 = vmatmul.mubr.bf16.gmra.mrb[0].mxu0 %v2941
      %v5520 = vpop.f32.mrb[0].mxu0
      %v5521 = vadd.f32 %v3094, %v5520
      %v5522 = vpop.f32.mrb[0].mxu0
      %v5523 = vadd.f32 %v3098, %v5522
      %v5524 = vpop.f32.mrb[0].mxu0
      %v5525 = vadd.f32 %v3094, %v5524
      %v5526 = vpop.f32.mrb[0].mxu0
      %v5527 = vadd.f32 %v3098, %v5526
      %5528 = vmatprep.mubr.bf16.mxu0 0
      %5529 = vmatmul.mubr.bf16.gmra.mrb[0].mxu0 %v2942
      %v5530 = vpop.f32.mrb[0].mxu0
      %v5531 = vadd.f32 %v3094, %v5530
      %v5532 = vpop.f32.mrb[0].mxu0
      %v5533 = vadd.f32 %v3098, %v5532
      %v5534 = vpop.f32.mrb[0].mxu0
      %v5535 = vadd.f32 %v3094, %v5534
      %v5536 = vpop.f32.mrb[0].mxu0
      %v5537 = vadd.f32 %v3098, %v5536
      %5538 = vmatprep.mubr.bf16.mxu0 0
      %5539 = vmatmul.mubr.bf16.gmra.mrb[0].mxu0 %v2943
      %v5540 = vpop.f32.mrb[0].mxu0
      %v5541 = vadd.f32 %v3094, %v5540
      %v5542 = vpop.f32.mrb[0].mxu0
      %v5543 = vadd.f32 %v3098, %v5542
      %v5544 = vpop.f32.mrb[0].mxu0
      %v5545 = vadd.f32 %v3094, %v5544
      %v5546 = vpop.f32.mrb[0].mxu0
      %v5547 = vadd.f32 %v3098, %v5546
      %5548 = vmatprep.mubr.bf16.mxu0 0
      %5549 = vmatmul.mubr.bf16.gmra.mrb[0].mxu0 %v2944
      %v5550 = vpop.f32.mrb[0].mxu0
      %v5551 = vadd.f32 %v3094, %v5550
      %v5552 = vpop.f32.mrb[0].mxu0
      %v5553 = vadd.f32 %v3098, %v5552
      %v5554 = vpop.f32.mrb[0].mxu0
      %v5555 = vadd.f32 %v3094, %v5554
      %v5556 = vpop.f32.mrb[0].mxu0
      %v5557 = vadd.f32 %v3098, %v5556
      %5558 = vmatprep.mubr.bf16.mxu0 0
      %5559 = vmatmul.mubr.bf16.gmra.mrb[0].mxu0 %v2945
      %v5560 = vpop.f32.mrb[0].mxu0
      %v5561 = vadd.f32 %v3094, %v5560
      %v5562 = vpop.f32.mrb[0].mxu0
      %v5563 = vadd.f32 %v3098, %v5562
      %v5564 = vpop.f32.mrb[0].mxu0
      %v5565 = vadd.f32 %v3094, %v5564
      %v5566 = vpop.f32.mrb[0].mxu0
      %v5567 = vadd.f32 %v3098, %v5566
      %5568 = vmatprep.mubr.bf16.mxu0 0
      %5569 = vmatmul.mubr.bf16.gmra.mrb[0].mxu0 %v2946
      %v5570 = vpop.f32.mrb[0].mxu0
      %v5571 = vadd.f32 %v3094, %v5570
      %v5572 = vpop.f32.mrb[0].mxu0
      %v5573 = vadd.f32 %v3098, %v5572
      %v5574 = vpop.f32.mrb[0].mxu0
      %v5575 = vadd.f32 %v3094, %v5574
      %v5576 = vpop.f32.mrb[0].mxu0
      %v5577 = vadd.f32 %v3098, %v5576
      %5578 = vmatprep.mubr.bf16.mxu0 0
      %5579 = vmatmul.mubr.bf16.gmra.mrb[0].mxu0 %v2947
      %v5580 = vpop.f32.mrb[0].mxu0
      %v5581 = vadd.f32 %v3094, %v5580
      %v5582 = vpop.f32.mrb[0].mxu0
      %v5583 = vadd.f32 %v3098, %v5582
      %v5584 = vpop.f32.mrb[0].mxu0
      %v5585 = vadd.f32 %v3094, %v5584
      %v5586 = vpop.f32.mrb[0].mxu0
      %v5587 = vadd.f32 %v3098, %v5586
      %5588 = vmatprep.mubr.bf16.mxu0 0
      %5589 = vmatmul.mubr.bf16.gmra.mrb[0].mxu0 %v2948
      %v5590 = vpop.f32.mrb[0].mxu0
      %v5591 = vadd.f32 %v3094, %v5590
      %v5592 = vpop.f32.mrb[0].mxu0
      %v5593 = vadd.f32 %v3098, %v5592
      %v5594 = vpop.f32.mrb[0].mxu0
      %v5595 = vadd.f32 %v3094, %v5594
      %v5596 = vpop.f32.mrb[0].mxu0
      %v5597 = vadd.f32 %v3098, %v5596
      %5598 = vmatprep.mubr.bf16.mxu0 0
      %5599 = vmatmul.mubr.bf16.gmra.mrb[0].mxu0 %v2949
      %v5600 = vpop.f32.mrb[0].mxu0
      %v5601 = vadd.f32 %v3094, %v5600
      %v5602 = vpop.f32.mrb[0].mxu0
      %v5603 = vadd.f32 %v3098, %v5602
      %v5604 = vpop.f32.mrb[0].mxu0
      %v5605 = vadd.f32 %v3094, %v5604
      %v5606 = vpop.f32.mrb[0].mxu0
      %v5607 = vadd.f32 %v3098, %v5606
      %5608 = vmatprep.mubr.bf16.mxu0 0
      %5609 = vmatmul.mubr.bf16.gmra.mrb[0].mxu0 %v2950
      %v5610 = vpop.f32.mrb[0].mxu0
      %v5611 = vadd.f32 %v3094, %v5610
      %v5612 = vpop.f32.mrb[0].mxu0
      %v5613 = vadd.f32 %v3098, %v5612
      %v5614 = vpop.f32.mrb[0].mxu0
      %v5615 = vadd.f32 %v3094, %v5614
      %v5616 = vpop.f32.mrb[0].mxu0
      %v5617 = vadd.f32 %v3098, %v5616
      %5618 = vmatprep.mubr.bf16.mxu0 0
      %5619 = vmatmul.mubr.bf16.gmra.mrb[0].mxu0 %v2951
      %v5620 = vpop.f32.mrb[0].mxu0
      %v5621 = vadd.f32 %v3094, %v5620
      %v5622 = vpop.f32.mrb[0].mxu0
      %v5623 = vadd.f32 %v3098, %v5622
      %v5624 = vpop.f32.mrb[0].mxu0
      %v5625 = vadd.f32 %v3094, %v5624
      %v5626 = vpop.f32.mrb[0].mxu0
      %v5627 = vadd.f32 %v3098, %v5626
      %5628 = vmatprep.mubr.bf16.mxu0 0
      %5629 = vmatmul.mubr.bf16.gmra.mrb[0].mxu0 %v2952
      %v5630 = vpop.f32.mrb[0].mxu0
      %v5631 = vadd.f32 %v3094, %v5630
      %v5632 = vpop.f32.mrb[0].mxu0
      %v5633 = vadd.f32 %v3098, %v5632
      %v5634 = vpop.f32.mrb[0].mxu0
      %v5635 = vadd.f32 %v3094, %v5634
      %v5636 = vpop.f32.mrb[0].mxu0
      %v5637 = vadd.f32 %v3098, %v5636
      %5638 = vmatprep.mubr.bf16.mxu0 0
      %5639 = vmatmul.mubr.bf16.gmra.mrb[0].mxu0 %v2953
      %v5640 = vpop.f32.mrb[0].mxu0
      %v5641 = vadd.f32 %v3094, %v5640
      %v5642 = vpop.f32.mrb[0].mxu0
      %v5643 = vadd.f32 %v3098, %v5642
      %v5644 = vpop.f32.mrb[0].mxu0
      %v5645 = vadd.f32 %v3094, %v5644
      %v5646 = vpop.f32.mrb[0].mxu0
      %v5647 = vadd.f32 %v3098, %v5646
      %5648 = vmatprep.mubr.bf16.mxu0 0
      %5649 = vmatmul.mubr.bf16.gmra.mrb[0].mxu0 %v2954
      %v5650 = vpop.f32.mrb[0].mxu0
      %v5651 = vadd.f32 %v3094, %v5650
      %v5652 = vpop.f32.mrb[0].mxu0
      %v5653 = vadd.f32 %v3098, %v5652
      %v5654 = vpop.f32.mrb[0].mxu0
      %v5655 = vadd.f32 %v3094, %v5654
      %v5656 = vpop.f32.mrb[0].mxu0
      %v5657 = vadd.f32 %v3098, %v5656
      %5658 = vmatprep.mubr.bf16.mxu0 0
      %5659 = vmatmul.mubr.bf16.gmra.mrb[0].mxu0 %v2955
      %v5660 = vpop.f32.mrb[0].mxu0
      %v5661 = vadd.f32 %v3094, %v5660
      %v5662 = vpop.f32.mrb[0].mxu0
      %v5663 = vadd.f32 %v3098, %v5662
      %v5664 = vpop.f32.mrb[0].mxu0
      %v5665 = vadd.f32 %v3094, %v5664
      %v5666 = vpop.f32.mrb[0].mxu0
      %v5667 = vadd.f32 %v3098, %v5666
      %5668 = vmatprep.mubr.bf16.mxu0 0
      %5669 = vmatmul.mubr.bf16.gmra.mrb[0].mxu0 %v2956
      %v5670 = vpop.f32.mrb[0].mxu0
      %v5671 = vadd.f32 %v3094, %v5670
      %v5672 = vpop.f32.mrb[0].mxu0
      %v5673 = vadd.f32 %v3098, %v5672
      %v5674 = vpop.f32.mrb[0].mxu0
      %v5675 = vadd.f32 %v3094, %v5674
      %v5676 = vpop.f32.mrb[0].mxu0
      %v5677 = vadd.f32 %v3098, %v5676
      %5678 = vmatprep.mubr.bf16.mxu0 0
      %5679 = vmatmul.mubr.bf16.gmra.mrb[0].mxu0 %v2957
      %v5680 = vpop.f32.mrb[0].mxu0
      %v5681 = vadd.f32 %v3094, %v5680
      %v5682 = vpop.f32.mrb[0].mxu0
      %v5683 = vadd.f32 %v3098, %v5682
      %v5684 = vpop.f32.mrb[0].mxu0
      %v5685 = vadd.f32 %v3094, %v5684
      %v5686 = vpop.f32.mrb[0].mxu0
      %v5687 = vadd.f32 %v3098, %v5686
      %5688 = vmatprep.mubr.bf16.mxu0 0
      %5689 = vmatmul.mubr.bf16.gmra.mrb[0].mxu0 %v2958
      %v5690 = vpop.f32.mrb[0].mxu0
      %v5691 = vadd.f32 %v3094, %v5690
      %v5692 = vpop.f32.mrb[0].mxu0
      %v5693 = vadd.f32 %v3098, %v5692
      %v5694 = vpop.f32.mrb[0].mxu0
      %v5695 = vadd.f32 %v3094, %v5694
      %v5696 = vpop.f32.mrb[0].mxu0
      %v5697 = vadd.f32 %v3098, %v5696
      %5698 = vmatprep.mubr.bf16.mxu0 0
      %5699 = vmatmul.mubr.bf16.gmra.mrb[0].mxu0 %v2959
      %v5700 = vpop.f32.mrb[0].mxu0
      %v5701 = vadd.f32 %v3094, %v5700
      %v5702 = vpop.f32.mrb[0].mxu0
      %v5703 = vadd.f32 %v3098, %v5702
      %v5704 = vpop.f32.mrb[0].mxu0
      %v5705 = vadd.f32 %v3094, %v5704
      %v5706 = vpop.f32.mrb[0].mxu0
      %v5707 = vadd.f32 %v3098, %v5706
      %5708 = vmatprep.mubr.bf16.mxu0 0
      %5709 = vmatmul.mubr.bf16.gmra.mrb[0].mxu0 %v2960
      %v5710 = vpop.f32.mrb[0].mxu0
      %v5711 = vadd.f32 %v3094, %v5710
      %v5712 = vpop.f32.mrb[0].mxu0
      %v5713 = vadd.f32 %v3098, %v5712
      %v5714 = vpop.f32.mrb[0].mxu0
      %v5715 = vadd.f32 %v3094, %v5714
      %v5716 = vpop.f32.mrb[0].mxu0
      %v5717 = vadd.f32 %v3098, %v5716
      %5718 = vmatprep.mubr.bf16.mxu0 0
      %5719 = vmatmul.mubr.bf16.gmra.mrb[0].mxu0 %v2961
      %v5720 = vpop.f32.mrb[0].mxu0
      %v5721 = vadd.f32 %v3094, %v5720
      %v5722 = vpop.f32.mrb[0].mxu0
      %v5723 = vadd.f32 %v3098, %v5722
      %v5724 = vpop.f32.mrb[0].mxu0
      %v5725 = vadd.f32 %v3094, %v5724
      %v5726 = vpop.f32.mrb[0].mxu0
      %v5727 = vadd.f32 %v3098, %v5726
      %5728 = vmatprep.mubr.bf16.mxu0 0
      %5729 = vmatmul.mubr.bf16.gmra.mrb[0].mxu0 %v2962
      %v5730 = vpop.f32.mrb[0].mxu0
      %v5731 = vadd.f32 %v3094, %v5730
      %v5732 = vpop.f32.mrb[0].mxu0
      %v5733 = vadd.f32 %v3098, %v5732
      %v5734 = vpop.f32.mrb[0].mxu0
      %v5735 = vadd.f32 %v3094, %v5734
      %v5736 = vpop.f32.mrb[0].mxu0
      %v5737 = vadd.f32 %v3098, %v5736
      %5738 = vmatprep.mubr.bf16.mxu0 0
      %5739 = vmatmul.mubr.bf16.gmra.mrb[0].mxu0 %v2963
      %v5740 = vpop.f32.mrb[0].mxu0
      %v5741 = vadd.f32 %v3094, %v5740
      %v5742 = vpop.f32.mrb[0].mxu0
      %v5743 = vadd.f32 %v3098, %v5742
      %v5744 = vpop.f32.mrb[0].mxu0
      %v5745 = vadd.f32 %v3094, %v5744
      %v5746 = vpop.f32.mrb[0].mxu0
      %v5747 = vadd.f32 %v3098, %v5746
      %5748 = vmatprep.mubr.bf16.mxu0 0
      %5749 = vmatmul.mubr.bf16.gmra.mrb[0].mxu0 %v2964
      %v5750 = vpop.f32.mrb[0].mxu0
      %v5751 = vadd.f32 %v3094, %v5750
      %v5752 = vpop.f32.mrb[0].mxu0
      %v5753 = vadd.f32 %v3098, %v5752
      %v5754 = vpop.f32.mrb[0].mxu0
      %v5755 = vadd.f32 %v3094, %v5754
      %v5756 = vpop.f32.mrb[0].mxu0
      %v5757 = vadd.f32 %v3098, %v5756
      %5758 = vmatprep.mubr.bf16.mxu0 0
      %5759 = vmatmul.mubr.bf16.gmra.mrb[0].mxu0 %v2965
      %v5760 = vpop.f32.mrb[0].mxu0
      %v5761 = vadd.f32 %v3094, %v5760
      %v5762 = vpop.f32.mrb[0].mxu0
      %v5763 = vadd.f32 %v3098, %v5762
      %v5764 = vpop.f32.mrb[0].mxu0
      %v5765 = vadd.f32 %v3094, %v5764
      %v5766 = vpop.f32.mrb[0].mxu0
      %v5767 = vadd.f32 %v3098, %v5766
      %5768 = vmatprep.mubr.bf16.mxu0 0
      %5769 = vmatmul.mubr.bf16.gmra.mrb[0].mxu0 %v2966
      %v5770 = vpop.f32.mrb[0].mxu0
      %v5771 = vadd.f32 %v3094, %v5770
      %v5772 = vpop.f32.mrb[0].mxu0
      %v5773 = vadd.f32 %v3098, %v5772
      %v5774 = vpop.f32.mrb[0].mxu0
      %v5775 = vadd.f32 %v3094, %v5774
      %v5776 = vpop.f32.mrb[0].mxu0
      %v5777 = vadd.f32 %v3098, %v5776
      %5778 = vmatprep.mubr.bf16.mxu0 0
      %5779 = vmatmul.mubr.bf16.gmra.mrb[0].mxu0 %v2967
      %v5780 = vpop.f32.mrb[0].mxu0
      %v5781 = vadd.f32 %v3094, %v5780
      %v5782 = vpop.f32.mrb[0].mxu0
      %v5783 = vadd.f32 %v3098, %v5782
      %v5784 = vpop.f32.mrb[0].mxu0
      %v5785 = vadd.f32 %v3094, %v5784
      %v5786 = vpop.f32.mrb[0].mxu0
      %v5787 = vadd.f32 %v3098, %v5786
      %5788 = vmatprep.mubr.bf16.mxu0 0
      %5789 = vmatmul.mubr.bf16.gmra.mrb[0].mxu0 %v2968
      %v5790 = vpop.f32.mrb[0].mxu0
      %v5791 = vadd.f32 %v3094, %v5790
      %v5792 = vpop.f32.mrb[0].mxu0
      %v5793 = vadd.f32 %v3098, %v5792
      %v5794 = vpop.f32.mrb[0].mxu0
      %v5795 = vadd.f32 %v3094, %v5794
      %v5796 = vpop.f32.mrb[0].mxu0
      %v5797 = vadd.f32 %v3098, %v5796
      %5798 = vmatprep.mubr.bf16.mxu0 0
      %5799 = vmatmul.mubr.bf16.gmra.mrb[0].mxu0 %v2969
      %v5800 = vpop.f32.mrb[0].mxu0
      %v5801 = vadd.f32 %v3094, %v5800
      %v5802 = vpop.f32.mrb[0].mxu0
      %v5803 = vadd.f32 %v3098, %v5802
      %v5804 = vpop.f32.mrb[0].mxu0
      %v5805 = vadd.f32 %v3094, %v5804
      %v5806 = vpop.f32.mrb[0].mxu0
      %v5807 = vadd.f32 %v3098, %v5806
      %5808 = vmatprep.mubr.bf16.mxu0 0
      %5809 = vmatmul.mubr.bf16.gmra.mrb[0].mxu0 %v2970
      %v5810 = vpop.f32.mrb[0].mxu0
      %v5811 = vadd.f32 %v3094, %v5810
      %v5812 = vpop.f32.mrb[0].mxu0
      %v5813 = vadd.f32 %v3098, %v5812
      %v5814 = vpop.f32.mrb[0].mxu0
      %v5815 = vadd.f32 %v3094, %v5814
      %v5816 = vpop.f32.mrb[0].mxu0
      %v5817 = vadd.f32 %v3098, %v5816
      %5818 = vmatprep.mubr.bf16.mxu0 0
      %5819 = vmatmul.mubr.bf16.gmra.mrb[0].mxu0 %v2971
      %v5820 = vpop.f32.mrb[0].mxu0
      %v5821 = vadd.f32 %v3094, %v5820
      %v5822 = vpop.f32.mrb[0].mxu0
      %v5823 = vadd.f32 %v3098, %v5822
      %v5824 = vpop.f32.mrb[0].mxu0
      %v5825 = vadd.f32 %v3094, %v5824
      %v5826 = vpop.f32.mrb[0].mxu0
      %v5827 = vadd.f32 %v3098, %v5826
      %5828 = vmatprep.mubr.bf16.mxu0 0
      %5829 = vmatmul.mubr.bf16.gmra.mrb[0].mxu0 %v2972
      %v5830 = vpop.f32.mrb[0].mxu0
      %v5831 = vadd.f32 %v3094, %v5830
      %v5832 = vpop.f32.mrb[0].mxu0
      %v5833 = vadd.f32 %v3098, %v5832
      %v5834 = vpop.f32.mrb[0].mxu0
      %v5835 = vadd.f32 %v3094, %v5834
      %v5836 = vpop.f32.mrb[0].mxu0
      %v5837 = vadd.f32 %v3098, %v5836
      %5838 = vmatprep.mubr.bf16.mxu0 0
      %5839 = vmatmul.mubr.bf16.gmra.mrb[0].mxu0 %v2973
      %v5840 = vpop.f32.mrb[0].mxu0
      %v5841 = vadd.f32 %v3094, %v5840
      %v5842 = vpop.f32.mrb[0].mxu0
      %v5843 = vadd.f32 %v3098, %v5842
      %v5844 = vpop.f32.mrb[0].mxu0
      %v5845 = vadd.f32 %v3094, %v5844
      %v5846 = vpop.f32.mrb[0].mxu0
      %v5847 = vadd.f32 %v3098, %v5846
      %5848 = vmatprep.mubr.bf16.mxu0 0
      %5849 = vmatmul.mubr.bf16.gmra.mrb[0].mxu0 %v2974
      %v5850 = vpop.f32.mrb[0].mxu0
      %v5851 = vadd.f32 %v3094, %v5850
      %v5852 = vpop.f32.mrb[0].mxu0
      %v5853 = vadd.f32 %v3098, %v5852
      %v5854 = vpop.f32.mrb[0].mxu0
      %v5855 = vadd.f32 %v3094, %v5854
      %v5856 = vpop.f32.mrb[0].mxu0
      %v5857 = vadd.f32 %v3098, %v5856
      %5858 = vmatprep.mubr.bf16.mxu0 0
      %5859 = vmatmul.mubr.bf16.gmra.mrb[0].mxu0 %v2975
      %v5860 = vpop.f32.mrb[0].mxu0
      %v5861 = vadd.f32 %v3094, %v5860
      %v5862 = vpop.f32.mrb[0].mxu0
      %v5863 = vadd.f32 %v3098, %v5862
      %v5864 = vpop.f32.mrb[0].mxu0
      %v5865 = vadd.f32 %v3094, %v5864
      %v5866 = vpop.f32.mrb[0].mxu0
      %v5867 = vadd.f32 %v3098, %v5866
      %5868 = vmatprep.mubr.bf16.mxu0 0
      %5869 = vmatmul.mubr.bf16.gmra.mrb[0].mxu0 %v2976
      %v5870 = vpop.f32.mrb[0].mxu0
      %v5871 = vadd.f32 %v3094, %v5870
      %v5872 = vpop.f32.mrb[0].mxu0
      %v5873 = vadd.f32 %v3098, %v5872
      %v5874 = vpop.f32.mrb[0].mxu0
      %v5875 = vadd.f32 %v3094, %v5874
      %v5876 = vpop.f32.mrb[0].mxu0
      %v5877 = vadd.f32 %v3098, %v5876
      %5878 = vmatprep.mubr.bf16.mxu0 0
      %5879 = vmatmul.mubr.bf16.gmra.mrb[0].mxu0 %v2977
      %v5880 = vpop.f32.mrb[0].mxu0
      %v5881 = vadd.f32 %v3094, %v5880
      %v5882 = vpop.f32.mrb[0].mxu0
      %v5883 = vadd.f32 %v3098, %v5882
      %v5884 = vpop.f32.mrb[0].mxu0
      %v5885 = vadd.f32 %v3094, %v5884
      %v5886 = vpop.f32.mrb[0].mxu0
      %v5887 = vadd.f32 %v3098, %v5886
      %5888 = vmatprep.mubr.bf16.mxu0 0
      %5889 = vmatmul.mubr.bf16.gmra.mrb[0].mxu0 %v2978
      %v5890 = vpop.f32.mrb[0].mxu0
      %v5891 = vadd.f32 %v3094, %v5890
      %v5892 = vpop.f32.mrb[0].mxu0
      %v5893 = vadd.f32 %v3098, %v5892
      %v5894 = vpop.f32.mrb[0].mxu0
      %v5895 = vadd.f32 %v3094, %v5894
      %v5896 = vpop.f32.mrb[0].mxu0
      %v5897 = vadd.f32 %v3098, %v5896
      %5898 = vmatprep.mubr.bf16.mxu0 0
      %5899 = vmatmul.mubr.bf16.gmra.mrb[0].mxu0 %v2979
      %v5900 = vpop.f32.mrb[0].mxu0
      %v5901 = vadd.f32 %v3094, %v5900
      %v5902 = vpop.f32.mrb[0].mxu0
      %v5903 = vadd.f32 %v3098, %v5902
      %v5904 = vpop.f32.mrb[0].mxu0
      %v5905 = vadd.f32 %v3094, %v5904
      %v5906 = vpop.f32.mrb[0].mxu0
      %v5907 = vadd.f32 %v3098, %v5906
      %5908 = vmatprep.mubr.bf16.mxu0 0
      %5909 = vmatmul.mubr.bf16.gmra.mrb[0].mxu0 %v2980
      %v5910 = vpop.f32.mrb[0].mxu0
      %v5911 = vadd.f32 %v3094, %v5910
      %v5912 = vpop.f32.mrb[0].mxu0
      %v5913 = vadd.f32 %v3098, %v5912
      %v5914 = vpop.f32.mrb[0].mxu0
      %v5915 = vadd.f32 %v3094, %v5914
      %v5916 = vpop.f32.mrb[0].mxu0
      %v5917 = vadd.f32 %v3098, %v5916
      %5918 = vmatprep.mubr.bf16.mxu0 0
      %5919 = vmatmul.mubr.bf16.gmra.mrb[0].mxu0 %v2981
      %v5920 = vpop.f32.mrb[0].mxu0
      %v5921 = vadd.f32 %v3094, %v5920
      %v5922 = vpop.f32.mrb[0].mxu0
      %v5923 = vadd.f32 %v3098, %v5922
      %v5924 = vpop.f32.mrb[0].mxu0
      %v5925 = vadd.f32 %v3094, %v5924
      %v5926 = vpop.f32.mrb[0].mxu0
      %v5927 = vadd.f32 %v3098, %v5926
      %5928 = vmatprep.mubr.bf16.mxu0 0
      %5929 = vmatmul.mubr.bf16.gmra.mrb[0].mxu0 %v2982
      %v5930 = vpop.f32.mrb[0].mxu0
      %v5931 = vadd.f32 %v3094, %v5930
      %v5932 = vpop.f32.mrb[0].mxu0
      %v5933 = vadd.f32 %v3098, %v5932
      %v5934 = vpop.f32.mrb[0].mxu0
      %v5935 = vadd.f32 %v3094, %v5934
      %v5936 = vpop.f32.mrb[0].mxu0
      %v5937 = vadd.f32 %v3098, %v5936
      %5938 = vmatprep.mubr.bf16.mxu0 0
      %5939 = vmatmul.mubr.bf16.gmra.mrb[0].mxu0 %v2983
      %v5940 = vpop.f32.mrb[0].mxu0
      %v5941 = vadd.f32 %v3094, %v5940
      %v5942 = vpop.f32.mrb[0].mxu0
      %v5943 = vadd.f32 %v3098, %v5942
      %v5944 = vpop.f32.mrb[0].mxu0
      %v5945 = vadd.f32 %v3094, %v5944
      %v5946 = vpop.f32.mrb[0].mxu0
      %v5947 = vadd.f32 %v3098, %v5946
      %5948 = vmatprep.mubr.bf16.mxu0 0
      %5949 = vmatmul.mubr.bf16.gmra.mrb[0].mxu0 %v2984
      %v5950 = vpop.f32.mrb[0].mxu0
      %v5951 = vadd.f32 %v3094, %v5950
      %v5952 = vpop.f32.mrb[0].mxu0
      %v5953 = vadd.f32 %v3098, %v5952
      %v5954 = vpop.f32.mrb[0].mxu0
      %v5955 = vadd.f32 %v3094, %v5954
      %v5956 = vpop.f32.mrb[0].mxu0
      %v5957 = vadd.f32 %v3098, %v5956
      %5958 = vmatprep.mubr.bf16.mxu0 0
      %5959 = vmatmul.mubr.bf16.gmra.mrb[0].mxu0 %v2985
      %v5960 = vpop.f32.mrb[0].mxu0
      %v5961 = vadd.f32 %v3094, %v5960
      %v5962 = vpop.f32.mrb[0].mxu0
      %v5963 = vadd.f32 %v3098, %v5962
      %v5964 = vpop.f32.mrb[0].mxu0
      %v5965 = vadd.f32 %v3094, %v5964
      %v5966 = vpop.f32.mrb[0].mxu0
      %v5967 = vadd.f32 %v3098, %v5966
      %5968 = vmatprep.mubr.bf16.mxu0 0
      %5969 = vmatmul.mubr.bf16.gmra.mrb[0].mxu0 %v2986
      %v5970 = vpop.f32.mrb[0].mxu0
      %v5971 = vadd.f32 %v3094, %v5970
      %v5972 = vpop.f32.mrb[0].mxu0
      %v5973 = vadd.f32 %v3098, %v5972
      %v5974 = vpop.f32.mrb[0].mxu0
      %v5975 = vadd.f32 %v3094, %v5974
      %v5976 = vpop.f32.mrb[0].mxu0
      %v5977 = vadd.f32 %v3098, %v5976
      %5978 = vmatprep.mubr.bf16.mxu0 0
      %5979 = vmatmul.mubr.bf16.gmra.mrb[0].mxu0 %v2987
      %v5980 = vpop.f32.mrb[0].mxu0
      %v5981 = vadd.f32 %v3094, %v5980
      %v5982 = vpop.f32.mrb[0].mxu0
      %v5983 = vadd.f32 %v3098, %v5982
      %v5984 = vpop.f32.mrb[0].mxu0
      %v5985 = vadd.f32 %v3094, %v5984
      %v5986 = vpop.f32.mrb[0].mxu0
      %v5987 = vadd.f32 %v3098, %v5986
      %5988 = vmatprep.mubr.bf16.mxu0 0
      %5989 = vmatmul.mubr.bf16.gmra.mrb[0].mxu0 %v2988
      %v5990 = vpop.f32.mrb[0].mxu0
      %v5991 = vadd.f32 %v3094, %v5990
      %v5992 = vpop.f32.mrb[0].mxu0
      %v5993 = vadd.f32 %v3098, %v5992
      %v5994 = vpop.f32.mrb[0].mxu0
      %v5995 = vadd.f32 %v3094, %v5994
      %v5996 = vpop.f32.mrb[0].mxu0
      %v5997 = vadd.f32 %v3098, %v5996
      %5998 = vmatprep.mubr.bf16.mxu0 0
      %5999 = vmatmul.mubr.bf16.gmra.mrb[0].mxu0 %v2989
      %v6000 = vpop.f32.mrb[0].mxu0
      %v6001 = vadd.f32 %v3094, %v6000
      %v6002 = vpop.f32.mrb[0].mxu0
      %v6003 = vadd.f32 %v3098, %v6002
      %v6004 = vpop.f32.mrb[0].mxu0
      %v6005 = vadd.f32 %v3094, %v6004
      %v6006 = vpop.f32.mrb[0].mxu0
      %v6007 = vadd.f32 %v3098, %v6006
      %6008 = vmatprep.mubr.bf16.mxu0 0
      %6009 = vmatmul.mubr.bf16.gmra.mrb[0].mxu0 %v2990
      %v6010 = vpop.f32.mrb[0].mxu0
      %v6011 = vadd.f32 %v3094, %v6010
      %v6012 = vpop.f32.mrb[0].mxu0
      %v6013 = vadd.f32 %v3098, %v6012
      %v6014 = vpop.f32.mrb[0].mxu0
      %v6015 = vadd.f32 %v3094, %v6014
      %v6016 = vpop.f32.mrb[0].mxu0
      %v6017 = vadd.f32 %v3098, %v6016
      %6018 = vmatprep.mubr.bf16.mxu0 0
      %6019 = vmatmul.mubr.bf16.gmra.mrb[0].mxu0 %v2991
      %v6020 = vpop.f32.mrb[0].mxu0
      %v6021 = vadd.f32 %v3094, %v6020
      %v6022 = vpop.f32.mrb[0].mxu0
      %v6023 = vadd.f32 %v3098, %v6022
      %v6024 = vpop.f32.mrb[0].mxu0
      %v6025 = vadd.f32 %v3094, %v6024
      %v6026 = vpop.f32.mrb[0].mxu0
      %v6027 = vadd.f32 %v3098, %v6026
      %6028 = vmatprep.mubr.bf16.mxu0 0
      %6029 = vmatmul.mubr.bf16.gmra.mrb[0].mxu0 %v2992
      %v6030 = vpop.f32.mrb[0].mxu0
      %v6031 = vadd.f32 %v3094, %v6030
      %v6032 = vpop.f32.mrb[0].mxu0
      %v6033 = vadd.f32 %v3098, %v6032
      %v6034 = vpop.f32.mrb[0].mxu0
      %v6035 = vadd.f32 %v3094, %v6034
      %v6036 = vpop.f32.mrb[0].mxu0
      %v6037 = vadd.f32 %v3098, %v6036
      %6038 = vmatprep.mubr.bf16.mxu0 0
      %6039 = vmatmul.mubr.bf16.gmra.mrb[0].mxu0 %v2993
      %v6040 = vpop.f32.mrb[0].mxu0
      %v6041 = vadd.f32 %v3094, %v6040
      %v6042 = vpop.f32.mrb[0].mxu0
      %v6043 = vadd.f32 %v3098, %v6042
      %v6044 = vpop.f32.mrb[0].mxu0
      %v6045 = vadd.f32 %v3094, %v6044
      %v6046 = vpop.f32.mrb[0].mxu0
      %v6047 = vadd.f32 %v3098, %v6046
      %6048 = vmatprep.mubr.bf16.mxu0 0
      %6049 = vmatmul.mubr.bf16.gmra.mrb[0].mxu0 %v2994
      %v6050 = vpop.f32.mrb[0].mxu0
      %v6051 = vadd.f32 %v3094, %v6050
      %v6052 = vpop.f32.mrb[0].mxu0
      %v6053 = vadd.f32 %v3098, %v6052
      %v6054 = vpop.f32.mrb[0].mxu0
      %v6055 = vadd.f32 %v3094, %v6054
      %v6056 = vpop.f32.mrb[0].mxu0
      %v6057 = vadd.f32 %v3098, %v6056
      %6058 = vmatprep.mubr.bf16.mxu0 0
      %6059 = vmatmul.mubr.bf16.gmra.mrb[0].mxu0 %v2995
      %v6060 = vpop.f32.mrb[0].mxu0
      %v6061 = vadd.f32 %v3094, %v6060
      %v6062 = vpop.f32.mrb[0].mxu0
      %v6063 = vadd.f32 %v3098, %v6062
      %v6064 = vpop.f32.mrb[0].mxu0
      %v6065 = vadd.f32 %v3094, %v6064
      %v6066 = vpop.f32.mrb[0].mxu0
      %v6067 = vadd.f32 %v3098, %v6066
      %6068 = vmatprep.mubr.bf16.mxu0 0
      %6069 = vmatmul.mubr.bf16.gmra.mrb[0].mxu0 %v2996
      %v6070 = vpop.f32.mrb[0].mxu0
      %v6071 = vadd.f32 %v3094, %v6070
      %v6072 = vpop.f32.mrb[0].mxu0
      %v6073 = vadd.f32 %v3098, %v6072
      %v6074 = vpop.f32.mrb[0].mxu0
      %v6075 = vadd.f32 %v3094, %v6074
      %v6076 = vpop.f32.mrb[0].mxu0
      %v6077 = vadd.f32 %v3098, %v6076
      %6078 = vmatprep.mubr.bf16.mxu0 0
      %6079 = vmatmul.mubr.bf16.gmra.mrb[0].mxu0 %v2997
      %v6080 = vpop.f32.mrb[0].mxu0
      %v6081 = vadd.f32 %v3094, %v6080
      %v6082 = vpop.f32.mrb[0].mxu0
      %v6083 = vadd.f32 %v3098, %v6082
      %v6084 = vpop.f32.mrb[0].mxu0
      %v6085 = vadd.f32 %v3094, %v6084
      %v6086 = vpop.f32.mrb[0].mxu0
      %v6087 = vadd.f32 %v3098, %v6086
      %6088 = vmatprep.mubr.bf16.mxu0 0
      %6089 = vmatmul.mubr.bf16.gmra.mrb[0].mxu0 %v2998
      %v6090 = vpop.f32.mrb[0].mxu0
      %v6091 = vadd.f32 %v3094, %v6090
      %v6092 = vpop.f32.mrb[0].mxu0
      %v6093 = vadd.f32 %v3098, %v6092
      %v6094 = vpop.f32.mrb[0].mxu0
      %v6095 = vadd.f32 %v3094, %v6094
      %v6096 = vpop.f32.mrb[0].mxu0
      %v6097 = vadd.f32 %v3098, %v6096
      %6098 = vmatprep.mubr.bf16.mxu0 0
      %6099 = vmatmul.mubr.bf16.gmra.mrb[0].mxu0 %v2999
      %v6100 = vpop.f32.mrb[0].mxu0
      %v6101 = vadd.f32 %v3094, %v6100
      %v6102 = vpop.f32.mrb[0].mxu0
      %v6103 = vadd.f32 %v3098, %v6102
      %v6104 = vpop.f32.mrb[0].mxu0
      %v6105 = vadd.f32 %v3094, %v6104
      %v6106 = vpop.f32.mrb[0].mxu0
      %v6107 = vadd.f32 %v3098, %v6106
      %6108 = vmatprep.mubr.bf16.mxu0 0
      %6109 = vmatmul.mubr.bf16.gmra.mrb[0].mxu0 %v3000
      %v6110 = vpop.f32.mrb[0].mxu0
      %v6111 = vadd.f32 %v3094, %v6110
      %v6112 = vpop.f32.mrb[0].mxu0
      %v6113 = vadd.f32 %v3098, %v6112
      %v6114 = vpop.f32.mrb[0].mxu0
      %v6115 = vadd.f32 %v3094, %v6114
      %v6116 = vpop.f32.mrb[0].mxu0
      %v6117 = vadd.f32 %v3098, %v6116
      %6118 = vdwg.mxu0
      %v6119 = vmax.f32 %v3462, 0.0
      %v6120 = vmax.f32 %v3464, 0.0
      %v6121 = vmax.f32 %v4135, 0.0
      %v6122 = vmax.f32 %v4137, 0.0
      %v6123 = vmax.f32 %v4808, 0.0
      %v6124 = vmax.f32 %v4810, 0.0
      %v6125 = vmax.f32 %v5481, 0.0
      %v6126 = vmax.f32 %v5483, 0.0
      %v6127 = vmax.f32 %v3466, 0.0
      %v6128 = vmax.f32 %v3468, 0.0
      %v6129 = vmax.f32 %v4139, 0.0
      %v6130 = vmax.f32 %v4141, 0.0
      %v6131 = vmax.f32 %v4812, 0.0
      %v6132 = vmax.f32 %v4814, 0.0
      %v6133 = vmax.f32 %v5485, 0.0
      %v6134 = vmax.f32 %v5487, 0.0
      %v6135 = vmax.f32 %v3472, 0.0
      %v6136 = vmax.f32 %v3474, 0.0
      %v6137 = vmax.f32 %v4145, 0.0
      %v6138 = vmax.f32 %v4147, 0.0
      %v6139 = vmax.f32 %v4818, 0.0
      %v6140 = vmax.f32 %v4820, 0.0
      %v6141 = vmax.f32 %v5491, 0.0
      %v6142 = vmax.f32 %v5493, 0.0
      %v6143 = vmax.f32 %v3476, 0.0
      %v6144 = vmax.f32 %v3478, 0.0
      %v6145 = vmax.f32 %v4149, 0.0
      %v6146 = vmax.f32 %v4151, 0.0
      %v6147 = vmax.f32 %v4822, 0.0
      %v6148 = vmax.f32 %v4824, 0.0
      %v6149 = vmax.f32 %v5495, 0.0
      %v6150 = vmax.f32 %v5497, 0.0
      %v6151 = vmax.f32 %v3482, 0.0
      %v6152 = vmax.f32 %v3484, 0.0
      %v6153 = vmax.f32 %v4155, 0.0
      %v6154 = vmax.f32 %v4157, 0.0
      %v6155 = vmax.f32 %v4828, 0.0
      %v6156 = vmax.f32 %v4830, 0.0
      %v6157 = vmax.f32 %v5501, 0.0
      %v6158 = vmax.f32 %v5503, 0.0
      %v6159 = vmax.f32 %v3486, 0.0
      %v6160 = vmax.f32 %v3488, 0.0
      %v6161 = vmax.f32 %v4159, 0.0
      %v6162 = vmax.f32 %v4161, 0.0
      %v6163 = vmax.f32 %v4832, 0.0
      %v6164 = vmax.f32 %v4834, 0.0
      %v6165 = vmax.f32 %v5505, 0.0
      %v6166 = vmax.f32 %v5507, 0.0
      %v6167 = vmax.f32 %v3492, 0.0
      %v6168 = vmax.f32 %v3494, 0.0
      %v6169 = vmax.f32 %v4165, 0.0
      %v6170 = vmax.f32 %v4167, 0.0
      %v6171 = vmax.f32 %v4838, 0.0
      %v6172 = vmax.f32 %v4840, 0.0
      %v6173 = vmax.f32 %v5511, 0.0
      %v6174 = vmax.f32 %v5513, 0.0
      %v6175 = vmax.f32 %v3496, 0.0
      %v6176 = vmax.f32 %v3498, 0.0
      %v6177 = vmax.f32 %v4169, 0.0
      %v6178 = vmax.f32 %v4171, 0.0
      %v6179 = vmax.f32 %v4842, 0.0
      %v6180 = vmax.f32 %v4844, 0.0
      %v6181 = vmax.f32 %v5515, 0.0
      %v6182 = vmax.f32 %v5517, 0.0
      %v6183 = vmax.f32 %v3502, 0.0
      %v6184 = vmax.f32 %v3504, 0.0
      %v6185 = vmax.f32 %v4175, 0.0
      %v6186 = vmax.f32 %v4177, 0.0
      %v6187 = vmax.f32 %v4848, 0.0
      %v6188 = vmax.f32 %v4850, 0.0
      %v6189 = vmax.f32 %v5521, 0.0
      %v6190 = vmax.f32 %v5523, 0.0
      %v6191 = vmax.f32 %v3506, 0.0
      %v6192 = vmax.f32 %v3508, 0.0
      %v6193 = vmax.f32 %v4179, 0.0
      %v6194 = vmax.f32 %v4181, 0.0
      %v6195 = vmax.f32 %v4852, 0.0
      %v6196 = vmax.f32 %v4854, 0.0
      %v6197 = vmax.f32 %v5525, 0.0
      %v6198 = vmax.f32 %v5527, 0.0
      %v6199 = vmax.f32 %v3512, 0.0
      %v6200 = vmax.f32 %v3514, 0.0
      %v6201 = vmax.f32 %v4185, 0.0
      %v6202 = vmax.f32 %v4187, 0.0
      %v6203 = vmax.f32 %v4858, 0.0
      %v6204 = vmax.f32 %v4860, 0.0
      %v6205 = vmax.f32 %v5531, 0.0
      %v6206 = vmax.f32 %v5533, 0.0
      %v6207 = vmax.f32 %v3516, 0.0
      %v6208 = vmax.f32 %v3518, 0.0
      %v6209 = vmax.f32 %v4189, 0.0
      %v6210 = vmax.f32 %v4191, 0.0
      %v6211 = vmax.f32 %v4862, 0.0
      %v6212 = vmax.f32 %v4864, 0.0
      %v6213 = vmax.f32 %v5535, 0.0
      %v6214 = vmax.f32 %v5537, 0.0
      %v6215 = vmax.f32 %v3522, 0.0
      %v6216 = vmax.f32 %v3524, 0.0
      %v6217 = vmax.f32 %v4195, 0.0
      %v6218 = vmax.f32 %v4197, 0.0
      %v6219 = vmax.f32 %v4868, 0.0
      %v6220 = vmax.f32 %v4870, 0.0
      %v6221 = vmax.f32 %v5541, 0.0
      %v6222 = vmax.f32 %v5543, 0.0
      %v6223 = vmax.f32 %v3526, 0.0
      %v6224 = vmax.f32 %v3528, 0.0
      %v6225 = vmax.f32 %v4199, 0.0
      %v6226 = vmax.f32 %v4201, 0.0
      %v6227 = vmax.f32 %v4872, 0.0
      %v6228 = vmax.f32 %v4874, 0.0
      %v6229 = vmax.f32 %v5545, 0.0
      %v6230 = vmax.f32 %v5547, 0.0
      %v6231 = vmax.f32 %v3532, 0.0
      %v6232 = vmax.f32 %v3534, 0.0
      %v6233 = vmax.f32 %v4205, 0.0
      %v6234 = vmax.f32 %v4207, 0.0
      %v6235 = vmax.f32 %v4878, 0.0
      %v6236 = vmax.f32 %v4880, 0.0
      %v6237 = vmax.f32 %v5551, 0.0
      %v6238 = vmax.f32 %v5553, 0.0
      %v6239 = vmax.f32 %v3536, 0.0
      %v6240 = vmax.f32 %v3538, 0.0
      %v6241 = vmax.f32 %v4209, 0.0
      %v6242 = vmax.f32 %v4211, 0.0
      %v6243 = vmax.f32 %v4882, 0.0
      %v6244 = vmax.f32 %v4884, 0.0
      %v6245 = vmax.f32 %v5555, 0.0
      %v6246 = vmax.f32 %v5557, 0.0
      %v6247 = vmax.f32 %v3542, 0.0
      %v6248 = vmax.f32 %v3544, 0.0
      %v6249 = vmax.f32 %v4215, 0.0
      %v6250 = vmax.f32 %v4217, 0.0
      %v6251 = vmax.f32 %v4888, 0.0
      %v6252 = vmax.f32 %v4890, 0.0
      %v6253 = vmax.f32 %v5561, 0.0
      %v6254 = vmax.f32 %v5563, 0.0
      %v6255 = vmax.f32 %v3546, 0.0
      %v6256 = vmax.f32 %v3548, 0.0
      %v6257 = vmax.f32 %v4219, 0.0
      %v6258 = vmax.f32 %v4221, 0.0
      %v6259 = vmax.f32 %v4892, 0.0
      %v6260 = vmax.f32 %v4894, 0.0
      %v6261 = vmax.f32 %v5565, 0.0
      %v6262 = vmax.f32 %v5567, 0.0
      %v6263 = vmax.f32 %v3552, 0.0
      %v6264 = vmax.f32 %v3554, 0.0
      %v6265 = vmax.f32 %v4225, 0.0
      %v6266 = vmax.f32 %v4227, 0.0
      %v6267 = vmax.f32 %v4898, 0.0
      %v6268 = vmax.f32 %v4900, 0.0
      %v6269 = vmax.f32 %v5571, 0.0
      %v6270 = vmax.f32 %v5573, 0.0
      %v6271 = vmax.f32 %v3556, 0.0
      %v6272 = vmax.f32 %v3558, 0.0
      %v6273 = vmax.f32 %v4229, 0.0
      %v6274 = vmax.f32 %v4231, 0.0
      %v6275 = vmax.f32 %v4902, 0.0
      %v6276 = vmax.f32 %v4904, 0.0
      %v6277 = vmax.f32 %v5575, 0.0
      %v6278 = vmax.f32 %v5577, 0.0
      %v6279 = vmax.f32 %v3562, 0.0
      %v6280 = vmax.f32 %v3564, 0.0
      %v6281 = vmax.f32 %v4235, 0.0
      %v6282 = vmax.f32 %v4237, 0.0
      %v6283 = vmax.f32 %v4908, 0.0
      %v6284 = vmax.f32 %v4910, 0.0
      %v6285 = vmax.f32 %v5581, 0.0
      %v6286 = vmax.f32 %v5583, 0.0
      %v6287 = vmax.f32 %v3566, 0.0
      %v6288 = vmax.f32 %v3568, 0.0
      %v6289 = vmax.f32 %v4239, 0.0
      %v6290 = vmax.f32 %v4241, 0.0
      %v6291 = vmax.f32 %v4912, 0.0
      %v6292 = vmax.f32 %v4914, 0.0
      %v6293 = vmax.f32 %v5585, 0.0
      %v6294 = vmax.f32 %v5587, 0.0
      %v6295 = vmax.f32 %v3572, 0.0
      %v6296 = vmax.f32 %v3574, 0.0
      %v6297 = vmax.f32 %v4245, 0.0
      %v6298 = vmax.f32 %v4247, 0.0
      %v6299 = vmax.f32 %v4918, 0.0
      %v6300 = vmax.f32 %v4920, 0.0
      %v6301 = vmax.f32 %v5591, 0.0
      %v6302 = vmax.f32 %v5593, 0.0
      %v6303 = vmax.f32 %v3576, 0.0
      %v6304 = vmax.f32 %v3578, 0.0
      %v6305 = vmax.f32 %v4249, 0.0
      %v6306 = vmax.f32 %v4251, 0.0
      %v6307 = vmax.f32 %v4922, 0.0
      %v6308 = vmax.f32 %v4924, 0.0
      %v6309 = vmax.f32 %v5595, 0.0
      %v6310 = vmax.f32 %v5597, 0.0
      %v6311 = vmax.f32 %v3582, 0.0
      %v6312 = vmax.f32 %v3584, 0.0
      %v6313 = vmax.f32 %v4255, 0.0
      %v6314 = vmax.f32 %v4257, 0.0
      %v6315 = vmax.f32 %v4928, 0.0
      %v6316 = vmax.f32 %v4930, 0.0
      %v6317 = vmax.f32 %v5601, 0.0
      %v6318 = vmax.f32 %v5603, 0.0
      %v6319 = vmax.f32 %v3586, 0.0
      %v6320 = vmax.f32 %v3588, 0.0
      %v6321 = vmax.f32 %v4259, 0.0
      %v6322 = vmax.f32 %v4261, 0.0
      %v6323 = vmax.f32 %v4932, 0.0
      %v6324 = vmax.f32 %v4934, 0.0
      %v6325 = vmax.f32 %v5605, 0.0
      %v6326 = vmax.f32 %v5607, 0.0
      %v6327 = vmax.f32 %v3592, 0.0
      %v6328 = vmax.f32 %v3594, 0.0
      %v6329 = vmax.f32 %v4265, 0.0
      %v6330 = vmax.f32 %v4267, 0.0
      %v6331 = vmax.f32 %v4938, 0.0
      %v6332 = vmax.f32 %v4940, 0.0
      %v6333 = vmax.f32 %v5611, 0.0
      %v6334 = vmax.f32 %v5613, 0.0
      %v6335 = vmax.f32 %v3596, 0.0
      %v6336 = vmax.f32 %v3598, 0.0
      %v6337 = vmax.f32 %v4269, 0.0
      %v6338 = vmax.f32 %v4271, 0.0
      %v6339 = vmax.f32 %v4942, 0.0
      %v6340 = vmax.f32 %v4944, 0.0
      %v6341 = vmax.f32 %v5615, 0.0
      %v6342 = vmax.f32 %v5617, 0.0
      %v6343 = vmax.f32 %v3602, 0.0
      %v6344 = vmax.f32 %v3604, 0.0
      %v6345 = vmax.f32 %v4275, 0.0
      %v6346 = vmax.f32 %v4277, 0.0
      %v6347 = vmax.f32 %v4948, 0.0
      %v6348 = vmax.f32 %v4950, 0.0
      %v6349 = vmax.f32 %v5621, 0.0
      %v6350 = vmax.f32 %v5623, 0.0
      %v6351 = vmax.f32 %v3606, 0.0
      %v6352 = vmax.f32 %v3608, 0.0
      %v6353 = vmax.f32 %v4279, 0.0
      %v6354 = vmax.f32 %v4281, 0.0
      %v6355 = vmax.f32 %v4952, 0.0
      %v6356 = vmax.f32 %v4954, 0.0
      %v6357 = vmax.f32 %v5625, 0.0
      %v6358 = vmax.f32 %v5627, 0.0
      %v6359 = vmax.f32 %v3612, 0.0
      %v6360 = vmax.f32 %v3614, 0.0
      %v6361 = vmax.f32 %v4285, 0.0
      %v6362 = vmax.f32 %v4287, 0.0
      %v6363 = vmax.f32 %v4958, 0.0
      %v6364 = vmax.f32 %v4960, 0.0
      %v6365 = vmax.f32 %v5631, 0.0
      %v6366 = vmax.f32 %v5633, 0.0
      %v6367 = vmax.f32 %v3616, 0.0
      %v6368 = vmax.f32 %v3618, 0.0
      %v6369 = vmax.f32 %v4289, 0.0
      %v6370 = vmax.f32 %v4291, 0.0
      %v6371 = vmax.f32 %v4962, 0.0
      %v6372 = vmax.f32 %v4964, 0.0
      %v6373 = vmax.f32 %v5635, 0.0
      %v6374 = vmax.f32 %v5637, 0.0
      %v6375 = vmax.f32 %v3622, 0.0
      %v6376 = vmax.f32 %v3624, 0.0
      %v6377 = vmax.f32 %v4295, 0.0
      %v6378 = vmax.f32 %v4297, 0.0
      %v6379 = vmax.f32 %v4968, 0.0
      %v6380 = vmax.f32 %v4970, 0.0
      %v6381 = vmax.f32 %v5641, 0.0
      %v6382 = vmax.f32 %v5643, 0.0
      %v6383 = vmax.f32 %v3626, 0.0
      %v6384 = vmax.f32 %v3628, 0.0
      %v6385 = vmax.f32 %v4299, 0.0
      %v6386 = vmax.f32 %v4301, 0.0
      %v6387 = vmax.f32 %v4972, 0.0
      %v6388 = vmax.f32 %v4974, 0.0
      %v6389 = vmax.f32 %v5645, 0.0
      %v6390 = vmax.f32 %v5647, 0.0
      %v6391 = vmax.f32 %v3632, 0.0
      %v6392 = vmax.f32 %v3634, 0.0
      %v6393 = vmax.f32 %v4305, 0.0
      %v6394 = vmax.f32 %v4307, 0.0
      %v6395 = vmax.f32 %v4978, 0.0
      %v6396 = vmax.f32 %v4980, 0.0
      %v6397 = vmax.f32 %v5651, 0.0
      %v6398 = vmax.f32 %v5653, 0.0
      %v6399 = vmax.f32 %v3636, 0.0
      %v6400 = vmax.f32 %v3638, 0.0
      %v6401 = vmax.f32 %v4309, 0.0
      %v6402 = vmax.f32 %v4311, 0.0
      %v6403 = vmax.f32 %v4982, 0.0
      %v6404 = vmax.f32 %v4984, 0.0
      %v6405 = vmax.f32 %v5655, 0.0
      %v6406 = vmax.f32 %v5657, 0.0
      %v6407 = vmax.f32 %v3642, 0.0
      %v6408 = vmax.f32 %v3644, 0.0
      %v6409 = vmax.f32 %v4315, 0.0
      %v6410 = vmax.f32 %v4317, 0.0
      %v6411 = vmax.f32 %v4988, 0.0
      %v6412 = vmax.f32 %v4990, 0.0
      %v6413 = vmax.f32 %v5661, 0.0
      %v6414 = vmax.f32 %v5663, 0.0
      %v6415 = vmax.f32 %v3646, 0.0
      %v6416 = vmax.f32 %v3648, 0.0
      %v6417 = vmax.f32 %v4319, 0.0
      %v6418 = vmax.f32 %v4321, 0.0
      %v6419 = vmax.f32 %v4992, 0.0
      %v6420 = vmax.f32 %v4994, 0.0
      %v6421 = vmax.f32 %v5665, 0.0
      %v6422 = vmax.f32 %v5667, 0.0
      %v6423 = vmax.f32 %v3652, 0.0
      %v6424 = vmax.f32 %v3654, 0.0
      %v6425 = vmax.f32 %v4325, 0.0
      %v6426 = vmax.f32 %v4327, 0.0
      %v6427 = vmax.f32 %v4998, 0.0
      %v6428 = vmax.f32 %v5000, 0.0
      %v6429 = vmax.f32 %v5671, 0.0
      %v6430 = vmax.f32 %v5673, 0.0
      %v6431 = vmax.f32 %v3656, 0.0
      %v6432 = vmax.f32 %v3658, 0.0
      %v6433 = vmax.f32 %v4329, 0.0
      %v6434 = vmax.f32 %v4331, 0.0
      %v6435 = vmax.f32 %v5002, 0.0
      %v6436 = vmax.f32 %v5004, 0.0
      %v6437 = vmax.f32 %v5675, 0.0
      %v6438 = vmax.f32 %v5677, 0.0
      %v6439 = vmax.f32 %v3662, 0.0
      %v6440 = vmax.f32 %v3664, 0.0
      %v6441 = vmax.f32 %v4335, 0.0
      %v6442 = vmax.f32 %v4337, 0.0
      %v6443 = vmax.f32 %v5008, 0.0
      %v6444 = vmax.f32 %v5010, 0.0
      %v6445 = vmax.f32 %v5681, 0.0
      %v6446 = vmax.f32 %v5683, 0.0
      %v6447 = vmax.f32 %v3666, 0.0
      %v6448 = vmax.f32 %v3668, 0.0
      %v6449 = vmax.f32 %v4339, 0.0
      %v6450 = vmax.f32 %v4341, 0.0
      %v6451 = vmax.f32 %v5012, 0.0
      %v6452 = vmax.f32 %v5014, 0.0
      %v6453 = vmax.f32 %v5685, 0.0
      %v6454 = vmax.f32 %v5687, 0.0
      %v6455 = vmax.f32 %v3672, 0.0
      %v6456 = vmax.f32 %v3674, 0.0
      %v6457 = vmax.f32 %v4345, 0.0
      %v6458 = vmax.f32 %v4347, 0.0
      %v6459 = vmax.f32 %v5018, 0.0
      %v6460 = vmax.f32 %v5020, 0.0
      %v6461 = vmax.f32 %v5691, 0.0
      %v6462 = vmax.f32 %v5693, 0.0
      %v6463 = vmax.f32 %v3676, 0.0
      %v6464 = vmax.f32 %v3678, 0.0
      %v6465 = vmax.f32 %v4349, 0.0
      %v6466 = vmax.f32 %v4351, 0.0
      %v6467 = vmax.f32 %v5022, 0.0
      %v6468 = vmax.f32 %v5024, 0.0
      %v6469 = vmax.f32 %v5695, 0.0
      %v6470 = vmax.f32 %v5697, 0.0
      %v6471 = vmax.f32 %v3682, 0.0
      %v6472 = vmax.f32 %v3684, 0.0
      %v6473 = vmax.f32 %v4355, 0.0
      %v6474 = vmax.f32 %v4357, 0.0
      %v6475 = vmax.f32 %v5028, 0.0
      %v6476 = vmax.f32 %v5030, 0.0
      %v6477 = vmax.f32 %v5701, 0.0
      %v6478 = vmax.f32 %v5703, 0.0
      %v6479 = vmax.f32 %v3686, 0.0
      %v6480 = vmax.f32 %v3688, 0.0
      %v6481 = vmax.f32 %v4359, 0.0
      %v6482 = vmax.f32 %v4361, 0.0
      %v6483 = vmax.f32 %v5032, 0.0
      %v6484 = vmax.f32 %v5034, 0.0
      %v6485 = vmax.f32 %v5705, 0.0
      %v6486 = vmax.f32 %v5707, 0.0
      %v6487 = vmax.f32 %v3692, 0.0
      %v6488 = vmax.f32 %v3694, 0.0
      %v6489 = vmax.f32 %v4365, 0.0
      %v6490 = vmax.f32 %v4367, 0.0
      %v6491 = vmax.f32 %v5038, 0.0
      %v6492 = vmax.f32 %v5040, 0.0
      %v6493 = vmax.f32 %v5711, 0.0
      %v6494 = vmax.f32 %v5713, 0.0
      %v6495 = vmax.f32 %v3696, 0.0
      %v6496 = vmax.f32 %v3698, 0.0
      %v6497 = vmax.f32 %v4369, 0.0
      %v6498 = vmax.f32 %v4371, 0.0
      %v6499 = vmax.f32 %v5042, 0.0
      %v6500 = vmax.f32 %v5044, 0.0
      %v6501 = vmax.f32 %v5715, 0.0
      %v6502 = vmax.f32 %v5717, 0.0
      %v6503 = vmax.f32 %v3702, 0.0
      %v6504 = vmax.f32 %v3704, 0.0
      %v6505 = vmax.f32 %v4375, 0.0
      %v6506 = vmax.f32 %v4377, 0.0
      %v6507 = vmax.f32 %v5048, 0.0
      %v6508 = vmax.f32 %v5050, 0.0
      %v6509 = vmax.f32 %v5721, 0.0
      %v6510 = vmax.f32 %v5723, 0.0
      %v6511 = vmax.f32 %v3706, 0.0
      %v6512 = vmax.f32 %v3708, 0.0
      %v6513 = vmax.f32 %v4379, 0.0
      %v6514 = vmax.f32 %v4381, 0.0
      %v6515 = vmax.f32 %v5052, 0.0
      %v6516 = vmax.f32 %v5054, 0.0
      %v6517 = vmax.f32 %v5725, 0.0
      %v6518 = vmax.f32 %v5727, 0.0
      %v6519 = vmax.f32 %v3712, 0.0
      %v6520 = vmax.f32 %v3714, 0.0
      %v6521 = vmax.f32 %v4385, 0.0
      %v6522 = vmax.f32 %v4387, 0.0
      %v6523 = vmax.f32 %v5058, 0.0
      %v6524 = vmax.f32 %v5060, 0.0
      %v6525 = vmax.f32 %v5731, 0.0
      %v6526 = vmax.f32 %v5733, 0.0
      %v6527 = vmax.f32 %v3716, 0.0
      %v6528 = vmax.f32 %v3718, 0.0
      %v6529 = vmax.f32 %v4389, 0.0
      %v6530 = vmax.f32 %v4391, 0.0
      %v6531 = vmax.f32 %v5062, 0.0
      %v6532 = vmax.f32 %v5064, 0.0
      %v6533 = vmax.f32 %v5735, 0.0
      %v6534 = vmax.f32 %v5737, 0.0
      %v6535 = vmax.f32 %v3722, 0.0
      %v6536 = vmax.f32 %v3724, 0.0
      %v6537 = vmax.f32 %v4395, 0.0
      %v6538 = vmax.f32 %v4397, 0.0
      %v6539 = vmax.f32 %v5068, 0.0
      %v6540 = vmax.f32 %v5070, 0.0
      %v6541 = vmax.f32 %v5741, 0.0
      %v6542 = vmax.f32 %v5743, 0.0
      %v6543 = vmax.f32 %v3726, 0.0
      %v6544 = vmax.f32 %v3728, 0.0
      %v6545 = vmax.f32 %v4399, 0.0
      %v6546 = vmax.f32 %v4401, 0.0
      %v6547 = vmax.f32 %v5072, 0.0
      %v6548 = vmax.f32 %v5074, 0.0
      %v6549 = vmax.f32 %v5745, 0.0
      %v6550 = vmax.f32 %v5747, 0.0
      %v6551 = vmax.f32 %v3732, 0.0
      %v6552 = vmax.f32 %v3734, 0.0
      %v6553 = vmax.f32 %v4405, 0.0
      %v6554 = vmax.f32 %v4407, 0.0
      %v6555 = vmax.f32 %v5078, 0.0
      %v6556 = vmax.f32 %v5080, 0.0
      %v6557 = vmax.f32 %v5751, 0.0
      %v6558 = vmax.f32 %v5753, 0.0
      %v6559 = vmax.f32 %v3736, 0.0
      %v6560 = vmax.f32 %v3738, 0.0
      %v6561 = vmax.f32 %v4409, 0.0
      %v6562 = vmax.f32 %v4411, 0.0
      %v6563 = vmax.f32 %v5082, 0.0
      %v6564 = vmax.f32 %v5084, 0.0
      %v6565 = vmax.f32 %v5755, 0.0
      %v6566 = vmax.f32 %v5757, 0.0
      %v6567 = vmax.f32 %v3742, 0.0
      %v6568 = vmax.f32 %v3744, 0.0
      %v6569 = vmax.f32 %v4415, 0.0
      %v6570 = vmax.f32 %v4417, 0.0
      %v6571 = vmax.f32 %v5088, 0.0
      %v6572 = vmax.f32 %v5090, 0.0
      %v6573 = vmax.f32 %v5761, 0.0
      %v6574 = vmax.f32 %v5763, 0.0
      %v6575 = vmax.f32 %v3746, 0.0
      %v6576 = vmax.f32 %v3748, 0.0
      %v6577 = vmax.f32 %v4419, 0.0
      %v6578 = vmax.f32 %v4421, 0.0
      %v6579 = vmax.f32 %v5092, 0.0
      %v6580 = vmax.f32 %v5094, 0.0
      %v6581 = vmax.f32 %v5765, 0.0
      %v6582 = vmax.f32 %v5767, 0.0
      %v6583 = vmax.f32 %v3752, 0.0
      %v6584 = vmax.f32 %v3754, 0.0
      %v6585 = vmax.f32 %v4425, 0.0
      %v6586 = vmax.f32 %v4427, 0.0
      %v6587 = vmax.f32 %v5098, 0.0
      %v6588 = vmax.f32 %v5100, 0.0
      %v6589 = vmax.f32 %v5771, 0.0
      %v6590 = vmax.f32 %v5773, 0.0
      %v6591 = vmax.f32 %v3756, 0.0
      %v6592 = vmax.f32 %v3758, 0.0
      %v6593 = vmax.f32 %v4429, 0.0
      %v6594 = vmax.f32 %v4431, 0.0
      %v6595 = vmax.f32 %v5102, 0.0
      %v6596 = vmax.f32 %v5104, 0.0
      %v6597 = vmax.f32 %v5775, 0.0
      %v6598 = vmax.f32 %v5777, 0.0
      %v6599 = vmax.f32 %v3762, 0.0
      %v6600 = vmax.f32 %v3764, 0.0
      %v6601 = vmax.f32 %v4435, 0.0
      %v6602 = vmax.f32 %v4437, 0.0
      %v6603 = vmax.f32 %v5108, 0.0
      %v6604 = vmax.f32 %v5110, 0.0
      %v6605 = vmax.f32 %v5781, 0.0
      %v6606 = vmax.f32 %v5783, 0.0
      %v6607 = vmax.f32 %v3766, 0.0
      %v6608 = vmax.f32 %v3768, 0.0
      %v6609 = vmax.f32 %v4439, 0.0
      %v6610 = vmax.f32 %v4441, 0.0
      %v6611 = vmax.f32 %v5112, 0.0
      %v6612 = vmax.f32 %v5114, 0.0
      %v6613 = vmax.f32 %v5785, 0.0
      %v6614 = vmax.f32 %v5787, 0.0
      %v6615 = vmax.f32 %v3772, 0.0
      %v6616 = vmax.f32 %v3774, 0.0
      %v6617 = vmax.f32 %v4445, 0.0
      %v6618 = vmax.f32 %v4447, 0.0
      %v6619 = vmax.f32 %v5118, 0.0
      %v6620 = vmax.f32 %v5120, 0.0
      %v6621 = vmax.f32 %v5791, 0.0
      %v6622 = vmax.f32 %v5793, 0.0
      %v6623 = vmax.f32 %v3776, 0.0
      %v6624 = vmax.f32 %v3778, 0.0
      %v6625 = vmax.f32 %v4449, 0.0
      %v6626 = vmax.f32 %v4451, 0.0
      %v6627 = vmax.f32 %v5122, 0.0
      %v6628 = vmax.f32 %v5124, 0.0
      %v6629 = vmax.f32 %v5795, 0.0
      %v6630 = vmax.f32 %v5797, 0.0
      %v6631 = vmax.f32 %v3782, 0.0
      %v6632 = vmax.f32 %v3784, 0.0
      %v6633 = vmax.f32 %v4455, 0.0
      %v6634 = vmax.f32 %v4457, 0.0
      %v6635 = vmax.f32 %v5128, 0.0
      %v6636 = vmax.f32 %v5130, 0.0
      %v6637 = vmax.f32 %v5801, 0.0
      %v6638 = vmax.f32 %v5803, 0.0
      %v6639 = vmax.f32 %v3786, 0.0
      %v6640 = vmax.f32 %v3788, 0.0
      %v6641 = vmax.f32 %v4459, 0.0
      %v6642 = vmax.f32 %v4461, 0.0
      %v6643 = vmax.f32 %v5132, 0.0
      %v6644 = vmax.f32 %v5134, 0.0
      %v6645 = vmax.f32 %v5805, 0.0
      %v6646 = vmax.f32 %v5807, 0.0
      %v6647 = vmax.f32 %v3792, 0.0
      %v6648 = vmax.f32 %v3794, 0.0
      %v6649 = vmax.f32 %v4465, 0.0
      %v6650 = vmax.f32 %v4467, 0.0
      %v6651 = vmax.f32 %v5138, 0.0
      %v6652 = vmax.f32 %v5140, 0.0
      %v6653 = vmax.f32 %v5811, 0.0
      %v6654 = vmax.f32 %v5813, 0.0
      %v6655 = vmax.f32 %v3796, 0.0
      %v6656 = vmax.f32 %v3798, 0.0
      %v6657 = vmax.f32 %v4469, 0.0
      %v6658 = vmax.f32 %v4471, 0.0
      %v6659 = vmax.f32 %v5142, 0.0
      %v6660 = vmax.f32 %v5144, 0.0
      %v6661 = vmax.f32 %v5815, 0.0
      %v6662 = vmax.f32 %v5817, 0.0
      %v6663 = vmax.f32 %v3802, 0.0
      %v6664 = vmax.f32 %v3804, 0.0
      %v6665 = vmax.f32 %v4475, 0.0
      %v6666 = vmax.f32 %v4477, 0.0
      %v6667 = vmax.f32 %v5148, 0.0
      %v6668 = vmax.f32 %v5150, 0.0
      %v6669 = vmax.f32 %v5821, 0.0
      %v6670 = vmax.f32 %v5823, 0.0
      %v6671 = vmax.f32 %v3806, 0.0
      %v6672 = vmax.f32 %v3808, 0.0
      %v6673 = vmax.f32 %v4479, 0.0
      %v6674 = vmax.f32 %v4481, 0.0
      %v6675 = vmax.f32 %v5152, 0.0
      %v6676 = vmax.f32 %v5154, 0.0
      %v6677 = vmax.f32 %v5825, 0.0
      %v6678 = vmax.f32 %v5827, 0.0
      %v6679 = vmax.f32 %v3812, 0.0
      %v6680 = vmax.f32 %v3814, 0.0
      %v6681 = vmax.f32 %v4485, 0.0
      %v6682 = vmax.f32 %v4487, 0.0
      %v6683 = vmax.f32 %v5158, 0.0
      %v6684 = vmax.f32 %v5160, 0.0
      %v6685 = vmax.f32 %v5831, 0.0
      %v6686 = vmax.f32 %v5833, 0.0
      %v6687 = vmax.f32 %v3816, 0.0
      %v6688 = vmax.f32 %v3818, 0.0
      %v6689 = vmax.f32 %v4489, 0.0
      %v6690 = vmax.f32 %v4491, 0.0
      %v6691 = vmax.f32 %v5162, 0.0
      %v6692 = vmax.f32 %v5164, 0.0
      %v6693 = vmax.f32 %v5835, 0.0
      %v6694 = vmax.f32 %v5837, 0.0
      %v6695 = vmax.f32 %v3822, 0.0
      %v6696 = vmax.f32 %v3824, 0.0
      %v6697 = vmax.f32 %v4495, 0.0
      %v6698 = vmax.f32 %v4497, 0.0
      %v6699 = vmax.f32 %v5168, 0.0
      %v6700 = vmax.f32 %v5170, 0.0
      %v6701 = vmax.f32 %v5841, 0.0
      %v6702 = vmax.f32 %v5843, 0.0
      %v6703 = vmax.f32 %v3826, 0.0
      %v6704 = vmax.f32 %v3828, 0.0
      %v6705 = vmax.f32 %v4499, 0.0
      %v6706 = vmax.f32 %v4501, 0.0
      %v6707 = vmax.f32 %v5172, 0.0
      %v6708 = vmax.f32 %v5174, 0.0
      %v6709 = vmax.f32 %v5845, 0.0
      %v6710 = vmax.f32 %v5847, 0.0
      %v6711 = vmax.f32 %v3832, 0.0
      %v6712 = vmax.f32 %v3834, 0.0
      %v6713 = vmax.f32 %v4505, 0.0
      %v6714 = vmax.f32 %v4507, 0.0
      %v6715 = vmax.f32 %v5178, 0.0
      %v6716 = vmax.f32 %v5180, 0.0
      %v6717 = vmax.f32 %v5851, 0.0
      %v6718 = vmax.f32 %v5853, 0.0
      %v6719 = vmax.f32 %v3836, 0.0
      %v6720 = vmax.f32 %v3838, 0.0
      %v6721 = vmax.f32 %v4509, 0.0
      %v6722 = vmax.f32 %v4511, 0.0
      %v6723 = vmax.f32 %v5182, 0.0
      %v6724 = vmax.f32 %v5184, 0.0
      %v6725 = vmax.f32 %v5855, 0.0
      %v6726 = vmax.f32 %v5857, 0.0
      %v6727 = vmax.f32 %v3842, 0.0
      %v6728 = vmax.f32 %v3844, 0.0
      %v6729 = vmax.f32 %v4515, 0.0
      %v6730 = vmax.f32 %v4517, 0.0
      %v6731 = vmax.f32 %v5188, 0.0
      %v6732 = vmax.f32 %v5190, 0.0
      %v6733 = vmax.f32 %v5861, 0.0
      %v6734 = vmax.f32 %v5863, 0.0
      %v6735 = vmax.f32 %v3846, 0.0
      %v6736 = vmax.f32 %v3848, 0.0
      %v6737 = vmax.f32 %v4519, 0.0
      %v6738 = vmax.f32 %v4521, 0.0
      %v6739 = vmax.f32 %v5192, 0.0
      %v6740 = vmax.f32 %v5194, 0.0
      %v6741 = vmax.f32 %v5865, 0.0
      %v6742 = vmax.f32 %v5867, 0.0
      %v6743 = vmax.f32 %v3852, 0.0
      %v6744 = vmax.f32 %v3854, 0.0
      %v6745 = vmax.f32 %v4525, 0.0
      %v6746 = vmax.f32 %v4527, 0.0
      %v6747 = vmax.f32 %v5198, 0.0
      %v6748 = vmax.f32 %v5200, 0.0
      %v6749 = vmax.f32 %v5871, 0.0
      %v6750 = vmax.f32 %v5873, 0.0
      %v6751 = vmax.f32 %v3856, 0.0
      %v6752 = vmax.f32 %v3858, 0.0
      %v6753 = vmax.f32 %v4529, 0.0
      %v6754 = vmax.f32 %v4531, 0.0
      %v6755 = vmax.f32 %v5202, 0.0
      %v6756 = vmax.f32 %v5204, 0.0
      %v6757 = vmax.f32 %v5875, 0.0
      %v6758 = vmax.f32 %v5877, 0.0
      %v6759 = vmax.f32 %v3862, 0.0
      %v6760 = vmax.f32 %v3864, 0.0
      %v6761 = vmax.f32 %v4535, 0.0
      %v6762 = vmax.f32 %v4537, 0.0
      %v6763 = vmax.f32 %v5208, 0.0
      %v6764 = vmax.f32 %v5210, 0.0
      %v6765 = vmax.f32 %v5881, 0.0
      %v6766 = vmax.f32 %v5883, 0.0
      %v6767 = vmax.f32 %v3866, 0.0
      %v6768 = vmax.f32 %v3868, 0.0
      %v6769 = vmax.f32 %v4539, 0.0
      %v6770 = vmax.f32 %v4541, 0.0
      %v6771 = vmax.f32 %v5212, 0.0
      %v6772 = vmax.f32 %v5214, 0.0
      %v6773 = vmax.f32 %v5885, 0.0
      %v6774 = vmax.f32 %v5887, 0.0
      %v6775 = vmax.f32 %v3872, 0.0
      %v6776 = vmax.f32 %v3874, 0.0
      %v6777 = vmax.f32 %v4545, 0.0
      %v6778 = vmax.f32 %v4547, 0.0
      %v6779 = vmax.f32 %v5218, 0.0
      %v6780 = vmax.f32 %v5220, 0.0
      %v6781 = vmax.f32 %v5891, 0.0
      %v6782 = vmax.f32 %v5893, 0.0
      %v6783 = vmax.f32 %v3876, 0.0
      %v6784 = vmax.f32 %v3878, 0.0
      %v6785 = vmax.f32 %v4549, 0.0
      %v6786 = vmax.f32 %v4551, 0.0
      %v6787 = vmax.f32 %v5222, 0.0
      %v6788 = vmax.f32 %v5224, 0.0
      %v6789 = vmax.f32 %v5895, 0.0
      %v6790 = vmax.f32 %v5897, 0.0
      %v6791 = vmax.f32 %v3882, 0.0
      %v6792 = vmax.f32 %v3884, 0.0
      %v6793 = vmax.f32 %v4555, 0.0
      %v6794 = vmax.f32 %v4557, 0.0
      %v6795 = vmax.f32 %v5228, 0.0
      %v6796 = vmax.f32 %v5230, 0.0
      %v6797 = vmax.f32 %v5901, 0.0
      %v6798 = vmax.f32 %v5903, 0.0
      %v6799 = vmax.f32 %v3886, 0.0
      %v6800 = vmax.f32 %v3888, 0.0
      %v6801 = vmax.f32 %v4559, 0.0
      %v6802 = vmax.f32 %v4561, 0.0
      %v6803 = vmax.f32 %v5232, 0.0
      %v6804 = vmax.f32 %v5234, 0.0
      %v6805 = vmax.f32 %v5905, 0.0
      %v6806 = vmax.f32 %v5907, 0.0
      %v6807 = vmax.f32 %v3892, 0.0
      %v6808 = vmax.f32 %v3894, 0.0
      %v6809 = vmax.f32 %v4565, 0.0
      %v6810 = vmax.f32 %v4567, 0.0
      %v6811 = vmax.f32 %v5238, 0.0
      %v6812 = vmax.f32 %v5240, 0.0
      %v6813 = vmax.f32 %v5911, 0.0
      %v6814 = vmax.f32 %v5913, 0.0
      %v6815 = vmax.f32 %v3896, 0.0
      %v6816 = vmax.f32 %v3898, 0.0
      %v6817 = vmax.f32 %v4569, 0.0
      %v6818 = vmax.f32 %v4571, 0.0
      %v6819 = vmax.f32 %v5242, 0.0
      %v6820 = vmax.f32 %v5244, 0.0
      %v6821 = vmax.f32 %v5915, 0.0
      %v6822 = vmax.f32 %v5917, 0.0
      %v6823 = vmax.f32 %v3902, 0.0
      %v6824 = vmax.f32 %v3904, 0.0
      %v6825 = vmax.f32 %v4575, 0.0
      %v6826 = vmax.f32 %v4577, 0.0
      %v6827 = vmax.f32 %v5248, 0.0
      %v6828 = vmax.f32 %v5250, 0.0
      %v6829 = vmax.f32 %v5921, 0.0
      %v6830 = vmax.f32 %v5923, 0.0
      %v6831 = vmax.f32 %v3906, 0.0
      %v6832 = vmax.f32 %v3908, 0.0
      %v6833 = vmax.f32 %v4579, 0.0
      %v6834 = vmax.f32 %v4581, 0.0
      %v6835 = vmax.f32 %v5252, 0.0
      %v6836 = vmax.f32 %v5254, 0.0
      %v6837 = vmax.f32 %v5925, 0.0
      %v6838 = vmax.f32 %v5927, 0.0
      %v6839 = vmax.f32 %v3912, 0.0
      %v6840 = vmax.f32 %v3914, 0.0
      %v6841 = vmax.f32 %v4585, 0.0
      %v6842 = vmax.f32 %v4587, 0.0
      %v6843 = vmax.f32 %v5258, 0.0
      %v6844 = vmax.f32 %v5260, 0.0
      %v6845 = vmax.f32 %v5931, 0.0
      %v6846 = vmax.f32 %v5933, 0.0
      %v6847 = vmax.f32 %v3916, 0.0
      %v6848 = vmax.f32 %v3918, 0.0
      %v6849 = vmax.f32 %v4589, 0.0
      %v6850 = vmax.f32 %v4591, 0.0
      %v6851 = vmax.f32 %v5262, 0.0
      %v6852 = vmax.f32 %v5264, 0.0
      %v6853 = vmax.f32 %v5935, 0.0
      %v6854 = vmax.f32 %v5937, 0.0
      %v6855 = vmax.f32 %v3922, 0.0
      %v6856 = vmax.f32 %v3924, 0.0
      %v6857 = vmax.f32 %v4595, 0.0
      %v6858 = vmax.f32 %v4597, 0.0
      %v6859 = vmax.f32 %v5268, 0.0
      %v6860 = vmax.f32 %v5270, 0.0
      %v6861 = vmax.f32 %v5941, 0.0
      %v6862 = vmax.f32 %v5943, 0.0
      %v6863 = vmax.f32 %v3926, 0.0
      %v6864 = vmax.f32 %v3928, 0.0
      %v6865 = vmax.f32 %v4599, 0.0
      %v6866 = vmax.f32 %v4601, 0.0
      %v6867 = vmax.f32 %v5272, 0.0
      %v6868 = vmax.f32 %v5274, 0.0
      %v6869 = vmax.f32 %v5945, 0.0
      %v6870 = vmax.f32 %v5947, 0.0
      %v6871 = vmax.f32 %v3932, 0.0
      %v6872 = vmax.f32 %v3934, 0.0
      %v6873 = vmax.f32 %v4605, 0.0
      %v6874 = vmax.f32 %v4607, 0.0
      %v6875 = vmax.f32 %v5278, 0.0
      %v6876 = vmax.f32 %v5280, 0.0
      %v6877 = vmax.f32 %v5951, 0.0
      %v6878 = vmax.f32 %v5953, 0.0
      %v6879 = vmax.f32 %v3936, 0.0
      %v6880 = vmax.f32 %v3938, 0.0
      %v6881 = vmax.f32 %v4609, 0.0
      %v6882 = vmax.f32 %v4611, 0.0
      %v6883 = vmax.f32 %v5282, 0.0
      %v6884 = vmax.f32 %v5284, 0.0
      %v6885 = vmax.f32 %v5955, 0.0
      %v6886 = vmax.f32 %v5957, 0.0
      %v6887 = vmax.f32 %v3942, 0.0
      %v6888 = vmax.f32 %v3944, 0.0
      %v6889 = vmax.f32 %v4615, 0.0
      %v6890 = vmax.f32 %v4617, 0.0
      %v6891 = vmax.f32 %v5288, 0.0
      %v6892 = vmax.f32 %v5290, 0.0
      %v6893 = vmax.f32 %v5961, 0.0
      %v6894 = vmax.f32 %v5963, 0.0
      %v6895 = vmax.f32 %v3946, 0.0
      %v6896 = vmax.f32 %v3948, 0.0
      %v6897 = vmax.f32 %v4619, 0.0
      %v6898 = vmax.f32 %v4621, 0.0
      %v6899 = vmax.f32 %v5292, 0.0
      %v6900 = vmax.f32 %v5294, 0.0
      %v6901 = vmax.f32 %v5965, 0.0
      %v6902 = vmax.f32 %v5967, 0.0
      %v6903 = vmax.f32 %v3952, 0.0
      %v6904 = vmax.f32 %v3954, 0.0
      %v6905 = vmax.f32 %v4625, 0.0
      %v6906 = vmax.f32 %v4627, 0.0
      %v6907 = vmax.f32 %v5298, 0.0
      %v6908 = vmax.f32 %v5300, 0.0
      %v6909 = vmax.f32 %v5971, 0.0
      %v6910 = vmax.f32 %v5973, 0.0
      %v6911 = vmax.f32 %v3956, 0.0
      %v6912 = vmax.f32 %v3958, 0.0
      %v6913 = vmax.f32 %v4629, 0.0
      %v6914 = vmax.f32 %v4631, 0.0
      %v6915 = vmax.f32 %v5302, 0.0
      %v6916 = vmax.f32 %v5304, 0.0
      %v6917 = vmax.f32 %v5975, 0.0
      %v6918 = vmax.f32 %v5977, 0.0
      %v6919 = vmax.f32 %v3962, 0.0
      %v6920 = vmax.f32 %v3964, 0.0
      %v6921 = vmax.f32 %v4635, 0.0
      %v6922 = vmax.f32 %v4637, 0.0
      %v6923 = vmax.f32 %v5308, 0.0
      %v6924 = vmax.f32 %v5310, 0.0
      %v6925 = vmax.f32 %v5981, 0.0
      %v6926 = vmax.f32 %v5983, 0.0
      %v6927 = vmax.f32 %v3966, 0.0
      %v6928 = vmax.f32 %v3968, 0.0
      %v6929 = vmax.f32 %v4639, 0.0
      %v6930 = vmax.f32 %v4641, 0.0
      %v6931 = vmax.f32 %v5312, 0.0
      %v6932 = vmax.f32 %v5314, 0.0
      %v6933 = vmax.f32 %v5985, 0.0
      %v6934 = vmax.f32 %v5987, 0.0
      %v6935 = vmax.f32 %v3972, 0.0
      %v6936 = vmax.f32 %v3974, 0.0
      %v6937 = vmax.f32 %v4645, 0.0
      %v6938 = vmax.f32 %v4647, 0.0
      %v6939 = vmax.f32 %v5318, 0.0
      %v6940 = vmax.f32 %v5320, 0.0
      %v6941 = vmax.f32 %v5991, 0.0
      %v6942 = vmax.f32 %v5993, 0.0
      %v6943 = vmax.f32 %v3976, 0.0
      %v6944 = vmax.f32 %v3978, 0.0
      %v6945 = vmax.f32 %v4649, 0.0
      %v6946 = vmax.f32 %v4651, 0.0
      %v6947 = vmax.f32 %v5322, 0.0
      %v6948 = vmax.f32 %v5324, 0.0
      %v6949 = vmax.f32 %v5995, 0.0
      %v6950 = vmax.f32 %v5997, 0.0
      %v6951 = vmax.f32 %v3982, 0.0
      %v6952 = vmax.f32 %v3984, 0.0
      %v6953 = vmax.f32 %v4655, 0.0
      %v6954 = vmax.f32 %v4657, 0.0
      %v6955 = vmax.f32 %v5328, 0.0
      %v6956 = vmax.f32 %v5330, 0.0
      %v6957 = vmax.f32 %v6001, 0.0
      %v6958 = vmax.f32 %v6003, 0.0
      %v6959 = vmax.f32 %v3986, 0.0
      %v6960 = vmax.f32 %v3988, 0.0
      %v6961 = vmax.f32 %v4659, 0.0
      %v6962 = vmax.f32 %v4661, 0.0
      %v6963 = vmax.f32 %v5332, 0.0
      %v6964 = vmax.f32 %v5334, 0.0
      %v6965 = vmax.f32 %v6005, 0.0
      %v6966 = vmax.f32 %v6007, 0.0
      %v6967 = vmax.f32 %v3992, 0.0
      %v6968 = vmax.f32 %v3994, 0.0
      %v6969 = vmax.f32 %v4665, 0.0
      %v6970 = vmax.f32 %v4667, 0.0
      %v6971 = vmax.f32 %v5338, 0.0
      %v6972 = vmax.f32 %v5340, 0.0
      %v6973 = vmax.f32 %v6011, 0.0
      %v6974 = vmax.f32 %v6013, 0.0
      %v6975 = vmax.f32 %v3996, 0.0
      %v6976 = vmax.f32 %v3998, 0.0
      %v6977 = vmax.f32 %v4669, 0.0
      %v6978 = vmax.f32 %v4671, 0.0
      %v6979 = vmax.f32 %v5342, 0.0
      %v6980 = vmax.f32 %v5344, 0.0
      %v6981 = vmax.f32 %v6015, 0.0
      %v6982 = vmax.f32 %v6017, 0.0
      %v6983 = vmax.f32 %v4002, 0.0
      %v6984 = vmax.f32 %v4004, 0.0
      %v6985 = vmax.f32 %v4675, 0.0
      %v6986 = vmax.f32 %v4677, 0.0
      %v6987 = vmax.f32 %v5348, 0.0
      %v6988 = vmax.f32 %v5350, 0.0
      %v6989 = vmax.f32 %v6021, 0.0
      %v6990 = vmax.f32 %v6023, 0.0
      %v6991 = vmax.f32 %v4006, 0.0
      %v6992 = vmax.f32 %v4008, 0.0
      %v6993 = vmax.f32 %v4679, 0.0
      %v6994 = vmax.f32 %v4681, 0.0
      %v6995 = vmax.f32 %v5352, 0.0
      %v6996 = vmax.f32 %v5354, 0.0
      %v6997 = vmax.f32 %v6025, 0.0
      %v6998 = vmax.f32 %v6027, 0.0
      %v6999 = vmax.f32 %v4012, 0.0
      %v7000 = vmax.f32 %v4014, 0.0
      %v7001 = vmax.f32 %v4685, 0.0
      %v7002 = vmax.f32 %v4687, 0.0
      %v7003 = vmax.f32 %v5358, 0.0
      %v7004 = vmax.f32 %v5360, 0.0
      %v7005 = vmax.f32 %v6031, 0.0
      %v7006 = vmax.f32 %v6033, 0.0
      %v7007 = vmax.f32 %v4016, 0.0
      %v7008 = vmax.f32 %v4018, 0.0
      %v7009 = vmax.f32 %v4689, 0.0
      %v7010 = vmax.f32 %v4691, 0.0
      %v7011 = vmax.f32 %v5362, 0.0
      %v7012 = vmax.f32 %v5364, 0.0
      %v7013 = vmax.f32 %v6035, 0.0
      %v7014 = vmax.f32 %v6037, 0.0
      %v7015 = vmax.f32 %v4022, 0.0
      %v7016 = vmax.f32 %v4024, 0.0
      %v7017 = vmax.f32 %v4695, 0.0
      %v7018 = vmax.f32 %v4697, 0.0
      %v7019 = vmax.f32 %v5368, 0.0
      %v7020 = vmax.f32 %v5370, 0.0
      %v7021 = vmax.f32 %v6041, 0.0
      %v7022 = vmax.f32 %v6043, 0.0
      %v7023 = vmax.f32 %v4026, 0.0
      %v7024 = vmax.f32 %v4028, 0.0
      %v7025 = vmax.f32 %v4699, 0.0
      %v7026 = vmax.f32 %v4701, 0.0
      %v7027 = vmax.f32 %v5372, 0.0
      %v7028 = vmax.f32 %v5374, 0.0
      %v7029 = vmax.f32 %v6045, 0.0
      %v7030 = vmax.f32 %v6047, 0.0
      %v7031 = vmax.f32 %v4032, 0.0
      %v7032 = vmax.f32 %v4034, 0.0
      %v7033 = vmax.f32 %v4705, 0.0
      %v7034 = vmax.f32 %v4707, 0.0
      %v7035 = vmax.f32 %v5378, 0.0
      %v7036 = vmax.f32 %v5380, 0.0
      %v7037 = vmax.f32 %v6051, 0.0
      %v7038 = vmax.f32 %v6053, 0.0
      %v7039 = vmax.f32 %v4036, 0.0
      %v7040 = vmax.f32 %v4038, 0.0
      %v7041 = vmax.f32 %v4709, 0.0
      %v7042 = vmax.f32 %v4711, 0.0
      %v7043 = vmax.f32 %v5382, 0.0
      %v7044 = vmax.f32 %v5384, 0.0
      %v7045 = vmax.f32 %v6055, 0.0
      %v7046 = vmax.f32 %v6057, 0.0
      %v7047 = vmax.f32 %v4042, 0.0
      %v7048 = vmax.f32 %v4044, 0.0
      %v7049 = vmax.f32 %v4715, 0.0
      %v7050 = vmax.f32 %v4717, 0.0
      %v7051 = vmax.f32 %v5388, 0.0
      %v7052 = vmax.f32 %v5390, 0.0
      %v7053 = vmax.f32 %v6061, 0.0
      %v7054 = vmax.f32 %v6063, 0.0
      %v7055 = vmax.f32 %v4046, 0.0
      %v7056 = vmax.f32 %v4048, 0.0
      %v7057 = vmax.f32 %v4719, 0.0
      %v7058 = vmax.f32 %v4721, 0.0
      %v7059 = vmax.f32 %v5392, 0.0
      %v7060 = vmax.f32 %v5394, 0.0
      %v7061 = vmax.f32 %v6065, 0.0
      %v7062 = vmax.f32 %v6067, 0.0
      %v7063 = vmax.f32 %v4052, 0.0
      %v7064 = vmax.f32 %v4054, 0.0
      %v7065 = vmax.f32 %v4725, 0.0
      %v7066 = vmax.f32 %v4727, 0.0
      %v7067 = vmax.f32 %v5398, 0.0
      %v7068 = vmax.f32 %v5400, 0.0
      %v7069 = vmax.f32 %v6071, 0.0
      %v7070 = vmax.f32 %v6073, 0.0
      %v7071 = vmax.f32 %v4056, 0.0
      %v7072 = vmax.f32 %v4058, 0.0
      %v7073 = vmax.f32 %v4729, 0.0
      %v7074 = vmax.f32 %v4731, 0.0
      %v7075 = vmax.f32 %v5402, 0.0
      %v7076 = vmax.f32 %v5404, 0.0
      %v7077 = vmax.f32 %v6075, 0.0
      %v7078 = vmax.f32 %v6077, 0.0
      %v7079 = vmax.f32 %v4062, 0.0
      %v7080 = vmax.f32 %v4064, 0.0
      %v7081 = vmax.f32 %v4735, 0.0
      %v7082 = vmax.f32 %v4737, 0.0
      %v7083 = vmax.f32 %v5408, 0.0
      %v7084 = vmax.f32 %v5410, 0.0
      %v7085 = vmax.f32 %v6081, 0.0
      %v7086 = vmax.f32 %v6083, 0.0
      %v7087 = vmax.f32 %v4066, 0.0
      %v7088 = vmax.f32 %v4068, 0.0
      %v7089 = vmax.f32 %v4739, 0.0
      %v7090 = vmax.f32 %v4741, 0.0
      %v7091 = vmax.f32 %v5412, 0.0
      %v7092 = vmax.f32 %v5414, 0.0
      %v7093 = vmax.f32 %v6085, 0.0
      %v7094 = vmax.f32 %v6087, 0.0
      %v7095 = vmax.f32 %v4072, 0.0
      %v7096 = vmax.f32 %v4074, 0.0
      %v7097 = vmax.f32 %v4745, 0.0
      %v7098 = vmax.f32 %v4747, 0.0
      %v7099 = vmax.f32 %v5418, 0.0
      %v7100 = vmax.f32 %v5420, 0.0
      %v7101 = vmax.f32 %v6091, 0.0
      %v7102 = vmax.f32 %v6093, 0.0
      %v7103 = vmax.f32 %v4076, 0.0
      %v7104 = vmax.f32 %v4078, 0.0
      %v7105 = vmax.f32 %v4749, 0.0
      %v7106 = vmax.f32 %v4751, 0.0
      %v7107 = vmax.f32 %v5422, 0.0
      %v7108 = vmax.f32 %v5424, 0.0
      %v7109 = vmax.f32 %v6095, 0.0
      %v7110 = vmax.f32 %v6097, 0.0
      %v7111 = vmax.f32 %v4082, 0.0
      %v7112 = vmax.f32 %v4084, 0.0
      %v7113 = vmax.f32 %v4755, 0.0
      %v7114 = vmax.f32 %v4757, 0.0
      %v7115 = vmax.f32 %v5428, 0.0
      %v7116 = vmax.f32 %v5430, 0.0
      %v7117 = vmax.f32 %v6101, 0.0
      %v7118 = vmax.f32 %v6103, 0.0
      %v7119 = vmax.f32 %v4086, 0.0
      %v7120 = vmax.f32 %v4088, 0.0
      %v7121 = vmax.f32 %v4759, 0.0
      %v7122 = vmax.f32 %v4761, 0.0
      %v7123 = vmax.f32 %v5432, 0.0
      %v7124 = vmax.f32 %v5434, 0.0
      %v7125 = vmax.f32 %v6105, 0.0
      %v7126 = vmax.f32 %v6107, 0.0
      %v7127 = vmax.f32 %v4092, 0.0
      %v7128 = vmax.f32 %v4094, 0.0
      %v7129 = vmax.f32 %v4765, 0.0
      %v7130 = vmax.f32 %v4767, 0.0
      %v7131 = vmax.f32 %v5438, 0.0
      %v7132 = vmax.f32 %v5440, 0.0
      %v7133 = vmax.f32 %v6111, 0.0
      %v7134 = vmax.f32 %v6113, 0.0
      %v7135 = vmax.f32 %v4096, 0.0
      %v7136 = vmax.f32 %v4098, 0.0
      %v7137 = vmax.f32 %v4769, 0.0
      %v7138 = vmax.f32 %v4771, 0.0
      %v7139 = vmax.f32 %v5442, 0.0
      %v7140 = vmax.f32 %v5444, 0.0
      %v7141 = vmax.f32 %v6115, 0.0
      %v7142 = vmax.f32 %v6117, 0.0
      %v7143 = vmax.f32 %v6119, %v6127
      %v7144 = vmax.f32 %v7143, %v6135
      %v7145 = vmax.f32 %v7144, %v6143
      %v7146 = vmax.f32 %v7145, %v6151
      %v7147 = vmax.f32 %v7146, %v6159
      %v7148 = vmax.f32 %v7147, %v6167
      %v7149 = vmax.f32 %v7148, %v6175
      %v7150 = vmax.f32 %v7149, %v6183
      %v7151 = vmax.f32 %v7150, %v6191
      %v7152 = vmax.f32 %v7151, %v6199
      %v7153 = vmax.f32 %v7152, %v6207
      %v7154 = vmax.f32 %v7153, %v6215
      %v7155 = vmax.f32 %v7154, %v6223
      %v7156 = vmax.f32 %v7155, %v6231
      %v7157 = vmax.f32 %v7156, %v6239
      %v7158 = vmax.f32 %v7157, %v6247
      %v7159 = vmax.f32 %v7158, %v6255
      %v7160 = vmax.f32 %v7159, %v6263
      %v7161 = vmax.f32 %v7160, %v6271
      %v7162 = vmax.f32 %v7161, %v6279
      %v7163 = vmax.f32 %v7162, %v6287
      %v7164 = vmax.f32 %v7163, %v6295
      %v7165 = vmax.f32 %v7164, %v6303
      %v7166 = vmax.f32 %v7165, %v6311
      %v7167 = vmax.f32 %v7166, %v6319
      %v7168 = vmax.f32 %v7167, %v6327
      %v7169 = vmax.f32 %v7168, %v6335
      %v7170 = vmax.f32 %v7169, %v6343
      %v7171 = vmax.f32 %v7170, %v6351
      %v7172 = vmax.f32 %v7171, %v6359
      %v7173 = vmax.f32 %v7172, %v6367
      %v7174 = vmax.f32 %v7173, %v6375
      %v7175 = vmax.f32 %v7174, %v6383
      %v7176 = vmax.f32 %v7175, %v6391
      %v7177 = vmax.f32 %v7176, %v6399
      %v7178 = vmax.f32 %v7177, %v6407
      %v7179 = vmax.f32 %v7178, %v6415
      %v7180 = vmax.f32 %v7179, %v6423
      %v7181 = vmax.f32 %v7180, %v6431
      %v7182 = vmax.f32 %v7181, %v6439
      %v7183 = vmax.f32 %v7182, %v6447
      %v7184 = vmax.f32 %v7183, %v6455
      %v7185 = vmax.f32 %v7184, %v6463
      %v7186 = vmax.f32 %v7185, %v6471
      %v7187 = vmax.f32 %v7186, %v6479
      %v7188 = vmax.f32 %v7187, %v6487
      %v7189 = vmax.f32 %v7188, %v6495
      %v7190 = vmax.f32 %v7189, %v6503
      %v7191 = vmax.f32 %v7190, %v6511
      %v7192 = vmax.f32 %v7191, %v6519
      %v7193 = vmax.f32 %v7192, %v6527
      %v7194 = vmax.f32 %v7193, %v6535
      %v7195 = vmax.f32 %v7194, %v6543
      %v7196 = vmax.f32 %v7195, %v6551
      %v7197 = vmax.f32 %v7196, %v6559
      %v7198 = vmax.f32 %v7197, %v6567
      %v7199 = vmax.f32 %v7198, %v6575
      %v7200 = vmax.f32 %v7199, %v6583
      %v7201 = vmax.f32 %v7200, %v6591
      %v7202 = vmax.f32 %v7201, %v6599
      %v7203 = vmax.f32 %v7202, %v6607
      %v7204 = vmax.f32 %v7203, %v6615
      %v7205 = vmax.f32 %v7204, %v6623
      %v7206 = vmax.f32 %v7205, %v6631
      %v7207 = vmax.f32 %v7206, %v6639
      %v7208 = vmax.f32 %v7207, %v6647
      %v7209 = vmax.f32 %v7208, %v6655
      %v7210 = vmax.f32 %v7209, %v6663
      %v7211 = vmax.f32 %v7210, %v6671
      %v7212 = vmax.f32 %v7211, %v6679
      %v7213 = vmax.f32 %v7212, %v6687
      %v7214 = vmax.f32 %v7213, %v6695
      %v7215 = vmax.f32 %v7214, %v6703
      %v7216 = vmax.f32 %v7215, %v6711
      %v7217 = vmax.f32 %v7216, %v6719
      %v7218 = vmax.f32 %v7217, %v6727
      %v7219 = vmax.f32 %v7218, %v6735
      %v7220 = vmax.f32 %v7219, %v6743
      %v7221 = vmax.f32 %v7220, %v6751
      %v7222 = vmax.f32 %v7221, %v6759
      %v7223 = vmax.f32 %v7222, %v6767
      %v7224 = vmax.f32 %v7223, %v6775
      %v7225 = vmax.f32 %v7224, %v6783
      %v7226 = vmax.f32 %v7225, %v6791
      %v7227 = vmax.f32 %v7226, %v6799
      %v7228 = vmax.f32 %v7227, %v6807
      %v7229 = vmax.f32 %v7228, %v6815
      %v7230 = vmax.f32 %v7229, %v6823
      %v7231 = vmax.f32 %v7230, %v6831
      %v7232 = vmax.f32 %v7231, %v6839
      %v7233 = vmax.f32 %v7232, %v6847
      %v7234 = vmax.f32 %v7233, %v6855
      %v7235 = vmax.f32 %v7234, %v6863
      %v7236 = vmax.f32 %v7235, %v6871
      %v7237 = vmax.f32 %v7236, %v6879
      %v7238 = vmax.f32 %v7237, %v6887
      %v7239 = vmax.f32 %v7238, %v6895
      %v7240 = vmax.f32 %v7239, %v6903
      %v7241 = vmax.f32 %v7240, %v6911
      %v7242 = vmax.f32 %v7241, %v6919
      %v7243 = vmax.f32 %v7242, %v6927
      %v7244 = vmax.f32 %v7243, %v6935
      %v7245 = vmax.f32 %v7244, %v6943
      %v7246 = vmax.f32 %v7245, %v6951
      %v7247 = vmax.f32 %v7246, %v6959
      %v7248 = vmax.f32 %v7247, %v6967
      %v7249 = vmax.f32 %v7248, %v6975
      %v7250 = vmax.f32 %v7249, %v6983
      %v7251 = vmax.f32 %v7250, %v6991
      %v7252 = vmax.f32 %v7251, %v6999
      %v7253 = vmax.f32 %v7252, %v7007
      %v7254 = vmax.f32 %v7253, %v7015
      %v7255 = vmax.f32 %v7254, %v7023
      %v7256 = vmax.f32 %v7255, %v7031
      %v7257 = vmax.f32 %v7256, %v7039
      %v7258 = vmax.f32 %v7257, %v7047
      %v7259 = vmax.f32 %v7258, %v7055
      %v7260 = vmax.f32 %v7259, %v7063
      %v7261 = vmax.f32 %v7260, %v7071
      %v7262 = vmax.f32 %v7261, %v7079
      %v7263 = vmax.f32 %v7262, %v7087
      %v7264 = vmax.f32 %v7263, %v7095
      %v7265 = vmax.f32 %v7264, %v7103
      %v7266 = vmax.f32 %v7265, %v7111
      %v7267 = vmax.f32 %v7266, %v7119
      %v7268 = vmax.f32 %v7267, %v7127
      %v7269 = vmax.f32 %v7268, %v7135
      %v7270 = vrot.slane %v7269, 4
      %v7271 = vmax.f32 %v7269, %v7270
      %v7272 = vrot.slane %v7271, 2
      %v7273 = vmax.f32 %v7271, %v7272
      %v7274 = vrot.slane %v7273, 1
      %v7275 = vmax.f32 %v7273, %v7274
      %v7276 = vmax.f32 %v6120, %v6128
      %v7277 = vmax.f32 %v7276, %v6136
      %v7278 = vmax.f32 %v7277, %v6144
      %v7279 = vmax.f32 %v7278, %v6152
      %v7280 = vmax.f32 %v7279, %v6160
      %v7281 = vmax.f32 %v7280, %v6168
      %v7282 = vmax.f32 %v7281, %v6176
      %v7283 = vmax.f32 %v7282, %v6184
      %v7284 = vmax.f32 %v7283, %v6192
      %v7285 = vmax.f32 %v7284, %v6200
      %v7286 = vmax.f32 %v7285, %v6208
      %v7287 = vmax.f32 %v7286, %v6216
      %v7288 = vmax.f32 %v7287, %v6224
      %v7289 = vmax.f32 %v7288, %v6232
      %v7290 = vmax.f32 %v7289, %v6240
      %v7291 = vmax.f32 %v7290, %v6248
      %v7292 = vmax.f32 %v7291, %v6256
      %v7293 = vmax.f32 %v7292, %v6264
      %v7294 = vmax.f32 %v7293, %v6272
      %v7295 = vmax.f32 %v7294, %v6280
      %v7296 = vmax.f32 %v7295, %v6288
      %v7297 = vmax.f32 %v7296, %v6296
      %v7298 = vmax.f32 %v7297, %v6304
      %v7299 = vmax.f32 %v7298, %v6312
      %v7300 = vmax.f32 %v7299, %v6320
      %v7301 = vmax.f32 %v7300, %v6328
      %v7302 = vmax.f32 %v7301, %v6336
      %v7303 = vmax.f32 %v7302, %v6344
      %v7304 = vmax.f32 %v7303, %v6352
      %v7305 = vmax.f32 %v7304, %v6360
      %v7306 = vmax.f32 %v7305, %v6368
      %v7307 = vmax.f32 %v7306, %v6376
      %v7308 = vmax.f32 %v7307, %v6384
      %v7309 = vmax.f32 %v7308, %v6392
      %v7310 = vmax.f32 %v7309, %v6400
      %v7311 = vmax.f32 %v7310, %v6408
      %v7312 = vmax.f32 %v7311, %v6416
      %v7313 = vmax.f32 %v7312, %v6424
      %v7314 = vmax.f32 %v7313, %v6432
      %v7315 = vmax.f32 %v7314, %v6440
      %v7316 = vmax.f32 %v7315, %v6448
      %v7317 = vmax.f32 %v7316, %v6456
      %v7318 = vmax.f32 %v7317, %v6464
      %v7319 = vmax.f32 %v7318, %v6472
      %v7320 = vmax.f32 %v7319, %v6480
      %v7321 = vmax.f32 %v7320, %v6488
      %v7322 = vmax.f32 %v7321, %v6496
      %v7323 = vmax.f32 %v7322, %v6504
      %v7324 = vmax.f32 %v7323, %v6512
      %v7325 = vmax.f32 %v7324, %v6520
      %v7326 = vmax.f32 %v7325, %v6528
      %v7327 = vmax.f32 %v7326, %v6536
      %v7328 = vmax.f32 %v7327, %v6544
      %v7329 = vmax.f32 %v7328, %v6552
      %v7330 = vmax.f32 %v7329, %v6560
      %v7331 = vmax.f32 %v7330, %v6568
      %v7332 = vmax.f32 %v7331, %v6576
      %v7333 = vmax.f32 %v7332, %v6584
      %v7334 = vmax.f32 %v7333, %v6592
      %v7335 = vmax.f32 %v7334, %v6600
      %v7336 = vmax.f32 %v7335, %v6608
      %v7337 = vmax.f32 %v7336, %v6616
      %v7338 = vmax.f32 %v7337, %v6624
      %v7339 = vmax.f32 %v7338, %v6632
      %v7340 = vmax.f32 %v7339, %v6640
      %v7341 = vmax.f32 %v7340, %v6648
      %v7342 = vmax.f32 %v7341, %v6656
      %v7343 = vmax.f32 %v7342, %v6664
      %v7344 = vmax.f32 %v7343, %v6672
      %v7345 = vmax.f32 %v7344, %v6680
      %v7346 = vmax.f32 %v7345, %v6688
      %v7347 = vmax.f32 %v7346, %v6696
      %v7348 = vmax.f32 %v7347, %v6704
      %v7349 = vmax.f32 %v7348, %v6712
      %v7350 = vmax.f32 %v7349, %v6720
      %v7351 = vmax.f32 %v7350, %v6728
      %v7352 = vmax.f32 %v7351, %v6736
      %v7353 = vmax.f32 %v7352, %v6744
      %v7354 = vmax.f32 %v7353, %v6752
      %v7355 = vmax.f32 %v7354, %v6760
      %v7356 = vmax.f32 %v7355, %v6768
      %v7357 = vmax.f32 %v7356, %v6776
      %v7358 = vmax.f32 %v7357, %v6784
      %v7359 = vmax.f32 %v7358, %v6792
      %v7360 = vmax.f32 %v7359, %v6800
      %v7361 = vmax.f32 %v7360, %v6808
      %v7362 = vmax.f32 %v7361, %v6816
      %v7363 = vmax.f32 %v7362, %v6824
      %v7364 = vmax.f32 %v7363, %v6832
      %v7365 = vmax.f32 %v7364, %v6840
      %v7366 = vmax.f32 %v7365, %v6848
      %v7367 = vmax.f32 %v7366, %v6856
      %v7368 = vmax.f32 %v7367, %v6864
      %v7369 = vmax.f32 %v7368, %v6872
      %v7370 = vmax.f32 %v7369, %v6880
      %v7371 = vmax.f32 %v7370, %v6888
      %v7372 = vmax.f32 %v7371, %v6896
      %v7373 = vmax.f32 %v7372, %v6904
      %v7374 = vmax.f32 %v7373, %v6912
      %v7375 = vmax.f32 %v7374, %v6920
      %v7376 = vmax.f32 %v7375, %v6928
      %v7377 = vmax.f32 %v7376, %v6936
      %v7378 = vmax.f32 %v7377, %v6944
      %v7379 = vmax.f32 %v7378, %v6952
      %v7380 = vmax.f32 %v7379, %v6960
      %v7381 = vmax.f32 %v7380, %v6968
      %v7382 = vmax.f32 %v7381, %v6976
      %v7383 = vmax.f32 %v7382, %v6984
      %v7384 = vmax.f32 %v7383, %v6992
      %v7385 = vmax.f32 %v7384, %v7000
      %v7386 = vmax.f32 %v7385, %v7008
      %v7387 = vmax.f32 %v7386, %v7016
      %v7388 = vmax.f32 %v7387, %v7024
      %v7389 = vmax.f32 %v7388, %v7032
      %v7390 = vmax.f32 %v7389, %v7040
      %v7391 = vmax.f32 %v7390, %v7048
      %v7392 = vmax.f32 %v7391, %v7056
      %v7393 = vmax.f32 %v7392, %v7064
      %v7394 = vmax.f32 %v7393, %v7072
      %v7395 = vmax.f32 %v7394, %v7080
      %v7396 = vmax.f32 %v7395, %v7088
      %v7397 = vmax.f32 %v7396, %v7096
      %v7398 = vmax.f32 %v7397, %v7104
      %v7399 = vmax.f32 %v7398, %v7112
      %v7400 = vmax.f32 %v7399, %v7120
      %v7401 = vmax.f32 %v7400, %v7128
      %v7402 = vmax.f32 %v7401, %v7136
      %v7403 = vrot.slane %v7402, 4
      %v7404 = vmax.f32 %v7402, %v7403
      %v7405 = vrot.slane %v7404, 2
      %v7406 = vmax.f32 %v7404, %v7405
      %v7407 = vrot.slane %v7406, 1
      %v7408 = vmax.f32 %v7406, %v7407
      %v7409 = vmax.f32 %v6121, %v6129
      %v7410 = vmax.f32 %v7409, %v6137
      %v7411 = vmax.f32 %v7410, %v6145
      %v7412 = vmax.f32 %v7411, %v6153
      %v7413 = vmax.f32 %v7412, %v6161
      %v7414 = vmax.f32 %v7413, %v6169
      %v7415 = vmax.f32 %v7414, %v6177
      %v7416 = vmax.f32 %v7415, %v6185
      %v7417 = vmax.f32 %v7416, %v6193
      %v7418 = vmax.f32 %v7417, %v6201
      %v7419 = vmax.f32 %v7418, %v6209
      %v7420 = vmax.f32 %v7419, %v6217
      %v7421 = vmax.f32 %v7420, %v6225
      %v7422 = vmax.f32 %v7421, %v6233
      %v7423 = vmax.f32 %v7422, %v6241
      %v7424 = vmax.f32 %v7423, %v6249
      %v7425 = vmax.f32 %v7424, %v6257
      %v7426 = vmax.f32 %v7425, %v6265
      %v7427 = vmax.f32 %v7426, %v6273
      %v7428 = vmax.f32 %v7427, %v6281
      %v7429 = vmax.f32 %v7428, %v6289
      %v7430 = vmax.f32 %v7429, %v6297
      %v7431 = vmax.f32 %v7430, %v6305
      %v7432 = vmax.f32 %v7431, %v6313
      %v7433 = vmax.f32 %v7432, %v6321
      %v7434 = vmax.f32 %v7433, %v6329
      %v7435 = vmax.f32 %v7434, %v6337
      %v7436 = vmax.f32 %v7435, %v6345
      %v7437 = vmax.f32 %v7436, %v6353
      %v7438 = vmax.f32 %v7437, %v6361
      %v7439 = vmax.f32 %v7438, %v6369
      %v7440 = vmax.f32 %v7439, %v6377
      %v7441 = vmax.f32 %v7440, %v6385
      %v7442 = vmax.f32 %v7441, %v6393
      %v7443 = vmax.f32 %v7442, %v6401
      %v7444 = vmax.f32 %v7443, %v6409
      %v7445 = vmax.f32 %v7444, %v6417
      %v7446 = vmax.f32 %v7445, %v6425
      %v7447 = vmax.f32 %v7446, %v6433
      %v7448 = vmax.f32 %v7447, %v6441
      %v7449 = vmax.f32 %v7448, %v6449
      %v7450 = vmax.f32 %v7449, %v6457
      %v7451 = vmax.f32 %v7450, %v6465
      %v7452 = vmax.f32 %v7451, %v6473
      %v7453 = vmax.f32 %v7452, %v6481
      %v7454 = vmax.f32 %v7453, %v6489
      %v7455 = vmax.f32 %v7454, %v6497
      %v7456 = vmax.f32 %v7455, %v6505
      %v7457 = vmax.f32 %v7456, %v6513
      %v7458 = vmax.f32 %v7457, %v6521
      %v7459 = vmax.f32 %v7458, %v6529
      %v7460 = vmax.f32 %v7459, %v6537
      %v7461 = vmax.f32 %v7460, %v6545
      %v7462 = vmax.f32 %v7461, %v6553
      %v7463 = vmax.f32 %v7462, %v6561
      %v7464 = vmax.f32 %v7463, %v6569
      %v7465 = vmax.f32 %v7464, %v6577
      %v7466 = vmax.f32 %v7465, %v6585
      %v7467 = vmax.f32 %v7466, %v6593
      %v7468 = vmax.f32 %v7467, %v6601
      %v7469 = vmax.f32 %v7468, %v6609
      %v7470 = vmax.f32 %v7469, %v6617
      %v7471 = vmax.f32 %v7470, %v6625
      %v7472 = vmax.f32 %v7471, %v6633
      %v7473 = vmax.f32 %v7472, %v6641
      %v7474 = vmax.f32 %v7473, %v6649
      %v7475 = vmax.f32 %v7474, %v6657
      %v7476 = vmax.f32 %v7475, %v6665
      %v7477 = vmax.f32 %v7476, %v6673
      %v7478 = vmax.f32 %v7477, %v6681
      %v7479 = vmax.f32 %v7478, %v6689
      %v7480 = vmax.f32 %v7479, %v6697
      %v7481 = vmax.f32 %v7480, %v6705
      %v7482 = vmax.f32 %v7481, %v6713
      %v7483 = vmax.f32 %v7482, %v6721
      %v7484 = vmax.f32 %v7483, %v6729
      %v7485 = vmax.f32 %v7484, %v6737
      %v7486 = vmax.f32 %v7485, %v6745
      %v7487 = vmax.f32 %v7486, %v6753
      %v7488 = vmax.f32 %v7487, %v6761
      %v7489 = vmax.f32 %v7488, %v6769
      %v7490 = vmax.f32 %v7489, %v6777
      %v7491 = vmax.f32 %v7490, %v6785
      %v7492 = vmax.f32 %v7491, %v6793
      %v7493 = vmax.f32 %v7492, %v6801
      %v7494 = vmax.f32 %v7493, %v6809
      %v7495 = vmax.f32 %v7494, %v6817
      %v7496 = vmax.f32 %v7495, %v6825
      %v7497 = vmax.f32 %v7496, %v6833
      %v7498 = vmax.f32 %v7497, %v6841
      %v7499 = vmax.f32 %v7498, %v6849
      %v7500 = vmax.f32 %v7499, %v6857
      %v7501 = vmax.f32 %v7500, %v6865
      %v7502 = vmax.f32 %v7501, %v6873
      %v7503 = vmax.f32 %v7502, %v6881
      %v7504 = vmax.f32 %v7503, %v6889
      %v7505 = vmax.f32 %v7504, %v6897
      %v7506 = vmax.f32 %v7505, %v6905
      %v7507 = vmax.f32 %v7506, %v6913
      %v7508 = vmax.f32 %v7507, %v6921
      %v7509 = vmax.f32 %v7508, %v6929
      %v7510 = vmax.f32 %v7509, %v6937
      %v7511 = vmax.f32 %v7510, %v6945
      %v7512 = vmax.f32 %v7511, %v6953
      %v7513 = vmax.f32 %v7512, %v6961
      %v7514 = vmax.f32 %v7513, %v6969
      %v7515 = vmax.f32 %v7514, %v6977
      %v7516 = vmax.f32 %v7515, %v6985
      %v7517 = vmax.f32 %v7516, %v6993
      %v7518 = vmax.f32 %v7517, %v7001
      %v7519 = vmax.f32 %v7518, %v7009
      %v7520 = vmax.f32 %v7519, %v7017
      %v7521 = vmax.f32 %v7520, %v7025
      %v7522 = vmax.f32 %v7521, %v7033
      %v7523 = vmax.f32 %v7522, %v7041
      %v7524 = vmax.f32 %v7523, %v7049
      %v7525 = vmax.f32 %v7524, %v7057
      %v7526 = vmax.f32 %v7525, %v7065
      %v7527 = vmax.f32 %v7526, %v7073
      %v7528 = vmax.f32 %v7527, %v7081
      %v7529 = vmax.f32 %v7528, %v7089
      %v7530 = vmax.f32 %v7529, %v7097
      %v7531 = vmax.f32 %v7530, %v7105
      %v7532 = vmax.f32 %v7531, %v7113
      %v7533 = vmax.f32 %v7532, %v7121
      %v7534 = vmax.f32 %v7533, %v7129
      %v7535 = vmax.f32 %v7534, %v7137
      %v7536 = vrot.slane %v7535, 4
      %v7537 = vmax.f32 %v7535, %v7536
      %v7538 = vrot.slane %v7537, 2
      %v7539 = vmax.f32 %v7537, %v7538
      %v7540 = vrot.slane %v7539, 1
      %v7541 = vmax.f32 %v7539, %v7540
      %v7542 = vmax.f32 %v6122, %v6130
      %v7543 = vmax.f32 %v7542, %v6138
      %v7544 = vmax.f32 %v7543, %v6146
      %v7545 = vmax.f32 %v7544, %v6154
      %v7546 = vmax.f32 %v7545, %v6162
      %v7547 = vmax.f32 %v7546, %v6170
      %v7548 = vmax.f32 %v7547, %v6178
      %v7549 = vmax.f32 %v7548, %v6186
      %v7550 = vmax.f32 %v7549, %v6194
      %v7551 = vmax.f32 %v7550, %v6202
      %v7552 = vmax.f32 %v7551, %v6210
      %v7553 = vmax.f32 %v7552, %v6218
      %v7554 = vmax.f32 %v7553, %v6226
      %v7555 = vmax.f32 %v7554, %v6234
      %v7556 = vmax.f32 %v7555, %v6242
      %v7557 = vmax.f32 %v7556, %v6250
      %v7558 = vmax.f32 %v7557, %v6258
      %v7559 = vmax.f32 %v7558, %v6266
      %v7560 = vmax.f32 %v7559, %v6274
      %v7561 = vmax.f32 %v7560, %v6282
      %v7562 = vmax.f32 %v7561, %v6290
      %v7563 = vmax.f32 %v7562, %v6298
      %v7564 = vmax.f32 %v7563, %v6306
      %v7565 = vmax.f32 %v7564, %v6314
      %v7566 = vmax.f32 %v7565, %v6322
      %v7567 = vmax.f32 %v7566, %v6330
      %v7568 = vmax.f32 %v7567, %v6338
      %v7569 = vmax.f32 %v7568, %v6346
      %v7570 = vmax.f32 %v7569, %v6354
      %v7571 = vmax.f32 %v7570, %v6362
      %v7572 = vmax.f32 %v7571, %v6370
      %v7573 = vmax.f32 %v7572, %v6378
      %v7574 = vmax.f32 %v7573, %v6386
      %v7575 = vmax.f32 %v7574, %v6394
      %v7576 = vmax.f32 %v7575, %v6402
      %v7577 = vmax.f32 %v7576, %v6410
      %v7578 = vmax.f32 %v7577, %v6418
      %v7579 = vmax.f32 %v7578, %v6426
      %v7580 = vmax.f32 %v7579, %v6434
      %v7581 = vmax.f32 %v7580, %v6442
      %v7582 = vmax.f32 %v7581, %v6450
      %v7583 = vmax.f32 %v7582, %v6458
      %v7584 = vmax.f32 %v7583, %v6466
      %v7585 = vmax.f32 %v7584, %v6474
      %v7586 = vmax.f32 %v7585, %v6482
      %v7587 = vmax.f32 %v7586, %v6490
      %v7588 = vmax.f32 %v7587, %v6498
      %v7589 = vmax.f32 %v7588, %v6506
      %v7590 = vmax.f32 %v7589, %v6514
      %v7591 = vmax.f32 %v7590, %v6522
      %v7592 = vmax.f32 %v7591, %v6530
      %v7593 = vmax.f32 %v7592, %v6538
      %v7594 = vmax.f32 %v7593, %v6546
      %v7595 = vmax.f32 %v7594, %v6554
      %v7596 = vmax.f32 %v7595, %v6562
      %v7597 = vmax.f32 %v7596, %v6570
      %v7598 = vmax.f32 %v7597, %v6578
      %v7599 = vmax.f32 %v7598, %v6586
      %v7600 = vmax.f32 %v7599, %v6594
      %v7601 = vmax.f32 %v7600, %v6602
      %v7602 = vmax.f32 %v7601, %v6610
      %v7603 = vmax.f32 %v7602, %v6618
      %v7604 = vmax.f32 %v7603, %v6626
      %v7605 = vmax.f32 %v7604, %v6634
      %v7606 = vmax.f32 %v7605, %v6642
      %v7607 = vmax.f32 %v7606, %v6650
      %v7608 = vmax.f32 %v7607, %v6658
      %v7609 = vmax.f32 %v7608, %v6666
      %v7610 = vmax.f32 %v7609, %v6674
      %v7611 = vmax.f32 %v7610, %v6682
      %v7612 = vmax.f32 %v7611, %v6690
      %v7613 = vmax.f32 %v7612, %v6698
      %v7614 = vmax.f32 %v7613, %v6706
      %v7615 = vmax.f32 %v7614, %v6714
      %v7616 = vmax.f32 %v7615, %v6722
      %v7617 = vmax.f32 %v7616, %v6730
      %v7618 = vmax.f32 %v7617, %v6738
      %v7619 = vmax.f32 %v7618, %v6746
      %v7620 = vmax.f32 %v7619, %v6754
      %v7621 = vmax.f32 %v7620, %v6762
      %v7622 = vmax.f32 %v7621, %v6770
      %v7623 = vmax.f32 %v7622, %v6778
      %v7624 = vmax.f32 %v7623, %v6786
      %v7625 = vmax.f32 %v7624, %v6794
      %v7626 = vmax.f32 %v7625, %v6802
      %v7627 = vmax.f32 %v7626, %v6810
      %v7628 = vmax.f32 %v7627, %v6818
      %v7629 = vmax.f32 %v7628, %v6826
      %v7630 = vmax.f32 %v7629, %v6834
      %v7631 = vmax.f32 %v7630, %v6842
      %v7632 = vmax.f32 %v7631, %v6850
      %v7633 = vmax.f32 %v7632, %v6858
      %v7634 = vmax.f32 %v7633, %v6866
      %v7635 = vmax.f32 %v7634, %v6874
      %v7636 = vmax.f32 %v7635, %v6882
      %v7637 = vmax.f32 %v7636, %v6890
      %v7638 = vmax.f32 %v7637, %v6898
      %v7639 = vmax.f32 %v7638, %v6906
      %v7640 = vmax.f32 %v7639, %v6914
      %v7641 = vmax.f32 %v7640, %v6922
      %v7642 = vmax.f32 %v7641, %v6930
      %v7643 = vmax.f32 %v7642, %v6938
      %v7644 = vmax.f32 %v7643, %v6946
      %v7645 = vmax.f32 %v7644, %v6954
      %v7646 = vmax.f32 %v7645, %v6962
      %v7647 = vmax.f32 %v7646, %v6970
      %v7648 = vmax.f32 %v7647, %v6978
      %v7649 = vmax.f32 %v7648, %v6986
      %v7650 = vmax.f32 %v7649, %v6994
      %v7651 = vmax.f32 %v7650, %v7002
      %v7652 = vmax.f32 %v7651, %v7010
      %v7653 = vmax.f32 %v7652, %v7018
      %v7654 = vmax.f32 %v7653, %v7026
      %v7655 = vmax.f32 %v7654, %v7034
      %v7656 = vmax.f32 %v7655, %v7042
      %v7657 = vmax.f32 %v7656, %v7050
      %v7658 = vmax.f32 %v7657, %v7058
      %v7659 = vmax.f32 %v7658, %v7066
      %v7660 = vmax.f32 %v7659, %v7074
      %v7661 = vmax.f32 %v7660, %v7082
      %v7662 = vmax.f32 %v7661, %v7090
      %v7663 = vmax.f32 %v7662, %v7098
      %v7664 = vmax.f32 %v7663, %v7106
      %v7665 = vmax.f32 %v7664, %v7114
      %v7666 = vmax.f32 %v7665, %v7122
      %v7667 = vmax.f32 %v7666, %v7130
      %v7668 = vmax.f32 %v7667, %v7138
      %v7669 = vrot.slane %v7668, 4
      %v7670 = vmax.f32 %v7668, %v7669
      %v7671 = vrot.slane %v7670, 2
      %v7672 = vmax.f32 %v7670, %v7671
      %v7673 = vrot.slane %v7672, 1
      %v7674 = vmax.f32 %v7672, %v7673
      %v7675 = vmax.f32 %v6123, %v6131
      %v7676 = vmax.f32 %v7675, %v6139
      %v7677 = vmax.f32 %v7676, %v6147
      %v7678 = vmax.f32 %v7677, %v6155
      %v7679 = vmax.f32 %v7678, %v6163
      %v7680 = vmax.f32 %v7679, %v6171
      %v7681 = vmax.f32 %v7680, %v6179
      %v7682 = vmax.f32 %v7681, %v6187
      %v7683 = vmax.f32 %v7682, %v6195
      %v7684 = vmax.f32 %v7683, %v6203
      %v7685 = vmax.f32 %v7684, %v6211
      %v7686 = vmax.f32 %v7685, %v6219
      %v7687 = vmax.f32 %v7686, %v6227
      %v7688 = vmax.f32 %v7687, %v6235
      %v7689 = vmax.f32 %v7688, %v6243
      %v7690 = vmax.f32 %v7689, %v6251
      %v7691 = vmax.f32 %v7690, %v6259
      %v7692 = vmax.f32 %v7691, %v6267
      %v7693 = vmax.f32 %v7692, %v6275
      %v7694 = vmax.f32 %v7693, %v6283
      %v7695 = vmax.f32 %v7694, %v6291
      %v7696 = vmax.f32 %v7695, %v6299
      %v7697 = vmax.f32 %v7696, %v6307
      %v7698 = vmax.f32 %v7697, %v6315
      %v7699 = vmax.f32 %v7698, %v6323
      %v7700 = vmax.f32 %v7699, %v6331
      %v7701 = vmax.f32 %v7700, %v6339
      %v7702 = vmax.f32 %v7701, %v6347
      %v7703 = vmax.f32 %v7702, %v6355
      %v7704 = vmax.f32 %v7703, %v6363
      %v7705 = vmax.f32 %v7704, %v6371
      %v7706 = vmax.f32 %v7705, %v6379
      %v7707 = vmax.f32 %v7706, %v6387
      %v7708 = vmax.f32 %v7707, %v6395
      %v7709 = vmax.f32 %v7708, %v6403
      %v7710 = vmax.f32 %v7709, %v6411
      %v7711 = vmax.f32 %v7710, %v6419
      %v7712 = vmax.f32 %v7711, %v6427
      %v7713 = vmax.f32 %v7712, %v6435
      %v7714 = vmax.f32 %v7713, %v6443
      %v7715 = vmax.f32 %v7714, %v6451
      %v7716 = vmax.f32 %v7715, %v6459
      %v7717 = vmax.f32 %v7716, %v6467
      %v7718 = vmax.f32 %v7717, %v6475
      %v7719 = vmax.f32 %v7718, %v6483
      %v7720 = vmax.f32 %v7719, %v6491
      %v7721 = vmax.f32 %v7720, %v6499
      %v7722 = vmax.f32 %v7721, %v6507
      %v7723 = vmax.f32 %v7722, %v6515
      %v7724 = vmax.f32 %v7723, %v6523
      %v7725 = vmax.f32 %v7724, %v6531
      %v7726 = vmax.f32 %v7725, %v6539
      %v7727 = vmax.f32 %v7726, %v6547
      %v7728 = vmax.f32 %v7727, %v6555
      %v7729 = vmax.f32 %v7728, %v6563
      %v7730 = vmax.f32 %v7729, %v6571
      %v7731 = vmax.f32 %v7730, %v6579
      %v7732 = vmax.f32 %v7731, %v6587
      %v7733 = vmax.f32 %v7732, %v6595
      %v7734 = vmax.f32 %v7733, %v6603
      %v7735 = vmax.f32 %v7734, %v6611
      %v7736 = vmax.f32 %v7735, %v6619
      %v7737 = vmax.f32 %v7736, %v6627
      %v7738 = vmax.f32 %v7737, %v6635
      %v7739 = vmax.f32 %v7738, %v6643
      %v7740 = vmax.f32 %v7739, %v6651
      %v7741 = vmax.f32 %v7740, %v6659
      %v7742 = vmax.f32 %v7741, %v6667
      %v7743 = vmax.f32 %v7742, %v6675
      %v7744 = vmax.f32 %v7743, %v6683
      %v7745 = vmax.f32 %v7744, %v6691
      %v7746 = vmax.f32 %v7745, %v6699
      %v7747 = vmax.f32 %v7746, %v6707
      %v7748 = vmax.f32 %v7747, %v6715
      %v7749 = vmax.f32 %v7748, %v6723
      %v7750 = vmax.f32 %v7749, %v6731
      %v7751 = vmax.f32 %v7750, %v6739
      %v7752 = vmax.f32 %v7751, %v6747
      %v7753 = vmax.f32 %v7752, %v6755
      %v7754 = vmax.f32 %v7753, %v6763
      %v7755 = vmax.f32 %v7754, %v6771
      %v7756 = vmax.f32 %v7755, %v6779
      %v7757 = vmax.f32 %v7756, %v6787
      %v7758 = vmax.f32 %v7757, %v6795
      %v7759 = vmax.f32 %v7758, %v6803
      %v7760 = vmax.f32 %v7759, %v6811
      %v7761 = vmax.f32 %v7760, %v6819
      %v7762 = vmax.f32 %v7761, %v6827
      %v7763 = vmax.f32 %v7762, %v6835
      %v7764 = vmax.f32 %v7763, %v6843
      %v7765 = vmax.f32 %v7764, %v6851
      %v7766 = vmax.f32 %v7765, %v6859
      %v7767 = vmax.f32 %v7766, %v6867
      %v7768 = vmax.f32 %v7767, %v6875
      %v7769 = vmax.f32 %v7768, %v6883
      %v7770 = vmax.f32 %v7769, %v6891
      %v7771 = vmax.f32 %v7770, %v6899
      %v7772 = vmax.f32 %v7771, %v6907
      %v7773 = vmax.f32 %v7772, %v6915
      %v7774 = vmax.f32 %v7773, %v6923
      %v7775 = vmax.f32 %v7774, %v6931
      %v7776 = vmax.f32 %v7775, %v6939
      %v7777 = vmax.f32 %v7776, %v6947
      %v7778 = vmax.f32 %v7777, %v6955
      %v7779 = vmax.f32 %v7778, %v6963
      %v7780 = vmax.f32 %v7779, %v6971
      %v7781 = vmax.f32 %v7780, %v6979
      %v7782 = vmax.f32 %v7781, %v6987
      %v7783 = vmax.f32 %v7782, %v6995
      %v7784 = vmax.f32 %v7783, %v7003
      %v7785 = vmax.f32 %v7784, %v7011
      %v7786 = vmax.f32 %v7785, %v7019
      %v7787 = vmax.f32 %v7786, %v7027
      %v7788 = vmax.f32 %v7787, %v7035
      %v7789 = vmax.f32 %v7788, %v7043
      %v7790 = vmax.f32 %v7789, %v7051
      %v7791 = vmax.f32 %v7790, %v7059
      %v7792 = vmax.f32 %v7791, %v7067
      %v7793 = vmax.f32 %v7792, %v7075
      %v7794 = vmax.f32 %v7793, %v7083
      %v7795 = vmax.f32 %v7794, %v7091
      %v7796 = vmax.f32 %v7795, %v7099
      %v7797 = vmax.f32 %v7796, %v7107
      %v7798 = vmax.f32 %v7797, %v7115
      %v7799 = vmax.f32 %v7798, %v7123
      %v7800 = vmax.f32 %v7799, %v7131
      %v7801 = vmax.f32 %v7800, %v7139
      %v7802 = vrot.slane %v7801, 4
      %v7803 = vmax.f32 %v7801, %v7802
      %v7804 = vrot.slane %v7803, 2
      %v7805 = vmax.f32 %v7803, %v7804
      %v7806 = vrot.slane %v7805, 1
      %v7807 = vmax.f32 %v7805, %v7806
      %v7808 = vmax.f32 %v6124, %v6132
      %v7809 = vmax.f32 %v7808, %v6140
      %v7810 = vmax.f32 %v7809, %v6148
      %v7811 = vmax.f32 %v7810, %v6156
      %v7812 = vmax.f32 %v7811, %v6164
      %v7813 = vmax.f32 %v7812, %v6172
      %v7814 = vmax.f32 %v7813, %v6180
      %v7815 = vmax.f32 %v7814, %v6188
      %v7816 = vmax.f32 %v7815, %v6196
      %v7817 = vmax.f32 %v7816, %v6204
      %v7818 = vmax.f32 %v7817, %v6212
      %v7819 = vmax.f32 %v7818, %v6220
      %v7820 = vmax.f32 %v7819, %v6228
      %v7821 = vmax.f32 %v7820, %v6236
      %v7822 = vmax.f32 %v7821, %v6244
      %v7823 = vmax.f32 %v7822, %v6252
      %v7824 = vmax.f32 %v7823, %v6260
      %v7825 = vmax.f32 %v7824, %v6268
      %v7826 = vmax.f32 %v7825, %v6276
      %v7827 = vmax.f32 %v7826, %v6284
      %v7828 = vmax.f32 %v7827, %v6292
      %v7829 = vmax.f32 %v7828, %v6300
      %v7830 = vmax.f32 %v7829, %v6308
      %v7831 = vmax.f32 %v7830, %v6316
      %v7832 = vmax.f32 %v7831, %v6324
      %v7833 = vmax.f32 %v7832, %v6332
      %v7834 = vmax.f32 %v7833, %v6340
      %v7835 = vmax.f32 %v7834, %v6348
      %v7836 = vmax.f32 %v7835, %v6356
      %v7837 = vmax.f32 %v7836, %v6364
      %v7838 = vmax.f32 %v7837, %v6372
      %v7839 = vmax.f32 %v7838, %v6380
      %v7840 = vmax.f32 %v7839, %v6388
      %v7841 = vmax.f32 %v7840, %v6396
      %v7842 = vmax.f32 %v7841, %v6404
      %v7843 = vmax.f32 %v7842, %v6412
      %v7844 = vmax.f32 %v7843, %v6420
      %v7845 = vmax.f32 %v7844, %v6428
      %v7846 = vmax.f32 %v7845, %v6436
      %v7847 = vmax.f32 %v7846, %v6444
      %v7848 = vmax.f32 %v7847, %v6452
      %v7849 = vmax.f32 %v7848, %v6460
      %v7850 = vmax.f32 %v7849, %v6468
      %v7851 = vmax.f32 %v7850, %v6476
      %v7852 = vmax.f32 %v7851, %v6484
      %v7853 = vmax.f32 %v7852, %v6492
      %v7854 = vmax.f32 %v7853, %v6500
      %v7855 = vmax.f32 %v7854, %v6508
      %v7856 = vmax.f32 %v7855, %v6516
      %v7857 = vmax.f32 %v7856, %v6524
      %v7858 = vmax.f32 %v7857, %v6532
      %v7859 = vmax.f32 %v7858, %v6540
      %v7860 = vmax.f32 %v7859, %v6548
      %v7861 = vmax.f32 %v7860, %v6556
      %v7862 = vmax.f32 %v7861, %v6564
      %v7863 = vmax.f32 %v7862, %v6572
      %v7864 = vmax.f32 %v7863, %v6580
      %v7865 = vmax.f32 %v7864, %v6588
      %v7866 = vmax.f32 %v7865, %v6596
      %v7867 = vmax.f32 %v7866, %v6604
      %v7868 = vmax.f32 %v7867, %v6612
      %v7869 = vmax.f32 %v7868, %v6620
      %v7870 = vmax.f32 %v7869, %v6628
      %v7871 = vmax.f32 %v7870, %v6636
      %v7872 = vmax.f32 %v7871, %v6644
      %v7873 = vmax.f32 %v7872, %v6652
      %v7874 = vmax.f32 %v7873, %v6660
      %v7875 = vmax.f32 %v7874, %v6668
      %v7876 = vmax.f32 %v7875, %v6676
      %v7877 = vmax.f32 %v7876, %v6684
      %v7878 = vmax.f32 %v7877, %v6692
      %v7879 = vmax.f32 %v7878, %v6700
      %v7880 = vmax.f32 %v7879, %v6708
      %v7881 = vmax.f32 %v7880, %v6716
      %v7882 = vmax.f32 %v7881, %v6724
      %v7883 = vmax.f32 %v7882, %v6732
      %v7884 = vmax.f32 %v7883, %v6740
      %v7885 = vmax.f32 %v7884, %v6748
      %v7886 = vmax.f32 %v7885, %v6756
      %v7887 = vmax.f32 %v7886, %v6764
      %v7888 = vmax.f32 %v7887, %v6772
      %v7889 = vmax.f32 %v7888, %v6780
      %v7890 = vmax.f32 %v7889, %v6788
      %v7891 = vmax.f32 %v7890, %v6796
      %v7892 = vmax.f32 %v7891, %v6804
      %v7893 = vmax.f32 %v7892, %v6812
      %v7894 = vmax.f32 %v7893, %v6820
      %v7895 = vmax.f32 %v7894, %v6828
      %v7896 = vmax.f32 %v7895, %v6836
      %v7897 = vmax.f32 %v7896, %v6844
      %v7898 = vmax.f32 %v7897, %v6852
      %v7899 = vmax.f32 %v7898, %v6860
      %v7900 = vmax.f32 %v7899, %v6868
      %v7901 = vmax.f32 %v7900, %v6876
      %v7902 = vmax.f32 %v7901, %v6884
      %v7903 = vmax.f32 %v7902, %v6892
      %v7904 = vmax.f32 %v7903, %v6900
      %v7905 = vmax.f32 %v7904, %v6908
      %v7906 = vmax.f32 %v7905, %v6916
      %v7907 = vmax.f32 %v7906, %v6924
      %v7908 = vmax.f32 %v7907, %v6932
      %v7909 = vmax.f32 %v7908, %v6940
      %v7910 = vmax.f32 %v7909, %v6948
      %v7911 = vmax.f32 %v7910, %v6956
      %v7912 = vmax.f32 %v7911, %v6964
      %v7913 = vmax.f32 %v7912, %v6972
      %v7914 = vmax.f32 %v7913, %v6980
      %v7915 = vmax.f32 %v7914, %v6988
      %v7916 = vmax.f32 %v7915, %v6996
      %v7917 = vmax.f32 %v7916, %v7004
      %v7918 = vmax.f32 %v7917, %v7012
      %v7919 = vmax.f32 %v7918, %v7020
      %v7920 = vmax.f32 %v7919, %v7028
      %v7921 = vmax.f32 %v7920, %v7036
      %v7922 = vmax.f32 %v7921, %v7044
      %v7923 = vmax.f32 %v7922, %v7052
      %v7924 = vmax.f32 %v7923, %v7060
      %v7925 = vmax.f32 %v7924, %v7068
      %v7926 = vmax.f32 %v7925, %v7076
      %v7927 = vmax.f32 %v7926, %v7084
      %v7928 = vmax.f32 %v7927, %v7092
      %v7929 = vmax.f32 %v7928, %v7100
      %v7930 = vmax.f32 %v7929, %v7108
      %v7931 = vmax.f32 %v7930, %v7116
      %v7932 = vmax.f32 %v7931, %v7124
      %v7933 = vmax.f32 %v7932, %v7132
      %v7934 = vmax.f32 %v7933, %v7140
      %v7935 = vrot.slane %v7934, 4
      %v7936 = vmax.f32 %v7934, %v7935
      %v7937 = vrot.slane %v7936, 2
      %v7938 = vmax.f32 %v7936, %v7937
      %v7939 = vrot.slane %v7938, 1
      %v7940 = vmax.f32 %v7938, %v7939
      %v7941 = vmax.f32 %v6125, %v6133
      %v7942 = vmax.f32 %v7941, %v6141
      %v7943 = vmax.f32 %v7942, %v6149
      %v7944 = vmax.f32 %v7943, %v6157
      %v7945 = vmax.f32 %v7944, %v6165
      %v7946 = vmax.f32 %v7945, %v6173
      %v7947 = vmax.f32 %v7946, %v6181
      %v7948 = vmax.f32 %v7947, %v6189
      %v7949 = vmax.f32 %v7948, %v6197
      %v7950 = vmax.f32 %v7949, %v6205
      %v7951 = vmax.f32 %v7950, %v6213
      %v7952 = vmax.f32 %v7951, %v6221
      %v7953 = vmax.f32 %v7952, %v6229
      %v7954 = vmax.f32 %v7953, %v6237
      %v7955 = vmax.f32 %v7954, %v6245
      %v7956 = vmax.f32 %v7955, %v6253
      %v7957 = vmax.f32 %v7956, %v6261
      %v7958 = vmax.f32 %v7957, %v6269
      %v7959 = vmax.f32 %v7958, %v6277
      %v7960 = vmax.f32 %v7959, %v6285
      %v7961 = vmax.f32 %v7960, %v6293
      %v7962 = vmax.f32 %v7961, %v6301
      %v7963 = vmax.f32 %v7962, %v6309
      %v7964 = vmax.f32 %v7963, %v6317
      %v7965 = vmax.f32 %v7964, %v6325
      %v7966 = vmax.f32 %v7965, %v6333
      %v7967 = vmax.f32 %v7966, %v6341
      %v7968 = vmax.f32 %v7967, %v6349
      %v7969 = vmax.f32 %v7968, %v6357
      %v7970 = vmax.f32 %v7969, %v6365
      %v7971 = vmax.f32 %v7970, %v6373
      %v7972 = vmax.f32 %v7971, %v6381
      %v7973 = vmax.f32 %v7972, %v6389
      %v7974 = vmax.f32 %v7973, %v6397
      %v7975 = vmax.f32 %v7974, %v6405
      %v7976 = vmax.f32 %v7975, %v6413
      %v7977 = vmax.f32 %v7976, %v6421
      %v7978 = vmax.f32 %v7977, %v6429
      %v7979 = vmax.f32 %v7978, %v6437
      %v7980 = vmax.f32 %v7979, %v6445
      %v7981 = vmax.f32 %v7980, %v6453
      %v7982 = vmax.f32 %v7981, %v6461
      %v7983 = vmax.f32 %v7982, %v6469
      %v7984 = vmax.f32 %v7983, %v6477
      %v7985 = vmax.f32 %v7984, %v6485
      %v7986 = vmax.f32 %v7985, %v6493
      %v7987 = vmax.f32 %v7986, %v6501
      %v7988 = vmax.f32 %v7987, %v6509
      %v7989 = vmax.f32 %v7988, %v6517
      %v7990 = vmax.f32 %v7989, %v6525
      %v7991 = vmax.f32 %v7990, %v6533
      %v7992 = vmax.f32 %v7991, %v6541
      %v7993 = vmax.f32 %v7992, %v6549
      %v7994 = vmax.f32 %v7993, %v6557
      %v7995 = vmax.f32 %v7994, %v6565
      %v7996 = vmax.f32 %v7995, %v6573
      %v7997 = vmax.f32 %v7996, %v6581
      %v7998 = vmax.f32 %v7997, %v6589
      %v7999 = vmax.f32 %v7998, %v6597
      %v8000 = vmax.f32 %v7999, %v6605
      %v8001 = vmax.f32 %v8000, %v6613
      %v8002 = vmax.f32 %v8001, %v6621
      %v8003 = vmax.f32 %v8002, %v6629
      %v8004 = vmax.f32 %v8003, %v6637
      %v8005 = vmax.f32 %v8004, %v6645
      %v8006 = vmax.f32 %v8005, %v6653
      %v8007 = vmax.f32 %v8006, %v6661
      %v8008 = vmax.f32 %v8007, %v6669
      %v8009 = vmax.f32 %v8008, %v6677
      %v8010 = vmax.f32 %v8009, %v6685
      %v8011 = vmax.f32 %v8010, %v6693
      %v8012 = vmax.f32 %v8011, %v6701
      %v8013 = vmax.f32 %v8012, %v6709
      %v8014 = vmax.f32 %v8013, %v6717
      %v8015 = vmax.f32 %v8014, %v6725
      %v8016 = vmax.f32 %v8015, %v6733
      %v8017 = vmax.f32 %v8016, %v6741
      %v8018 = vmax.f32 %v8017, %v6749
      %v8019 = vmax.f32 %v8018, %v6757
      %v8020 = vmax.f32 %v8019, %v6765
      %v8021 = vmax.f32 %v8020, %v6773
      %v8022 = vmax.f32 %v8021, %v6781
      %v8023 = vmax.f32 %v8022, %v6789
      %v8024 = vmax.f32 %v8023, %v6797
      %v8025 = vmax.f32 %v8024, %v6805
      %v8026 = vmax.f32 %v8025, %v6813
      %v8027 = vmax.f32 %v8026, %v6821
      %v8028 = vmax.f32 %v8027, %v6829
      %v8029 = vmax.f32 %v8028, %v6837
      %v8030 = vmax.f32 %v8029, %v6845
      %v8031 = vmax.f32 %v8030, %v6853
      %v8032 = vmax.f32 %v8031, %v6861
      %v8033 = vmax.f32 %v8032, %v6869
      %v8034 = vmax.f32 %v8033, %v6877
      %v8035 = vmax.f32 %v8034, %v6885
      %v8036 = vmax.f32 %v8035, %v6893
      %v8037 = vmax.f32 %v8036, %v6901
      %v8038 = vmax.f32 %v8037, %v6909
      %v8039 = vmax.f32 %v8038, %v6917
      %v8040 = vmax.f32 %v8039, %v6925
      %v8041 = vmax.f32 %v8040, %v6933
      %v8042 = vmax.f32 %v8041, %v6941
      %v8043 = vmax.f32 %v8042, %v6949
      %v8044 = vmax.f32 %v8043, %v6957
      %v8045 = vmax.f32 %v8044, %v6965
      %v8046 = vmax.f32 %v8045, %v6973
      %v8047 = vmax.f32 %v8046, %v6981
      %v8048 = vmax.f32 %v8047, %v6989
      %v8049 = vmax.f32 %v8048, %v6997
      %v8050 = vmax.f32 %v8049, %v7005
      %v8051 = vmax.f32 %v8050, %v7013
      %v8052 = vmax.f32 %v8051, %v7021
      %v8053 = vmax.f32 %v8052, %v7029
      %v8054 = vmax.f32 %v8053, %v7037
      %v8055 = vmax.f32 %v8054, %v7045
      %v8056 = vmax.f32 %v8055, %v7053
      %v8057 = vmax.f32 %v8056, %v7061
      %v8058 = vmax.f32 %v8057, %v7069
      %v8059 = vmax.f32 %v8058, %v7077
      %v8060 = vmax.f32 %v8059, %v7085
      %v8061 = vmax.f32 %v8060, %v7093
      %v8062 = vmax.f32 %v8061, %v7101
      %v8063 = vmax.f32 %v8062, %v7109
      %v8064 = vmax.f32 %v8063, %v7117
      %v8065 = vmax.f32 %v8064, %v7125
      %v8066 = vmax.f32 %v8065, %v7133
      %v8067 = vmax.f32 %v8066, %v7141
      %v8068 = vrot.slane %v8067, 4
      %v8069 = vmax.f32 %v8067, %v8068
      %v8070 = vrot.slane %v8069, 2
      %v8071 = vmax.f32 %v8069, %v8070
      %v8072 = vrot.slane %v8071, 1
      %v8073 = vmax.f32 %v8071, %v8072
      %v8074 = vmax.f32 %v6126, %v6134
      %v8075 = vmax.f32 %v8074, %v6142
      %v8076 = vmax.f32 %v8075, %v6150
      %v8077 = vmax.f32 %v8076, %v6158
      %v8078 = vmax.f32 %v8077, %v6166
      %v8079 = vmax.f32 %v8078, %v6174
      %v8080 = vmax.f32 %v8079, %v6182
      %v8081 = vmax.f32 %v8080, %v6190
      %v8082 = vmax.f32 %v8081, %v6198
      %v8083 = vmax.f32 %v8082, %v6206
      %v8084 = vmax.f32 %v8083, %v6214
      %v8085 = vmax.f32 %v8084, %v6222
      %v8086 = vmax.f32 %v8085, %v6230
      %v8087 = vmax.f32 %v8086, %v6238
      %v8088 = vmax.f32 %v8087, %v6246
      %v8089 = vmax.f32 %v8088, %v6254
      %v8090 = vmax.f32 %v8089, %v6262
      %v8091 = vmax.f32 %v8090, %v6270
      %v8092 = vmax.f32 %v8091, %v6278
      %v8093 = vmax.f32 %v8092, %v6286
      %v8094 = vmax.f32 %v8093, %v6294
      %v8095 = vmax.f32 %v8094, %v6302
      %v8096 = vmax.f32 %v8095, %v6310
      %v8097 = vmax.f32 %v8096, %v6318
      %v8098 = vmax.f32 %v8097, %v6326
      %v8099 = vmax.f32 %v8098, %v6334
      %v8100 = vmax.f32 %v8099, %v6342
      %v8101 = vmax.f32 %v8100, %v6350
      %v8102 = vmax.f32 %v8101, %v6358
      %v8103 = vmax.f32 %v8102, %v6366
      %v8104 = vmax.f32 %v8103, %v6374
      %v8105 = vmax.f32 %v8104, %v6382
      %v8106 = vmax.f32 %v8105, %v6390
      %v8107 = vmax.f32 %v8106, %v6398
      %v8108 = vmax.f32 %v8107, %v6406
      %v8109 = vmax.f32 %v8108, %v6414
      %v8110 = vmax.f32 %v8109, %v6422
      %v8111 = vmax.f32 %v8110, %v6430
      %v8112 = vmax.f32 %v8111, %v6438
      %v8113 = vmax.f32 %v8112, %v6446
      %v8114 = vmax.f32 %v8113, %v6454
      %v8115 = vmax.f32 %v8114, %v6462
      %v8116 = vmax.f32 %v8115, %v6470
      %v8117 = vmax.f32 %v8116, %v6478
      %v8118 = vmax.f32 %v8117, %v6486
      %v8119 = vmax.f32 %v8118, %v6494
      %v8120 = vmax.f32 %v8119, %v6502
      %v8121 = vmax.f32 %v8120, %v6510
      %v8122 = vmax.f32 %v8121, %v6518
      %v8123 = vmax.f32 %v8122, %v6526
      %v8124 = vmax.f32 %v8123, %v6534
      %v8125 = vmax.f32 %v8124, %v6542
      %v8126 = vmax.f32 %v8125, %v6550
      %v8127 = vmax.f32 %v8126, %v6558
      %v8128 = vmax.f32 %v8127, %v6566
      %v8129 = vmax.f32 %v8128, %v6574
      %v8130 = vmax.f32 %v8129, %v6582
      %v8131 = vmax.f32 %v8130, %v6590
      %v8132 = vmax.f32 %v8131, %v6598
      %v8133 = vmax.f32 %v8132, %v6606
      %v8134 = vmax.f32 %v8133, %v6614
      %v8135 = vmax.f32 %v8134, %v6622
      %v8136 = vmax.f32 %v8135, %v6630
      %v8137 = vmax.f32 %v8136, %v6638
      %v8138 = vmax.f32 %v8137, %v6646
      %v8139 = vmax.f32 %v8138, %v6654
      %v8140 = vmax.f32 %v8139, %v6662
      %v8141 = vmax.f32 %v8140, %v6670
      %v8142 = vmax.f32 %v8141, %v6678
      %v8143 = vmax.f32 %v8142, %v6686
      %v8144 = vmax.f32 %v8143, %v6694
      %v8145 = vmax.f32 %v8144, %v6702
      %v8146 = vmax.f32 %v8145, %v6710
      %v8147 = vmax.f32 %v8146, %v6718
      %v8148 = vmax.f32 %v8147, %v6726
      %v8149 = vmax.f32 %v8148, %v6734
      %v8150 = vmax.f32 %v8149, %v6742
      %v8151 = vmax.f32 %v8150, %v6750
      %v8152 = vmax.f32 %v8151, %v6758
      %v8153 = vmax.f32 %v8152, %v6766
      %v8154 = vmax.f32 %v8153, %v6774
      %v8155 = vmax.f32 %v8154, %v6782
      %v8156 = vmax.f32 %v8155, %v6790
      %v8157 = vmax.f32 %v8156, %v6798
      %v8158 = vmax.f32 %v8157, %v6806
      %v8159 = vmax.f32 %v8158, %v6814
      %v8160 = vmax.f32 %v8159, %v6822
      %v8161 = vmax.f32 %v8160, %v6830
      %v8162 = vmax.f32 %v8161, %v6838
      %v8163 = vmax.f32 %v8162, %v6846
      %v8164 = vmax.f32 %v8163, %v6854
      %v8165 = vmax.f32 %v8164, %v6862
      %v8166 = vmax.f32 %v8165, %v6870
      %v8167 = vmax.f32 %v8166, %v6878
      %v8168 = vmax.f32 %v8167, %v6886
      %v8169 = vmax.f32 %v8168, %v6894
      %v8170 = vmax.f32 %v8169, %v6902
      %v8171 = vmax.f32 %v8170, %v6910
      %v8172 = vmax.f32 %v8171, %v6918
      %v8173 = vmax.f32 %v8172, %v6926
      %v8174 = vmax.f32 %v8173, %v6934
      %v8175 = vmax.f32 %v8174, %v6942
      %v8176 = vmax.f32 %v8175, %v6950
      %v8177 = vmax.f32 %v8176, %v6958
      %v8178 = vmax.f32 %v8177, %v6966
      %v8179 = vmax.f32 %v8178, %v6974
      %v8180 = vmax.f32 %v8179, %v6982
      %v8181 = vmax.f32 %v8180, %v6990
      %v8182 = vmax.f32 %v8181, %v6998
      %v8183 = vmax.f32 %v8182, %v7006
      %v8184 = vmax.f32 %v8183, %v7014
      %v8185 = vmax.f32 %v8184, %v7022
      %v8186 = vmax.f32 %v8185, %v7030
      %v8187 = vmax.f32 %v8186, %v7038
      %v8188 = vmax.f32 %v8187, %v7046
      %v8189 = vmax.f32 %v8188, %v7054
      %v8190 = vmax.f32 %v8189, %v7062
      %v8191 = vmax.f32 %v8190, %v7070
      %v8192 = vmax.f32 %v8191, %v7078
      %v8193 = vmax.f32 %v8192, %v7086
      %v8194 = vmax.f32 %v8193, %v7094
      %v8195 = vmax.f32 %v8194, %v7102
      %v8196 = vmax.f32 %v8195, %v7110
      %v8197 = vmax.f32 %v8196, %v7118
      %v8198 = vmax.f32 %v8197, %v7126
      %v8199 = vmax.f32 %v8198, %v7134
      %v8200 = vmax.f32 %v8199, %v7142
      %v8201 = vrot.slane %v8200, 4
      %v8202 = vmax.f32 %v8200, %v8201
      %v8203 = vrot.slane %v8202, 2
      %v8204 = vmax.f32 %v8202, %v8203
      %v8205 = vrot.slane %v8204, 1
      %v8206 = vmax.f32 %v8204, %v8205
      %p8207 = scmp.eq.s32.totalorder %s29, 0
      // Predicated region
      $region73: #{stn3d_forward.1} parent=71 // pred_check
        %p8208 = pneg %p8207
      $region74: #{stn3d_forward.1} parent=71 // pred_check_branch
        %8210 = sbr.rel (%p8208) target = $region76
      $region75: #{stn3d_forward.1} parent=71 // pred_region
        %v8219 = vcombine.low %v7275, %v7408
        %v8220 = vcombine.low %v7541, %v7674
        %v8221 = vcombine.low %v7807, %v7940
        %v8222 = vcombine.low %v8073, %v8206
        %v8224 = vunpack.c.l.s4 1966171168
        %v8225 = vunpack.c.0.s8 %v8224
        %v8226 = vlaneseq
        %v8227 = vshrl.u32 %v8226, 7
        %v8228 = vsub.s32 %v8225, %v8227
        %v8229 = vrot.slane %v8219, %v8228
        %v8231 = vunpack.c.l.s4 1966171168
        %v8232 = vunpack.c.0.s8 %v8231
        %v8233 = vlaneseq
        %v8234 = vshrl.u32 %v8233, 7
        %v8235 = vsub.s32 %v8232, %v8234
        %v8236 = vrot.slane %v8220, %v8235
        %v8238 = vunpack.c.l.s4 1966171168
        %v8239 = vunpack.c.0.s8 %v8238
        %v8240 = vlaneseq
        %v8241 = vshrl.u32 %v8240, 7
        %v8242 = vsub.s32 %v8239, %v8241
        %v8243 = vrot.slane %v8221, %v8242
        %v8245 = vunpack.c.l.s4 1966171168
        %v8246 = vunpack.c.0.s8 %v8245
        %v8247 = vlaneseq
        %v8248 = vshrl.u32 %v8247, 7
        %v8249 = vsub.s32 %v8246, %v8248
        %v8250 = vrot.slane %v8222, %v8249
        %v8251 = vcombine.low %v8229, %v8236
        %v8252 = vcombine.low %v8243, %v8250
        %v8254 = vunpack.c.l.s4 1966171168
        %v8255 = vunpack.c.0.s8 %v8254
        %v8256 = vlaneseq
        %v8257 = vshrl.u32 %v8256, 7
        %v8258 = vsub.s32 %v8255, %v8257
        %v8259 = vrot.slane %v8251, %v8258
        %v8261 = vunpack.c.l.s4 1966171168
        %v8262 = vunpack.c.0.s8 %v8261
        %v8263 = vlaneseq
        %v8264 = vshrl.u32 %v8263, 7
        %v8265 = vsub.s32 %v8262, %v8264
        %v8266 = vrot.slane %v8252, %v8265
        %v8267 = vcombine.low %v8259, %v8266
        %8269 = vst [vmem:[#allocation2] sm:$0xff] %v8267
      $region76: #{stn3d_forward.1} parent=71 // pred_fallthru
        _
      %p8270 = scmp.ne.s32.totalorder %s29, 0
      // Predicated region
      $region77: #{stn3d_forward.1} parent=71 // pred_check
        %p8271 = pneg %p8270
      $region78: #{stn3d_forward.1} parent=71 // pred_check_branch
        %8273 = sbr.rel (%p8271) target = $region80
      $region79: #{stn3d_forward.1} parent=71 // pred_region
        %v8274 = vld [vmem:[#allocation2] sm:$0xff]
        %v8283 = vcombine.low %v7275, %v7408
        %v8284 = vcombine.low %v7541, %v7674
        %v8285 = vcombine.low %v7807, %v7940
        %v8286 = vcombine.low %v8073, %v8206
        %v8288 = vunpack.c.l.s4 1966171168
        %v8289 = vunpack.c.0.s8 %v8288
        %v8290 = vlaneseq
        %v8291 = vshrl.u32 %v8290, 7
        %v8292 = vsub.s32 %v8289, %v8291
        %v8293 = vrot.slane %v8283, %v8292
        %v8295 = vunpack.c.l.s4 1966171168
        %v8296 = vunpack.c.0.s8 %v8295
        %v8297 = vlaneseq
        %v8298 = vshrl.u32 %v8297, 7
        %v8299 = vsub.s32 %v8296, %v8298
        %v8300 = vrot.slane %v8284, %v8299
        %v8302 = vunpack.c.l.s4 1966171168
        %v8303 = vunpack.c.0.s8 %v8302
        %v8304 = vlaneseq
        %v8305 = vshrl.u32 %v8304, 7
        %v8306 = vsub.s32 %v8303, %v8305
        %v8307 = vrot.slane %v8285, %v8306
        %v8309 = vunpack.c.l.s4 1966171168
        %v8310 = vunpack.c.0.s8 %v8309
        %v8311 = vlaneseq
        %v8312 = vshrl.u32 %v8311, 7
        %v8313 = vsub.s32 %v8310, %v8312
        %v8314 = vrot.slane %v8286, %v8313
        %v8315 = vcombine.low %v8293, %v8300
        %v8316 = vcombine.low %v8307, %v8314
        %v8318 = vunpack.c.l.s4 1966171168
        %v8319 = vunpack.c.0.s8 %v8318
        %v8320 = vlaneseq
        %v8321 = vshrl.u32 %v8320, 7
        %v8322 = vsub.s32 %v8319, %v8321
        %v8323 = vrot.slane %v8315, %v8322
        %v8325 = vunpack.c.l.s4 1966171168
        %v8326 = vunpack.c.0.s8 %v8325
        %v8327 = vlaneseq
        %v8328 = vshrl.u32 %v8327, 7
        %v8329 = vsub.s32 %v8326, %v8328
        %v8330 = vrot.slane %v8316, %v8329
        %v8331 = vcombine.low %v8323, %v8330
        %v8333 = vmax.f32 %v8274, %v8331
        %8334 = vst [vmem:[#allocation2] sm:$0xff] %v8333
      $region80: #{stn3d_forward.1} parent=71 // pred_fallthru
        _
      // Predicated region
      $region81: #{stn3d_forward.1} parent=71 // pred_check
        %p8335 = pneg %p8207
      $region82: #{stn3d_forward.1} parent=71 // pred_check_branch
        %8337 = sbr.rel (%p8335) target = $region84
      $region83: #{stn3d_forward.1} parent=71 // pred_region
        %v8338 = vld [vmem:[#allocation2] sm:$0xff]
        %v8340 = vlaneseq
        %v8341 = vshrl.u32 %v8340, 7
        %v8342 = vsub.s32 0, %v8341
        %v8343 = vrot.slane %v8338, %v8342
        %v8344 = vlaneseq
        %v8345 = vshrl.u32 %v8344, 7
        %v8346 = vsub.s32 1, %v8345
        %v8347 = vrot.slane %v8338, %v8346
        %v8348 = vlaneseq
        %v8349 = vshrl.u32 %v8348, 7
        %v8350 = vsub.s32 2, %v8349
        %v8351 = vrot.slane %v8338, %v8350
        %v8352 = vlaneseq
        %v8353 = vshrl.u32 %v8352, 7
        %v8354 = vsub.s32 3, %v8353
        %v8355 = vrot.slane %v8338, %v8354
        %v8356 = vlaneseq
        %v8357 = vshrl.u32 %v8356, 7
        %v8358 = vsub.s32 4, %v8357
        %v8359 = vrot.slane %v8338, %v8358
        %v8360 = vlaneseq
        %v8361 = vshrl.u32 %v8360, 7
        %v8362 = vsub.s32 5, %v8361
        %v8363 = vrot.slane %v8338, %v8362
        %v8364 = vlaneseq
        %v8365 = vshrl.u32 %v8364, 7
        %v8366 = vsub.s32 6, %v8365
        %v8367 = vrot.slane %v8338, %v8366
        %v8368 = vlaneseq
        %v8369 = vshrl.u32 %v8368, 7
        %v8370 = vsub.s32 7, %v8369
        %v8371 = vrot.slane %v8338, %v8370
        %v8380 = vpack.c.bf16 %v8343, %v8343
        %v8381 = vpack.c.bf16 %v8347, %v8347
        %v8382 = vpack.c.bf16 %v8351, %v8351
        %v8383 = vpack.c.bf16 %v8355, %v8355
        %v8384 = vpack.c.bf16 %v8359, %v8359
        %v8385 = vpack.c.bf16 %v8363, %v8363
        %v8386 = vpack.c.bf16 %v8367, %v8367
        %v8387 = vpack.c.bf16 %v8371, %v8371
        %v8388 = vld [vmem:[%s7] sm:$0xff]
        %v8389 = vld [vmem:[%s7 + $0x8] sm:$0xff]
        %v8390 = vld [vmem:[%s7 + $0x10] sm:$0xff]
        %v8391 = vld [vmem:[%s7 + $0x18] sm:$0xff]
        %v8392 = vld [vmem:[%s7 + $0x20] sm:$0xff]
        %v8393 = vld [vmem:[%s7 + $0x28] sm:$0xff]
        %v8394 = vld [vmem:[%s7 + $0x30] sm:$0xff]
        %v8395 = vld [vmem:[%s7 + $0x38] sm:$0xff]
        %v8396 = vld [vmem:[%s7 + $0x40] sm:$0xff]
        %v8397 = vld [vmem:[%s7 + $0x48] sm:$0xff]
        %v8398 = vld [vmem:[%s7 + $0x50] sm:$0xff]
        %v8399 = vld [vmem:[%s7 + $0x58] sm:$0xff]
        %v8400 = vld [vmem:[%s7 + $0x60] sm:$0xff]
        %v8401 = vld [vmem:[%s7 + $0x68] sm:$0xff]
        %v8402 = vld [vmem:[%s7 + $0x70] sm:$0xff]
        %v8403 = vld [vmem:[%s7 + $0x78] sm:$0xff]
        %v8404 = vld [vmem:[%s7 + $0x80] sm:$0xff]
        %v8405 = vld [vmem:[%s7 + $0x88] sm:$0xff]
        %v8406 = vld [vmem:[%s7 + $0x90] sm:$0xff]
        %v8407 = vld [vmem:[%s7 + $0x98] sm:$0xff]
        %v8408 = vld [vmem:[%s7 + $0xa0] sm:$0xff]
        %v8409 = vld [vmem:[%s7 + $0xa8] sm:$0xff]
        %v8410 = vld [vmem:[%s7 + $0xb0] sm:$0xff]
        %v8411 = vld [vmem:[%s7 + $0xb8] sm:$0xff]
        %v8412 = vld [vmem:[%s7 + $0xc0] sm:$0xff]
        %v8413 = vld [vmem:[%s7 + $0xc8] sm:$0xff]
        %v8414 = vld [vmem:[%s7 + $0xd0] sm:$0xff]
        %v8415 = vld [vmem:[%s7 + $0xd8] sm:$0xff]
        %v8416 = vld [vmem:[%s7 + $0xe0] sm:$0xff]
        %v8417 = vld [vmem:[%s7 + $0xe8] sm:$0xff]
        %v8418 = vld [vmem:[%s7 + $0xf0] sm:$0xff]
        %v8419 = vld [vmem:[%s7 + $0xf8] sm:$0xff]
        %v8420 = vld [vmem:[%s7 + $0x100] sm:$0xff]
        %v8421 = vld [vmem:[%s7 + $0x108] sm:$0xff]
        %v8422 = vld [vmem:[%s7 + $0x110] sm:$0xff]
        %v8423 = vld [vmem:[%s7 + $0x118] sm:$0xff]
        %v8424 = vld [vmem:[%s7 + $0x120] sm:$0xff]
        %v8425 = vld [vmem:[%s7 + $0x128] sm:$0xff]
        %v8426 = vld [vmem:[%s7 + $0x130] sm:$0xff]
        %v8427 = vld [vmem:[%s7 + $0x138] sm:$0xff]
        %v8428 = vld [vmem:[%s7 + $0x140] sm:$0xff]
        %v8429 = vld [vmem:[%s7 + $0x148] sm:$0xff]
        %v8430 = vld [vmem:[%s7 + $0x150] sm:$0xff]
        %v8431 = vld [vmem:[%s7 + $0x158] sm:$0xff]
        %v8432 = vld [vmem:[%s7 + $0x160] sm:$0xff]
        %v8433 = vld [vmem:[%s7 + $0x168] sm:$0xff]
        %v8434 = vld [vmem:[%s7 + $0x170] sm:$0xff]
        %v8435 = vld [vmem:[%s7 + $0x178] sm:$0xff]
        %v8436 = vld [vmem:[%s7 + $0x180] sm:$0xff]
        %v8437 = vld [vmem:[%s7 + $0x188] sm:$0xff]
        %v8438 = vld [vmem:[%s7 + $0x190] sm:$0xff]
        %v8439 = vld [vmem:[%s7 + $0x198] sm:$0xff]
        %v8440 = vld [vmem:[%s7 + $0x1a0] sm:$0xff]
        %v8441 = vld [vmem:[%s7 + $0x1a8] sm:$0xff]
        %v8442 = vld [vmem:[%s7 + $0x1b0] sm:$0xff]
        %v8443 = vld [vmem:[%s7 + $0x1b8] sm:$0xff]
        %v8444 = vld [vmem:[%s7 + $0x1c0] sm:$0xff]
        %v8445 = vld [vmem:[%s7 + $0x1c8] sm:$0xff]
        %v8446 = vld [vmem:[%s7 + $0x1d0] sm:$0xff]
        %v8447 = vld [vmem:[%s7 + $0x1d8] sm:$0xff]
        %v8448 = vld [vmem:[%s7 + $0x1e0] sm:$0xff]
        %v8449 = vld [vmem:[%s7 + $0x1e8] sm:$0xff]
        %v8450 = vld [vmem:[%s7 + $0x1f0] sm:$0xff]
        %v8451 = vld [vmem:[%s7 + $0x1f8] sm:$0xff]
        %v8452 = vld [vmem:[%s7 + $0x200] sm:$0xff]
        %v8453 = vld [vmem:[%s7 + $0x208] sm:$0xff]
        %v8454 = vld [vmem:[%s7 + $0x210] sm:$0xff]
        %v8455 = vld [vmem:[%s7 + $0x218] sm:$0xff]
        %v8456 = vld [vmem:[%s7 + $0x220] sm:$0xff]
        %v8457 = vld [vmem:[%s7 + $0x228] sm:$0xff]
        %v8458 = vld [vmem:[%s7 + $0x230] sm:$0xff]
        %v8459 = vld [vmem:[%s7 + $0x238] sm:$0xff]
        %v8460 = vld [vmem:[%s7 + $0x240] sm:$0xff]
        %v8461 = vld [vmem:[%s7 + $0x248] sm:$0xff]
        %v8462 = vld [vmem:[%s7 + $0x250] sm:$0xff]
        %v8463 = vld [vmem:[%s7 + $0x258] sm:$0xff]
        %v8464 = vld [vmem:[%s7 + $0x260] sm:$0xff]
        %v8465 = vld [vmem:[%s7 + $0x268] sm:$0xff]
        %v8466 = vld [vmem:[%s7 + $0x270] sm:$0xff]
        %v8467 = vld [vmem:[%s7 + $0x278] sm:$0xff]
        %v8468 = vld [vmem:[%s7 + $0x280] sm:$0xff]
        %v8469 = vld [vmem:[%s7 + $0x288] sm:$0xff]
        %v8470 = vld [vmem:[%s7 + $0x290] sm:$0xff]
        %v8471 = vld [vmem:[%s7 + $0x298] sm:$0xff]
        %v8472 = vld [vmem:[%s7 + $0x2a0] sm:$0xff]
        %v8473 = vld [vmem:[%s7 + $0x2a8] sm:$0xff]
        %v8474 = vld [vmem:[%s7 + $0x2b0] sm:$0xff]
        %v8475 = vld [vmem:[%s7 + $0x2b8] sm:$0xff]
        %v8476 = vld [vmem:[%s7 + $0x2c0] sm:$0xff]
        %v8477 = vld [vmem:[%s7 + $0x2c8] sm:$0xff]
        %v8478 = vld [vmem:[%s7 + $0x2d0] sm:$0xff]
        %v8479 = vld [vmem:[%s7 + $0x2d8] sm:$0xff]
        %v8480 = vld [vmem:[%s7 + $0x2e0] sm:$0xff]
        %v8481 = vld [vmem:[%s7 + $0x2e8] sm:$0xff]
        %v8482 = vld [vmem:[%s7 + $0x2f0] sm:$0xff]
        %v8483 = vld [vmem:[%s7 + $0x2f8] sm:$0xff]
        %v8484 = vld [vmem:[%s7 + $0x300] sm:$0xff]
        %v8485 = vld [vmem:[%s7 + $0x308] sm:$0xff]
        %v8486 = vld [vmem:[%s7 + $0x310] sm:$0xff]
        %v8487 = vld [vmem:[%s7 + $0x318] sm:$0xff]
        %v8488 = vld [vmem:[%s7 + $0x320] sm:$0xff]
        %v8489 = vld [vmem:[%s7 + $0x328] sm:$0xff]
        %v8490 = vld [vmem:[%s7 + $0x330] sm:$0xff]
        %v8491 = vld [vmem:[%s7 + $0x338] sm:$0xff]
        %v8492 = vld [vmem:[%s7 + $0x340] sm:$0xff]
        %v8493 = vld [vmem:[%s7 + $0x348] sm:$0xff]
        %v8494 = vld [vmem:[%s7 + $0x350] sm:$0xff]
        %v8495 = vld [vmem:[%s7 + $0x358] sm:$0xff]
        %v8496 = vld [vmem:[%s7 + $0x360] sm:$0xff]
        %v8497 = vld [vmem:[%s7 + $0x368] sm:$0xff]
        %v8498 = vld [vmem:[%s7 + $0x370] sm:$0xff]
        %v8499 = vld [vmem:[%s7 + $0x378] sm:$0xff]
        %v8500 = vld [vmem:[%s7 + $0x380] sm:$0xff]
        %v8501 = vld [vmem:[%s7 + $0x388] sm:$0xff]
        %v8502 = vld [vmem:[%s7 + $0x390] sm:$0xff]
        %v8503 = vld [vmem:[%s7 + $0x398] sm:$0xff]
        %v8504 = vld [vmem:[%s7 + $0x3a0] sm:$0xff]
        %v8505 = vld [vmem:[%s7 + $0x3a8] sm:$0xff]
        %v8506 = vld [vmem:[%s7 + $0x3b0] sm:$0xff]
        %v8507 = vld [vmem:[%s7 + $0x3b8] sm:$0xff]
        %v8508 = vld [vmem:[%s7 + $0x3c0] sm:$0xff]
        %v8509 = vld [vmem:[%s7 + $0x3c8] sm:$0xff]
        %v8510 = vld [vmem:[%s7 + $0x3d0] sm:$0xff]
        %v8511 = vld [vmem:[%s7 + $0x3d8] sm:$0xff]
        %v8512 = vld [vmem:[%s7 + $0x3e0] sm:$0xff]
        %v8513 = vld [vmem:[%s7 + $0x3e8] sm:$0xff]
        %v8514 = vld [vmem:[%s7 + $0x3f0] sm:$0xff]
        %v8515 = vld [vmem:[%s7 + $0x3f8] sm:$0xff]
        %v8516 = vld [vmem:[%s7 + $0x400] sm:$0xff]
        %v8517 = vld [vmem:[%s7 + $0x408] sm:$0xff]
        %v8518 = vld [vmem:[%s7 + $0x410] sm:$0xff]
        %v8519 = vld [vmem:[%s7 + $0x418] sm:$0xff]
        %v8520 = vld [vmem:[%s7 + $0x420] sm:$0xff]
        %v8521 = vld [vmem:[%s7 + $0x428] sm:$0xff]
        %v8522 = vld [vmem:[%s7 + $0x430] sm:$0xff]
        %v8523 = vld [vmem:[%s7 + $0x438] sm:$0xff]
        %v8524 = vld [vmem:[%s7 + $0x440] sm:$0xff]
        %v8525 = vld [vmem:[%s7 + $0x448] sm:$0xff]
        %v8526 = vld [vmem:[%s7 + $0x450] sm:$0xff]
        %v8527 = vld [vmem:[%s7 + $0x458] sm:$0xff]
        %v8528 = vld [vmem:[%s7 + $0x460] sm:$0xff]
        %v8529 = vld [vmem:[%s7 + $0x468] sm:$0xff]
        %v8530 = vld [vmem:[%s7 + $0x470] sm:$0xff]
        %v8531 = vld [vmem:[%s7 + $0x478] sm:$0xff]
        %v8532 = vld [vmem:[%s7 + $0x480] sm:$0xff]
        %v8533 = vld [vmem:[%s7 + $0x488] sm:$0xff]
        %v8534 = vld [vmem:[%s7 + $0x490] sm:$0xff]
        %v8535 = vld [vmem:[%s7 + $0x498] sm:$0xff]
        %v8536 = vld [vmem:[%s7 + $0x4a0] sm:$0xff]
        %v8537 = vld [vmem:[%s7 + $0x4a8] sm:$0xff]
        %v8538 = vld [vmem:[%s7 + $0x4b0] sm:$0xff]
        %v8539 = vld [vmem:[%s7 + $0x4b8] sm:$0xff]
        %v8540 = vld [vmem:[%s7 + $0x4c0] sm:$0xff]
        %v8541 = vld [vmem:[%s7 + $0x4c8] sm:$0xff]
        %v8542 = vld [vmem:[%s7 + $0x4d0] sm:$0xff]
        %v8543 = vld [vmem:[%s7 + $0x4d8] sm:$0xff]
        %v8544 = vld [vmem:[%s7 + $0x4e0] sm:$0xff]
        %v8545 = vld [vmem:[%s7 + $0x4e8] sm:$0xff]
        %v8546 = vld [vmem:[%s7 + $0x4f0] sm:$0xff]
        %v8547 = vld [vmem:[%s7 + $0x4f8] sm:$0xff]
        %v8548 = vld [vmem:[%s7 + $0x500] sm:$0xff]
        %v8549 = vld [vmem:[%s7 + $0x508] sm:$0xff]
        %v8550 = vld [vmem:[%s7 + $0x510] sm:$0xff]
        %v8551 = vld [vmem:[%s7 + $0x518] sm:$0xff]
        %v8552 = vld [vmem:[%s7 + $0x520] sm:$0xff]
        %v8553 = vld [vmem:[%s7 + $0x528] sm:$0xff]
        %v8554 = vld [vmem:[%s7 + $0x530] sm:$0xff]
        %v8555 = vld [vmem:[%s7 + $0x538] sm:$0xff]
        %v8556 = vld [vmem:[%s7 + $0x540] sm:$0xff]
        %v8557 = vld [vmem:[%s7 + $0x548] sm:$0xff]
        %v8558 = vld [vmem:[%s7 + $0x550] sm:$0xff]
        %v8559 = vld [vmem:[%s7 + $0x558] sm:$0xff]
        %v8560 = vld [vmem:[%s7 + $0x560] sm:$0xff]
        %v8561 = vld [vmem:[%s7 + $0x568] sm:$0xff]
        %v8562 = vld [vmem:[%s7 + $0x570] sm:$0xff]
        %v8563 = vld [vmem:[%s7 + $0x578] sm:$0xff]
        %v8564 = vld [vmem:[%s7 + $0x580] sm:$0xff]
        %v8565 = vld [vmem:[%s7 + $0x588] sm:$0xff]
        %v8566 = vld [vmem:[%s7 + $0x590] sm:$0xff]
        %v8567 = vld [vmem:[%s7 + $0x598] sm:$0xff]
        %v8568 = vld [vmem:[%s7 + $0x5a0] sm:$0xff]
        %v8569 = vld [vmem:[%s7 + $0x5a8] sm:$0xff]
        %v8570 = vld [vmem:[%s7 + $0x5b0] sm:$0xff]
        %v8571 = vld [vmem:[%s7 + $0x5b8] sm:$0xff]
        %v8572 = vld [vmem:[%s7 + $0x5c0] sm:$0xff]
        %v8573 = vld [vmem:[%s7 + $0x5c8] sm:$0xff]
        %v8574 = vld [vmem:[%s7 + $0x5d0] sm:$0xff]
        %v8575 = vld [vmem:[%s7 + $0x5d8] sm:$0xff]
        %v8576 = vld [vmem:[%s7 + $0x5e0] sm:$0xff]
        %v8577 = vld [vmem:[%s7 + $0x5e8] sm:$0xff]
        %v8578 = vld [vmem:[%s7 + $0x5f0] sm:$0xff]
        %v8579 = vld [vmem:[%s7 + $0x5f8] sm:$0xff]
        %v8580 = vld [vmem:[%s7 + $0x600] sm:$0xff]
        %v8581 = vld [vmem:[%s7 + $0x608] sm:$0xff]
        %v8582 = vld [vmem:[%s7 + $0x610] sm:$0xff]
        %v8583 = vld [vmem:[%s7 + $0x618] sm:$0xff]
        %v8584 = vld [vmem:[%s7 + $0x620] sm:$0xff]
        %v8585 = vld [vmem:[%s7 + $0x628] sm:$0xff]
        %v8586 = vld [vmem:[%s7 + $0x630] sm:$0xff]
        %v8587 = vld [vmem:[%s7 + $0x638] sm:$0xff]
        %v8588 = vld [vmem:[%s7 + $0x640] sm:$0xff]
        %v8589 = vld [vmem:[%s7 + $0x648] sm:$0xff]
        %v8590 = vld [vmem:[%s7 + $0x650] sm:$0xff]
        %v8591 = vld [vmem:[%s7 + $0x658] sm:$0xff]
        %v8592 = vld [vmem:[%s7 + $0x660] sm:$0xff]
        %v8593 = vld [vmem:[%s7 + $0x668] sm:$0xff]
        %v8594 = vld [vmem:[%s7 + $0x670] sm:$0xff]
        %v8595 = vld [vmem:[%s7 + $0x678] sm:$0xff]
        %v8596 = vld [vmem:[%s7 + $0x680] sm:$0xff]
        %v8597 = vld [vmem:[%s7 + $0x688] sm:$0xff]
        %v8598 = vld [vmem:[%s7 + $0x690] sm:$0xff]
        %v8599 = vld [vmem:[%s7 + $0x698] sm:$0xff]
        %v8600 = vld [vmem:[%s7 + $0x6a0] sm:$0xff]
        %v8601 = vld [vmem:[%s7 + $0x6a8] sm:$0xff]
        %v8602 = vld [vmem:[%s7 + $0x6b0] sm:$0xff]
        %v8603 = vld [vmem:[%s7 + $0x6b8] sm:$0xff]
        %v8604 = vld [vmem:[%s7 + $0x6c0] sm:$0xff]
        %v8605 = vld [vmem:[%s7 + $0x6c8] sm:$0xff]
        %v8606 = vld [vmem:[%s7 + $0x6d0] sm:$0xff]
        %v8607 = vld [vmem:[%s7 + $0x6d8] sm:$0xff]
        %v8608 = vld [vmem:[%s7 + $0x6e0] sm:$0xff]
        %v8609 = vld [vmem:[%s7 + $0x6e8] sm:$0xff]
        %v8610 = vld [vmem:[%s7 + $0x6f0] sm:$0xff]
        %v8611 = vld [vmem:[%s7 + $0x6f8] sm:$0xff]
        %v8612 = vld [vmem:[%s7 + $0x700] sm:$0xff]
        %v8613 = vld [vmem:[%s7 + $0x708] sm:$0xff]
        %v8614 = vld [vmem:[%s7 + $0x710] sm:$0xff]
        %v8615 = vld [vmem:[%s7 + $0x718] sm:$0xff]
        %v8616 = vld [vmem:[%s7 + $0x720] sm:$0xff]
        %v8617 = vld [vmem:[%s7 + $0x728] sm:$0xff]
        %v8618 = vld [vmem:[%s7 + $0x730] sm:$0xff]
        %v8619 = vld [vmem:[%s7 + $0x738] sm:$0xff]
        %v8620 = vld [vmem:[%s7 + $0x740] sm:$0xff]
        %v8621 = vld [vmem:[%s7 + $0x748] sm:$0xff]
        %v8622 = vld [vmem:[%s7 + $0x750] sm:$0xff]
        %v8623 = vld [vmem:[%s7 + $0x758] sm:$0xff]
        %v8624 = vld [vmem:[%s7 + $0x760] sm:$0xff]
        %v8625 = vld [vmem:[%s7 + $0x768] sm:$0xff]
        %v8626 = vld [vmem:[%s7 + $0x770] sm:$0xff]
        %v8627 = vld [vmem:[%s7 + $0x778] sm:$0xff]
        %v8628 = vld [vmem:[%s7 + $0x780] sm:$0xff]
        %v8629 = vld [vmem:[%s7 + $0x788] sm:$0xff]
        %v8630 = vld [vmem:[%s7 + $0x790] sm:$0xff]
        %v8631 = vld [vmem:[%s7 + $0x798] sm:$0xff]
        %v8632 = vld [vmem:[%s7 + $0x7a0] sm:$0xff]
        %v8633 = vld [vmem:[%s7 + $0x7a8] sm:$0xff]
        %v8634 = vld [vmem:[%s7 + $0x7b0] sm:$0xff]
        %v8635 = vld [vmem:[%s7 + $0x7b8] sm:$0xff]
        %v8636 = vld [vmem:[%s7 + $0x7c0] sm:$0xff]
        %v8637 = vld [vmem:[%s7 + $0x7c8] sm:$0xff]
        %v8638 = vld [vmem:[%s7 + $0x7d0] sm:$0xff]
        %v8639 = vld [vmem:[%s7 + $0x7d8] sm:$0xff]
        %v8640 = vld [vmem:[%s7 + $0x7e0] sm:$0xff]
        %v8641 = vld [vmem:[%s7 + $0x7e8] sm:$0xff]
        %v8642 = vld [vmem:[%s7 + $0x7f0] sm:$0xff]
        %v8643 = vld [vmem:[%s7 + $0x7f8] sm:$0xff]
        %v8644 = vld [vmem:[%s8] sm:$0xf]
        %v8901 = vunpack.c.l.b16 %v8388
        %v8902 = vunpack.c.h.b16 %v8388
        %v8903 = vunpack.c.l.b16 %v8389
        %v8904 = vunpack.c.h.b16 %v8389
        %v8905 = vunpack.c.l.b16 %v8390
        %v8906 = vunpack.c.h.b16 %v8390
        %v8907 = vunpack.c.l.b16 %v8391
        %v8908 = vunpack.c.h.b16 %v8391
        %v8909 = vunpack.c.l.b16 %v8392
        %v8910 = vunpack.c.h.b16 %v8392
        %v8911 = vunpack.c.l.b16 %v8393
        %v8912 = vunpack.c.h.b16 %v8393
        %v8913 = vunpack.c.l.b16 %v8394
        %v8914 = vunpack.c.h.b16 %v8394
        %v8915 = vunpack.c.l.b16 %v8395
        %v8916 = vunpack.c.h.b16 %v8395
        %v8917 = vunpack.c.l.b16 %v8396
        %v8918 = vunpack.c.h.b16 %v8396
        %v8919 = vunpack.c.l.b16 %v8397
        %v8920 = vunpack.c.h.b16 %v8397
        %v8921 = vunpack.c.l.b16 %v8398
        %v8922 = vunpack.c.h.b16 %v8398
        %v8923 = vunpack.c.l.b16 %v8399
        %v8924 = vunpack.c.h.b16 %v8399
        %v8925 = vunpack.c.l.b16 %v8400
        %v8926 = vunpack.c.h.b16 %v8400
        %v8927 = vunpack.c.l.b16 %v8401
        %v8928 = vunpack.c.h.b16 %v8401
        %v8929 = vunpack.c.l.b16 %v8402
        %v8930 = vunpack.c.h.b16 %v8402
        %v8931 = vunpack.c.l.b16 %v8403
        %v8932 = vunpack.c.h.b16 %v8403
        %v8933 = vunpack.c.l.b16 %v8404
        %v8934 = vunpack.c.h.b16 %v8404
        %v8935 = vunpack.c.l.b16 %v8405
        %v8936 = vunpack.c.h.b16 %v8405
        %v8937 = vunpack.c.l.b16 %v8406
        %v8938 = vunpack.c.h.b16 %v8406
        %v8939 = vunpack.c.l.b16 %v8407
        %v8940 = vunpack.c.h.b16 %v8407
        %v8941 = vunpack.c.l.b16 %v8408
        %v8942 = vunpack.c.h.b16 %v8408
        %v8943 = vunpack.c.l.b16 %v8409
        %v8944 = vunpack.c.h.b16 %v8409
        %v8945 = vunpack.c.l.b16 %v8410
        %v8946 = vunpack.c.h.b16 %v8410
        %v8947 = vunpack.c.l.b16 %v8411
        %v8948 = vunpack.c.h.b16 %v8411
        %v8949 = vunpack.c.l.b16 %v8412
        %v8950 = vunpack.c.h.b16 %v8412
        %v8951 = vunpack.c.l.b16 %v8413
        %v8952 = vunpack.c.h.b16 %v8413
        %v8953 = vunpack.c.l.b16 %v8414
        %v8954 = vunpack.c.h.b16 %v8414
        %v8955 = vunpack.c.l.b16 %v8415
        %v8956 = vunpack.c.h.b16 %v8415
        %v8957 = vunpack.c.l.b16 %v8416
        %v8958 = vunpack.c.h.b16 %v8416
        %v8959 = vunpack.c.l.b16 %v8417
        %v8960 = vunpack.c.h.b16 %v8417
        %v8961 = vunpack.c.l.b16 %v8418
        %v8962 = vunpack.c.h.b16 %v8418
        %v8963 = vunpack.c.l.b16 %v8419
        %v8964 = vunpack.c.h.b16 %v8419
        %v8965 = vunpack.c.l.b16 %v8420
        %v8966 = vunpack.c.h.b16 %v8420
        %v8967 = vunpack.c.l.b16 %v8421
        %v8968 = vunpack.c.h.b16 %v8421
        %v8969 = vunpack.c.l.b16 %v8422
        %v8970 = vunpack.c.h.b16 %v8422
        %v8971 = vunpack.c.l.b16 %v8423
        %v8972 = vunpack.c.h.b16 %v8423
        %v8973 = vunpack.c.l.b16 %v8424
        %v8974 = vunpack.c.h.b16 %v8424
        %v8975 = vunpack.c.l.b16 %v8425
        %v8976 = vunpack.c.h.b16 %v8425
        %v8977 = vunpack.c.l.b16 %v8426
        %v8978 = vunpack.c.h.b16 %v8426
        %v8979 = vunpack.c.l.b16 %v8427
        %v8980 = vunpack.c.h.b16 %v8427
        %v8981 = vunpack.c.l.b16 %v8428
        %v8982 = vunpack.c.h.b16 %v8428
        %v8983 = vunpack.c.l.b16 %v8429
        %v8984 = vunpack.c.h.b16 %v8429
        %v8985 = vunpack.c.l.b16 %v8430
        %v8986 = vunpack.c.h.b16 %v8430
        %v8987 = vunpack.c.l.b16 %v8431
        %v8988 = vunpack.c.h.b16 %v8431
        %v8989 = vunpack.c.l.b16 %v8432
        %v8990 = vunpack.c.h.b16 %v8432
        %v8991 = vunpack.c.l.b16 %v8433
        %v8992 = vunpack.c.h.b16 %v8433
        %v8993 = vunpack.c.l.b16 %v8434
        %v8994 = vunpack.c.h.b16 %v8434
        %v8995 = vunpack.c.l.b16 %v8435
        %v8996 = vunpack.c.h.b16 %v8435
        %v8997 = vunpack.c.l.b16 %v8436
        %v8998 = vunpack.c.h.b16 %v8436
        %v8999 = vunpack.c.l.b16 %v8437
        %v9000 = vunpack.c.h.b16 %v8437
        %v9001 = vunpack.c.l.b16 %v8438
        %v9002 = vunpack.c.h.b16 %v8438
        %v9003 = vunpack.c.l.b16 %v8439
        %v9004 = vunpack.c.h.b16 %v8439
        %v9005 = vunpack.c.l.b16 %v8440
        %v9006 = vunpack.c.h.b16 %v8440
        %v9007 = vunpack.c.l.b16 %v8441
        %v9008 = vunpack.c.h.b16 %v8441
        %v9009 = vunpack.c.l.b16 %v8442
        %v9010 = vunpack.c.h.b16 %v8442
        %v9011 = vunpack.c.l.b16 %v8443
        %v9012 = vunpack.c.h.b16 %v8443
        %v9013 = vunpack.c.l.b16 %v8444
        %v9014 = vunpack.c.h.b16 %v8444
        %v9015 = vunpack.c.l.b16 %v8445
        %v9016 = vunpack.c.h.b16 %v8445
        %v9017 = vunpack.c.l.b16 %v8446
        %v9018 = vunpack.c.h.b16 %v8446
        %v9019 = vunpack.c.l.b16 %v8447
        %v9020 = vunpack.c.h.b16 %v8447
        %v9021 = vunpack.c.l.b16 %v8448
        %v9022 = vunpack.c.h.b16 %v8448
        %v9023 = vunpack.c.l.b16 %v8449
        %v9024 = vunpack.c.h.b16 %v8449
        %v9025 = vunpack.c.l.b16 %v8450
        %v9026 = vunpack.c.h.b16 %v8450
        %v9027 = vunpack.c.l.b16 %v8451
        %v9028 = vunpack.c.h.b16 %v8451
        %v9029 = vunpack.c.l.b16 %v8452
        %v9030 = vunpack.c.h.b16 %v8452
        %v9031 = vunpack.c.l.b16 %v8453
        %v9032 = vunpack.c.h.b16 %v8453
        %v9033 = vunpack.c.l.b16 %v8454
        %v9034 = vunpack.c.h.b16 %v8454
        %v9035 = vunpack.c.l.b16 %v8455
        %v9036 = vunpack.c.h.b16 %v8455
        %v9037 = vunpack.c.l.b16 %v8456
        %v9038 = vunpack.c.h.b16 %v8456
        %v9039 = vunpack.c.l.b16 %v8457
        %v9040 = vunpack.c.h.b16 %v8457
        %v9041 = vunpack.c.l.b16 %v8458
        %v9042 = vunpack.c.h.b16 %v8458
        %v9043 = vunpack.c.l.b16 %v8459
        %v9044 = vunpack.c.h.b16 %v8459
        %v9045 = vunpack.c.l.b16 %v8460
        %v9046 = vunpack.c.h.b16 %v8460
        %v9047 = vunpack.c.l.b16 %v8461
        %v9048 = vunpack.c.h.b16 %v8461
        %v9049 = vunpack.c.l.b16 %v8462
        %v9050 = vunpack.c.h.b16 %v8462
        %v9051 = vunpack.c.l.b16 %v8463
        %v9052 = vunpack.c.h.b16 %v8463
        %v9053 = vunpack.c.l.b16 %v8464
        %v9054 = vunpack.c.h.b16 %v8464
        %v9055 = vunpack.c.l.b16 %v8465
        %v9056 = vunpack.c.h.b16 %v8465
        %v9057 = vunpack.c.l.b16 %v8466
        %v9058 = vunpack.c.h.b16 %v8466
        %v9059 = vunpack.c.l.b16 %v8467
        %v9060 = vunpack.c.h.b16 %v8467
        %v9061 = vunpack.c.l.b16 %v8468
        %v9062 = vunpack.c.h.b16 %v8468
        %v9063 = vunpack.c.l.b16 %v8469
        %v9064 = vunpack.c.h.b16 %v8469
        %v9065 = vunpack.c.l.b16 %v8470
        %v9066 = vunpack.c.h.b16 %v8470
        %v9067 = vunpack.c.l.b16 %v8471
        %v9068 = vunpack.c.h.b16 %v8471
        %v9069 = vunpack.c.l.b16 %v8472
        %v9070 = vunpack.c.h.b16 %v8472
        %v9071 = vunpack.c.l.b16 %v8473
        %v9072 = vunpack.c.h.b16 %v8473
        %v9073 = vunpack.c.l.b16 %v8474
        %v9074 = vunpack.c.h.b16 %v8474
        %v9075 = vunpack.c.l.b16 %v8475
        %v9076 = vunpack.c.h.b16 %v8475
        %v9077 = vunpack.c.l.b16 %v8476
        %v9078 = vunpack.c.h.b16 %v8476
        %v9079 = vunpack.c.l.b16 %v8477
        %v9080 = vunpack.c.h.b16 %v8477
        %v9081 = vunpack.c.l.b16 %v8478
        %v9082 = vunpack.c.h.b16 %v8478
        %v9083 = vunpack.c.l.b16 %v8479
        %v9084 = vunpack.c.h.b16 %v8479
        %v9085 = vunpack.c.l.b16 %v8480
        %v9086 = vunpack.c.h.b16 %v8480
        %v9087 = vunpack.c.l.b16 %v8481
        %v9088 = vunpack.c.h.b16 %v8481
        %v9089 = vunpack.c.l.b16 %v8482
        %v9090 = vunpack.c.h.b16 %v8482
        %v9091 = vunpack.c.l.b16 %v8483
        %v9092 = vunpack.c.h.b16 %v8483
        %v9093 = vunpack.c.l.b16 %v8484
        %v9094 = vunpack.c.h.b16 %v8484
        %v9095 = vunpack.c.l.b16 %v8485
        %v9096 = vunpack.c.h.b16 %v8485
        %v9097 = vunpack.c.l.b16 %v8486
        %v9098 = vunpack.c.h.b16 %v8486
        %v9099 = vunpack.c.l.b16 %v8487
        %v9100 = vunpack.c.h.b16 %v8487
        %v9101 = vunpack.c.l.b16 %v8488
        %v9102 = vunpack.c.h.b16 %v8488
        %v9103 = vunpack.c.l.b16 %v8489
        %v9104 = vunpack.c.h.b16 %v8489
        %v9105 = vunpack.c.l.b16 %v8490
        %v9106 = vunpack.c.h.b16 %v8490
        %v9107 = vunpack.c.l.b16 %v8491
        %v9108 = vunpack.c.h.b16 %v8491
        %v9109 = vunpack.c.l.b16 %v8492
        %v9110 = vunpack.c.h.b16 %v8492
        %v9111 = vunpack.c.l.b16 %v8493
        %v9112 = vunpack.c.h.b16 %v8493
        %v9113 = vunpack.c.l.b16 %v8494
        %v9114 = vunpack.c.h.b16 %v8494
        %v9115 = vunpack.c.l.b16 %v8495
        %v9116 = vunpack.c.h.b16 %v8495
        %v9117 = vunpack.c.l.b16 %v8496
        %v9118 = vunpack.c.h.b16 %v8496
        %v9119 = vunpack.c.l.b16 %v8497
        %v9120 = vunpack.c.h.b16 %v8497
        %v9121 = vunpack.c.l.b16 %v8498
        %v9122 = vunpack.c.h.b16 %v8498
        %v9123 = vunpack.c.l.b16 %v8499
        %v9124 = vunpack.c.h.b16 %v8499
        %v9125 = vunpack.c.l.b16 %v8500
        %v9126 = vunpack.c.h.b16 %v8500
        %v9127 = vunpack.c.l.b16 %v8501
        %v9128 = vunpack.c.h.b16 %v8501
        %v9129 = vunpack.c.l.b16 %v8502
        %v9130 = vunpack.c.h.b16 %v8502
        %v9131 = vunpack.c.l.b16 %v8503
        %v9132 = vunpack.c.h.b16 %v8503
        %v9133 = vunpack.c.l.b16 %v8504
        %v9134 = vunpack.c.h.b16 %v8504
        %v9135 = vunpack.c.l.b16 %v8505
        %v9136 = vunpack.c.h.b16 %v8505
        %v9137 = vunpack.c.l.b16 %v8506
        %v9138 = vunpack.c.h.b16 %v8506
        %v9139 = vunpack.c.l.b16 %v8507
        %v9140 = vunpack.c.h.b16 %v8507
        %v9141 = vunpack.c.l.b16 %v8508
        %v9142 = vunpack.c.h.b16 %v8508
        %v9143 = vunpack.c.l.b16 %v8509
        %v9144 = vunpack.c.h.b16 %v8509
        %v9145 = vunpack.c.l.b16 %v8510
        %v9146 = vunpack.c.h.b16 %v8510
        %v9147 = vunpack.c.l.b16 %v8511
        %v9148 = vunpack.c.h.b16 %v8511
        %v9149 = vunpack.c.l.b16 %v8512
        %v9150 = vunpack.c.h.b16 %v8512
        %v9151 = vunpack.c.l.b16 %v8513
        %v9152 = vunpack.c.h.b16 %v8513
        %v9153 = vunpack.c.l.b16 %v8514
        %v9154 = vunpack.c.h.b16 %v8514
        %v9155 = vunpack.c.l.b16 %v8515
        %v9156 = vunpack.c.h.b16 %v8515
        %v9157 = vunpack.c.l.b16 %v8516
        %v9158 = vunpack.c.h.b16 %v8516
        %v9159 = vunpack.c.l.b16 %v8517
        %v9160 = vunpack.c.h.b16 %v8517
        %v9161 = vunpack.c.l.b16 %v8518
        %v9162 = vunpack.c.h.b16 %v8518
        %v9163 = vunpack.c.l.b16 %v8519
        %v9164 = vunpack.c.h.b16 %v8519
        %v9165 = vunpack.c.l.b16 %v8520
        %v9166 = vunpack.c.h.b16 %v8520
        %v9167 = vunpack.c.l.b16 %v8521
        %v9168 = vunpack.c.h.b16 %v8521
        %v9169 = vunpack.c.l.b16 %v8522
        %v9170 = vunpack.c.h.b16 %v8522
        %v9171 = vunpack.c.l.b16 %v8523
        %v9172 = vunpack.c.h.b16 %v8523
        %v9173 = vunpack.c.l.b16 %v8524
        %v9174 = vunpack.c.h.b16 %v8524
        %v9175 = vunpack.c.l.b16 %v8525
        %v9176 = vunpack.c.h.b16 %v8525
        %v9177 = vunpack.c.l.b16 %v8526
        %v9178 = vunpack.c.h.b16 %v8526
        %v9179 = vunpack.c.l.b16 %v8527
        %v9180 = vunpack.c.h.b16 %v8527
        %v9181 = vunpack.c.l.b16 %v8528
        %v9182 = vunpack.c.h.b16 %v8528
        %v9183 = vunpack.c.l.b16 %v8529
        %v9184 = vunpack.c.h.b16 %v8529
        %v9185 = vunpack.c.l.b16 %v8530
        %v9186 = vunpack.c.h.b16 %v8530
        %v9187 = vunpack.c.l.b16 %v8531
        %v9188 = vunpack.c.h.b16 %v8531
        %v9189 = vunpack.c.l.b16 %v8532
        %v9190 = vunpack.c.h.b16 %v8532
        %v9191 = vunpack.c.l.b16 %v8533
        %v9192 = vunpack.c.h.b16 %v8533
        %v9193 = vunpack.c.l.b16 %v8534
        %v9194 = vunpack.c.h.b16 %v8534
        %v9195 = vunpack.c.l.b16 %v8535
        %v9196 = vunpack.c.h.b16 %v8535
        %v9197 = vunpack.c.l.b16 %v8536
        %v9198 = vunpack.c.h.b16 %v8536
        %v9199 = vunpack.c.l.b16 %v8537
        %v9200 = vunpack.c.h.b16 %v8537
        %v9201 = vunpack.c.l.b16 %v8538
        %v9202 = vunpack.c.h.b16 %v8538
        %v9203 = vunpack.c.l.b16 %v8539
        %v9204 = vunpack.c.h.b16 %v8539
        %v9205 = vunpack.c.l.b16 %v8540
        %v9206 = vunpack.c.h.b16 %v8540
        %v9207 = vunpack.c.l.b16 %v8541
        %v9208 = vunpack.c.h.b16 %v8541
        %v9209 = vunpack.c.l.b16 %v8542
        %v9210 = vunpack.c.h.b16 %v8542
        %v9211 = vunpack.c.l.b16 %v8543
        %v9212 = vunpack.c.h.b16 %v8543
        %v9213 = vunpack.c.l.b16 %v8544
        %v9214 = vunpack.c.h.b16 %v8544
        %v9215 = vunpack.c.l.b16 %v8545
        %v9216 = vunpack.c.h.b16 %v8545
        %v9217 = vunpack.c.l.b16 %v8546
        %v9218 = vunpack.c.h.b16 %v8546
        %v9219 = vunpack.c.l.b16 %v8547
        %v9220 = vunpack.c.h.b16 %v8547
        %v9221 = vunpack.c.l.b16 %v8548
        %v9222 = vunpack.c.h.b16 %v8548
        %v9223 = vunpack.c.l.b16 %v8549
        %v9224 = vunpack.c.h.b16 %v8549
        %v9225 = vunpack.c.l.b16 %v8550
        %v9226 = vunpack.c.h.b16 %v8550
        %v9227 = vunpack.c.l.b16 %v8551
        %v9228 = vunpack.c.h.b16 %v8551
        %v9229 = vunpack.c.l.b16 %v8552
        %v9230 = vunpack.c.h.b16 %v8552
        %v9231 = vunpack.c.l.b16 %v8553
        %v9232 = vunpack.c.h.b16 %v8553
        %v9233 = vunpack.c.l.b16 %v8554
        %v9234 = vunpack.c.h.b16 %v8554
        %v9235 = vunpack.c.l.b16 %v8555
        %v9236 = vunpack.c.h.b16 %v8555
        %v9237 = vunpack.c.l.b16 %v8556
        %v9238 = vunpack.c.h.b16 %v8556
        %v9239 = vunpack.c.l.b16 %v8557
        %v9240 = vunpack.c.h.b16 %v8557
        %v9241 = vunpack.c.l.b16 %v8558
        %v9242 = vunpack.c.h.b16 %v8558
        %v9243 = vunpack.c.l.b16 %v8559
        %v9244 = vunpack.c.h.b16 %v8559
        %v9245 = vunpack.c.l.b16 %v8560
        %v9246 = vunpack.c.h.b16 %v8560
        %v9247 = vunpack.c.l.b16 %v8561
        %v9248 = vunpack.c.h.b16 %v8561
        %v9249 = vunpack.c.l.b16 %v8562
        %v9250 = vunpack.c.h.b16 %v8562
        %v9251 = vunpack.c.l.b16 %v8563
        %v9252 = vunpack.c.h.b16 %v8563
        %v9253 = vunpack.c.l.b16 %v8564
        %v9254 = vunpack.c.h.b16 %v8564
        %v9255 = vunpack.c.l.b16 %v8565
        %v9256 = vunpack.c.h.b16 %v8565
        %v9257 = vunpack.c.l.b16 %v8566
        %v9258 = vunpack.c.h.b16 %v8566
        %v9259 = vunpack.c.l.b16 %v8567
        %v9260 = vunpack.c.h.b16 %v8567
        %v9261 = vunpack.c.l.b16 %v8568
        %v9262 = vunpack.c.h.b16 %v8568
        %v9263 = vunpack.c.l.b16 %v8569
        %v9264 = vunpack.c.h.b16 %v8569
        %v9265 = vunpack.c.l.b16 %v8570
        %v9266 = vunpack.c.h.b16 %v8570
        %v9267 = vunpack.c.l.b16 %v8571
        %v9268 = vunpack.c.h.b16 %v8571
        %v9269 = vunpack.c.l.b16 %v8572
        %v9270 = vunpack.c.h.b16 %v8572
        %v9271 = vunpack.c.l.b16 %v8573
        %v9272 = vunpack.c.h.b16 %v8573
        %v9273 = vunpack.c.l.b16 %v8574
        %v9274 = vunpack.c.h.b16 %v8574
        %v9275 = vunpack.c.l.b16 %v8575
        %v9276 = vunpack.c.h.b16 %v8575
        %v9277 = vunpack.c.l.b16 %v8576
        %v9278 = vunpack.c.h.b16 %v8576
        %v9279 = vunpack.c.l.b16 %v8577
        %v9280 = vunpack.c.h.b16 %v8577
        %v9281 = vunpack.c.l.b16 %v8578
        %v9282 = vunpack.c.h.b16 %v8578
        %v9283 = vunpack.c.l.b16 %v8579
        %v9284 = vunpack.c.h.b16 %v8579
        %v9285 = vunpack.c.l.b16 %v8580
        %v9286 = vunpack.c.h.b16 %v8580
        %v9287 = vunpack.c.l.b16 %v8581
        %v9288 = vunpack.c.h.b16 %v8581
        %v9289 = vunpack.c.l.b16 %v8582
        %v9290 = vunpack.c.h.b16 %v8582
        %v9291 = vunpack.c.l.b16 %v8583
        %v9292 = vunpack.c.h.b16 %v8583
        %v9293 = vunpack.c.l.b16 %v8584
        %v9294 = vunpack.c.h.b16 %v8584
        %v9295 = vunpack.c.l.b16 %v8585
        %v9296 = vunpack.c.h.b16 %v8585
        %v9297 = vunpack.c.l.b16 %v8586
        %v9298 = vunpack.c.h.b16 %v8586
        %v9299 = vunpack.c.l.b16 %v8587
        %v9300 = vunpack.c.h.b16 %v8587
        %v9301 = vunpack.c.l.b16 %v8588
        %v9302 = vunpack.c.h.b16 %v8588
        %v9303 = vunpack.c.l.b16 %v8589
        %v9304 = vunpack.c.h.b16 %v8589
        %v9305 = vunpack.c.l.b16 %v8590
        %v9306 = vunpack.c.h.b16 %v8590
        %v9307 = vunpack.c.l.b16 %v8591
        %v9308 = vunpack.c.h.b16 %v8591
        %v9309 = vunpack.c.l.b16 %v8592
        %v9310 = vunpack.c.h.b16 %v8592
        %v9311 = vunpack.c.l.b16 %v8593
        %v9312 = vunpack.c.h.b16 %v8593
        %v9313 = vunpack.c.l.b16 %v8594
        %v9314 = vunpack.c.h.b16 %v8594
        %v9315 = vunpack.c.l.b16 %v8595
        %v9316 = vunpack.c.h.b16 %v8595
        %v9317 = vunpack.c.l.b16 %v8596
        %v9318 = vunpack.c.h.b16 %v8596
        %v9319 = vunpack.c.l.b16 %v8597
        %v9320 = vunpack.c.h.b16 %v8597
        %v9321 = vunpack.c.l.b16 %v8598
        %v9322 = vunpack.c.h.b16 %v8598
        %v9323 = vunpack.c.l.b16 %v8599
        %v9324 = vunpack.c.h.b16 %v8599
        %v9325 = vunpack.c.l.b16 %v8600
        %v9326 = vunpack.c.h.b16 %v8600
        %v9327 = vunpack.c.l.b16 %v8601
        %v9328 = vunpack.c.h.b16 %v8601
        %v9329 = vunpack.c.l.b16 %v8602
        %v9330 = vunpack.c.h.b16 %v8602
        %v9331 = vunpack.c.l.b16 %v8603
        %v9332 = vunpack.c.h.b16 %v8603
        %v9333 = vunpack.c.l.b16 %v8604
        %v9334 = vunpack.c.h.b16 %v8604
        %v9335 = vunpack.c.l.b16 %v8605
        %v9336 = vunpack.c.h.b16 %v8605
        %v9337 = vunpack.c.l.b16 %v8606
        %v9338 = vunpack.c.h.b16 %v8606
        %v9339 = vunpack.c.l.b16 %v8607
        %v9340 = vunpack.c.h.b16 %v8607
        %v9341 = vunpack.c.l.b16 %v8608
        %v9342 = vunpack.c.h.b16 %v8608
        %v9343 = vunpack.c.l.b16 %v8609
        %v9344 = vunpack.c.h.b16 %v8609
        %v9345 = vunpack.c.l.b16 %v8610
        %v9346 = vunpack.c.h.b16 %v8610
        %v9347 = vunpack.c.l.b16 %v8611
        %v9348 = vunpack.c.h.b16 %v8611
        %v9349 = vunpack.c.l.b16 %v8612
        %v9350 = vunpack.c.h.b16 %v8612
        %v9351 = vunpack.c.l.b16 %v8613
        %v9352 = vunpack.c.h.b16 %v8613
        %v9353 = vunpack.c.l.b16 %v8614
        %v9354 = vunpack.c.h.b16 %v8614
        %v9355 = vunpack.c.l.b16 %v8615
        %v9356 = vunpack.c.h.b16 %v8615
        %v9357 = vunpack.c.l.b16 %v8616
        %v9358 = vunpack.c.h.b16 %v8616
        %v9359 = vunpack.c.l.b16 %v8617
        %v9360 = vunpack.c.h.b16 %v8617
        %v9361 = vunpack.c.l.b16 %v8618
        %v9362 = vunpack.c.h.b16 %v8618
        %v9363 = vunpack.c.l.b16 %v8619
        %v9364 = vunpack.c.h.b16 %v8619
        %v9365 = vunpack.c.l.b16 %v8620
        %v9366 = vunpack.c.h.b16 %v8620
        %v9367 = vunpack.c.l.b16 %v8621
        %v9368 = vunpack.c.h.b16 %v8621
        %v9369 = vunpack.c.l.b16 %v8622
        %v9370 = vunpack.c.h.b16 %v8622
        %v9371 = vunpack.c.l.b16 %v8623
        %v9372 = vunpack.c.h.b16 %v8623
        %v9373 = vunpack.c.l.b16 %v8624
        %v9374 = vunpack.c.h.b16 %v8624
        %v9375 = vunpack.c.l.b16 %v8625
        %v9376 = vunpack.c.h.b16 %v8625
        %v9377 = vunpack.c.l.b16 %v8626
        %v9378 = vunpack.c.h.b16 %v8626
        %v9379 = vunpack.c.l.b16 %v8627
        %v9380 = vunpack.c.h.b16 %v8627
        %v9381 = vunpack.c.l.b16 %v8628
        %v9382 = vunpack.c.h.b16 %v8628
        %v9383 = vunpack.c.l.b16 %v8629
        %v9384 = vunpack.c.h.b16 %v8629
        %v9385 = vunpack.c.l.b16 %v8630
        %v9386 = vunpack.c.h.b16 %v8630
        %v9387 = vunpack.c.l.b16 %v8631
        %v9388 = vunpack.c.h.b16 %v8631
        %v9389 = vunpack.c.l.b16 %v8632
        %v9390 = vunpack.c.h.b16 %v8632
        %v9391 = vunpack.c.l.b16 %v8633
        %v9392 = vunpack.c.h.b16 %v8633
        %v9393 = vunpack.c.l.b16 %v8634
        %v9394 = vunpack.c.h.b16 %v8634
        %v9395 = vunpack.c.l.b16 %v8635
        %v9396 = vunpack.c.h.b16 %v8635
        %v9397 = vunpack.c.l.b16 %v8636
        %v9398 = vunpack.c.h.b16 %v8636
        %v9399 = vunpack.c.l.b16 %v8637
        %v9400 = vunpack.c.h.b16 %v8637
        %v9401 = vunpack.c.l.b16 %v8638
        %v9402 = vunpack.c.h.b16 %v8638
        %v9403 = vunpack.c.l.b16 %v8639
        %v9404 = vunpack.c.h.b16 %v8639
        %v9405 = vunpack.c.l.b16 %v8640
        %v9406 = vunpack.c.h.b16 %v8640
        %v9407 = vunpack.c.l.b16 %v8641
        %v9408 = vunpack.c.h.b16 %v8641
        %v9409 = vunpack.c.l.b16 %v8642
        %v9410 = vunpack.c.h.b16 %v8642
        %v9411 = vunpack.c.l.b16 %v8643
        %v9412 = vunpack.c.h.b16 %v8643
        %v9413 = vpack.c.b16 %v8905, %v8901
        %v9414 = vpack.c.b16 %v8906, %v8902
        %v9415 = vpack.c.b16 %v8907, %v8903
        %v9416 = vpack.c.b16 %v8908, %v8904
        %v9417 = vpack.c.b16 %v8913, %v8909
        %v9418 = vpack.c.b16 %v8914, %v8910
        %v9419 = vpack.c.b16 %v8915, %v8911
        %v9420 = vpack.c.b16 %v8916, %v8912
        %v9421 = vpack.c.b16 %v8921, %v8917
        %v9422 = vpack.c.b16 %v8922, %v8918
        %v9423 = vpack.c.b16 %v8923, %v8919
        %v9424 = vpack.c.b16 %v8924, %v8920
        %v9425 = vpack.c.b16 %v8929, %v8925
        %v9426 = vpack.c.b16 %v8930, %v8926
        %v9427 = vpack.c.b16 %v8931, %v8927
        %v9428 = vpack.c.b16 %v8932, %v8928
        %v9429 = vpack.c.b16 %v8937, %v8933
        %v9430 = vpack.c.b16 %v8938, %v8934
        %v9431 = vpack.c.b16 %v8939, %v8935
        %v9432 = vpack.c.b16 %v8940, %v8936
        %v9433 = vpack.c.b16 %v8945, %v8941
        %v9434 = vpack.c.b16 %v8946, %v8942
        %v9435 = vpack.c.b16 %v8947, %v8943
        %v9436 = vpack.c.b16 %v8948, %v8944
        %v9437 = vpack.c.b16 %v8953, %v8949
        %v9438 = vpack.c.b16 %v8954, %v8950
        %v9439 = vpack.c.b16 %v8955, %v8951
        %v9440 = vpack.c.b16 %v8956, %v8952
        %v9441 = vpack.c.b16 %v8961, %v8957
        %v9442 = vpack.c.b16 %v8962, %v8958
        %v9443 = vpack.c.b16 %v8963, %v8959
        %v9444 = vpack.c.b16 %v8964, %v8960
        %v9445 = vpack.c.b16 %v8969, %v8965
        %v9446 = vpack.c.b16 %v8970, %v8966
        %v9447 = vpack.c.b16 %v8971, %v8967
        %v9448 = vpack.c.b16 %v8972, %v8968
        %v9449 = vpack.c.b16 %v8977, %v8973
        %v9450 = vpack.c.b16 %v8978, %v8974
        %v9451 = vpack.c.b16 %v8979, %v8975
        %v9452 = vpack.c.b16 %v8980, %v8976
        %v9453 = vpack.c.b16 %v8985, %v8981
        %v9454 = vpack.c.b16 %v8986, %v8982
        %v9455 = vpack.c.b16 %v8987, %v8983
        %v9456 = vpack.c.b16 %v8988, %v8984
        %v9457 = vpack.c.b16 %v8993, %v8989
        %v9458 = vpack.c.b16 %v8994, %v8990
        %v9459 = vpack.c.b16 %v8995, %v8991
        %v9460 = vpack.c.b16 %v8996, %v8992
        %v9461 = vpack.c.b16 %v9001, %v8997
        %v9462 = vpack.c.b16 %v9002, %v8998
        %v9463 = vpack.c.b16 %v9003, %v8999
        %v9464 = vpack.c.b16 %v9004, %v9000
        %v9465 = vpack.c.b16 %v9009, %v9005
        %v9466 = vpack.c.b16 %v9010, %v9006
        %v9467 = vpack.c.b16 %v9011, %v9007
        %v9468 = vpack.c.b16 %v9012, %v9008
        %v9469 = vpack.c.b16 %v9017, %v9013
        %v9470 = vpack.c.b16 %v9018, %v9014
        %v9471 = vpack.c.b16 %v9019, %v9015
        %v9472 = vpack.c.b16 %v9020, %v9016
        %v9473 = vpack.c.b16 %v9025, %v9021
        %v9474 = vpack.c.b16 %v9026, %v9022
        %v9475 = vpack.c.b16 %v9027, %v9023
        %v9476 = vpack.c.b16 %v9028, %v9024
        %v9477 = vpack.c.b16 %v9033, %v9029
        %v9478 = vpack.c.b16 %v9034, %v9030
        %v9479 = vpack.c.b16 %v9035, %v9031
        %v9480 = vpack.c.b16 %v9036, %v9032
        %v9481 = vpack.c.b16 %v9041, %v9037
        %v9482 = vpack.c.b16 %v9042, %v9038
        %v9483 = vpack.c.b16 %v9043, %v9039
        %v9484 = vpack.c.b16 %v9044, %v9040
        %v9485 = vpack.c.b16 %v9049, %v9045
        %v9486 = vpack.c.b16 %v9050, %v9046
        %v9487 = vpack.c.b16 %v9051, %v9047
        %v9488 = vpack.c.b16 %v9052, %v9048
        %v9489 = vpack.c.b16 %v9057, %v9053
        %v9490 = vpack.c.b16 %v9058, %v9054
        %v9491 = vpack.c.b16 %v9059, %v9055
        %v9492 = vpack.c.b16 %v9060, %v9056
        %v9493 = vpack.c.b16 %v9065, %v9061
        %v9494 = vpack.c.b16 %v9066, %v9062
        %v9495 = vpack.c.b16 %v9067, %v9063
        %v9496 = vpack.c.b16 %v9068, %v9064
        %v9497 = vpack.c.b16 %v9073, %v9069
        %v9498 = vpack.c.b16 %v9074, %v9070
        %v9499 = vpack.c.b16 %v9075, %v9071
        %v9500 = vpack.c.b16 %v9076, %v9072
        %v9501 = vpack.c.b16 %v9081, %v9077
        %v9502 = vpack.c.b16 %v9082, %v9078
        %v9503 = vpack.c.b16 %v9083, %v9079
        %v9504 = vpack.c.b16 %v9084, %v9080
        %v9505 = vpack.c.b16 %v9089, %v9085
        %v9506 = vpack.c.b16 %v9090, %v9086
        %v9507 = vpack.c.b16 %v9091, %v9087
        %v9508 = vpack.c.b16 %v9092, %v9088
        %v9509 = vpack.c.b16 %v9097, %v9093
        %v9510 = vpack.c.b16 %v9098, %v9094
        %v9511 = vpack.c.b16 %v9099, %v9095
        %v9512 = vpack.c.b16 %v9100, %v9096
        %v9513 = vpack.c.b16 %v9105, %v9101
        %v9514 = vpack.c.b16 %v9106, %v9102
        %v9515 = vpack.c.b16 %v9107, %v9103
        %v9516 = vpack.c.b16 %v9108, %v9104
        %v9517 = vpack.c.b16 %v9113, %v9109
        %v9518 = vpack.c.b16 %v9114, %v9110
        %v9519 = vpack.c.b16 %v9115, %v9111
        %v9520 = vpack.c.b16 %v9116, %v9112
        %v9521 = vpack.c.b16 %v9121, %v9117
        %v9522 = vpack.c.b16 %v9122, %v9118
        %v9523 = vpack.c.b16 %v9123, %v9119
        %v9524 = vpack.c.b16 %v9124, %v9120
        %v9525 = vpack.c.b16 %v9129, %v9125
        %v9526 = vpack.c.b16 %v9130, %v9126
        %v9527 = vpack.c.b16 %v9131, %v9127
        %v9528 = vpack.c.b16 %v9132, %v9128
        %v9529 = vpack.c.b16 %v9137, %v9133
        %v9530 = vpack.c.b16 %v9138, %v9134
        %v9531 = vpack.c.b16 %v9139, %v9135
        %v9532 = vpack.c.b16 %v9140, %v9136
        %v9533 = vpack.c.b16 %v9145, %v9141
        %v9534 = vpack.c.b16 %v9146, %v9142
        %v9535 = vpack.c.b16 %v9147, %v9143
        %v9536 = vpack.c.b16 %v9148, %v9144
        %v9537 = vpack.c.b16 %v9153, %v9149
        %v9538 = vpack.c.b16 %v9154, %v9150
        %v9539 = vpack.c.b16 %v9155, %v9151
        %v9540 = vpack.c.b16 %v9156, %v9152
        %v9541 = vpack.c.b16 %v9161, %v9157
        %v9542 = vpack.c.b16 %v9162, %v9158
        %v9543 = vpack.c.b16 %v9163, %v9159
        %v9544 = vpack.c.b16 %v9164, %v9160
        %v9545 = vpack.c.b16 %v9169, %v9165
        %v9546 = vpack.c.b16 %v9170, %v9166
        %v9547 = vpack.c.b16 %v9171, %v9167
        %v9548 = vpack.c.b16 %v9172, %v9168
        %v9549 = vpack.c.b16 %v9177, %v9173
        %v9550 = vpack.c.b16 %v9178, %v9174
        %v9551 = vpack.c.b16 %v9179, %v9175
        %v9552 = vpack.c.b16 %v9180, %v9176
        %v9553 = vpack.c.b16 %v9185, %v9181
        %v9554 = vpack.c.b16 %v9186, %v9182
        %v9555 = vpack.c.b16 %v9187, %v9183
        %v9556 = vpack.c.b16 %v9188, %v9184
        %v9557 = vpack.c.b16 %v9193, %v9189
        %v9558 = vpack.c.b16 %v9194, %v9190
        %v9559 = vpack.c.b16 %v9195, %v9191
        %v9560 = vpack.c.b16 %v9196, %v9192
        %v9561 = vpack.c.b16 %v9201, %v9197
        %v9562 = vpack.c.b16 %v9202, %v9198
        %v9563 = vpack.c.b16 %v9203, %v9199
        %v9564 = vpack.c.b16 %v9204, %v9200
        %v9565 = vpack.c.b16 %v9209, %v9205
        %v9566 = vpack.c.b16 %v9210, %v9206
        %v9567 = vpack.c.b16 %v9211, %v9207
        %v9568 = vpack.c.b16 %v9212, %v9208
        %v9569 = vpack.c.b16 %v9217, %v9213
        %v9570 = vpack.c.b16 %v9218, %v9214
        %v9571 = vpack.c.b16 %v9219, %v9215
        %v9572 = vpack.c.b16 %v9220, %v9216
        %v9573 = vpack.c.b16 %v9225, %v9221
        %v9574 = vpack.c.b16 %v9226, %v9222
        %v9575 = vpack.c.b16 %v9227, %v9223
        %v9576 = vpack.c.b16 %v9228, %v9224
        %v9577 = vpack.c.b16 %v9233, %v9229
        %v9578 = vpack.c.b16 %v9234, %v9230
        %v9579 = vpack.c.b16 %v9235, %v9231
        %v9580 = vpack.c.b16 %v9236, %v9232
        %v9581 = vpack.c.b16 %v9241, %v9237
        %v9582 = vpack.c.b16 %v9242, %v9238
        %v9583 = vpack.c.b16 %v9243, %v9239
        %v9584 = vpack.c.b16 %v9244, %v9240
        %v9585 = vpack.c.b16 %v9249, %v9245
        %v9586 = vpack.c.b16 %v9250, %v9246
        %v9587 = vpack.c.b16 %v9251, %v9247
        %v9588 = vpack.c.b16 %v9252, %v9248
        %v9589 = vpack.c.b16 %v9257, %v9253
        %v9590 = vpack.c.b16 %v9258, %v9254
        %v9591 = vpack.c.b16 %v9259, %v9255
        %v9592 = vpack.c.b16 %v9260, %v9256
        %v9593 = vpack.c.b16 %v9265, %v9261
        %v9594 = vpack.c.b16 %v9266, %v9262
        %v9595 = vpack.c.b16 %v9267, %v9263
        %v9596 = vpack.c.b16 %v9268, %v9264
        %v9597 = vpack.c.b16 %v9273, %v9269
        %v9598 = vpack.c.b16 %v9274, %v9270
        %v9599 = vpack.c.b16 %v9275, %v9271
        %v9600 = vpack.c.b16 %v9276, %v9272
        %v9601 = vpack.c.b16 %v9281, %v9277
        %v9602 = vpack.c.b16 %v9282, %v9278
        %v9603 = vpack.c.b16 %v9283, %v9279
        %v9604 = vpack.c.b16 %v9284, %v9280
        %v9605 = vpack.c.b16 %v9289, %v9285
        %v9606 = vpack.c.b16 %v9290, %v9286
        %v9607 = vpack.c.b16 %v9291, %v9287
        %v9608 = vpack.c.b16 %v9292, %v9288
        %v9609 = vpack.c.b16 %v9297, %v9293
        %v9610 = vpack.c.b16 %v9298, %v9294
        %v9611 = vpack.c.b16 %v9299, %v9295
        %v9612 = vpack.c.b16 %v9300, %v9296
        %v9613 = vpack.c.b16 %v9305, %v9301
        %v9614 = vpack.c.b16 %v9306, %v9302
        %v9615 = vpack.c.b16 %v9307, %v9303
        %v9616 = vpack.c.b16 %v9308, %v9304
        %v9617 = vpack.c.b16 %v9313, %v9309
        %v9618 = vpack.c.b16 %v9314, %v9310
        %v9619 = vpack.c.b16 %v9315, %v9311
        %v9620 = vpack.c.b16 %v9316, %v9312
        %v9621 = vpack.c.b16 %v9321, %v9317
        %v9622 = vpack.c.b16 %v9322, %v9318
        %v9623 = vpack.c.b16 %v9323, %v9319
        %v9624 = vpack.c.b16 %v9324, %v9320
        %v9625 = vpack.c.b16 %v9329, %v9325
        %v9626 = vpack.c.b16 %v9330, %v9326
        %v9627 = vpack.c.b16 %v9331, %v9327
        %v9628 = vpack.c.b16 %v9332, %v9328
        %v9629 = vpack.c.b16 %v9337, %v9333
        %v9630 = vpack.c.b16 %v9338, %v9334
        %v9631 = vpack.c.b16 %v9339, %v9335
        %v9632 = vpack.c.b16 %v9340, %v9336
        %v9633 = vpack.c.b16 %v9345, %v9341
        %v9634 = vpack.c.b16 %v9346, %v9342
        %v9635 = vpack.c.b16 %v9347, %v9343
        %v9636 = vpack.c.b16 %v9348, %v9344
        %v9637 = vpack.c.b16 %v9353, %v9349
        %v9638 = vpack.c.b16 %v9354, %v9350
        %v9639 = vpack.c.b16 %v9355, %v9351
        %v9640 = vpack.c.b16 %v9356, %v9352
        %v9641 = vpack.c.b16 %v9361, %v9357
        %v9642 = vpack.c.b16 %v9362, %v9358
        %v9643 = vpack.c.b16 %v9363, %v9359
        %v9644 = vpack.c.b16 %v9364, %v9360
        %v9645 = vpack.c.b16 %v9369, %v9365
        %v9646 = vpack.c.b16 %v9370, %v9366
        %v9647 = vpack.c.b16 %v9371, %v9367
        %v9648 = vpack.c.b16 %v9372, %v9368
        %v9649 = vpack.c.b16 %v9377, %v9373
        %v9650 = vpack.c.b16 %v9378, %v9374
        %v9651 = vpack.c.b16 %v9379, %v9375
        %v9652 = vpack.c.b16 %v9380, %v9376
        %v9653 = vpack.c.b16 %v9385, %v9381
        %v9654 = vpack.c.b16 %v9386, %v9382
        %v9655 = vpack.c.b16 %v9387, %v9383
        %v9656 = vpack.c.b16 %v9388, %v9384
        %v9657 = vpack.c.b16 %v9393, %v9389
        %v9658 = vpack.c.b16 %v9394, %v9390
        %v9659 = vpack.c.b16 %v9395, %v9391
        %v9660 = vpack.c.b16 %v9396, %v9392
        %v9661 = vpack.c.b16 %v9401, %v9397
        %v9662 = vpack.c.b16 %v9402, %v9398
        %v9663 = vpack.c.b16 %v9403, %v9399
        %v9664 = vpack.c.b16 %v9404, %v9400
        %v9665 = vpack.c.b16 %v9409, %v9405
        %v9666 = vpack.c.b16 %v9410, %v9406
        %v9667 = vpack.c.b16 %v9411, %v9407
        %v9668 = vpack.c.b16 %v9412, %v9408
        %v9926 = vlaneseq
        %v9927 = vshrl.u32 %v9926, 7
        %v9928 = vsub.s32 0, %v9927
        %v9929 = vrot.slane %v8644, %v9928
        %v9930 = vlaneseq
        %v9931 = vshrl.u32 %v9930, 7
        %v9932 = vsub.s32 1, %v9931
        %v9933 = vrot.slane %v8644, %v9932
        %v9934 = vlaneseq
        %v9935 = vshrl.u32 %v9934, 7
        %v9936 = vsub.s32 2, %v9935
        %v9937 = vrot.slane %v8644, %v9936
        %v9938 = vlaneseq
        %v9939 = vshrl.u32 %v9938, 7
        %v9940 = vsub.s32 3, %v9939
        %v9941 = vrot.slane %v8644, %v9940
        %9946 = vmatprep.subr.bf16.mxu0 %v9414
        %9947 = vmatpush1.bf16.msra.mxu0 %v9413
        %9948 = vmatprep.subr.bf16.mxu0 %v9418
        %9949 = vmatpush1.bf16.msra.mxu0 %v9417
        %9950 = vmatprep.subr.bf16.mxu0 %v9422
        %9951 = vmatpush1.bf16.msra.mxu0 %v9421
        %9952 = vmatprep.subr.bf16.mxu0 %v9426
        %9953 = vmatpush1.bf16.msra.mxu0 %v9425
        %9954 = vmatprep.subr.bf16.mxu0 %v9430
        %9955 = vmatpush1.bf16.msra.mxu0 %v9429
        %9956 = vmatprep.subr.bf16.mxu0 %v9434
        %9957 = vmatpush1.bf16.msra.mxu0 %v9433
        %9958 = vmatprep.subr.bf16.mxu0 %v9438
        %9959 = vmatpush1.bf16.msra.mxu0 %v9437
        %9960 = vmatprep.subr.bf16.mxu0 %v9442
        %9961 = vmatpush1.bf16.msra.mxu0 %v9441
        %9962 = vmatprep.subr.bf16.mxu0 %v9446
        %9963 = vmatpush1.bf16.msra.mxu0 %v9445
        %9964 = vmatprep.subr.bf16.mxu0 %v9450
        %9965 = vmatpush1.bf16.msra.mxu0 %v9449
        %9966 = vmatprep.subr.bf16.mxu0 %v9454
        %9967 = vmatpush1.bf16.msra.mxu0 %v9453
        %9968 = vmatprep.subr.bf16.mxu0 %v9458
        %9969 = vmatpush1.bf16.msra.mxu0 %v9457
        %9970 = vmatprep.subr.bf16.mxu0 %v9462
        %9971 = vmatpush1.bf16.msra.mxu0 %v9461
        %9972 = vmatprep.subr.bf16.mxu0 %v9466
        %9973 = vmatpush1.bf16.msra.mxu0 %v9465
        %9974 = vmatprep.subr.bf16.mxu0 %v9470
        %9975 = vmatpush1.bf16.msra.mxu0 %v9469
        %9976 = vmatprep.subr.bf16.mxu0 %v9474
        %9977 = vmatpush1.bf16.msra.mxu0 %v9473
        %9978 = vmatprep.mubr.bf16.mxu0 %v8381
        %9979 = vmatmul.mubr.bf16.gmra.mrb[0].mxu0 %v8380
        %v9980 = vpop.f32.mrb[0].mxu0
        %v9981 = vadd.f32 %v9929, %v9980
        %v9982 = vpop.f32.mrb[0].mxu0
        %v9983 = vadd.f32 %v9933, %v9982
        %v9984 = vpop.f32.mrb[0].mxu0
        %v9985 = vpop.f32.mrb[0].mxu0
        %9986 = vdwg.mxu0
        %9987 = vmatprep.subr.bf16.mxu0 %v9478
        %9988 = vmatpush1.bf16.msra.mxu0 %v9477
        %9989 = vmatprep.subr.bf16.mxu0 %v9482
        %9990 = vmatpush1.bf16.msra.mxu0 %v9481
        %9991 = vmatprep.subr.bf16.mxu0 %v9486
        %9992 = vmatpush1.bf16.msra.mxu0 %v9485
        %9993 = vmatprep.subr.bf16.mxu0 %v9490
        %9994 = vmatpush1.bf16.msra.mxu0 %v9489
        %9995 = vmatprep.subr.bf16.mxu0 %v9494
        %9996 = vmatpush1.bf16.msra.mxu0 %v9493
        %9997 = vmatprep.subr.bf16.mxu0 %v9498
        %9998 = vmatpush1.bf16.msra.mxu0 %v9497
        %9999 = vmatprep.subr.bf16.mxu0 %v9502
        %10000 = vmatpush1.bf16.msra.mxu0 %v9501
        %10001 = vmatprep.subr.bf16.mxu0 %v9506
        %10002 = vmatpush1.bf16.msra.mxu0 %v9505
        %10003 = vmatprep.subr.bf16.mxu0 %v9510
        %10004 = vmatpush1.bf16.msra.mxu0 %v9509
        %10005 = vmatprep.subr.bf16.mxu0 %v9514
        %10006 = vmatpush1.bf16.msra.mxu0 %v9513
        %10007 = vmatprep.subr.bf16.mxu0 %v9518
        %10008 = vmatpush1.bf16.msra.mxu0 %v9517
        %10009 = vmatprep.subr.bf16.mxu0 %v9522
        %10010 = vmatpush1.bf16.msra.mxu0 %v9521
        %10011 = vmatprep.subr.bf16.mxu0 %v9526
        %10012 = vmatpush1.bf16.msra.mxu0 %v9525
        %10013 = vmatprep.subr.bf16.mxu0 %v9530
        %10014 = vmatpush1.bf16.msra.mxu0 %v9529
        %10015 = vmatprep.subr.bf16.mxu0 %v9534
        %10016 = vmatpush1.bf16.msra.mxu0 %v9533
        %10017 = vmatprep.subr.bf16.mxu0 %v9538
        %10018 = vmatpush1.bf16.msra.mxu0 %v9537
        %10019 = vmatprep.mubr.bf16.mxu0 %v8383
        %10020 = vmatmul.mubr.bf16.gmra.mrb[0].mxu0 %v8382
        %v10021 = vpop.f32.mrb[0].mxu0
        %v10022 = vadd.f32 %v9981, %v10021
        %v10023 = vpop.f32.mrb[0].mxu0
        %v10024 = vadd.f32 %v9983, %v10023
        %v10025 = vpop.f32.mrb[0].mxu0
        %v10026 = vpop.f32.mrb[0].mxu0
        %10027 = vdwg.mxu0
        %10028 = vmatprep.subr.bf16.mxu0 %v9542
        %10029 = vmatpush1.bf16.msra.mxu0 %v9541
        %10030 = vmatprep.subr.bf16.mxu0 %v9546
        %10031 = vmatpush1.bf16.msra.mxu0 %v9545
        %10032 = vmatprep.subr.bf16.mxu0 %v9550
        %10033 = vmatpush1.bf16.msra.mxu0 %v9549
        %10034 = vmatprep.subr.bf16.mxu0 %v9554
        %10035 = vmatpush1.bf16.msra.mxu0 %v9553
        %10036 = vmatprep.subr.bf16.mxu0 %v9558
        %10037 = vmatpush1.bf16.msra.mxu0 %v9557
        %10038 = vmatprep.subr.bf16.mxu0 %v9562
        %10039 = vmatpush1.bf16.msra.mxu0 %v9561
        %10040 = vmatprep.subr.bf16.mxu0 %v9566
        %10041 = vmatpush1.bf16.msra.mxu0 %v9565
        %10042 = vmatprep.subr.bf16.mxu0 %v9570
        %10043 = vmatpush1.bf16.msra.mxu0 %v9569
        %10044 = vmatprep.subr.bf16.mxu0 %v9574
        %10045 = vmatpush1.bf16.msra.mxu0 %v9573
        %10046 = vmatprep.subr.bf16.mxu0 %v9578
        %10047 = vmatpush1.bf16.msra.mxu0 %v9577
        %10048 = vmatprep.subr.bf16.mxu0 %v9582
        %10049 = vmatpush1.bf16.msra.mxu0 %v9581
        %10050 = vmatprep.subr.bf16.mxu0 %v9586
        %10051 = vmatpush1.bf16.msra.mxu0 %v9585
        %10052 = vmatprep.subr.bf16.mxu0 %v9590
        %10053 = vmatpush1.bf16.msra.mxu0 %v9589
        %10054 = vmatprep.subr.bf16.mxu0 %v9594
        %10055 = vmatpush1.bf16.msra.mxu0 %v9593
        %10056 = vmatprep.subr.bf16.mxu0 %v9598
        %10057 = vmatpush1.bf16.msra.mxu0 %v9597
        %10058 = vmatprep.subr.bf16.mxu0 %v9602
        %10059 = vmatpush1.bf16.msra.mxu0 %v9601
        %10060 = vmatprep.mubr.bf16.mxu0 %v8385
        %10061 = vmatmul.mubr.bf16.gmra.mrb[0].mxu0 %v8384
        %v10062 = vpop.f32.mrb[0].mxu0
        %v10063 = vadd.f32 %v10022, %v10062
        %v10064 = vpop.f32.mrb[0].mxu0
        %v10065 = vadd.f32 %v10024, %v10064
        %v10066 = vpop.f32.mrb[0].mxu0
        %v10067 = vpop.f32.mrb[0].mxu0
        %10068 = vdwg.mxu0
        %10069 = vmatprep.subr.bf16.mxu0 %v9606
        %10070 = vmatpush1.bf16.msra.mxu0 %v9605
        %10071 = vmatprep.subr.bf16.mxu0 %v9610
        %10072 = vmatpush1.bf16.msra.mxu0 %v9609
        %10073 = vmatprep.subr.bf16.mxu0 %v9614
        %10074 = vmatpush1.bf16.msra.mxu0 %v9613
        %10075 = vmatprep.subr.bf16.mxu0 %v9618
        %10076 = vmatpush1.bf16.msra.mxu0 %v9617
        %10077 = vmatprep.subr.bf16.mxu0 %v9622
        %10078 = vmatpush1.bf16.msra.mxu0 %v9621
        %10079 = vmatprep.subr.bf16.mxu0 %v9626
        %10080 = vmatpush1.bf16.msra.mxu0 %v9625
        %10081 = vmatprep.subr.bf16.mxu0 %v9630
        %10082 = vmatpush1.bf16.msra.mxu0 %v9629
        %10083 = vmatprep.subr.bf16.mxu0 %v9634
        %10084 = vmatpush1.bf16.msra.mxu0 %v9633
        %10085 = vmatprep.subr.bf16.mxu0 %v9638
        %10086 = vmatpush1.bf16.msra.mxu0 %v9637
        %10087 = vmatprep.subr.bf16.mxu0 %v9642
        %10088 = vmatpush1.bf16.msra.mxu0 %v9641
        %10089 = vmatprep.subr.bf16.mxu0 %v9646
        %10090 = vmatpush1.bf16.msra.mxu0 %v9645
        %10091 = vmatprep.subr.bf16.mxu0 %v9650
        %10092 = vmatpush1.bf16.msra.mxu0 %v9649
        %10093 = vmatprep.subr.bf16.mxu0 %v9654
        %10094 = vmatpush1.bf16.msra.mxu0 %v9653
        %10095 = vmatprep.subr.bf16.mxu0 %v9658
        %10096 = vmatpush1.bf16.msra.mxu0 %v9657
        %10097 = vmatprep.subr.bf16.mxu0 %v9662
        %10098 = vmatpush1.bf16.msra.mxu0 %v9661
        %10099 = vmatprep.subr.bf16.mxu0 %v9666
        %10100 = vmatpush1.bf16.msra.mxu0 %v9665
        %10101 = vmatprep.mubr.bf16.mxu0 %v8387
        %10102 = vmatmul.mubr.bf16.gmra.mrb[0].mxu0 %v8386
        %v10103 = vpop.f32.mrb[0].mxu0
        %v10104 = vadd.f32 %v10063, %v10103
        %v10105 = vpop.f32.mrb[0].mxu0
        %v10106 = vadd.f32 %v10065, %v10105
        %v10107 = vpop.f32.mrb[0].mxu0
        %v10108 = vpop.f32.mrb[0].mxu0
        %10109 = vdwg.mxu0
        %10110 = vmatprep.subr.bf16.mxu0 %v9416
        %10111 = vmatpush1.bf16.msra.mxu0 %v9415
        %10112 = vmatprep.subr.bf16.mxu0 %v9420
        %10113 = vmatpush1.bf16.msra.mxu0 %v9419
        %10114 = vmatprep.subr.bf16.mxu0 %v9424
        %10115 = vmatpush1.bf16.msra.mxu0 %v9423
        %10116 = vmatprep.subr.bf16.mxu0 %v9428
        %10117 = vmatpush1.bf16.msra.mxu0 %v9427
        %10118 = vmatprep.subr.bf16.mxu0 %v9432
        %10119 = vmatpush1.bf16.msra.mxu0 %v9431
        %10120 = vmatprep.subr.bf16.mxu0 %v9436
        %10121 = vmatpush1.bf16.msra.mxu0 %v9435
        %10122 = vmatprep.subr.bf16.mxu0 %v9440
        %10123 = vmatpush1.bf16.msra.mxu0 %v9439
        %10124 = vmatprep.subr.bf16.mxu0 %v9444
        %10125 = vmatpush1.bf16.msra.mxu0 %v9443
        %10126 = vmatprep.subr.bf16.mxu0 %v9448
        %10127 = vmatpush1.bf16.msra.mxu0 %v9447
        %10128 = vmatprep.subr.bf16.mxu0 %v9452
        %10129 = vmatpush1.bf16.msra.mxu0 %v9451
        %10130 = vmatprep.subr.bf16.mxu0 %v9456
        %10131 = vmatpush1.bf16.msra.mxu0 %v9455
        %10132 = vmatprep.subr.bf16.mxu0 %v9460
        %10133 = vmatpush1.bf16.msra.mxu0 %v9459
        %10134 = vmatprep.subr.bf16.mxu0 %v9464
        %10135 = vmatpush1.bf16.msra.mxu0 %v9463
        %10136 = vmatprep.subr.bf16.mxu0 %v9468
        %10137 = vmatpush1.bf16.msra.mxu0 %v9467
        %10138 = vmatprep.subr.bf16.mxu0 %v9472
        %10139 = vmatpush1.bf16.msra.mxu0 %v9471
        %10140 = vmatprep.subr.bf16.mxu0 %v9476
        %10141 = vmatpush1.bf16.msra.mxu0 %v9475
        %10142 = vmatprep.mubr.bf16.mxu0 %v8381
        %10143 = vmatmul.mubr.bf16.gmra.mrb[0].mxu0 %v8380
        %v10144 = vpop.f32.mrb[0].mxu0
        %v10145 = vadd.f32 %v9937, %v10144
        %v10146 = vpop.f32.mrb[0].mxu0
        %v10147 = vadd.f32 %v9941, %v10146
        %v10148 = vpop.f32.mrb[0].mxu0
        %v10149 = vpop.f32.mrb[0].mxu0
        %10150 = vdwg.mxu0
        %10151 = vmatprep.subr.bf16.mxu0 %v9480
        %10152 = vmatpush1.bf16.msra.mxu0 %v9479
        %10153 = vmatprep.subr.bf16.mxu0 %v9484
        %10154 = vmatpush1.bf16.msra.mxu0 %v9483
        %10155 = vmatprep.subr.bf16.mxu0 %v9488
        %10156 = vmatpush1.bf16.msra.mxu0 %v9487
        %10157 = vmatprep.subr.bf16.mxu0 %v9492
        %10158 = vmatpush1.bf16.msra.mxu0 %v9491
        %10159 = vmatprep.subr.bf16.mxu0 %v9496
        %10160 = vmatpush1.bf16.msra.mxu0 %v9495
        %10161 = vmatprep.subr.bf16.mxu0 %v9500
        %10162 = vmatpush1.bf16.msra.mxu0 %v9499
        %10163 = vmatprep.subr.bf16.mxu0 %v9504
        %10164 = vmatpush1.bf16.msra.mxu0 %v9503
        %10165 = vmatprep.subr.bf16.mxu0 %v9508
        %10166 = vmatpush1.bf16.msra.mxu0 %v9507
        %10167 = vmatprep.subr.bf16.mxu0 %v9512
        %10168 = vmatpush1.bf16.msra.mxu0 %v9511
        %10169 = vmatprep.subr.bf16.mxu0 %v9516
        %10170 = vmatpush1.bf16.msra.mxu0 %v9515
        %10171 = vmatprep.subr.bf16.mxu0 %v9520
        %10172 = vmatpush1.bf16.msra.mxu0 %v9519
        %10173 = vmatprep.subr.bf16.mxu0 %v9524
        %10174 = vmatpush1.bf16.msra.mxu0 %v9523
        %10175 = vmatprep.subr.bf16.mxu0 %v9528
        %10176 = vmatpush1.bf16.msra.mxu0 %v9527
        %10177 = vmatprep.subr.bf16.mxu0 %v9532
        %10178 = vmatpush1.bf16.msra.mxu0 %v9531
        %10179 = vmatprep.subr.bf16.mxu0 %v9536
        %10180 = vmatpush1.bf16.msra.mxu0 %v9535
        %10181 = vmatprep.subr.bf16.mxu0 %v9540
        %10182 = vmatpush1.bf16.msra.mxu0 %v9539
        %10183 = vmatprep.mubr.bf16.mxu0 %v8383
        %10184 = vmatmul.mubr.bf16.gmra.mrb[0].mxu0 %v8382
        %v10185 = vpop.f32.mrb[0].mxu0
        %v10186 = vadd.f32 %v10145, %v10185
        %v10187 = vpop.f32.mrb[0].mxu0
        %v10188 = vadd.f32 %v10147, %v10187
        %v10189 = vpop.f32.mrb[0].mxu0
        %v10190 = vpop.f32.mrb[0].mxu0
        %10191 = vdwg.mxu0
        %10192 = vmatprep.subr.bf16.mxu0 %v9544
        %10193 = vmatpush1.bf16.msra.mxu0 %v9543
        %10194 = vmatprep.subr.bf16.mxu0 %v9548
        %10195 = vmatpush1.bf16.msra.mxu0 %v9547
        %10196 = vmatprep.subr.bf16.mxu0 %v9552
        %10197 = vmatpush1.bf16.msra.mxu0 %v9551
        %10198 = vmatprep.subr.bf16.mxu0 %v9556
        %10199 = vmatpush1.bf16.msra.mxu0 %v9555
        %10200 = vmatprep.subr.bf16.mxu0 %v9560
        %10201 = vmatpush1.bf16.msra.mxu0 %v9559
        %10202 = vmatprep.subr.bf16.mxu0 %v9564
        %10203 = vmatpush1.bf16.msra.mxu0 %v9563
        %10204 = vmatprep.subr.bf16.mxu0 %v9568
        %10205 = vmatpush1.bf16.msra.mxu0 %v9567
        %10206 = vmatprep.subr.bf16.mxu0 %v9572
        %10207 = vmatpush1.bf16.msra.mxu0 %v9571
        %10208 = vmatprep.subr.bf16.mxu0 %v9576
        %10209 = vmatpush1.bf16.msra.mxu0 %v9575
        %10210 = vmatprep.subr.bf16.mxu0 %v9580
        %10211 = vmatpush1.bf16.msra.mxu0 %v9579
        %10212 = vmatprep.subr.bf16.mxu0 %v9584
        %10213 = vmatpush1.bf16.msra.mxu0 %v9583
        %10214 = vmatprep.subr.bf16.mxu0 %v9588
        %10215 = vmatpush1.bf16.msra.mxu0 %v9587
        %10216 = vmatprep.subr.bf16.mxu0 %v9592
        %10217 = vmatpush1.bf16.msra.mxu0 %v9591
        %10218 = vmatprep.subr.bf16.mxu0 %v9596
        %10219 = vmatpush1.bf16.msra.mxu0 %v9595
        %10220 = vmatprep.subr.bf16.mxu0 %v9600
        %10221 = vmatpush1.bf16.msra.mxu0 %v9599
        %10222 = vmatprep.subr.bf16.mxu0 %v9604
        %10223 = vmatpush1.bf16.msra.mxu0 %v9603
        %10224 = vmatprep.mubr.bf16.mxu0 %v8385
        %10225 = vmatmul.mubr.bf16.gmra.mrb[0].mxu0 %v8384
        %v10226 = vpop.f32.mrb[0].mxu0
        %v10227 = vadd.f32 %v10186, %v10226
        %v10228 = vpop.f32.mrb[0].mxu0
        %v10229 = vadd.f32 %v10188, %v10228
        %v10230 = vpop.f32.mrb[0].mxu0
        %v10231 = vpop.f32.mrb[0].mxu0
        %10232 = vdwg.mxu0
        %10233 = vmatprep.subr.bf16.mxu0 %v9608
        %10234 = vmatpush1.bf16.msra.mxu0 %v9607
        %10235 = vmatprep.subr.bf16.mxu0 %v9612
        %10236 = vmatpush1.bf16.msra.mxu0 %v9611
        %10237 = vmatprep.subr.bf16.mxu0 %v9616
        %10238 = vmatpush1.bf16.msra.mxu0 %v9615
        %10239 = vmatprep.subr.bf16.mxu0 %v9620
        %10240 = vmatpush1.bf16.msra.mxu0 %v9619
        %10241 = vmatprep.subr.bf16.mxu0 %v9624
        %10242 = vmatpush1.bf16.msra.mxu0 %v9623
        %10243 = vmatprep.subr.bf16.mxu0 %v9628
        %10244 = vmatpush1.bf16.msra.mxu0 %v9627
        %10245 = vmatprep.subr.bf16.mxu0 %v9632
        %10246 = vmatpush1.bf16.msra.mxu0 %v9631
        %10247 = vmatprep.subr.bf16.mxu0 %v9636
        %10248 = vmatpush1.bf16.msra.mxu0 %v9635
        %10249 = vmatprep.subr.bf16.mxu0 %v9640
        %10250 = vmatpush1.bf16.msra.mxu0 %v9639
        %10251 = vmatprep.subr.bf16.mxu0 %v9644
        %10252 = vmatpush1.bf16.msra.mxu0 %v9643
        %10253 = vmatprep.subr.bf16.mxu0 %v9648
        %10254 = vmatpush1.bf16.msra.mxu0 %v9647
        %10255 = vmatprep.subr.bf16.mxu0 %v9652
        %10256 = vmatpush1.bf16.msra.mxu0 %v9651
        %10257 = vmatprep.subr.bf16.mxu0 %v9656
        %10258 = vmatpush1.bf16.msra.mxu0 %v9655
        %10259 = vmatprep.subr.bf16.mxu0 %v9660
        %10260 = vmatpush1.bf16.msra.mxu0 %v9659
        %10261 = vmatprep.subr.bf16.mxu0 %v9664
        %10262 = vmatpush1.bf16.msra.mxu0 %v9663
        %10263 = vmatprep.subr.bf16.mxu0 %v9668
        %10264 = vmatpush1.bf16.msra.mxu0 %v9667
        %10265 = vmatprep.mubr.bf16.mxu0 %v8387
        %10266 = vmatmul.mubr.bf16.gmra.mrb[0].mxu0 %v8386
        %v10267 = vpop.f32.mrb[0].mxu0
        %v10268 = vadd.f32 %v10227, %v10267
        %v10269 = vpop.f32.mrb[0].mxu0
        %v10270 = vadd.f32 %v10229, %v10269
        %v10271 = vpop.f32.mrb[0].mxu0
        %v10272 = vpop.f32.mrb[0].mxu0
        %10273 = vdwg.mxu0
        %v10274 = vmax.f32 %v10104, 0.0
        %v10275 = vmax.f32 %v10106, 0.0
        %v10276 = vmax.f32 %v10268, 0.0
        %v10277 = vmax.f32 %v10270, 0.0
        %v10278 = vpack.c.bf16 %v10274, %v10274
        %v10279 = vpack.c.bf16 %v10275, %v10275
        %v10280 = vpack.c.bf16 %v10276, %v10276
        %v10281 = vpack.c.bf16 %v10277, %v10277
        %v10282 = vld [vmem:[%s9] sm:$0xff]
        %v10283 = vld [vmem:[%s9 + $0x8] sm:$0xff]
        %v10284 = vld [vmem:[%s9 + $0x10] sm:$0xff]
        %v10285 = vld [vmem:[%s9 + $0x18] sm:$0xff]
        %v10286 = vld [vmem:[%s9 + $0x20] sm:$0xff]
        %v10287 = vld [vmem:[%s9 + $0x28] sm:$0xff]
        %v10288 = vld [vmem:[%s9 + $0x30] sm:$0xff]
        %v10289 = vld [vmem:[%s9 + $0x38] sm:$0xff]
        %v10290 = vld [vmem:[%s9 + $0x40] sm:$0xff]
        %v10291 = vld [vmem:[%s9 + $0x48] sm:$0xff]
        %v10292 = vld [vmem:[%s9 + $0x50] sm:$0xff]
        %v10293 = vld [vmem:[%s9 + $0x58] sm:$0xff]
        %v10294 = vld [vmem:[%s9 + $0x60] sm:$0xff]
        %v10295 = vld [vmem:[%s9 + $0x68] sm:$0xff]
        %v10296 = vld [vmem:[%s9 + $0x70] sm:$0xff]
        %v10297 = vld [vmem:[%s9 + $0x78] sm:$0xff]
        %v10298 = vld [vmem:[%s9 + $0x80] sm:$0xff]
        %v10299 = vld [vmem:[%s9 + $0x88] sm:$0xff]
        %v10300 = vld [vmem:[%s9 + $0x90] sm:$0xff]
        %v10301 = vld [vmem:[%s9 + $0x98] sm:$0xff]
        %v10302 = vld [vmem:[%s9 + $0xa0] sm:$0xff]
        %v10303 = vld [vmem:[%s9 + $0xa8] sm:$0xff]
        %v10304 = vld [vmem:[%s9 + $0xb0] sm:$0xff]
        %v10305 = vld [vmem:[%s9 + $0xb8] sm:$0xff]
        %v10306 = vld [vmem:[%s9 + $0xc0] sm:$0xff]
        %v10307 = vld [vmem:[%s9 + $0xc8] sm:$0xff]
        %v10308 = vld [vmem:[%s9 + $0xd0] sm:$0xff]
        %v10309 = vld [vmem:[%s9 + $0xd8] sm:$0xff]
        %v10310 = vld [vmem:[%s9 + $0xe0] sm:$0xff]
        %v10311 = vld [vmem:[%s9 + $0xe8] sm:$0xff]
        %v10312 = vld [vmem:[%s9 + $0xf0] sm:$0xff]
        %v10313 = vld [vmem:[%s9 + $0xf8] sm:$0xff]
        %v10314 = vld [vmem:[%s9 + $0x100] sm:$0xff]
        %v10315 = vld [vmem:[%s9 + $0x108] sm:$0xff]
        %v10316 = vld [vmem:[%s9 + $0x110] sm:$0xff]
        %v10317 = vld [vmem:[%s9 + $0x118] sm:$0xff]
        %v10318 = vld [vmem:[%s9 + $0x120] sm:$0xff]
        %v10319 = vld [vmem:[%s9 + $0x128] sm:$0xff]
        %v10320 = vld [vmem:[%s9 + $0x130] sm:$0xff]
        %v10321 = vld [vmem:[%s9 + $0x138] sm:$0xff]
        %v10322 = vld [vmem:[%s9 + $0x140] sm:$0xff]
        %v10323 = vld [vmem:[%s9 + $0x148] sm:$0xff]
        %v10324 = vld [vmem:[%s9 + $0x150] sm:$0xff]
        %v10325 = vld [vmem:[%s9 + $0x158] sm:$0xff]
        %v10326 = vld [vmem:[%s9 + $0x160] sm:$0xff]
        %v10327 = vld [vmem:[%s9 + $0x168] sm:$0xff]
        %v10328 = vld [vmem:[%s9 + $0x170] sm:$0xff]
        %v10329 = vld [vmem:[%s9 + $0x178] sm:$0xff]
        %v10330 = vld [vmem:[%s9 + $0x180] sm:$0xff]
        %v10331 = vld [vmem:[%s9 + $0x188] sm:$0xff]
        %v10332 = vld [vmem:[%s9 + $0x190] sm:$0xff]
        %v10333 = vld [vmem:[%s9 + $0x198] sm:$0xff]
        %v10334 = vld [vmem:[%s9 + $0x1a0] sm:$0xff]
        %v10335 = vld [vmem:[%s9 + $0x1a8] sm:$0xff]
        %v10336 = vld [vmem:[%s9 + $0x1b0] sm:$0xff]
        %v10337 = vld [vmem:[%s9 + $0x1b8] sm:$0xff]
        %v10338 = vld [vmem:[%s9 + $0x1c0] sm:$0xff]
        %v10339 = vld [vmem:[%s9 + $0x1c8] sm:$0xff]
        %v10340 = vld [vmem:[%s9 + $0x1d0] sm:$0xff]
        %v10341 = vld [vmem:[%s9 + $0x1d8] sm:$0xff]
        %v10342 = vld [vmem:[%s9 + $0x1e0] sm:$0xff]
        %v10343 = vld [vmem:[%s9 + $0x1e8] sm:$0xff]
        %v10344 = vld [vmem:[%s9 + $0x1f0] sm:$0xff]
        %v10345 = vld [vmem:[%s9 + $0x1f8] sm:$0xff]
        %v10346 = vld [vmem:[%s10] sm:$0x3]
        %v10411 = vunpack.c.l.b16 %v10282
        %v10412 = vunpack.c.h.b16 %v10282
        %v10413 = vunpack.c.l.b16 %v10283
        %v10414 = vunpack.c.h.b16 %v10283
        %v10415 = vunpack.c.l.b16 %v10284
        %v10416 = vunpack.c.h.b16 %v10284
        %v10417 = vunpack.c.l.b16 %v10285
        %v10418 = vunpack.c.h.b16 %v10285
        %v10419 = vunpack.c.l.b16 %v10286
        %v10420 = vunpack.c.h.b16 %v10286
        %v10421 = vunpack.c.l.b16 %v10287
        %v10422 = vunpack.c.h.b16 %v10287
        %v10423 = vunpack.c.l.b16 %v10288
        %v10424 = vunpack.c.h.b16 %v10288
        %v10425 = vunpack.c.l.b16 %v10289
        %v10426 = vunpack.c.h.b16 %v10289
        %v10427 = vunpack.c.l.b16 %v10290
        %v10428 = vunpack.c.h.b16 %v10290
        %v10429 = vunpack.c.l.b16 %v10291
        %v10430 = vunpack.c.h.b16 %v10291
        %v10431 = vunpack.c.l.b16 %v10292
        %v10432 = vunpack.c.h.b16 %v10292
        %v10433 = vunpack.c.l.b16 %v10293
        %v10434 = vunpack.c.h.b16 %v10293
        %v10435 = vunpack.c.l.b16 %v10294
        %v10436 = vunpack.c.h.b16 %v10294
        %v10437 = vunpack.c.l.b16 %v10295
        %v10438 = vunpack.c.h.b16 %v10295
        %v10439 = vunpack.c.l.b16 %v10296
        %v10440 = vunpack.c.h.b16 %v10296
        %v10441 = vunpack.c.l.b16 %v10297
        %v10442 = vunpack.c.h.b16 %v10297
        %v10443 = vunpack.c.l.b16 %v10298
        %v10444 = vunpack.c.h.b16 %v10298
        %v10445 = vunpack.c.l.b16 %v10299
        %v10446 = vunpack.c.h.b16 %v10299
        %v10447 = vunpack.c.l.b16 %v10300
        %v10448 = vunpack.c.h.b16 %v10300
        %v10449 = vunpack.c.l.b16 %v10301
        %v10450 = vunpack.c.h.b16 %v10301
        %v10451 = vunpack.c.l.b16 %v10302
        %v10452 = vunpack.c.h.b16 %v10302
        %v10453 = vunpack.c.l.b16 %v10303
        %v10454 = vunpack.c.h.b16 %v10303
        %v10455 = vunpack.c.l.b16 %v10304
        %v10456 = vunpack.c.h.b16 %v10304
        %v10457 = vunpack.c.l.b16 %v10305
        %v10458 = vunpack.c.h.b16 %v10305
        %v10459 = vunpack.c.l.b16 %v10306
        %v10460 = vunpack.c.h.b16 %v10306
        %v10461 = vunpack.c.l.b16 %v10307
        %v10462 = vunpack.c.h.b16 %v10307
        %v10463 = vunpack.c.l.b16 %v10308
        %v10464 = vunpack.c.h.b16 %v10308
        %v10465 = vunpack.c.l.b16 %v10309
        %v10466 = vunpack.c.h.b16 %v10309
        %v10467 = vunpack.c.l.b16 %v10310
        %v10468 = vunpack.c.h.b16 %v10310
        %v10469 = vunpack.c.l.b16 %v10311
        %v10470 = vunpack.c.h.b16 %v10311
        %v10471 = vunpack.c.l.b16 %v10312
        %v10472 = vunpack.c.h.b16 %v10312
        %v10473 = vunpack.c.l.b16 %v10313
        %v10474 = vunpack.c.h.b16 %v10313
        %v10475 = vunpack.c.l.b16 %v10314
        %v10476 = vunpack.c.h.b16 %v10314
        %v10477 = vunpack.c.l.b16 %v10315
        %v10478 = vunpack.c.h.b16 %v10315
        %v10479 = vunpack.c.l.b16 %v10316
        %v10480 = vunpack.c.h.b16 %v10316
        %v10481 = vunpack.c.l.b16 %v10317
        %v10482 = vunpack.c.h.b16 %v10317
        %v10483 = vunpack.c.l.b16 %v10318
        %v10484 = vunpack.c.h.b16 %v10318
        %v10485 = vunpack.c.l.b16 %v10319
        %v10486 = vunpack.c.h.b16 %v10319
        %v10487 = vunpack.c.l.b16 %v10320
        %v10488 = vunpack.c.h.b16 %v10320
        %v10489 = vunpack.c.l.b16 %v10321
        %v10490 = vunpack.c.h.b16 %v10321
        %v10491 = vunpack.c.l.b16 %v10322
        %v10492 = vunpack.c.h.b16 %v10322
        %v10493 = vunpack.c.l.b16 %v10323
        %v10494 = vunpack.c.h.b16 %v10323
        %v10495 = vunpack.c.l.b16 %v10324
        %v10496 = vunpack.c.h.b16 %v10324
        %v10497 = vunpack.c.l.b16 %v10325
        %v10498 = vunpack.c.h.b16 %v10325
        %v10499 = vunpack.c.l.b16 %v10326
        %v10500 = vunpack.c.h.b16 %v10326
        %v10501 = vunpack.c.l.b16 %v10327
        %v10502 = vunpack.c.h.b16 %v10327
        %v10503 = vunpack.c.l.b16 %v10328
        %v10504 = vunpack.c.h.b16 %v10328
        %v10505 = vunpack.c.l.b16 %v10329
        %v10506 = vunpack.c.h.b16 %v10329
        %v10507 = vunpack.c.l.b16 %v10330
        %v10508 = vunpack.c.h.b16 %v10330
        %v10509 = vunpack.c.l.b16 %v10331
        %v10510 = vunpack.c.h.b16 %v10331
        %v10511 = vunpack.c.l.b16 %v10332
        %v10512 = vunpack.c.h.b16 %v10332
        %v10513 = vunpack.c.l.b16 %v10333
        %v10514 = vunpack.c.h.b16 %v10333
        %v10515 = vunpack.c.l.b16 %v10334
        %v10516 = vunpack.c.h.b16 %v10334
        %v10517 = vunpack.c.l.b16 %v10335
        %v10518 = vunpack.c.h.b16 %v10335
        %v10519 = vunpack.c.l.b16 %v10336
        %v10520 = vunpack.c.h.b16 %v10336
        %v10521 = vunpack.c.l.b16 %v10337
        %v10522 = vunpack.c.h.b16 %v10337
        %v10523 = vunpack.c.l.b16 %v10338
        %v10524 = vunpack.c.h.b16 %v10338
        %v10525 = vunpack.c.l.b16 %v10339
        %v10526 = vunpack.c.h.b16 %v10339
        %v10527 = vunpack.c.l.b16 %v10340
        %v10528 = vunpack.c.h.b16 %v10340
        %v10529 = vunpack.c.l.b16 %v10341
        %v10530 = vunpack.c.h.b16 %v10341
        %v10531 = vunpack.c.l.b16 %v10342
        %v10532 = vunpack.c.h.b16 %v10342
        %v10533 = vunpack.c.l.b16 %v10343
        %v10534 = vunpack.c.h.b16 %v10343
        %v10535 = vunpack.c.l.b16 %v10344
        %v10536 = vunpack.c.h.b16 %v10344
        %v10537 = vunpack.c.l.b16 %v10345
        %v10538 = vunpack.c.h.b16 %v10345
        %v10539 = vpack.c.b16 %v10413, %v10411
        %v10540 = vpack.c.b16 %v10414, %v10412
        %v10541 = vpack.c.b16 %v10417, %v10415
        %v10542 = vpack.c.b16 %v10418, %v10416
        %v10543 = vpack.c.b16 %v10421, %v10419
        %v10544 = vpack.c.b16 %v10422, %v10420
        %v10545 = vpack.c.b16 %v10425, %v10423
        %v10546 = vpack.c.b16 %v10426, %v10424
        %v10547 = vpack.c.b16 %v10429, %v10427
        %v10548 = vpack.c.b16 %v10430, %v10428
        %v10549 = vpack.c.b16 %v10433, %v10431
        %v10550 = vpack.c.b16 %v10434, %v10432
        %v10551 = vpack.c.b16 %v10437, %v10435
        %v10552 = vpack.c.b16 %v10438, %v10436
        %v10553 = vpack.c.b16 %v10441, %v10439
        %v10554 = vpack.c.b16 %v10442, %v10440
        %v10555 = vpack.c.b16 %v10445, %v10443
        %v10556 = vpack.c.b16 %v10446, %v10444
        %v10557 = vpack.c.b16 %v10449, %v10447
        %v10558 = vpack.c.b16 %v10450, %v10448
        %v10559 = vpack.c.b16 %v10453, %v10451
        %v10560 = vpack.c.b16 %v10454, %v10452
        %v10561 = vpack.c.b16 %v10457, %v10455
        %v10562 = vpack.c.b16 %v10458, %v10456
        %v10563 = vpack.c.b16 %v10461, %v10459
        %v10564 = vpack.c.b16 %v10462, %v10460
        %v10565 = vpack.c.b16 %v10465, %v10463
        %v10566 = vpack.c.b16 %v10466, %v10464
        %v10567 = vpack.c.b16 %v10469, %v10467
        %v10568 = vpack.c.b16 %v10470, %v10468
        %v10569 = vpack.c.b16 %v10473, %v10471
        %v10570 = vpack.c.b16 %v10474, %v10472
        %v10571 = vpack.c.b16 %v10477, %v10475
        %v10572 = vpack.c.b16 %v10478, %v10476
        %v10573 = vpack.c.b16 %v10481, %v10479
        %v10574 = vpack.c.b16 %v10482, %v10480
        %v10575 = vpack.c.b16 %v10485, %v10483
        %v10576 = vpack.c.b16 %v10486, %v10484
        %v10577 = vpack.c.b16 %v10489, %v10487
        %v10578 = vpack.c.b16 %v10490, %v10488
        %v10579 = vpack.c.b16 %v10493, %v10491
        %v10580 = vpack.c.b16 %v10494, %v10492
        %v10581 = vpack.c.b16 %v10497, %v10495
        %v10582 = vpack.c.b16 %v10498, %v10496
        %v10583 = vpack.c.b16 %v10501, %v10499
        %v10584 = vpack.c.b16 %v10502, %v10500
        %v10585 = vpack.c.b16 %v10505, %v10503
        %v10586 = vpack.c.b16 %v10506, %v10504
        %v10587 = vpack.c.b16 %v10509, %v10507
        %v10588 = vpack.c.b16 %v10510, %v10508
        %v10589 = vpack.c.b16 %v10513, %v10511
        %v10590 = vpack.c.b16 %v10514, %v10512
        %v10591 = vpack.c.b16 %v10517, %v10515
        %v10592 = vpack.c.b16 %v10518, %v10516
        %v10593 = vpack.c.b16 %v10521, %v10519
        %v10594 = vpack.c.b16 %v10522, %v10520
        %v10595 = vpack.c.b16 %v10525, %v10523
        %v10596 = vpack.c.b16 %v10526, %v10524
        %v10597 = vpack.c.b16 %v10529, %v10527
        %v10598 = vpack.c.b16 %v10530, %v10528
        %v10599 = vpack.c.b16 %v10533, %v10531
        %v10600 = vpack.c.b16 %v10534, %v10532
        %v10601 = vpack.c.b16 %v10537, %v10535
        %v10602 = vpack.c.b16 %v10538, %v10536
        %v10668 = vlaneseq
        %v10669 = vshrl.u32 %v10668, 7
        %v10670 = vsub.s32 0, %v10669
        %v10671 = vrot.slane %v10346, %v10670
        %v10672 = vlaneseq
        %v10673 = vshrl.u32 %v10672, 7
        %v10674 = vsub.s32 1, %v10673
        %v10675 = vrot.slane %v10346, %v10674
        %10678 = vmatprep.subr.bf16.mxu0 %v10540
        %10679 = vmatpush1.bf16.msra.mxu0 %v10539
        %10680 = vmatprep.subr.bf16.mxu0 %v10542
        %10681 = vmatpush1.bf16.msra.mxu0 %v10541
        %10682 = vmatprep.subr.bf16.mxu0 %v10544
        %10683 = vmatpush1.bf16.msra.mxu0 %v10543
        %10684 = vmatprep.subr.bf16.mxu0 %v10546
        %10685 = vmatpush1.bf16.msra.mxu0 %v10545
        %10686 = vmatprep.subr.bf16.mxu0 %v10548
        %10687 = vmatpush1.bf16.msra.mxu0 %v10547
        %10688 = vmatprep.subr.bf16.mxu0 %v10550
        %10689 = vmatpush1.bf16.msra.mxu0 %v10549
        %10690 = vmatprep.subr.bf16.mxu0 %v10552
        %10691 = vmatpush1.bf16.msra.mxu0 %v10551
        %10692 = vmatprep.subr.bf16.mxu0 %v10554
        %10693 = vmatpush1.bf16.msra.mxu0 %v10553
        %10694 = vmatprep.subr.bf16.mxu0 %v10556
        %10695 = vmatpush1.bf16.msra.mxu0 %v10555
        %10696 = vmatprep.subr.bf16.mxu0 %v10558
        %10697 = vmatpush1.bf16.msra.mxu0 %v10557
        %10698 = vmatprep.subr.bf16.mxu0 %v10560
        %10699 = vmatpush1.bf16.msra.mxu0 %v10559
        %10700 = vmatprep.subr.bf16.mxu0 %v10562
        %10701 = vmatpush1.bf16.msra.mxu0 %v10561
        %10702 = vmatprep.subr.bf16.mxu0 %v10564
        %10703 = vmatpush1.bf16.msra.mxu0 %v10563
        %10704 = vmatprep.subr.bf16.mxu0 %v10566
        %10705 = vmatpush1.bf16.msra.mxu0 %v10565
        %10706 = vmatprep.subr.bf16.mxu0 %v10568
        %10707 = vmatpush1.bf16.msra.mxu0 %v10567
        %10708 = vmatprep.subr.bf16.mxu0 %v10570
        %10709 = vmatpush1.bf16.msra.mxu0 %v10569
        %10710 = vmatprep.mubr.bf16.mxu0 %v10279
        %10711 = vmatmul.mubr.bf16.gmra.mrb[0].mxu0 %v10278
        %v10712 = vpop.f32.mrb[0].mxu0
        %v10713 = vadd.f32 %v10671, %v10712
        %v10714 = vpop.f32.mrb[0].mxu0
        %v10715 = vadd.f32 %v10675, %v10714
        %v10716 = vpop.f32.mrb[0].mxu0
        %v10717 = vpop.f32.mrb[0].mxu0
        %10718 = vdwg.mxu0
        %10719 = vmatprep.subr.bf16.mxu0 %v10572
        %10720 = vmatpush1.bf16.msra.mxu0 %v10571
        %10721 = vmatprep.subr.bf16.mxu0 %v10574
        %10722 = vmatpush1.bf16.msra.mxu0 %v10573
        %10723 = vmatprep.subr.bf16.mxu0 %v10576
        %10724 = vmatpush1.bf16.msra.mxu0 %v10575
        %10725 = vmatprep.subr.bf16.mxu0 %v10578
        %10726 = vmatpush1.bf16.msra.mxu0 %v10577
        %10727 = vmatprep.subr.bf16.mxu0 %v10580
        %10728 = vmatpush1.bf16.msra.mxu0 %v10579
        %10729 = vmatprep.subr.bf16.mxu0 %v10582
        %10730 = vmatpush1.bf16.msra.mxu0 %v10581
        %10731 = vmatprep.subr.bf16.mxu0 %v10584
        %10732 = vmatpush1.bf16.msra.mxu0 %v10583
        %10733 = vmatprep.subr.bf16.mxu0 %v10586
        %10734 = vmatpush1.bf16.msra.mxu0 %v10585
        %10735 = vmatprep.subr.bf16.mxu0 %v10588
        %10736 = vmatpush1.bf16.msra.mxu0 %v10587
        %10737 = vmatprep.subr.bf16.mxu0 %v10590
        %10738 = vmatpush1.bf16.msra.mxu0 %v10589
        %10739 = vmatprep.subr.bf16.mxu0 %v10592
        %10740 = vmatpush1.bf16.msra.mxu0 %v10591
        %10741 = vmatprep.subr.bf16.mxu0 %v10594
        %10742 = vmatpush1.bf16.msra.mxu0 %v10593
        %10743 = vmatprep.subr.bf16.mxu0 %v10596
        %10744 = vmatpush1.bf16.msra.mxu0 %v10595
        %10745 = vmatprep.subr.bf16.mxu0 %v10598
        %10746 = vmatpush1.bf16.msra.mxu0 %v10597
        %10747 = vmatprep.subr.bf16.mxu0 %v10600
        %10748 = vmatpush1.bf16.msra.mxu0 %v10599
        %10749 = vmatprep.subr.bf16.mxu0 %v10602
        %10750 = vmatpush1.bf16.msra.mxu0 %v10601
        %10751 = vmatprep.mubr.bf16.mxu0 %v10281
        %10752 = vmatmul.mubr.bf16.gmra.mrb[0].mxu0 %v10280
        %v10753 = vpop.f32.mrb[0].mxu0
        %v10754 = vadd.f32 %v10713, %v10753
        %v10755 = vpop.f32.mrb[0].mxu0
        %v10756 = vadd.f32 %v10715, %v10755
        %v10757 = vpop.f32.mrb[0].mxu0
        %v10758 = vpop.f32.mrb[0].mxu0
        %10759 = vdwg.mxu0
        %v10760 = vmax.f32 %v10754, 0.0
        %v10761 = vmax.f32 %v10756, 0.0
        %v10762 = vpack.c.bf16 %v10760, %v10760
        %v10763 = vpack.c.bf16 %v10761, %v10761
        %v10764 = vld [vmem:[%s11] sm:$0xf]
        %v10765 = vld [vmem:[%s11 + $0x4] sm:$0xf]
        %v10766 = vld [vmem:[%s11 + $0x8] sm:$0xf]
        %v10767 = vld [vmem:[%s11 + $0xc] sm:$0xf]
        %v10768 = vld [vmem:[%s11 + $0x10] sm:$0xf]
        %v10769 = vld [vmem:[%s11 + $0x14] sm:$0xf]
        %v10770 = vld [vmem:[%s11 + $0x18] sm:$0xf]
        %v10771 = vld [vmem:[%s11 + $0x1c] sm:$0xf]
        %v10772 = vld [vmem:[%s11 + $0x20] sm:$0xf]
        %v10773 = vld [vmem:[%s11 + $0x24] sm:$0xf]
        %v10774 = vld [vmem:[%s11 + $0x28] sm:$0xf]
        %v10775 = vld [vmem:[%s11 + $0x2c] sm:$0xf]
        %v10776 = vld [vmem:[%s11 + $0x30] sm:$0xf]
        %v10777 = vld [vmem:[%s11 + $0x34] sm:$0xf]
        %v10778 = vld [vmem:[%s11 + $0x38] sm:$0xf]
        %v10779 = vld [vmem:[%s11 + $0x3c] sm:$0xf]
        %v10780 = vld [vmem:[%s11 + $0x40] sm:$0xf]
        %v10781 = vld [vmem:[%s11 + $0x44] sm:$0xf]
        %v10782 = vld [vmem:[%s11 + $0x48] sm:$0xf]
        %v10783 = vld [vmem:[%s11 + $0x4c] sm:$0xf]
        %v10784 = vld [vmem:[%s11 + $0x50] sm:$0xf]
        %v10785 = vld [vmem:[%s11 + $0x54] sm:$0xf]
        %v10786 = vld [vmem:[%s11 + $0x58] sm:$0xf]
        %v10787 = vld [vmem:[%s11 + $0x5c] sm:$0xf]
        %v10788 = vld [vmem:[%s11 + $0x60] sm:$0xf]
        %v10789 = vld [vmem:[%s11 + $0x64] sm:$0xf]
        %v10790 = vld [vmem:[%s11 + $0x68] sm:$0xf]
        %v10791 = vld [vmem:[%s11 + $0x6c] sm:$0xf]
        %v10792 = vld [vmem:[%s11 + $0x70] sm:$0xf]
        %v10793 = vld [vmem:[%s11 + $0x74] sm:$0xf]
        %v10794 = vld [vmem:[%s11 + $0x78] sm:$0xf]
        %v10795 = vld [vmem:[%s11 + $0x7c] sm:$0xf]
        %v10796 = vld [vmem:[%s12] sm:$0x1]
        %v10829 = vunpack.c.l.b16 %v10764
        %v10830 = vunpack.c.l.b16 %v10765
        %v10831 = vunpack.c.l.b16 %v10766
        %v10832 = vunpack.c.l.b16 %v10767
        %v10833 = vunpack.c.l.b16 %v10768
        %v10834 = vunpack.c.l.b16 %v10769
        %v10835 = vunpack.c.l.b16 %v10770
        %v10836 = vunpack.c.l.b16 %v10771
        %v10837 = vunpack.c.l.b16 %v10772
        %v10838 = vunpack.c.l.b16 %v10773
        %v10839 = vunpack.c.l.b16 %v10774
        %v10840 = vunpack.c.l.b16 %v10775
        %v10841 = vunpack.c.l.b16 %v10776
        %v10842 = vunpack.c.l.b16 %v10777
        %v10843 = vunpack.c.l.b16 %v10778
        %v10844 = vunpack.c.l.b16 %v10779
        %v10845 = vunpack.c.l.b16 %v10780
        %v10846 = vunpack.c.l.b16 %v10781
        %v10847 = vunpack.c.l.b16 %v10782
        %v10848 = vunpack.c.l.b16 %v10783
        %v10849 = vunpack.c.l.b16 %v10784
        %v10850 = vunpack.c.l.b16 %v10785
        %v10851 = vunpack.c.l.b16 %v10786
        %v10852 = vunpack.c.l.b16 %v10787
        %v10853 = vunpack.c.l.b16 %v10788
        %v10854 = vunpack.c.l.b16 %v10789
        %v10855 = vunpack.c.l.b16 %v10790
        %v10856 = vunpack.c.l.b16 %v10791
        %v10857 = vunpack.c.l.b16 %v10792
        %v10858 = vunpack.c.l.b16 %v10793
        %v10859 = vunpack.c.l.b16 %v10794
        %v10860 = vunpack.c.l.b16 %v10795
        %v10861 = vpack.c.b16 %v10830, %v10829
        %v10862 = vpack.c.b16 %v10832, %v10831
        %v10863 = vpack.c.b16 %v10834, %v10833
        %v10864 = vpack.c.b16 %v10836, %v10835
        %v10865 = vpack.c.b16 %v10838, %v10837
        %v10866 = vpack.c.b16 %v10840, %v10839
        %v10867 = vpack.c.b16 %v10842, %v10841
        %v10868 = vpack.c.b16 %v10844, %v10843
        %v10869 = vpack.c.b16 %v10846, %v10845
        %v10870 = vpack.c.b16 %v10848, %v10847
        %v10871 = vpack.c.b16 %v10850, %v10849
        %v10872 = vpack.c.b16 %v10852, %v10851
        %v10873 = vpack.c.b16 %v10854, %v10853
        %v10874 = vpack.c.b16 %v10856, %v10855
        %v10875 = vpack.c.b16 %v10858, %v10857
        %v10876 = vpack.c.b16 %v10860, %v10859
        %10893 = vmatprep.subr.bf16.mxu0 0
        %10894 = vmatpush1.bf16.msra.mxu0 %v10861
        %10895 = vmatprep.subr.bf16.mxu0 0
        %10896 = vmatpush1.bf16.msra.mxu0 %v10862
        %10897 = vmatprep.subr.bf16.mxu0 0
        %10898 = vmatpush1.bf16.msra.mxu0 %v10863
        %10899 = vmatprep.subr.bf16.mxu0 0
        %10900 = vmatpush1.bf16.msra.mxu0 %v10864
        %10901 = vmatprep.subr.bf16.mxu0 0
        %10902 = vmatpush1.bf16.msra.mxu0 %v10865
        %10903 = vmatprep.subr.bf16.mxu0 0
        %10904 = vmatpush1.bf16.msra.mxu0 %v10866
        %10905 = vmatprep.subr.bf16.mxu0 0
        %10906 = vmatpush1.bf16.msra.mxu0 %v10867
        %10907 = vmatprep.subr.bf16.mxu0 0
        %10908 = vmatpush1.bf16.msra.mxu0 %v10868
        %10909 = vmatprep.subr.bf16.mxu0 0
        %10910 = vmatpush1.bf16.msra.mxu0 %v10869
        %10911 = vmatprep.subr.bf16.mxu0 0
        %10912 = vmatpush1.bf16.msra.mxu0 %v10870
        %10913 = vmatprep.subr.bf16.mxu0 0
        %10914 = vmatpush1.bf16.msra.mxu0 %v10871
        %10915 = vmatprep.subr.bf16.mxu0 0
        %10916 = vmatpush1.bf16.msra.mxu0 %v10872
        %10917 = vmatprep.subr.bf16.mxu0 0
        %10918 = vmatpush1.bf16.msra.mxu0 %v10873
        %10919 = vmatprep.subr.bf16.mxu0 0
        %10920 = vmatpush1.bf16.msra.mxu0 %v10874
        %10921 = vmatprep.subr.bf16.mxu0 0
        %10922 = vmatpush1.bf16.msra.mxu0 %v10875
        %10923 = vmatprep.subr.bf16.mxu0 0
        %10924 = vmatpush1.bf16.msra.mxu0 %v10876
        %10925 = vmatprep.mubr.bf16.mxu0 %v10763
        %10926 = vmatmul.mubr.bf16.gmra.mrb[0].mxu0 %v10762
        %v10927 = vpop.f32.mrb[0].mxu0
        %v10928 = vadd.f32 %v10796, %v10927
        %v10929 = vpop.f32.mrb[0].mxu0
        %v10930 = vpop.f32.mrb[0].mxu0
        %v10931 = vpop.f32.mrb[0].mxu0
        %10932 = vdwg.mxu0
        %vm10933 = vcmask 65536
        %10934 = vst.msk [vmem:[%s464] sm:$0x1] %vm10933, %v10928
      $region84: #{stn3d_forward.1} parent=71 // pred_fallthru
        _
      %p10935 = scmp.lt.s32.totalorder %s28, 1
      %s10936 = scalar_select %p10935, %s28, 1
      %s10937 = scalar_lea.vmem %s13, %s10936
      // Predicated region
      $region85: #{stn3d_forward.1} parent=71 // pred_check
        %p10938 = pneg %p334
      $region86: #{stn3d_forward.1} parent=71 // pred_check_branch
        %10940 = sbr.rel (%p10938) target = $region88
      $region87: #{stn3d_forward.1} parent=71 // pred_region
        _
      $region88: #{stn3d_forward.1} parent=71 // pred_fallthru
        _
    $region72: #{stn3d_forward.1} parent=5 // pred_fallthru
      _
    %p10941 = scmp.le.s32.totalorder 2, %s19
    // Predicated region
    $region89: #{stn3d_forward.1} parent=5 // pred_check
      %p10942 = pneg %p10941
    $region90: #{stn3d_forward.1} parent=5 // pred_check_branch
      %10944 = sbr.rel (%p10942) target = $region92
    $region91: #{stn3d_forward.1} parent=5 // pred_region
      %s10945 = ssub.s32 %s19, 2
      // Predicated region
      $region93: #{stn3d_forward.1} parent=91 // pred_check
        %p10946 = pneg %p340
      $region94: #{stn3d_forward.1} parent=91 // pred_check_branch
        %10948 = sbr.rel (%p10946) target = $region96
      $region95: #{stn3d_forward.1} parent=91 // pred_region
        %p10949 = scmp.lt.s32.totalorder %s30, 1
        %s10950 = scalar_select %p10949, %s30, 1
        %s10951 = scalar_lea.vmem %s13, %s10950
      $region96: #{stn3d_forward.1} parent=91 // pred_fallthru
        _
    $region92: #{stn3d_forward.1} parent=5 // pred_fallthru
      _
  $region6: #{stn3d_forward.1} parent=0 // loop_footer
    %s23 = sadd.s32 1, %s19
  $region7: #{stn3d_forward.1} parent=0 // loop_footer_branch
    %18 = sbr.rel target = $region3
  $region8: #{stn3d_forward.1} parent=0 // loop_exit
    _

</llo_original>
